<compile_context>
chip_gen: v7x
topology: tpu7x:2x2x1
jax: 0.10.0
libtpu: 0.0.40
codegen_flags: <defaults>
</compile_context>

<pallas_src>
import jax
import jax.numpy as jnp
from jax import lax
from jax.experimental import pallas as pl
from jax.experimental.pallas import tpu as pltpu

TE = 256          # edges per grid step (edge tile)
NB = 512          # node-chunk size bounding the one-hot working set


# ----------------------------- Pallas kernel --------------------------------
def pixel_gnn_kernel(
    x_ref, ei_ref, ea_ref,
    w1_ref, we1a_ref, we2_ref, wn1a_ref, wn2_ref,
    wnp8_ref, wep8_ref, bias_l_ref, bias_c_ref,
    node_out_ref, edge_out_ref,
    proj_sd_s, proj_nx_s, agg_s,
):
    f32, bf16 = jnp.float32, jnp.bfloat16
    t = pl.program_id(0)
    n_chunks, nb2, H = proj_sd_s.shape
    nb = nb2 // 2
    Te = ei_ref.shape[1]

    # -- step 0: ONE fused projection x @ [we1s | we1d | wn1x], written into
    #    an interleaved (src|dst per node chunk) bf16 scratch; zero the agg. -
    @pl.when(t == 0)
    def _init():
        p = jnp.dot(x_ref[...], w1_ref[...], preferred_element_type=f32)
        for c in range(n_chunks):                       # static, trace-time
            lo = c * nb
            proj_sd_s[c, 0:nb, :] = p[lo:lo + nb, 0:H].astype(bf16)
            proj_sd_s[c, nb:nb2, :] = p[lo:lo + nb, H:2 * H].astype(bf16)
        proj_nx_s[...] = p[:, 2 * H:3 * H].astype(bf16)
        agg_s[...] = jnp.zeros_like(agg_s)

    bias_l = bias_l_ref[...]                 # lane-oriented biases [8, 128]
    bias_c = bias_c_ref[...]                 # column-oriented biases [8, 128]
    be1 = bias_l[0:1, :H]
    be2 = bias_l[1:2, :H]
    src = ei_ref[0, :]                       # [Te] int32
    dst = ei_ref[1, :]                       # [Te] int32

    # -- fused src|dst gather: one bf16 one-hot matmul per node chunk.
    #    Padded edges carry sentinel index == N -> matches either a padded
    #    zero-x node (proj == 0) or nothing at all; either way contributes 0.
    def gather_chunk(c, g):
        base = c * nb
        col = lax.broadcasted_iota(jnp.int32, (Te, nb2), 1)
        node_id = jnp.where(col < nb, col, col - nb) + base
        tgt = jnp.where(col < nb, src[:, None], dst[:, None])
        oh = (node_id == tgt).astype(bf16)                        # [Te, 2*nb]
        return g + jnp.dot(oh, proj_sd_s[c], preferred_element_type=f32)

    g = lax.fori_loop(0, n_chunks, gather_chunk, jnp.zeros((Te, H), f32))

    # -- edge MLP -------------------------------------------------------------
    eh = jnp.maximum(
        g + jnp.dot(ea_ref[...], we1a_ref[...], preferred_element_type=f32)
        + be1, 0.0)
    ef = jnp.maximum(
        jnp.dot(eh, we2_ref[...], preferred_element_type=f32) + be2, 0.0)

    # -- edge prediction head, packed [8, Te] (lane dense, no 128-lane pad) --
    ep = lax.dot_general(wep8_ref[...], ef, (((1,), (1,)), ((), ())),
                         preferred_element_type=f32)              # [8, Te]
    edge_out_ref[0] = ep + bias_c[:, 0:1]

    # -- scatter-sum onto destination nodes, chunked over the node axis ------
    ef_b = ef.astype(bf16)

    def scatter_chunk(c, carry):
        base = c * nb
        iota = lax.broadcasted_iota(jnp.int32, (Te, nb), 1) + base
        dst_oh = (iota == dst[:, None]).astype(bf16)              # [Te, nb]
        part = lax.dot_general(dst_oh, ef_b, (((0,), (0,)), ((), ())),
                               preferred_element_type=f32)        # [nb, H]
        off = pl.multiple_of(c * nb, nb)
        agg_s[pl.ds(off, nb), :] = agg_s[pl.ds(off, nb), :] + part
        return carry

    lax.fori_loop(0, n_chunks, scatter_chunk, 0)

    # -- last edge tile: node MLP + node head (packed [8, N_pad]) ------------
    @pl.when(t == pl.num_programs(0) - 1)
    def _finalize():
        bn1 = bias_l[2:3, :H]
        bn2 = bias_l[3:4, :H]
        nh = jnp.maximum(
            proj_nx_s[...].astype(f32)
            + jnp.dot(agg_s[...], wn1a_ref[...], preferred_element_type=f32)
            + bn1, 0.0)
        nf = jnp.maximum(
            jnp.dot(nh, wn2_ref[...], preferred_element_type=f32) + bn2, 0.0)
        npk = lax.dot_general(wnp8_ref[...], nf, (((1,), (1,)), ((), ())),
                              preferred_element_type=f32)         # [8, N_pad]
        node_out_ref[...] = npk + bias_c[:, 1:2]


# ------------------------------ wrapper --------------------------------------
def _full(shape):
    nd = len(shape)
    return pl.BlockSpec(shape, lambda t, _nd=nd: (0,) * _nd)


def _vmem_limit_bytes():
    # ~3/4 of physical per-core VMEM, capped: ~96 MiB on v5e/v6e (128 MiB
    # physical), ~48 MiB on v7x (64 MiB physical).
    try:
        cap = int(getattr(pltpu.get_tpu_info(), "vmem_capacity_bytes", 0))
    except Exception:
        cap = 0
    if cap <= 0:
        cap = 64 * 1024 * 1024
    return min(100 * 1024 * 1024, cap * 3 // 4)


def pixel_gnn_forward(point_cloud, x, edge_index, edge_attr, params):
    """Inference-style PixelGNN forward (point-cloud slicing + GNN hot path)."""
    # glue: the slicing the PyTorch forward performs on the point cloud
    coordinates = point_cloud[:, :3]
    batch_indices = point_cloud[:, 3].astype(jnp.int32)

    N, Fn = x.shape
    E = edge_index.shape[1]
    Fe = edge_attr.shape[1]
    H = params["we2"].shape[0]
    Cn = params["wnp"].shape[1]
    Ce = params["wep"].shape[1]
    assert H <= 128, "packed biases assume hidden dim <= 128"
    assert Cn <= 8 and Ce <= 8, "packed prediction heads assume <= 8 classes"

    # ---- node padding / chunking (bounds one-hot intermediates) ------------
    nb = min(NB, ((N + 127) // 128) * 128)
    n_chunks = pl.cdiv(N, nb)
    N_pad = n_chunks * nb
    x_pad = jnp.zeros((N_pad, Fn), jnp.bfloat16).at[:N].set(
        x.astype(jnp.bfloat16))

    # ---- edge padding: sentinel index == N drops out of gather & scatter ---
    num_tiles = max(1, pl.cdiv(E, TE))        # E == 0 still runs one tile
    E_pad = num_tiles * TE
    ei = jnp.full((2, E_pad), N, jnp.int32).at[:, :E].set(
        edge_index.astype(jnp.int32))
    ea = jnp.zeros((E_pad, Fe), jnp.bfloat16).at[:E].set(
        edge_attr.astype(jnp.bfloat16))

    # ---- fused / packed weights & biases ------------------------------------
    w1 = jnp.concatenate(
        [params["we1s"], params["we1d"], params["wn1x"]],
        axis=1).astype(jnp.bfloat16)                      # [Fn, 3H]
    we1a = params["we1a"].astype(jnp.bfloat16)            # [Fe, H]
    wnp8 = jnp.zeros((8, H), jnp.float32).at[:Cn].set(params["wnp"].T)
    wep8 = jnp.zeros((8, H), jnp.float32).at[:Ce].set(params["wep"].T)

    bias_l = jnp.zeros((8, 128), jnp.float32)
    bias_l = bias_l.at[0, :H].set(params["be1"].reshape(-1))
    bias_l = bias_l.at[1, :H].set(params["be2"].reshape(-1))
    bias_l = bias_l.at[2, :H].set(params["bn1"].reshape(-1))
    bias_l = bias_l.at[3, :H].set(params["bn2"].reshape(-1))
    bias_c = jnp.zeros((8, 128), jnp.float32)
    bias_c = bias_c.at[:Ce, 0].set(params["bep"].reshape(-1))
    bias_c = bias_c.at[:Cn, 1].set(params["bnp"].reshape(-1))

    inputs = (x_pad, ei, ea, w1, we1a,
              params["we2"], params["wn1a"], params["wn2"],
              wnp8, wep8, bias_l, bias_c)

    in_specs = [
        _full((N_pad, Fn)),                          # x (bf16, resident)
        pl.BlockSpec((2, TE), lambda t: (0, t)),     # packed src/dst tile
        pl.BlockSpec((TE, Fe), lambda t: (t, 0)),    # edge_attr tile
        _full((Fn, 3 * H)),                          # fused first-layer W
        _full((Fe, H)), _full((H, H)),               # we1a, we2
        _full((H, H)), _full((H, H)),                # wn1a, wn2
        _full((8, H)), _full((8, H)),                # node / edge heads
        _full((8, 128)), _full((8, 128)),            # packed biases
    ]
    out_specs = (
        pl.BlockSpec((8, N_pad), lambda t: (0, 0)),      # packed node_pred
        pl.BlockSpec((1, 8, TE), lambda t: (t, 0, 0)),   # packed edge tile
    )

    node_packed, edge_packed = pl.pallas_call(
        pixel_gnn_kernel,
        out_shape=(
            jax.ShapeDtypeStruct((8, N_pad), jnp.float32),
            jax.ShapeDtypeStruct((num_tiles, 8, TE), jnp.float32),
        ),
        grid=(num_tiles,),
        in_specs=in_specs,
        out_specs=out_specs,
        scratch_shapes=[
            pltpu.VMEM((n_chunks, 2 * nb, H), jnp.bfloat16),  # src|dst proj
            pltpu.VMEM((N_pad, H), jnp.bfloat16),             # x @ wn1x
            pltpu.VMEM((N_pad, H), jnp.float32),              # scatter-sum acc
        ],
        compiler_params=pltpu.CompilerParams(
            dimension_semantics=("arbitrary",),
            vmem_limit_bytes=_vmem_limit_bytes()),
    )(*inputs)

    node_pred = node_packed.T[:N, :Cn]
    edge_pred = jnp.transpose(edge_packed, (0, 2, 1)).reshape(E_pad, 8)[:E, :Ce]

    return {
        "coordinates": [coordinates],
        "batch_indices": [batch_indices],
        "node_pred": node_pred,
        "edge_pred": edge_pred,
    }


# --------------------------- pure-JAX reference -------------------------------
def pixel_gnn_reference(x, edge_index, edge_attr, params):
    src, dst = edge_index[0], edge_index[1]
    N = x.shape[0]
    x_src = x[src]
    x_dst = x[dst]
    eh = jax.nn.relu(x_src @ params["we1s"] + x_dst @ params["we1d"]
                     + edge_attr @ params["we1a"] + params["be1"])
    ef = jax.nn.relu(eh @ params["we2"] + params["be2"])
    agg = jnp.zeros((N, ef.shape[1]), jnp.float32).at[dst].add(ef)
    nh = jax.nn.relu(x @ params["wn1x"] + agg @ params["wn1a"] + params["bn1"])
    nf = jax.nn.relu(nh @ params["wn2"] + params["bn2"])
    return (nf @ params["wnp"] + params["bnp"],
            ef @ params["wep"] + params["bep"])


# --------------------------------- main ---------------------------------------
if __name__ == "__main__":
    key = jax.random.PRNGKey(0)

    # small sizes that still exercise multiple edge tiles AND node chunks
    N, E = 600, 640          # nodes (pixels), edges  -> 3 edge tiles, 2 chunks
    Fn, Fe = 16, 8           # node / edge feature dims
    H = 32                   # hidden dim
    Cn, Ce = 2, 2            # node / edge prediction classes

    keys = jax.random.split(key, 20)

    # synthetic inputs (point cloud: x, y, z, batch_id, value)
    coords = jax.random.uniform(keys[0], (N, 3), jnp.float32) * 64.0
    batch_id = (jax.random.uniform(keys[1], (N, 1)) > 0.5).astype(jnp.float32)
    value = jax.random.normal(keys[2], (N, 1), jnp.float32)
    point_cloud = jnp.concatenate([coords, batch_id, value], axis=1)  # [N, 5]

    x = jax.random.normal(keys[3], (N, Fn), jnp.float32)
    edge_index = jax.random.randint(keys[4], (2, E), 0, N, jnp.int32)
    edge_attr = jax.random.normal(keys[5], (E, Fe), jnp.float32)

    def w(k, shape):
        return (0.1 * jax.random.normal(k, shape)).astype(jnp.float32)

    params = {
        "we1s": w(keys[6], (Fn, H)),
        "we1d": w(keys[7], (Fn, H)),
        "we1a": w(keys[8], (Fe, H)),
        "be1":  w(keys[9], (1, H)),
        "we2":  w(keys[10], (H, H)),
        "be2":  w(keys[11], (1, H)),
        "wn1x": w(keys[12], (Fn, H)),
        "wn1a": w(keys[13], (H, H)),
        "bn1":  w(keys[14], (1, H)),
        "wn2":  w(keys[15], (H, H)),
        "bn2":  w(keys[16], (1, H)),
        "wnp":  w(keys[17], (H, Cn)),
        "bnp":  jnp.zeros((1, Cn), jnp.float32),
        "wep":  w(keys[18], (H, Ce)),
        "bep":  jnp.zeros((1, Ce), jnp.float32),
    }

    out = pixel_gnn_forward(point_cloud, x, edge_index, edge_attr, params)
    jax.block_until_ready(out["node_pred"])
    jax.block_until_ready(out["edge_pred"])

    # correctness check against pure-f32 reference. bf16 is used for x, the
    # first-layer weights/projections, edge_attr and the scatter operand, so
    # expect ~1e-2-level absolute error at most -> loose tolerance.
    ref_node, ref_edge = pixel_gnn_reference(x, edge_index, edge_attr, params)
    node_err = float(jnp.max(jnp.abs(out["node_pred"] - ref_node)))
    edge_err = float(jnp.max(jnp.abs(out["edge_pred"] - ref_edge)))
    assert jnp.allclose(out["node_pred"], ref_node, rtol=5e-2, atol=5e-2), node_err
    assert jnp.allclose(out["edge_pred"], ref_edge, rtol=5e-2, atol=5e-2), edge_err

    print("KERNEL_OK")
</pallas_src>

<mosaic_0001>
module attributes {stable_mosaic.version = 11 : i64} {
  func.func @pixel_gnn_kernel(%arg0: i32, %arg1: memref<1024x16xbf16, #tpu.memory_space<vmem>>, %arg2: memref<2x256xi32, #tpu.memory_space<vmem>>, %arg3: memref<256x8xbf16, #tpu.memory_space<vmem>>, %arg4: memref<16x96xbf16, #tpu.memory_space<vmem>>, %arg5: memref<8x32xbf16, #tpu.memory_space<vmem>>, %arg6: memref<32x32xf32, #tpu.memory_space<vmem>>, %arg7: memref<32x32xf32, #tpu.memory_space<vmem>>, %arg8: memref<32x32xf32, #tpu.memory_space<vmem>>, %arg9: memref<8x32xf32, #tpu.memory_space<vmem>>, %arg10: memref<8x32xf32, #tpu.memory_space<vmem>>, %arg11: memref<8x128xf32, #tpu.memory_space<vmem>>, %arg12: memref<8x128xf32, #tpu.memory_space<vmem>>, %arg13: memref<8x1024xf32, #tpu.memory_space<vmem>>, %arg14: memref<1x8x256xf32, #tpu.memory_space<vmem>>, %arg15: memref<2x1024x32xbf16, #tpu.memory_space<vmem>>, %arg16: memref<1024x32xbf16, #tpu.memory_space<vmem>>, %arg17: memref<1024x32xf32, #tpu.memory_space<vmem>>) attributes {dimension_semantics = [#tpu.dimension_semantics<arbitrary>], iteration_bounds = array<i64: 3>, scalar_prefetch = 0 : i64, scratch_operands = 3 : i64, tpu.core_type = #tpu.core_type<tc>, window_params = [{pipeline_mode = #tpu.pipeline_mode<synchronous>, transform_indices = @transform_0, window_bounds = array<i64: 1024, 16>}, {transform_indices = @transform_1, window_bounds = array<i64: 2, 256>}, {transform_indices = @transform_2, window_bounds = array<i64: 256, 8>}, {pipeline_mode = #tpu.pipeline_mode<synchronous>, transform_indices = @transform_3, window_bounds = array<i64: 16, 96>}, {pipeline_mode = #tpu.pipeline_mode<synchronous>, transform_indices = @transform_4, window_bounds = array<i64: 8, 32>}, {pipeline_mode = #tpu.pipeline_mode<synchronous>, transform_indices = @transform_5, window_bounds = array<i64: 32, 32>}, {pipeline_mode = #tpu.pipeline_mode<synchronous>, transform_indices = @transform_6, window_bounds = array<i64: 32, 32>}, {pipeline_mode = #tpu.pipeline_mode<synchronous>, transform_indices = @transform_7, window_bounds = array<i64: 32, 32>}, {pipeline_mode = #tpu.pipeline_mode<synchronous>, transform_indices = @transform_8, window_bounds = array<i64: 8, 32>}, {pipeline_mode = #tpu.pipeline_mode<synchronous>, transform_indices = @transform_9, window_bounds = array<i64: 8, 32>}, {pipeline_mode = #tpu.pipeline_mode<synchronous>, transform_indices = @transform_10, window_bounds = array<i64: 8, 128>}, {pipeline_mode = #tpu.pipeline_mode<synchronous>, transform_indices = @transform_11, window_bounds = array<i64: 8, 128>}, {pipeline_mode = #tpu.pipeline_mode<synchronous>, transform_indices = @transform_12, window_bounds = array<i64: 8, 1024>}, {transform_indices = @transform_13, window_bounds = array<i64: 1, 8, 256>}]} {
    %c0_i32 = arith.constant 0 : i32
    %0 = arith.cmpi eq, %arg0, %c0_i32 : i32
    %1 = arith.extui %0 : i1 to i32
    %c0_i32_0 = arith.constant 0 : i32
    %2 = arith.cmpi ne, %1, %c0_i32_0 : i32
    scf.if %2 {
      %c0_31 = arith.constant 0 : index
      %c0_32 = arith.constant 0 : index
      %41 = vector.load %arg1[%c0_31, %c0_32] : memref<1024x16xbf16, #tpu.memory_space<vmem>>, vector<1024x16xbf16>
      %c0_33 = arith.constant 0 : index
      %c0_34 = arith.constant 0 : index
      %42 = vector.load %arg4[%c0_33, %c0_34] : memref<16x96xbf16, #tpu.memory_space<vmem>>, vector<16x96xbf16>
      %cst_35 = arith.constant dense<0.000000e+00> : vector<1024x96xf32>
      %43 = tpu.matmul %41, %42, %cst_35 {dimension_numbers = #tpu.dot_dimension_numbers<[1], [0], [0], [1], [0, 0, 1, 1], [], []>} : vector<1024x16xbf16>, vector<16x96xbf16>, vector<1024x96xf32> -> vector<1024x96xf32>
      %44 = vector.extract_strided_slice %43 {offsets = [0, 0], sizes = [512, 32], strides = [1, 1]} : vector<1024x96xf32> to vector<512x32xf32>
      %45 = arith.truncf %44 : vector<512x32xf32> to vector<512x32xbf16>
      %c0_36 = arith.constant 0 : index
      %c0_37 = arith.constant 0 : index
      %c0_38 = arith.constant 0 : index
      %46 = vector.load %arg15[%c0_36, %c0_37, %c0_38] : memref<2x1024x32xbf16, #tpu.memory_space<vmem>>, vector<1x512x32xbf16>
      %47 = vector.shape_cast %46 : vector<1x512x32xbf16> to vector<512x32xbf16>
      %48 = vector.shape_cast %45 : vector<512x32xbf16> to vector<1x512x32xbf16>
      tpu.vector_store %arg15[%c0_36, %c0_37, %c0_38], %48 {strides = array<i32>} : memref<2x1024x32xbf16, #tpu.memory_space<vmem>>, vector<1x512x32xbf16>,
      %49 = vector.extract_strided_slice %43 {offsets = [0, 32], sizes = [512, 32], strides = [1, 1]} : vector<1024x96xf32> to vector<512x32xf32>
      %50 = arith.truncf %49 : vector<512x32xf32> to vector<512x32xbf16>
      %c0_39 = arith.constant 0 : index
      %c512 = arith.constant 512 : index
      %c0_40 = arith.constant 0 : index
      %51 = vector.load %arg15[%c0_39, %c512, %c0_40] : memref<2x1024x32xbf16, #tpu.memory_space<vmem>>, vector<1x512x32xbf16>
      %52 = vector.shape_cast %51 : vector<1x512x32xbf16> to vector<512x32xbf16>
      %53 = vector.shape_cast %50 : vector<512x32xbf16> to vector<1x512x32xbf16>
      tpu.vector_store %arg15[%c0_39, %c512, %c0_40], %53 {strides = array<i32>} : memref<2x1024x32xbf16, #tpu.memory_space<vmem>>, vector<1x512x32xbf16>,
      %54 = vector.extract_strided_slice %43 {offsets = [512, 0], sizes = [512, 32], strides = [1, 1]} : vector<1024x96xf32> to vector<512x32xf32>
      %55 = arith.truncf %54 : vector<512x32xf32> to vector<512x32xbf16>
      %c1_41 = arith.constant 1 : index
      %c0_42 = arith.constant 0 : index
      %c0_43 = arith.constant 0 : index
      %56 = vector.load %arg15[%c1_41, %c0_42, %c0_43] : memref<2x1024x32xbf16, #tpu.memory_space<vmem>>, vector<1x512x32xbf16>
      %57 = vector.shape_cast %56 : vector<1x512x32xbf16> to vector<512x32xbf16>
      %58 = vector.shape_cast %55 : vector<512x32xbf16> to vector<1x512x32xbf16>
      tpu.vector_store %arg15[%c1_41, %c0_42, %c0_43], %58 {strides = array<i32>} : memref<2x1024x32xbf16, #tpu.memory_space<vmem>>, vector<1x512x32xbf16>,
      %59 = vector.extract_strided_slice %43 {offsets = [512, 32], sizes = [512, 32], strides = [1, 1]} : vector<1024x96xf32> to vector<512x32xf32>
      %60 = arith.truncf %59 : vector<512x32xf32> to vector<512x32xbf16>
      %c1_44 = arith.constant 1 : index
      %c512_45 = arith.constant 512 : index
      %c0_46 = arith.constant 0 : index
      %61 = vector.load %arg15[%c1_44, %c512_45, %c0_46] : memref<2x1024x32xbf16, #tpu.memory_space<vmem>>, vector<1x512x32xbf16>
      %62 = vector.shape_cast %61 : vector<1x512x32xbf16> to vector<512x32xbf16>
      %63 = vector.shape_cast %60 : vector<512x32xbf16> to vector<1x512x32xbf16>
      tpu.vector_store %arg15[%c1_44, %c512_45, %c0_46], %63 {strides = array<i32>} : memref<2x1024x32xbf16, #tpu.memory_space<vmem>>, vector<1x512x32xbf16>,
      %64 = vector.extract_strided_slice %43 {offsets = [0, 64], sizes = [1024, 32], strides = [1, 1]} : vector<1024x96xf32> to vector<1024x32xf32>
      %65 = arith.truncf %64 : vector<1024x32xf32> to vector<1024x32xbf16>
      %c0_47 = arith.constant 0 : index
      %c0_48 = arith.constant 0 : index
      %66 = vector.load %arg16[%c0_47, %c0_48] : memref<1024x32xbf16, #tpu.memory_space<vmem>>, vector<1024x32xbf16>
      tpu.vector_store %arg16[%c0_47, %c0_48], %65 {strides = array<i32>} : memref<1024x32xbf16, #tpu.memory_space<vmem>>, vector<1024x32xbf16>,
      %cst_49 = arith.constant 0.000000e+00 : f32
      %67 = vector.broadcast %cst_49 : f32 to vector<1024x32xf32>
      %c0_50 = arith.constant 0 : index
      %c0_51 = arith.constant 0 : index
      %68 = vector.load %arg17[%c0_50, %c0_51] : memref<1024x32xf32, #tpu.memory_space<vmem>>, vector<1024x32xf32>
      tpu.vector_store %arg17[%c0_50, %c0_51], %67 {strides = array<i32>} : memref<1024x32xf32, #tpu.memory_space<vmem>>, vector<1024x32xf32>,
    } else {
    }
    %c0 = arith.constant 0 : index
    %c0_1 = arith.constant 0 : index
    %3 = vector.load %arg11[%c0, %c0_1] : memref<8x128xf32, #tpu.memory_space<vmem>>, vector<8x128xf32>
    %c0_2 = arith.constant 0 : index
    %c0_3 = arith.constant 0 : index
    %4 = vector.load %arg12[%c0_2, %c0_3] : memref<8x128xf32, #tpu.memory_space<vmem>>, vector<8x128xf32>
    %5 = vector.extract_strided_slice %3 {offsets = [0, 0], sizes = [1, 32], strides = [1, 1]} : vector<8x128xf32> to vector<1x32xf32>
    %6 = vector.extract_strided_slice %3 {offsets = [1, 0], sizes = [1, 32], strides = [1, 1]} : vector<8x128xf32> to vector<1x32xf32>
    %c0_4 = arith.constant 0 : index
    %c0_5 = arith.constant 0 : index
    %7 = vector.load %arg2[%c0_4, %c0_5] : memref<2x256xi32, #tpu.memory_space<vmem>>, vector<1x256xi32>
    %8 = vector.shape_cast %7 : vector<1x256xi32> to vector<256xi32>
    %c1 = arith.constant 1 : index
    %c0_6 = arith.constant 0 : index
    %9 = vector.load %arg2[%c1, %c0_6] : memref<2x256xi32, #tpu.memory_space<vmem>>, vector<1x256xi32>
    %10 = vector.shape_cast %9 : vector<1x256xi32> to vector<256xi32>
    %cst = arith.constant 0.000000e+00 : f32
    %11 = vector.broadcast %cst : f32 to vector<256x32xf32>
    %c0_i32_7 = arith.constant 0 : i32
    %c2_i32 = arith.constant 2 : i32
    %12 = arith.addi %c0_i32_7, %c2_i32 : i32
    %c1_i32 = arith.constant 1 : i32
    %13 = scf.for %arg18 = %c0_i32_7 to %12 step %c1_i32 iter_args(%arg19 = %11) -> (vector<256x32xf32>)  : i32 {
      %c512_i32 = arith.constant 512 : i32
      %41 = arith.muli %arg18, %c512_i32 : i32
      %42 = tpu.iota {dimensions = array<i32: 1>} : vector<256x1024xi32>
      %c512_i32_31 = arith.constant 512 : i32
      %43 = vector.broadcast %c512_i32_31 : i32 to vector<256x1024xi32>
      %44 = arith.cmpi slt, %42, %43 : vector<256x1024xi32>
      %c512_i32_32 = arith.constant 512 : i32
      %45 = vector.broadcast %c512_i32_32 : i32 to vector<256x1024xi32>
      %46 = arith.subi %42, %45 : vector<256x1024xi32>
      %47 = arith.select %44, %42, %46 : vector<256x1024xi1>, vector<256x1024xi32>
      %48 = vector.broadcast %41 : i32 to vector<256x1024xi32>
      %49 = arith.addi %47, %48 : vector<256x1024xi32>
      %c512_i32_33 = arith.constant 512 : i32
      %50 = vector.broadcast %c512_i32_33 : i32 to vector<256x1024xi32>
      %51 = arith.cmpi slt, %42, %50 : vector<256x1024xi32>
      %52 = vector.shape_cast %8 : vector<256xi32> to vector<256x1xi32>
      %53 = vector.shape_cast %10 : vector<256xi32> to vector<256x1xi32>
      %54 = vector.shape_cast %52 : vector<256x1xi32> to vector<256x1xi32>
      %55 = vector.broadcast %54 : vector<256x1xi32> to vector<256x1024xi32>
      %56 = vector.shape_cast %53 : vector<256x1xi32> to vector<256x1xi32>
      %57 = vector.broadcast %56 : vector<256x1xi32> to vector<256x1024xi32>
      %58 = arith.select %51, %55, %57 : vector<256x1024xi1>, vector<256x1024xi32>
      %59 = arith.cmpi eq, %49, %58 : vector<256x1024xi32>
      %60 = arith.extui %59 : vector<256x1024xi1> to vector<256x1024xi32>
      %61 = arith.sitofp %60 : vector<256x1024xi32> to vector<256x1024xf32>
      %62 = arith.truncf %61 : vector<256x1024xf32> to vector<256x1024xbf16>
      %63 = arith.index_cast %arg18 : i32 to index
      %c0_34 = arith.constant 0 : index
      %c0_35 = arith.constant 0 : index
      %64 = vector.load %arg15[%63, %c0_34, %c0_35] : memref<2x1024x32xbf16, #tpu.memory_space<vmem>>, vector<1x1024x32xbf16>
      %65 = vector.shape_cast %64 : vector<1x1024x32xbf16> to vector<1024x32xbf16>
      %cst_36 = arith.constant dense<0.000000e+00> : vector<256x32xf32>
      %66 = tpu.matmul %62, %65, %cst_36 {dimension_numbers = #tpu.dot_dimension_numbers<[1], [0], [0], [1], [0, 0, 1, 1], [], []>} : vector<256x1024xbf16>, vector<1024x32xbf16>, vector<256x32xf32> -> vector<256x32xf32>
      %67 = arith.addf %arg19, %66 : vector<256x32xf32>
      scf.yield %67 : vector<256x32xf32>
    }
    %c2_i32_8 = arith.constant 2 : i32
    %c0_9 = arith.constant 0 : index
    %c0_10 = arith.constant 0 : index
    %14 = vector.load %arg3[%c0_9, %c0_10] : memref<256x8xbf16, #tpu.memory_space<vmem>>, vector<256x8xbf16>
    %c0_11 = arith.constant 0 : index
    %c0_12 = arith.constant 0 : index
    %15 = vector.load %arg5[%c0_11, %c0_12] : memref<8x32xbf16, #tpu.memory_space<vmem>>, vector<8x32xbf16>
    %cst_13 = arith.constant dense<0.000000e+00> : vector<256x32xf32>
    %16 = tpu.matmul %14, %15, %cst_13 {dimension_numbers = #tpu.dot_dimension_numbers<[1], [0], [0], [1], [0, 0, 1, 1], [], []>} : vector<256x8xbf16>, vector<8x32xbf16>, vector<256x32xf32> -> vector<256x32xf32>
    %17 = arith.addf %13, %16 : vector<256x32xf32>
    %18 = vector.broadcast %5 : vector<1x32xf32> to vector<256x32xf32>
    %19 = arith.addf %17, %18 : vector<256x32xf32>
    %cst_14 = arith.constant 0.000000e+00 : f32
    %20 = vector.broadcast %cst_14 : f32 to vector<256x32xf32>
    %21 = arith.maximumf %19, %20 : vector<256x32xf32>
    %c0_15 = arith.constant 0 : index
    %c0_16 = arith.constant 0 : index
    %22 = vector.load %arg6[%c0_15, %c0_16] : memref<32x32xf32, #tpu.memory_space<vmem>>, vector<32x32xf32>
    %cst_17 = arith.constant dense<0.000000e+00> : vector<256x32xf32>
    %23 = tpu.matmul %21, %22, %cst_17 {dimension_numbers = #tpu.dot_dimension_numbers<[1], [0], [0], [1], [0, 0, 1, 1], [], []>} : vector<256x32xf32>, vector<32x32xf32>, vector<256x32xf32> -> vector<256x32xf32>
    %24 = vector.broadcast %6 : vector<1x32xf32> to vector<256x32xf32>
    %25 = arith.addf %23, %24 : vector<256x32xf32>
    %cst_18 = arith.constant 0.000000e+00 : f32
    %26 = vector.broadcast %cst_18 : f32 to vector<256x32xf32>
    %27 = arith.maximumf %25, %26 : vector<256x32xf32>
    %c0_19 = arith.constant 0 : index
    %c0_20 = arith.constant 0 : index
    %28 = vector.load %arg10[%c0_19, %c0_20] : memref<8x32xf32, #tpu.memory_space<vmem>>, vector<8x32xf32>
    %cst_21 = arith.constant dense<0.000000e+00> : vector<8x256xf32>
    %29 = tpu.matmul %28, %27, %cst_21 {dimension_numbers = #tpu.dot_dimension_numbers<[1], [1], [0], [0], [0, 0, 1, 0], [], []>} : vector<8x32xf32>, vector<256x32xf32>, vector<8x256xf32> -> vector<8x256xf32>
    %30 = vector.extract_strided_slice %4 {offsets = [0, 0], sizes = [8, 1], strides = [1, 1]} : vector<8x128xf32> to vector<8x1xf32>
    %31 = vector.broadcast %30 : vector<8x1xf32> to vector<8x256xf32>
    %32 = arith.addf %29, %31 : vector<8x256xf32>
    %c0_22 = arith.constant 0 : index
    %c0_23 = arith.constant 0 : index
    %c0_24 = arith.constant 0 : index
    %33 = vector.load %arg14[%c0_22, %c0_23, %c0_24] : memref<1x8x256xf32, #tpu.memory_space<vmem>>, vector<1x8x256xf32>
    %34 = vector.shape_cast %33 : vector<1x8x256xf32> to vector<8x256xf32>
    %35 = vector.shape_cast %32 : vector<8x256xf32> to vector<1x8x256xf32>
    tpu.vector_store %arg14[%c0_22, %c0_23, %c0_24], %35 {strides = array<i32>} : memref<1x8x256xf32, #tpu.memory_space<vmem>>, vector<1x8x256xf32>,
    %36 = arith.truncf %27 : vector<256x32xf32> to vector<256x32xbf16>
    %c0_i32_25 = arith.constant 0 : i32
    %c2_i32_26 = arith.constant 2 : i32
    %37 = arith.addi %c0_i32_25, %c2_i32_26 : i32
    %c1_i32_27 = arith.constant 1 : i32
    scf.for %arg18 = %c0_i32_25 to %37 step %c1_i32_27  : i32 {
      %c512_i32 = arith.constant 512 : i32
      %41 = arith.muli %arg18, %c512_i32 : i32
      %42 = tpu.iota {dimensions = array<i32: 1>} : vector<256x512xi32>
      %43 = vector.broadcast %41 : i32 to vector<256x512xi32>
      %44 = arith.addi %42, %43 : vector<256x512xi32>
      %45 = vector.shape_cast %10 : vector<256xi32> to vector<256x1xi32>
      %46 = vector.broadcast %45 : vector<256x1xi32> to vector<256x512xi32>
      %47 = arith.cmpi eq, %44, %46 : vector<256x512xi32>
      %48 = arith.extui %47 : vector<256x512xi1> to vector<256x512xi32>
      %49 = arith.sitofp %48 : vector<256x512xi32> to vector<256x512xf32>
      %50 = arith.truncf %49 : vector<256x512xf32> to vector<256x512xbf16>
      %cst_31 = arith.constant dense<0.000000e+00> : vector<512x32xf32>
      %51 = tpu.matmul %50, %36, %cst_31 {dimension_numbers = #tpu.dot_dimension_numbers<[0], [0], [1], [1], [0, 1, 1, 1], [], []>} : vector<256x512xbf16>, vector<256x32xbf16>, vector<512x32xf32> -> vector<512x32xf32>
      %c512_i32_32 = arith.constant 512 : i32
      %52 = arith.muli %arg18, %c512_i32_32 : i32
      %53 = tpu.assume_multiple %52, 512 : i32
      %54 = arith.index_cast %53 : i32 to index
      %c0_33 = arith.constant 0 : index
      %55 = vector.load %arg17[%54, %c0_33] : memref<1024x32xf32, #tpu.memory_space<vmem>>, vector<512x32xf32>
      %56 = arith.addf %55, %51 : vector<512x32xf32>
      %57 = arith.index_cast %53 : i32 to index
      %c0_34 = arith.constant 0 : index
      %58 = vector.load %arg17[%57, %c0_34] : memref<1024x32xf32, #tpu.memory_space<vmem>>, vector<512x32xf32>
      tpu.vector_store %arg17[%57, %c0_34], %56 {strides = array<i32>} : memref<1024x32xf32, #tpu.memory_space<vmem>>, vector<512x32xf32>,
    }
    %c2_i32_28 = arith.constant 2 : i32
    %c2_i32_29 = arith.constant 2 : i32
    %38 = arith.cmpi eq, %arg0, %c2_i32_29 : i32
    %39 = arith.extui %38 : i1 to i32
    %c0_i32_30 = arith.constant 0 : i32
    %40 = arith.cmpi ne, %39, %c0_i32_30 : i32
    scf.if %40 {
      %41 = vector.extract_strided_slice %3 {offsets = [2, 0], sizes = [1, 32], strides = [1, 1]} : vector<8x128xf32> to vector<1x32xf32>
      %42 = vector.extract_strided_slice %3 {offsets = [3, 0], sizes = [1, 32], strides = [1, 1]} : vector<8x128xf32> to vector<1x32xf32>
      %c0_31 = arith.constant 0 : index
      %c0_32 = arith.constant 0 : index
      %43 = vector.load %arg16[%c0_31, %c0_32] : memref<1024x32xbf16, #tpu.memory_space<vmem>>, vector<1024x32xbf16>
      %44 = arith.extf %43 : vector<1024x32xbf16> to vector<1024x32xf32>
      %c0_33 = arith.constant 0 : index
      %c0_34 = arith.constant 0 : index
      %45 = vector.load %arg17[%c0_33, %c0_34] : memref<1024x32xf32, #tpu.memory_space<vmem>>, vector<1024x32xf32>
      %c0_35 = arith.constant 0 : index
      %c0_36 = arith.constant 0 : index
      %46 = vector.load %arg7[%c0_35, %c0_36] : memref<32x32xf32, #tpu.memory_space<vmem>>, vector<32x32xf32>
      %cst_37 = arith.constant dense<0.000000e+00> : vector<1024x32xf32>
      %47 = tpu.matmul %45, %46, %cst_37 {dimension_numbers = #tpu.dot_dimension_numbers<[1], [0], [0], [1], [0, 0, 1, 1], [], []>} : vector<1024x32xf32>, vector<32x32xf32>, vector<1024x32xf32> -> vector<1024x32xf32>
      %48 = arith.addf %44, %47 : vector<1024x32xf32>
      %49 = vector.broadcast %41 : vector<1x32xf32> to vector<1024x32xf32>
      %50 = arith.addf %48, %49 : vector<1024x32xf32>
      %cst_38 = arith.constant 0.000000e+00 : f32
      %51 = vector.broadcast %cst_38 : f32 to vector<1024x32xf32>
      %52 = arith.maximumf %50, %51 : vector<1024x32xf32>
      %c0_39 = arith.constant 0 : index
      %c0_40 = arith.constant 0 : index
      %53 = vector.load %arg8[%c0_39, %c0_40] : memref<32x32xf32, #tpu.memory_space<vmem>>, vector<32x32xf32>
      %cst_41 = arith.constant dense<0.000000e+00> : vector<1024x32xf32>
      %54 = tpu.matmul %52, %53, %cst_41 {dimension_numbers = #tpu.dot_dimension_numbers<[1], [0], [0], [1], [0, 0, 1, 1], [], []>} : vector<1024x32xf32>, vector<32x32xf32>, vector<1024x32xf32> -> vector<1024x32xf32>
      %55 = vector.broadcast %42 : vector<1x32xf32> to vector<1024x32xf32>
      %56 = arith.addf %54, %55 : vector<1024x32xf32>
      %cst_42 = arith.constant 0.000000e+00 : f32
      %57 = vector.broadcast %cst_42 : f32 to vector<1024x32xf32>
      %58 = arith.maximumf %56, %57 : vector<1024x32xf32>
      %c0_43 = arith.constant 0 : index
      %c0_44 = arith.constant 0 : index
      %59 = vector.load %arg9[%c0_43, %c0_44] : memref<8x32xf32, #tpu.memory_space<vmem>>, vector<8x32xf32>
      %cst_45 = arith.constant dense<0.000000e+00> : vector<8x1024xf32>
      %60 = tpu.matmul %59, %58, %cst_45 {dimension_numbers = #tpu.dot_dimension_numbers<[1], [1], [0], [0], [0, 0, 1, 0], [], []>} : vector<8x32xf32>, vector<1024x32xf32>, vector<8x1024xf32> -> vector<8x1024xf32>
      %61 = vector.extract_strided_slice %4 {offsets = [0, 1], sizes = [8, 1], strides = [1, 1]} : vector<8x128xf32> to vector<8x1xf32>
      %62 = vector.broadcast %61 : vector<8x1xf32> to vector<8x1024xf32>
      %63 = arith.addf %60, %62 : vector<8x1024xf32>
      %c0_46 = arith.constant 0 : index
      %c0_47 = arith.constant 0 : index
      %64 = vector.load %arg13[%c0_46, %c0_47] : memref<8x1024xf32, #tpu.memory_space<vmem>>, vector<8x1024xf32>
      tpu.vector_store %arg13[%c0_46, %c0_47], %63 {strides = array<i32>} : memref<8x1024xf32, #tpu.memory_space<vmem>>, vector<8x1024xf32>,
    } else {
    }
    return
  }
  func.func @transform_0(%arg0: i32) -> (i32, i32) {
    %c0_i32 = arith.constant 0 : i32
    %c0_i32_0 = arith.constant 0 : i32
    %c0_i32_1 = arith.constant 0 : i32
    return %c0_i32, %c0_i32_0 : i32, i32
  }
  func.func @transform_1(%arg0: i32) -> (i32, i32) {
    %c0_i32 = arith.constant 0 : i32
    %c0_i32_0 = arith.constant 0 : i32
    return %c0_i32, %arg0 : i32, i32
  }
  func.func @transform_2(%arg0: i32) -> (i32, i32) {
    %c0_i32 = arith.constant 0 : i32
    %c0_i32_0 = arith.constant 0 : i32
    return %arg0, %c0_i32 : i32, i32
  }
  func.func @transform_3(%arg0: i32) -> (i32, i32) {
    %c0_i32 = arith.constant 0 : i32
    %c0_i32_0 = arith.constant 0 : i32
    %c0_i32_1 = arith.constant 0 : i32
    return %c0_i32, %c0_i32_0 : i32, i32
  }
  func.func @transform_4(%arg0: i32) -> (i32, i32) {
    %c0_i32 = arith.constant 0 : i32
    %c0_i32_0 = arith.constant 0 : i32
    %c0_i32_1 = arith.constant 0 : i32
    return %c0_i32, %c0_i32_0 : i32, i32
  }
  func.func @transform_5(%arg0: i32) -> (i32, i32) {
    %c0_i32 = arith.constant 0 : i32
    %c0_i32_0 = arith.constant 0 : i32
    %c0_i32_1 = arith.constant 0 : i32
    return %c0_i32, %c0_i32_0 : i32, i32
  }
  func.func @transform_6(%arg0: i32) -> (i32, i32) {
    %c0_i32 = arith.constant 0 : i32
    %c0_i32_0 = arith.constant 0 : i32
    %c0_i32_1 = arith.constant 0 : i32
    return %c0_i32, %c0_i32_0 : i32, i32
  }
  func.func @transform_7(%arg0: i32) -> (i32, i32) {
    %c0_i32 = arith.constant 0 : i32
    %c0_i32_0 = arith.constant 0 : i32
    %c0_i32_1 = arith.constant 0 : i32
    return %c0_i32, %c0_i32_0 : i32, i32
  }
  func.func @transform_8(%arg0: i32) -> (i32, i32) {
    %c0_i32 = arith.constant 0 : i32
    %c0_i32_0 = arith.constant 0 : i32
    %c0_i32_1 = arith.constant 0 : i32
    return %c0_i32, %c0_i32_0 : i32, i32
  }
  func.func @transform_9(%arg0: i32) -> (i32, i32) {
    %c0_i32 = arith.constant 0 : i32
    %c0_i32_0 = arith.constant 0 : i32
    %c0_i32_1 = arith.constant 0 : i32
    return %c0_i32, %c0_i32_0 : i32, i32
  }
  func.func @transform_10(%arg0: i32) -> (i32, i32) {
    %c0_i32 = arith.constant 0 : i32
    %c0_i32_0 = arith.constant 0 : i32
    %c0_i32_1 = arith.constant 0 : i32
    return %c0_i32, %c0_i32_0 : i32, i32
  }
  func.func @transform_11(%arg0: i32) -> (i32, i32) {
    %c0_i32 = arith.constant 0 : i32
    %c0_i32_0 = arith.constant 0 : i32
    %c0_i32_1 = arith.constant 0 : i32
    return %c0_i32, %c0_i32_0 : i32, i32
  }
  func.func @transform_12(%arg0: i32) -> (i32, i32) {
    %c0_i32 = arith.constant 0 : i32
    %c0_i32_0 = arith.constant 0 : i32
    %c0_i32_1 = arith.constant 0 : i32
    return %c0_i32, %c0_i32_0 : i32, i32
  }
  func.func @transform_13(%arg0: i32) -> (i32, i32, i32) {
    %c0_i32 = arith.constant 0 : i32
    %c0_i32_0 = arith.constant 0 : i32
    %c0_i32_1 = arith.constant 0 : i32
    return %arg0, %c0_i32, %c0_i32_0 : i32, i32, i32
  }
}

</mosaic_0001>

<llo_original>
// kernel: tpu_custom_call.1
$region0: #{tpu_custom_call.1}
  #allocation0 [shape = 'u32[]', space=smem, size = 0x4, offset = 0x4, fixed_abs, tag = 'smem constant byte address 0x4 - core index']
  #allocation1 [shape = 'u32[144,128]{1,0:T(1,128)}', space=vmem, size = 0x12000, scoped, tag = 'internal scratch']
  #allocation2 [shape = 'bf16[2,1024,32]{2,1,0:T(16,128)(2,1)}', space=vmem, size = 0x80000, scoped, tag = 'scratch operand']
  #allocation3 [shape = 'bf16[1024,32]{1,0:T(16,128)(2,1)}', space=vmem, size = 0x40000, scoped, tag = 'scratch operand']
  #allocation4 [shape = 'f32[1024,32]{1,0:T(8,128)}', space=vmem, size = 0x80000, scoped, tag = 'scratch operand']
  %s0 = inlined_call_operand.vmem [shape: bf16[1024,16], index: 0, kind: input, shape index: {}]
  %s1 = inlined_call_operand.vmem [shape: s32[2,768], index: 1, kind: input, shape index: {}]
  %s2 = inlined_call_operand.vmem [shape: bf16[768,8], index: 2, kind: input, shape index: {}]
  %s3 = inlined_call_operand.vmem [shape: bf16[16,96], index: 3, kind: input, shape index: {}]
  %s4 = inlined_call_operand.vmem [shape: bf16[8,32], index: 4, kind: input, shape index: {}]
  %s5 = inlined_call_operand.vmem [shape: f32[32,32], index: 5, kind: input, shape index: {}]
  %s6 = inlined_call_operand.vmem [shape: f32[32,32], index: 6, kind: input, shape index: {}]
  %s7 = inlined_call_operand.vmem [shape: f32[32,32], index: 7, kind: input, shape index: {}]
  %s8 = inlined_call_operand.vmem [shape: f32[8,32], index: 8, kind: input, shape index: {}]
  %s9 = inlined_call_operand.vmem [shape: f32[8,32], index: 9, kind: input, shape index: {}]
  %s10 = inlined_call_operand.vmem [shape: f32[8,128], index: 10, kind: input, shape index: {}]
  %s11 = inlined_call_operand.vmem [shape: f32[8,128], index: 11, kind: input, shape index: {}]
  %s12 = inlined_call_operand.hbm [shape: f32[8,1024], index: 12, kind: output, shape index: {0}]
  %s13 = inlined_call_operand.hbm [shape: f32[3,8,256], index: 13, kind: output, shape index: {1}]
  %14 = xla_tuple %s12, %s13
  %s15 = sld [smem:[#allocation0]]
  $region111: #{tpu_custom_call.1} parent=0
    _
  %s17 = ssub.s32 1, %s15
  %s18 = scalar_select 0, %s17, %s15
  $region1: #{tpu_custom_call.1} parent=0
    #allocation5 [shape = 'u8[32768]{0}', space=vmem, size = 0x8000, scoped, tag = 'output window, operand 0, single buffered']
    #allocation6 [shape = 's32[2]{0}', space=sflag, size = 0x8, scoped, tag = 'scoped memory for tpu_custom_call.1']
    #allocation7 [shape = 'u8[16384]{0}', space=vmem, size = 0x4000, scoped, tag = 'output window, operand 1']
    #allocation8 [shape = 's32[2]{0}', space=sflag, size = 0x8, scoped, tag = 'scoped memory for tpu_custom_call.1']
    %19 = vsyncpa [#allocation6], 0
    %20 = vsyncpa [#allocation8], 0
    %s21 = scalar_lea.sflag [#allocation8], 1
    %22 = vsyncpa %s21, 0
    loop: start=0, step=1, limit=5
    $region2: #{tpu_custom_call.1} parent=1 // loop_pre_header
      _
    $region3: #{tpu_custom_call.1} parent=1 // loop_header
      %s24 = sphi 0, %s28
      %p25 = scmp.ge.s32.totalorder %s24, 5
      %s32 = sphi 0, %s32
      %s34 = sphi 0, %s32
      %s35 = sphi 0, %s34
      %s49 = sphi 0, %s35
      %s55 = sphi 0, %s57
      %s58 = sphi 0, %s55
      %s59 = sphi 0, %s58
      %s75 = sphi 0, %s59
      %s81 = sphi 0, %s83
      %s84 = sphi 0, %s81
      %s85 = sphi 0, %s84
      %s101 = sphi 0, %s85
      %s105 = sphi 0, %s105
      %s107 = sphi 0, %s105
      %s108 = sphi 0, %s107
      %s122 = sphi 0, %s108
      %s126 = sphi 0, %s126
      %s128 = sphi 0, %s126
      %s129 = sphi 0, %s128
      %s143 = sphi 0, %s129
      %s147 = sphi 0, %s147
      %s149 = sphi 0, %s147
      %s150 = sphi 0, %s149
      %s164 = sphi 0, %s150
      %s168 = sphi 0, %s168
      %s170 = sphi 0, %s168
      %s171 = sphi 0, %s170
      %s185 = sphi 0, %s171
      %s189 = sphi 0, %s189
      %s191 = sphi 0, %s189
      %s192 = sphi 0, %s191
      %s206 = sphi 0, %s192
      %s210 = sphi 0, %s210
      %s212 = sphi 0, %s210
      %s213 = sphi 0, %s212
      %s227 = sphi 0, %s213
      %s231 = sphi 0, %s231
      %s233 = sphi 0, %s231
      %s234 = sphi 0, %s233
      %s248 = sphi 0, %s234
      %s252 = sphi 0, %s252
      %s254 = sphi 0, %s252
      %s255 = sphi 0, %s254
      %s269 = sphi 0, %s255
      %s273 = sphi 0, %s273
      %s275 = sphi 0, %s273
      %s276 = sphi 0, %s275
      %s290 = sphi 0, %s276
      %s294 = sphi 0, %s294
      %s296 = sphi 0, %s294
      %s297 = sphi 0, %s296
      %s311 = sphi 0, %s297
      %s317 = sphi 0, %s319
      %s320 = sphi 0, %s317
      %s321 = sphi 0, %s320
      %s337 = sphi 0, %s321
    $region4: #{tpu_custom_call.1} parent=1 // loop_header_branch
      %27 = sbr.rel (%p25) target = $region8
    $region5: #{tpu_custom_call.1} parent=1 // loop_body
      %s29 = ssub.s32 %s24, 1
      %s30 = ssub.s32 %s24, 2
      %s31 = sadd.s32 %s24, 1
      %s33 = sadd.s32 %s32, 1
      %p36 = scmp.eq.s32.totalorder %s24, 2
      %p37 = scmp.ne.s32.totalorder %s32, %s34
      %p38 = scmp.eq.s32.totalorder %s24, 0
      %p39 = por %p37, %p38
      %p40 = scmp.ne.s32.totalorder %s32, %s34
      %p41 = scmp.eq.s32.totalorder %s29, 2
      %p42 = por %p40, %p41
      %p43 = scmp.ne.s32.totalorder %s34, %s35
      %p44 = scmp.eq.s32.totalorder %s29, 0
      %p45 = por %p43, %p44
      %p46 = scmp.ne.s32.totalorder %s34, %s35
      %p47 = scmp.eq.s32.totalorder %s30, 2
      %p48 = por %p46, %p47
      %p50 = scmp.ne.s32.totalorder %s35, %s49
      %p51 = scmp.eq.s32.totalorder %s30, 0
      %p52 = por %p50, %p51
      %s53 = ssub.s32 %s24, %s31
      %p54 = scmp.eq.s32.totalorder %s53, 0
      %s56 = sadd.s32 %s55, 1
      %s57 = scalar_select %p54, %s55, %s56
      %p60 = pneg %p54
      %p61 = scmp.eq.s32.totalorder %s24, 2
      %p62 = por %p60, %p61
      %p63 = scmp.ne.s32.totalorder %s55, %s58
      %p64 = scmp.eq.s32.totalorder %s24, 0
      %p65 = por %p63, %p64
      %p66 = scmp.ne.s32.totalorder %s55, %s58
      %p67 = scmp.eq.s32.totalorder %s29, 2
      %p68 = por %p66, %p67
      %p69 = scmp.ne.s32.totalorder %s58, %s59
      %p70 = scmp.eq.s32.totalorder %s29, 0
      %p71 = por %p69, %p70
      %p72 = scmp.ne.s32.totalorder %s58, %s59
      %p73 = scmp.eq.s32.totalorder %s30, 2
      %p74 = por %p72, %p73
      %p76 = scmp.ne.s32.totalorder %s59, %s75
      %p77 = scmp.eq.s32.totalorder %s30, 0
      %p78 = por %p76, %p77
      %s79 = ssub.s32 %s24, %s31
      %p80 = scmp.eq.s32.totalorder %s79, 0
      %s82 = sadd.s32 %s81, 1
      %s83 = scalar_select %p80, %s81, %s82
      %p86 = pneg %p80
      %p87 = scmp.eq.s32.totalorder %s24, 2
      %p88 = por %p86, %p87
      %p89 = scmp.ne.s32.totalorder %s81, %s84
      %p90 = scmp.eq.s32.totalorder %s24, 0
      %p91 = por %p89, %p90
      %p92 = scmp.ne.s32.totalorder %s81, %s84
      %p93 = scmp.eq.s32.totalorder %s29, 2
      %p94 = por %p92, %p93
      %p95 = scmp.ne.s32.totalorder %s84, %s85
      %p96 = scmp.eq.s32.totalorder %s29, 0
      %p97 = por %p95, %p96
      %p98 = scmp.ne.s32.totalorder %s84, %s85
      %p99 = scmp.eq.s32.totalorder %s30, 2
      %p100 = por %p98, %p99
      %p102 = scmp.ne.s32.totalorder %s85, %s101
      %p103 = scmp.eq.s32.totalorder %s30, 0
      %p104 = por %p102, %p103
      %s106 = sadd.s32 %s105, 1
      %p109 = scmp.eq.s32.totalorder %s24, 2
      %p110 = scmp.ne.s32.totalorder %s105, %s107
      %p111 = scmp.eq.s32.totalorder %s24, 0
      %p112 = por %p110, %p111
      %p113 = scmp.ne.s32.totalorder %s105, %s107
      %p114 = scmp.eq.s32.totalorder %s29, 2
      %p115 = por %p113, %p114
      %p116 = scmp.ne.s32.totalorder %s107, %s108
      %p117 = scmp.eq.s32.totalorder %s29, 0
      %p118 = por %p116, %p117
      %p119 = scmp.ne.s32.totalorder %s107, %s108
      %p120 = scmp.eq.s32.totalorder %s30, 2
      %p121 = por %p119, %p120
      %p123 = scmp.ne.s32.totalorder %s108, %s122
      %p124 = scmp.eq.s32.totalorder %s30, 0
      %p125 = por %p123, %p124
      %s127 = sadd.s32 %s126, 1
      %p130 = scmp.eq.s32.totalorder %s24, 2
      %p131 = scmp.ne.s32.totalorder %s126, %s128
      %p132 = scmp.eq.s32.totalorder %s24, 0
      %p133 = por %p131, %p132
      %p134 = scmp.ne.s32.totalorder %s126, %s128
      %p135 = scmp.eq.s32.totalorder %s29, 2
      %p136 = por %p134, %p135
      %p137 = scmp.ne.s32.totalorder %s128, %s129
      %p138 = scmp.eq.s32.totalorder %s29, 0
      %p139 = por %p137, %p138
      %p140 = scmp.ne.s32.totalorder %s128, %s129
      %p141 = scmp.eq.s32.totalorder %s30, 2
      %p142 = por %p140, %p141
      %p144 = scmp.ne.s32.totalorder %s129, %s143
      %p145 = scmp.eq.s32.totalorder %s30, 0
      %p146 = por %p144, %p145
      %s148 = sadd.s32 %s147, 1
      %p151 = scmp.eq.s32.totalorder %s24, 2
      %p152 = scmp.ne.s32.totalorder %s147, %s149
      %p153 = scmp.eq.s32.totalorder %s24, 0
      %p154 = por %p152, %p153
      %p155 = scmp.ne.s32.totalorder %s147, %s149
      %p156 = scmp.eq.s32.totalorder %s29, 2
      %p157 = por %p155, %p156
      %p158 = scmp.ne.s32.totalorder %s149, %s150
      %p159 = scmp.eq.s32.totalorder %s29, 0
      %p160 = por %p158, %p159
      %p161 = scmp.ne.s32.totalorder %s149, %s150
      %p162 = scmp.eq.s32.totalorder %s30, 2
      %p163 = por %p161, %p162
      %p165 = scmp.ne.s32.totalorder %s150, %s164
      %p166 = scmp.eq.s32.totalorder %s30, 0
      %p167 = por %p165, %p166
      %s169 = sadd.s32 %s168, 1
      %p172 = scmp.eq.s32.totalorder %s24, 2
      %p173 = scmp.ne.s32.totalorder %s168, %s170
      %p174 = scmp.eq.s32.totalorder %s24, 0
      %p175 = por %p173, %p174
      %p176 = scmp.ne.s32.totalorder %s168, %s170
      %p177 = scmp.eq.s32.totalorder %s29, 2
      %p178 = por %p176, %p177
      %p179 = scmp.ne.s32.totalorder %s170, %s171
      %p180 = scmp.eq.s32.totalorder %s29, 0
      %p181 = por %p179, %p180
      %p182 = scmp.ne.s32.totalorder %s170, %s171
      %p183 = scmp.eq.s32.totalorder %s30, 2
      %p184 = por %p182, %p183
      %p186 = scmp.ne.s32.totalorder %s171, %s185
      %p187 = scmp.eq.s32.totalorder %s30, 0
      %p188 = por %p186, %p187
      %s190 = sadd.s32 %s189, 1
      %p193 = scmp.eq.s32.totalorder %s24, 2
      %p194 = scmp.ne.s32.totalorder %s189, %s191
      %p195 = scmp.eq.s32.totalorder %s24, 0
      %p196 = por %p194, %p195
      %p197 = scmp.ne.s32.totalorder %s189, %s191
      %p198 = scmp.eq.s32.totalorder %s29, 2
      %p199 = por %p197, %p198
      %p200 = scmp.ne.s32.totalorder %s191, %s192
      %p201 = scmp.eq.s32.totalorder %s29, 0
      %p202 = por %p200, %p201
      %p203 = scmp.ne.s32.totalorder %s191, %s192
      %p204 = scmp.eq.s32.totalorder %s30, 2
      %p205 = por %p203, %p204
      %p207 = scmp.ne.s32.totalorder %s192, %s206
      %p208 = scmp.eq.s32.totalorder %s30, 0
      %p209 = por %p207, %p208
      %s211 = sadd.s32 %s210, 1
      %p214 = scmp.eq.s32.totalorder %s24, 2
      %p215 = scmp.ne.s32.totalorder %s210, %s212
      %p216 = scmp.eq.s32.totalorder %s24, 0
      %p217 = por %p215, %p216
      %p218 = scmp.ne.s32.totalorder %s210, %s212
      %p219 = scmp.eq.s32.totalorder %s29, 2
      %p220 = por %p218, %p219
      %p221 = scmp.ne.s32.totalorder %s212, %s213
      %p222 = scmp.eq.s32.totalorder %s29, 0
      %p223 = por %p221, %p222
      %p224 = scmp.ne.s32.totalorder %s212, %s213
      %p225 = scmp.eq.s32.totalorder %s30, 2
      %p226 = por %p224, %p225
      %p228 = scmp.ne.s32.totalorder %s213, %s227
      %p229 = scmp.eq.s32.totalorder %s30, 0
      %p230 = por %p228, %p229
      %s232 = sadd.s32 %s231, 1
      %p235 = scmp.eq.s32.totalorder %s24, 2
      %p236 = scmp.ne.s32.totalorder %s231, %s233
      %p237 = scmp.eq.s32.totalorder %s24, 0
      %p238 = por %p236, %p237
      %p239 = scmp.ne.s32.totalorder %s231, %s233
      %p240 = scmp.eq.s32.totalorder %s29, 2
      %p241 = por %p239, %p240
      %p242 = scmp.ne.s32.totalorder %s233, %s234
      %p243 = scmp.eq.s32.totalorder %s29, 0
      %p244 = por %p242, %p243
      %p245 = scmp.ne.s32.totalorder %s233, %s234
      %p246 = scmp.eq.s32.totalorder %s30, 2
      %p247 = por %p245, %p246
      %p249 = scmp.ne.s32.totalorder %s234, %s248
      %p250 = scmp.eq.s32.totalorder %s30, 0
      %p251 = por %p249, %p250
      %s253 = sadd.s32 %s252, 1
      %p256 = scmp.eq.s32.totalorder %s24, 2
      %p257 = scmp.ne.s32.totalorder %s252, %s254
      %p258 = scmp.eq.s32.totalorder %s24, 0
      %p259 = por %p257, %p258
      %p260 = scmp.ne.s32.totalorder %s252, %s254
      %p261 = scmp.eq.s32.totalorder %s29, 2
      %p262 = por %p260, %p261
      %p263 = scmp.ne.s32.totalorder %s254, %s255
      %p264 = scmp.eq.s32.totalorder %s29, 0
      %p265 = por %p263, %p264
      %p266 = scmp.ne.s32.totalorder %s254, %s255
      %p267 = scmp.eq.s32.totalorder %s30, 2
      %p268 = por %p266, %p267
      %p270 = scmp.ne.s32.totalorder %s255, %s269
      %p271 = scmp.eq.s32.totalorder %s30, 0
      %p272 = por %p270, %p271
      %s274 = sadd.s32 %s273, 1
      %p277 = scmp.eq.s32.totalorder %s24, 2
      %p278 = scmp.ne.s32.totalorder %s273, %s275
      %p279 = scmp.eq.s32.totalorder %s24, 0
      %p280 = por %p278, %p279
      %p281 = scmp.ne.s32.totalorder %s273, %s275
      %p282 = scmp.eq.s32.totalorder %s29, 2
      %p283 = por %p281, %p282
      %p284 = scmp.ne.s32.totalorder %s275, %s276
      %p285 = scmp.eq.s32.totalorder %s29, 0
      %p286 = por %p284, %p285
      %p287 = scmp.ne.s32.totalorder %s275, %s276
      %p288 = scmp.eq.s32.totalorder %s30, 2
      %p289 = por %p287, %p288
      %p291 = scmp.ne.s32.totalorder %s276, %s290
      %p292 = scmp.eq.s32.totalorder %s30, 0
      %p293 = por %p291, %p292
      %s295 = sadd.s32 %s294, 1
      %p298 = scmp.eq.s32.totalorder %s24, 2
      %p299 = scmp.ne.s32.totalorder %s294, %s296
      %p300 = scmp.eq.s32.totalorder %s24, 0
      %p301 = por %p299, %p300
      %p302 = scmp.ne.s32.totalorder %s294, %s296
      %p303 = scmp.eq.s32.totalorder %s29, 2
      %p304 = por %p302, %p303
      %p305 = scmp.ne.s32.totalorder %s296, %s297
      %p306 = scmp.eq.s32.totalorder %s29, 0
      %p307 = por %p305, %p306
      %p308 = scmp.ne.s32.totalorder %s296, %s297
      %p309 = scmp.eq.s32.totalorder %s30, 2
      %p310 = por %p308, %p309
      %p312 = scmp.ne.s32.totalorder %s297, %s311
      %p313 = scmp.eq.s32.totalorder %s30, 0
      %p314 = por %p312, %p313
      %s315 = ssub.s32 %s24, %s31
      %p316 = scmp.eq.s32.totalorder %s315, 0
      %s318 = sadd.s32 %s317, 1
      %s319 = scalar_select %p316, %s317, %s318
      %p322 = pneg %p316
      %p323 = scmp.eq.s32.totalorder %s24, 2
      %p324 = por %p322, %p323
      %p325 = scmp.ne.s32.totalorder %s317, %s320
      %p326 = scmp.eq.s32.totalorder %s24, 0
      %p327 = por %p325, %p326
      %p328 = scmp.ne.s32.totalorder %s317, %s320
      %p329 = scmp.eq.s32.totalorder %s29, 2
      %p330 = por %p328, %p329
      %p331 = scmp.ne.s32.totalorder %s320, %s321
      %p332 = scmp.eq.s32.totalorder %s29, 0
      %p333 = por %p331, %p332
      %p334 = scmp.ne.s32.totalorder %s320, %s321
      %p335 = scmp.eq.s32.totalorder %s30, 2
      %p336 = por %p334, %p335
      %p338 = scmp.ne.s32.totalorder %s321, %s337
      %p339 = scmp.eq.s32.totalorder %s30, 0
      %p340 = por %p338, %p339
      %p341 = scmp.le.s32.totalorder 1, %s24
      %p342 = scmp.lt.s32.totalorder %s24, 4
      %p343 = pnand %p341, %p342
      %p344 = pneg %p343
      // Predicated region
      $region9: #{tpu_custom_call.1} parent=5 // pred_check
        _
      $region10: #{tpu_custom_call.1} parent=5 // pred_check_branch
        %346 = sbr.rel (%p343) target = $region12
      $region11: #{tpu_custom_call.1} parent=5 // pred_region
        %s347 = ssub.s32 %s24, 1
        // Predicated region
        $region13: #{tpu_custom_call.1} parent=11 // pred_check
          %p348 = pneg %p45
        $region14: #{tpu_custom_call.1} parent=11 // pred_check_branch
          %350 = sbr.rel (%p348) target = $region16
        $region15: #{tpu_custom_call.1} parent=11 // pred_region
          _
        $region16: #{tpu_custom_call.1} parent=11 // pred_fallthru
          _
        // Predicated region
        $region17: #{tpu_custom_call.1} parent=11 // pred_check
          %p351 = pneg %p118
        $region18: #{tpu_custom_call.1} parent=11 // pred_check_branch
          %353 = sbr.rel (%p351) target = $region20
        $region19: #{tpu_custom_call.1} parent=11 // pred_region
          _
        $region20: #{tpu_custom_call.1} parent=11 // pred_fallthru
          _
        // Predicated region
        $region21: #{tpu_custom_call.1} parent=11 // pred_check
          %p354 = pneg %p139
        $region22: #{tpu_custom_call.1} parent=11 // pred_check_branch
          %356 = sbr.rel (%p354) target = $region24
        $region23: #{tpu_custom_call.1} parent=11 // pred_region
          _
        $region24: #{tpu_custom_call.1} parent=11 // pred_fallthru
          _
        // Predicated region
        $region25: #{tpu_custom_call.1} parent=11 // pred_check
          %p357 = pneg %p160
        $region26: #{tpu_custom_call.1} parent=11 // pred_check_branch
          %359 = sbr.rel (%p357) target = $region28
        $region27: #{tpu_custom_call.1} parent=11 // pred_region
          _
        $region28: #{tpu_custom_call.1} parent=11 // pred_fallthru
          _
        // Predicated region
        $region29: #{tpu_custom_call.1} parent=11 // pred_check
          %p360 = pneg %p181
        $region30: #{tpu_custom_call.1} parent=11 // pred_check_branch
          %362 = sbr.rel (%p360) target = $region32
        $region31: #{tpu_custom_call.1} parent=11 // pred_region
          _
        $region32: #{tpu_custom_call.1} parent=11 // pred_fallthru
          _
        // Predicated region
        $region33: #{tpu_custom_call.1} parent=11 // pred_check
          %p363 = pneg %p202
        $region34: #{tpu_custom_call.1} parent=11 // pred_check_branch
          %365 = sbr.rel (%p363) target = $region36
        $region35: #{tpu_custom_call.1} parent=11 // pred_region
          _
        $region36: #{tpu_custom_call.1} parent=11 // pred_fallthru
          _
        // Predicated region
        $region37: #{tpu_custom_call.1} parent=11 // pred_check
          %p366 = pneg %p223
        $region38: #{tpu_custom_call.1} parent=11 // pred_check_branch
          %368 = sbr.rel (%p366) target = $region40
        $region39: #{tpu_custom_call.1} parent=11 // pred_region
          _
        $region40: #{tpu_custom_call.1} parent=11 // pred_fallthru
          _
        // Predicated region
        $region41: #{tpu_custom_call.1} parent=11 // pred_check
          %p369 = pneg %p244
        $region42: #{tpu_custom_call.1} parent=11 // pred_check_branch
          %371 = sbr.rel (%p369) target = $region44
        $region43: #{tpu_custom_call.1} parent=11 // pred_region
          _
        $region44: #{tpu_custom_call.1} parent=11 // pred_fallthru
          _
        // Predicated region
        $region45: #{tpu_custom_call.1} parent=11 // pred_check
          %p372 = pneg %p265
        $region46: #{tpu_custom_call.1} parent=11 // pred_check_branch
          %374 = sbr.rel (%p372) target = $region48
        $region47: #{tpu_custom_call.1} parent=11 // pred_region
          _
        $region48: #{tpu_custom_call.1} parent=11 // pred_fallthru
          _
        // Predicated region
        $region49: #{tpu_custom_call.1} parent=11 // pred_check
          %p375 = pneg %p286
        $region50: #{tpu_custom_call.1} parent=11 // pred_check_branch
          %377 = sbr.rel (%p375) target = $region52
        $region51: #{tpu_custom_call.1} parent=11 // pred_region
          _
        $region52: #{tpu_custom_call.1} parent=11 // pred_fallthru
          _
      $region12: #{tpu_custom_call.1} parent=5 // pred_fallthru
        _
      %p378 = scmp.lt.s32.totalorder %s24, 3
      // Predicated region
      $region53: #{tpu_custom_call.1} parent=5 // pred_check
        %p379 = pneg %p378
      $region54: #{tpu_custom_call.1} parent=5 // pred_check_branch
        %381 = sbr.rel (%p379) target = $region56
      $region55: #{tpu_custom_call.1} parent=5 // pred_region
        // Predicated region
        $region57: #{tpu_custom_call.1} parent=55 // pred_check
          %p382 = pneg %p65
        $region58: #{tpu_custom_call.1} parent=55 // pred_check_branch
          %384 = sbr.rel (%p382) target = $region60
        $region59: #{tpu_custom_call.1} parent=55 // pred_region
          %s385 = smul.u32 2, %s24
          %p386 = scmp.lt.s32.totalorder %s385, 5
          %s387 = scalar_select %p386, %s385, 5
          %s388 = smul.addr %s387, 2
          %s389 = scalar_lea.vmem %s1, %s388
          %s390 = smul.u32 2, %s24
        $region60: #{tpu_custom_call.1} parent=55 // pred_fallthru
          _
        // Predicated region
        $region61: #{tpu_custom_call.1} parent=55 // pred_check
          %p391 = pneg %p91
        $region62: #{tpu_custom_call.1} parent=55 // pred_check_branch
          %393 = sbr.rel (%p391) target = $region64
        $region63: #{tpu_custom_call.1} parent=55 // pred_region
          %s394 = smul.u32 32, %s24
          %p395 = scmp.lt.s32.totalorder %s394, 95
          %s396 = scalar_select %p395, %s394, 95
          %s397 = smul.addr %s396, 4
          %s398 = scalar_lea.vmem %s2, %s397
          %s399 = smul.u32 32, %s24
        $region64: #{tpu_custom_call.1} parent=55 // pred_fallthru
          _
      $region56: #{tpu_custom_call.1} parent=5 // pred_fallthru
        _
      %p400 = scmp.le.s32.totalorder 1, %s24
      %p401 = scmp.lt.s32.totalorder %s24, 4
      %p402 = pnand %p400, %p401
      %p403 = pneg %p402
      // Predicated region
      $region65: #{tpu_custom_call.1} parent=5 // pred_check
        _
      $region66: #{tpu_custom_call.1} parent=5 // pred_check_branch
        %405 = sbr.rel (%p402) target = $region68
      $region67: #{tpu_custom_call.1} parent=5 // pred_region
        %s406 = ssub.s32 %s24, 1
        %p407 = pneg %p45
        %p408 = pneg %p42
        %s409 = smul.u32 2, %s29
        %p410 = scmp.lt.s32.totalorder %s409, 5
        %s411 = scalar_select %p410, %s409, 5
        %s412 = smul.addr %s411, 2
        %s413 = scalar_lea.vmem %s1, %s412
        %p414 = pneg %p71
        %p415 = pneg %p68
        %s416 = smul.u32 32, %s29
        %p417 = scmp.lt.s32.totalorder %s416, 95
        %s418 = scalar_select %p417, %s416, 95
        %s419 = smul.addr %s418, 4
        %s420 = scalar_lea.vmem %s2, %s419
        %p421 = pneg %p97
        %p422 = pneg %p94
        %p423 = pneg %p118
        %p424 = pneg %p115
        %p425 = pneg %p139
        %p426 = pneg %p136
        %p427 = pneg %p160
        %p428 = pneg %p157
        %p429 = pneg %p181
        %p430 = pneg %p178
        %p431 = pneg %p202
        %p432 = pneg %p199
        %p433 = pneg %p223
        %p434 = pneg %p220
        %p435 = pneg %p244
        %p436 = pneg %p241
        %p437 = pneg %p265
        %p438 = pneg %p262
        %p439 = pneg %p286
        %p440 = pneg %p283
        %p441 = pneg %p307
        %p442 = pneg %p304
        %p443 = pneg %p333
        %p444 = pneg %p330
        %s445 = sand.u32 %s320, 1
        %s446 = scalar_lea.sflag [#allocation8], %s445
        %s447 = sand.u32 %s320, 1
        %s448 = smul.addr %s447, 16
        %s449 = scalar_lea.vmem [#allocation7], %s448
        %s450 = smul.u32 2, %s29
        %p451 = scmp.lt.s32.totalorder %s450, 5
        %s452 = scalar_select %p451, %s450, 5
        %s453 = smul.addr %s452, 2
        %s454 = scalar_lea.vmem %s1, %s453
        %s455 = smul.u32 2, %s29
        %s456 = smul.u32 32, %s29
        %p457 = scmp.lt.s32.totalorder %s456, 95
        %s458 = scalar_select %p457, %s456, 95
        %s459 = smul.addr %s458, 4
        %s460 = scalar_lea.vmem %s2, %s459
        %s461 = smul.u32 32, %s29
        %p463 = scmp.eq.s32.totalorder %s29, 0
        // Predicated region
        $region69: #{tpu_custom_call.1} parent=67 // pred_check
          %p464 = pneg %p463
        $region70: #{tpu_custom_call.1} parent=67 // pred_check_branch
          %466 = sbr.rel (%p464) target = $region72
        $region71: #{tpu_custom_call.1} parent=67 // pred_region
          %v467 = vld [vmem:[%s0] sm:$0xf]
          %v468 = vld [vmem:[%s0 + $0x4] sm:$0xf]
          %v469 = vld [vmem:[%s0 + $0x8] sm:$0xf]
          %v470 = vld [vmem:[%s0 + $0xc] sm:$0xf]
          %v471 = vld [vmem:[%s0 + $0x10] sm:$0xf]
          %v472 = vld [vmem:[%s0 + $0x14] sm:$0xf]
          %v473 = vld [vmem:[%s0 + $0x18] sm:$0xf]
          %v474 = vld [vmem:[%s0 + $0x1c] sm:$0xf]
          %v475 = vld [vmem:[%s0 + $0x20] sm:$0xf]
          %v476 = vld [vmem:[%s0 + $0x24] sm:$0xf]
          %v477 = vld [vmem:[%s0 + $0x28] sm:$0xf]
          %v478 = vld [vmem:[%s0 + $0x2c] sm:$0xf]
          %v479 = vld [vmem:[%s0 + $0x30] sm:$0xf]
          %v480 = vld [vmem:[%s0 + $0x34] sm:$0xf]
          %v481 = vld [vmem:[%s0 + $0x38] sm:$0xf]
          %v482 = vld [vmem:[%s0 + $0x3c] sm:$0xf]
          %v483 = vld [vmem:[%s0 + $0x40] sm:$0xf]
          %v484 = vld [vmem:[%s0 + $0x44] sm:$0xf]
          %v485 = vld [vmem:[%s0 + $0x48] sm:$0xf]
          %v486 = vld [vmem:[%s0 + $0x4c] sm:$0xf]
          %v487 = vld [vmem:[%s0 + $0x50] sm:$0xf]
          %v488 = vld [vmem:[%s0 + $0x54] sm:$0xf]
          %v489 = vld [vmem:[%s0 + $0x58] sm:$0xf]
          %v490 = vld [vmem:[%s0 + $0x5c] sm:$0xf]
          %v491 = vld [vmem:[%s0 + $0x60] sm:$0xf]
          %v492 = vld [vmem:[%s0 + $0x64] sm:$0xf]
          %v493 = vld [vmem:[%s0 + $0x68] sm:$0xf]
          %v494 = vld [vmem:[%s0 + $0x6c] sm:$0xf]
          %v495 = vld [vmem:[%s0 + $0x70] sm:$0xf]
          %v496 = vld [vmem:[%s0 + $0x74] sm:$0xf]
          %v497 = vld [vmem:[%s0 + $0x78] sm:$0xf]
          %v498 = vld [vmem:[%s0 + $0x7c] sm:$0xf]
          %v499 = vld [vmem:[%s0 + $0x80] sm:$0xf]
          %v500 = vld [vmem:[%s0 + $0x84] sm:$0xf]
          %v501 = vld [vmem:[%s0 + $0x88] sm:$0xf]
          %v502 = vld [vmem:[%s0 + $0x8c] sm:$0xf]
          %v503 = vld [vmem:[%s0 + $0x90] sm:$0xf]
          %v504 = vld [vmem:[%s0 + $0x94] sm:$0xf]
          %v505 = vld [vmem:[%s0 + $0x98] sm:$0xf]
          %v506 = vld [vmem:[%s0 + $0x9c] sm:$0xf]
          %v507 = vld [vmem:[%s0 + $0xa0] sm:$0xf]
          %v508 = vld [vmem:[%s0 + $0xa4] sm:$0xf]
          %v509 = vld [vmem:[%s0 + $0xa8] sm:$0xf]
          %v510 = vld [vmem:[%s0 + $0xac] sm:$0xf]
          %v511 = vld [vmem:[%s0 + $0xb0] sm:$0xf]
          %v512 = vld [vmem:[%s0 + $0xb4] sm:$0xf]
          %v513 = vld [vmem:[%s0 + $0xb8] sm:$0xf]
          %v514 = vld [vmem:[%s0 + $0xbc] sm:$0xf]
          %v515 = vld [vmem:[%s0 + $0xc0] sm:$0xf]
          %v516 = vld [vmem:[%s0 + $0xc4] sm:$0xf]
          %v517 = vld [vmem:[%s0 + $0xc8] sm:$0xf]
          %v518 = vld [vmem:[%s0 + $0xcc] sm:$0xf]
          %v519 = vld [vmem:[%s0 + $0xd0] sm:$0xf]
          %v520 = vld [vmem:[%s0 + $0xd4] sm:$0xf]
          %v521 = vld [vmem:[%s0 + $0xd8] sm:$0xf]
          %v522 = vld [vmem:[%s0 + $0xdc] sm:$0xf]
          %v523 = vld [vmem:[%s0 + $0xe0] sm:$0xf]
          %v524 = vld [vmem:[%s0 + $0xe4] sm:$0xf]
          %v525 = vld [vmem:[%s0 + $0xe8] sm:$0xf]
          %v526 = vld [vmem:[%s0 + $0xec] sm:$0xf]
          %v527 = vld [vmem:[%s0 + $0xf0] sm:$0xf]
          %v528 = vld [vmem:[%s0 + $0xf4] sm:$0xf]
          %v529 = vld [vmem:[%s0 + $0xf8] sm:$0xf]
          %v530 = vld [vmem:[%s0 + $0xfc] sm:$0xf]
          %v531 = vld [vmem:[%s0 + $0x100] sm:$0xf]
          %v532 = vld [vmem:[%s0 + $0x104] sm:$0xf]
          %v533 = vld [vmem:[%s0 + $0x108] sm:$0xf]
          %v534 = vld [vmem:[%s0 + $0x10c] sm:$0xf]
          %v535 = vld [vmem:[%s0 + $0x110] sm:$0xf]
          %v536 = vld [vmem:[%s0 + $0x114] sm:$0xf]
          %v537 = vld [vmem:[%s0 + $0x118] sm:$0xf]
          %v538 = vld [vmem:[%s0 + $0x11c] sm:$0xf]
          %v539 = vld [vmem:[%s0 + $0x120] sm:$0xf]
          %v540 = vld [vmem:[%s0 + $0x124] sm:$0xf]
          %v541 = vld [vmem:[%s0 + $0x128] sm:$0xf]
          %v542 = vld [vmem:[%s0 + $0x12c] sm:$0xf]
          %v543 = vld [vmem:[%s0 + $0x130] sm:$0xf]
          %v544 = vld [vmem:[%s0 + $0x134] sm:$0xf]
          %v545 = vld [vmem:[%s0 + $0x138] sm:$0xf]
          %v546 = vld [vmem:[%s0 + $0x13c] sm:$0xf]
          %v547 = vld [vmem:[%s0 + $0x140] sm:$0xf]
          %v548 = vld [vmem:[%s0 + $0x144] sm:$0xf]
          %v549 = vld [vmem:[%s0 + $0x148] sm:$0xf]
          %v550 = vld [vmem:[%s0 + $0x14c] sm:$0xf]
          %v551 = vld [vmem:[%s0 + $0x150] sm:$0xf]
          %v552 = vld [vmem:[%s0 + $0x154] sm:$0xf]
          %v553 = vld [vmem:[%s0 + $0x158] sm:$0xf]
          %v554 = vld [vmem:[%s0 + $0x15c] sm:$0xf]
          %v555 = vld [vmem:[%s0 + $0x160] sm:$0xf]
          %v556 = vld [vmem:[%s0 + $0x164] sm:$0xf]
          %v557 = vld [vmem:[%s0 + $0x168] sm:$0xf]
          %v558 = vld [vmem:[%s0 + $0x16c] sm:$0xf]
          %v559 = vld [vmem:[%s0 + $0x170] sm:$0xf]
          %v560 = vld [vmem:[%s0 + $0x174] sm:$0xf]
          %v561 = vld [vmem:[%s0 + $0x178] sm:$0xf]
          %v562 = vld [vmem:[%s0 + $0x17c] sm:$0xf]
          %v563 = vld [vmem:[%s0 + $0x180] sm:$0xf]
          %v564 = vld [vmem:[%s0 + $0x184] sm:$0xf]
          %v565 = vld [vmem:[%s0 + $0x188] sm:$0xf]
          %v566 = vld [vmem:[%s0 + $0x18c] sm:$0xf]
          %v567 = vld [vmem:[%s0 + $0x190] sm:$0xf]
          %v568 = vld [vmem:[%s0 + $0x194] sm:$0xf]
          %v569 = vld [vmem:[%s0 + $0x198] sm:$0xf]
          %v570 = vld [vmem:[%s0 + $0x19c] sm:$0xf]
          %v571 = vld [vmem:[%s0 + $0x1a0] sm:$0xf]
          %v572 = vld [vmem:[%s0 + $0x1a4] sm:$0xf]
          %v573 = vld [vmem:[%s0 + $0x1a8] sm:$0xf]
          %v574 = vld [vmem:[%s0 + $0x1ac] sm:$0xf]
          %v575 = vld [vmem:[%s0 + $0x1b0] sm:$0xf]
          %v576 = vld [vmem:[%s0 + $0x1b4] sm:$0xf]
          %v577 = vld [vmem:[%s0 + $0x1b8] sm:$0xf]
          %v578 = vld [vmem:[%s0 + $0x1bc] sm:$0xf]
          %v579 = vld [vmem:[%s0 + $0x1c0] sm:$0xf]
          %v580 = vld [vmem:[%s0 + $0x1c4] sm:$0xf]
          %v581 = vld [vmem:[%s0 + $0x1c8] sm:$0xf]
          %v582 = vld [vmem:[%s0 + $0x1cc] sm:$0xf]
          %v583 = vld [vmem:[%s0 + $0x1d0] sm:$0xf]
          %v584 = vld [vmem:[%s0 + $0x1d4] sm:$0xf]
          %v585 = vld [vmem:[%s0 + $0x1d8] sm:$0xf]
          %v586 = vld [vmem:[%s0 + $0x1dc] sm:$0xf]
          %v587 = vld [vmem:[%s0 + $0x1e0] sm:$0xf]
          %v588 = vld [vmem:[%s0 + $0x1e4] sm:$0xf]
          %v589 = vld [vmem:[%s0 + $0x1e8] sm:$0xf]
          %v590 = vld [vmem:[%s0 + $0x1ec] sm:$0xf]
          %v591 = vld [vmem:[%s0 + $0x1f0] sm:$0xf]
          %v592 = vld [vmem:[%s0 + $0x1f4] sm:$0xf]
          %v593 = vld [vmem:[%s0 + $0x1f8] sm:$0xf]
          %v594 = vld [vmem:[%s0 + $0x1fc] sm:$0xf]
          %v595 = vld [vmem:[%s3] sm:$0xf]
          %v596 = vld [vmem:[%s3 + $0x4] sm:$0xf]
          %v725 = vunpack.c.l.b16 %v467
          %v726 = vunpack.c.l.b16 %v468
          %v727 = vunpack.c.l.b16 %v469
          %v728 = vunpack.c.l.b16 %v470
          %v729 = vunpack.c.l.b16 %v471
          %v730 = vunpack.c.l.b16 %v472
          %v731 = vunpack.c.l.b16 %v473
          %v732 = vunpack.c.l.b16 %v474
          %v733 = vunpack.c.l.b16 %v475
          %v734 = vunpack.c.l.b16 %v476
          %v735 = vunpack.c.l.b16 %v477
          %v736 = vunpack.c.l.b16 %v478
          %v737 = vunpack.c.l.b16 %v479
          %v738 = vunpack.c.l.b16 %v480
          %v739 = vunpack.c.l.b16 %v481
          %v740 = vunpack.c.l.b16 %v482
          %v741 = vunpack.c.l.b16 %v483
          %v742 = vunpack.c.l.b16 %v484
          %v743 = vunpack.c.l.b16 %v485
          %v744 = vunpack.c.l.b16 %v486
          %v745 = vunpack.c.l.b16 %v487
          %v746 = vunpack.c.l.b16 %v488
          %v747 = vunpack.c.l.b16 %v489
          %v748 = vunpack.c.l.b16 %v490
          %v749 = vunpack.c.l.b16 %v491
          %v750 = vunpack.c.l.b16 %v492
          %v751 = vunpack.c.l.b16 %v493
          %v752 = vunpack.c.l.b16 %v494
          %v753 = vunpack.c.l.b16 %v495
          %v754 = vunpack.c.l.b16 %v496
          %v755 = vunpack.c.l.b16 %v497
          %v756 = vunpack.c.l.b16 %v498
          %v757 = vunpack.c.l.b16 %v499
          %v758 = vunpack.c.l.b16 %v500
          %v759 = vunpack.c.l.b16 %v501
          %v760 = vunpack.c.l.b16 %v502
          %v761 = vunpack.c.l.b16 %v503
          %v762 = vunpack.c.l.b16 %v504
          %v763 = vunpack.c.l.b16 %v505
          %v764 = vunpack.c.l.b16 %v506
          %v765 = vunpack.c.l.b16 %v507
          %v766 = vunpack.c.l.b16 %v508
          %v767 = vunpack.c.l.b16 %v509
          %v768 = vunpack.c.l.b16 %v510
          %v769 = vunpack.c.l.b16 %v511
          %v770 = vunpack.c.l.b16 %v512
          %v771 = vunpack.c.l.b16 %v513
          %v772 = vunpack.c.l.b16 %v514
          %v773 = vunpack.c.l.b16 %v515
          %v774 = vunpack.c.l.b16 %v516
          %v775 = vunpack.c.l.b16 %v517
          %v776 = vunpack.c.l.b16 %v518
          %v777 = vunpack.c.l.b16 %v519
          %v778 = vunpack.c.l.b16 %v520
          %v779 = vunpack.c.l.b16 %v521
          %v780 = vunpack.c.l.b16 %v522
          %v781 = vunpack.c.l.b16 %v523
          %v782 = vunpack.c.l.b16 %v524
          %v783 = vunpack.c.l.b16 %v525
          %v784 = vunpack.c.l.b16 %v526
          %v785 = vunpack.c.l.b16 %v527
          %v786 = vunpack.c.l.b16 %v528
          %v787 = vunpack.c.l.b16 %v529
          %v788 = vunpack.c.l.b16 %v530
          %v789 = vunpack.c.l.b16 %v531
          %v790 = vunpack.c.l.b16 %v532
          %v791 = vunpack.c.l.b16 %v533
          %v792 = vunpack.c.l.b16 %v534
          %v793 = vunpack.c.l.b16 %v535
          %v794 = vunpack.c.l.b16 %v536
          %v795 = vunpack.c.l.b16 %v537
          %v796 = vunpack.c.l.b16 %v538
          %v797 = vunpack.c.l.b16 %v539
          %v798 = vunpack.c.l.b16 %v540
          %v799 = vunpack.c.l.b16 %v541
          %v800 = vunpack.c.l.b16 %v542
          %v801 = vunpack.c.l.b16 %v543
          %v802 = vunpack.c.l.b16 %v544
          %v803 = vunpack.c.l.b16 %v545
          %v804 = vunpack.c.l.b16 %v546
          %v805 = vunpack.c.l.b16 %v547
          %v806 = vunpack.c.l.b16 %v548
          %v807 = vunpack.c.l.b16 %v549
          %v808 = vunpack.c.l.b16 %v550
          %v809 = vunpack.c.l.b16 %v551
          %v810 = vunpack.c.l.b16 %v552
          %v811 = vunpack.c.l.b16 %v553
          %v812 = vunpack.c.l.b16 %v554
          %v813 = vunpack.c.l.b16 %v555
          %v814 = vunpack.c.l.b16 %v556
          %v815 = vunpack.c.l.b16 %v557
          %v816 = vunpack.c.l.b16 %v558
          %v817 = vunpack.c.l.b16 %v559
          %v818 = vunpack.c.l.b16 %v560
          %v819 = vunpack.c.l.b16 %v561
          %v820 = vunpack.c.l.b16 %v562
          %v821 = vunpack.c.l.b16 %v563
          %v822 = vunpack.c.l.b16 %v564
          %v823 = vunpack.c.l.b16 %v565
          %v824 = vunpack.c.l.b16 %v566
          %v825 = vunpack.c.l.b16 %v567
          %v826 = vunpack.c.l.b16 %v568
          %v827 = vunpack.c.l.b16 %v569
          %v828 = vunpack.c.l.b16 %v570
          %v829 = vunpack.c.l.b16 %v571
          %v830 = vunpack.c.l.b16 %v572
          %v831 = vunpack.c.l.b16 %v573
          %v832 = vunpack.c.l.b16 %v574
          %v833 = vunpack.c.l.b16 %v575
          %v834 = vunpack.c.l.b16 %v576
          %v835 = vunpack.c.l.b16 %v577
          %v836 = vunpack.c.l.b16 %v578
          %v837 = vunpack.c.l.b16 %v579
          %v838 = vunpack.c.l.b16 %v580
          %v839 = vunpack.c.l.b16 %v581
          %v840 = vunpack.c.l.b16 %v582
          %v841 = vunpack.c.l.b16 %v583
          %v842 = vunpack.c.l.b16 %v584
          %v843 = vunpack.c.l.b16 %v585
          %v844 = vunpack.c.l.b16 %v586
          %v845 = vunpack.c.l.b16 %v587
          %v846 = vunpack.c.l.b16 %v588
          %v847 = vunpack.c.l.b16 %v589
          %v848 = vunpack.c.l.b16 %v590
          %v849 = vunpack.c.l.b16 %v591
          %v850 = vunpack.c.l.b16 %v592
          %v851 = vunpack.c.l.b16 %v593
          %v852 = vunpack.c.l.b16 %v594
          %v853 = vpack.c.b16 %v726, %v725
          %v854 = vpack.c.b16 %v728, %v727
          %v855 = vpack.c.b16 %v730, %v729
          %v856 = vpack.c.b16 %v732, %v731
          %v857 = vpack.c.b16 %v734, %v733
          %v858 = vpack.c.b16 %v736, %v735
          %v859 = vpack.c.b16 %v738, %v737
          %v860 = vpack.c.b16 %v740, %v739
          %v861 = vpack.c.b16 %v742, %v741
          %v862 = vpack.c.b16 %v744, %v743
          %v863 = vpack.c.b16 %v746, %v745
          %v864 = vpack.c.b16 %v748, %v747
          %v865 = vpack.c.b16 %v750, %v749
          %v866 = vpack.c.b16 %v752, %v751
          %v867 = vpack.c.b16 %v754, %v753
          %v868 = vpack.c.b16 %v756, %v755
          %v869 = vpack.c.b16 %v758, %v757
          %v870 = vpack.c.b16 %v760, %v759
          %v871 = vpack.c.b16 %v762, %v761
          %v872 = vpack.c.b16 %v764, %v763
          %v873 = vpack.c.b16 %v766, %v765
          %v874 = vpack.c.b16 %v768, %v767
          %v875 = vpack.c.b16 %v770, %v769
          %v876 = vpack.c.b16 %v772, %v771
          %v877 = vpack.c.b16 %v774, %v773
          %v878 = vpack.c.b16 %v776, %v775
          %v879 = vpack.c.b16 %v778, %v777
          %v880 = vpack.c.b16 %v780, %v779
          %v881 = vpack.c.b16 %v782, %v781
          %v882 = vpack.c.b16 %v784, %v783
          %v883 = vpack.c.b16 %v786, %v785
          %v884 = vpack.c.b16 %v788, %v787
          %v885 = vpack.c.b16 %v790, %v789
          %v886 = vpack.c.b16 %v792, %v791
          %v887 = vpack.c.b16 %v794, %v793
          %v888 = vpack.c.b16 %v796, %v795
          %v889 = vpack.c.b16 %v798, %v797
          %v890 = vpack.c.b16 %v800, %v799
          %v891 = vpack.c.b16 %v802, %v801
          %v892 = vpack.c.b16 %v804, %v803
          %v893 = vpack.c.b16 %v806, %v805
          %v894 = vpack.c.b16 %v808, %v807
          %v895 = vpack.c.b16 %v810, %v809
          %v896 = vpack.c.b16 %v812, %v811
          %v897 = vpack.c.b16 %v814, %v813
          %v898 = vpack.c.b16 %v816, %v815
          %v899 = vpack.c.b16 %v818, %v817
          %v900 = vpack.c.b16 %v820, %v819
          %v901 = vpack.c.b16 %v822, %v821
          %v902 = vpack.c.b16 %v824, %v823
          %v903 = vpack.c.b16 %v826, %v825
          %v904 = vpack.c.b16 %v828, %v827
          %v905 = vpack.c.b16 %v830, %v829
          %v906 = vpack.c.b16 %v832, %v831
          %v907 = vpack.c.b16 %v834, %v833
          %v908 = vpack.c.b16 %v836, %v835
          %v909 = vpack.c.b16 %v838, %v837
          %v910 = vpack.c.b16 %v840, %v839
          %v911 = vpack.c.b16 %v842, %v841
          %v912 = vpack.c.b16 %v844, %v843
          %v913 = vpack.c.b16 %v846, %v845
          %v914 = vpack.c.b16 %v848, %v847
          %v915 = vpack.c.b16 %v850, %v849
          %v916 = vpack.c.b16 %v852, %v851
          %v919 = vunpack.c.l.b16 %v595
          %v920 = vunpack.c.l.b16 %v596
          %v921 = vpack.c.b16 %v920, %v919
          %vm923 = vcmask 130048
          %v925 = vsel %vm923, %v853, 0
          %v928 = vsel %vm923, %v854, 0
          %v931 = vsel %vm923, %v855, 0
          %v934 = vsel %vm923, %v856, 0
          %v937 = vsel %vm923, %v857, 0
          %v940 = vsel %vm923, %v858, 0
          %v943 = vsel %vm923, %v859, 0
          %v946 = vsel %vm923, %v860, 0
          %v949 = vsel %vm923, %v861, 0
          %v952 = vsel %vm923, %v862, 0
          %v955 = vsel %vm923, %v863, 0
          %v958 = vsel %vm923, %v864, 0
          %v961 = vsel %vm923, %v865, 0
          %v964 = vsel %vm923, %v866, 0
          %v967 = vsel %vm923, %v867, 0
          %v970 = vsel %vm923, %v868, 0
          %v973 = vsel %vm923, %v869, 0
          %v976 = vsel %vm923, %v870, 0
          %v979 = vsel %vm923, %v871, 0
          %v982 = vsel %vm923, %v872, 0
          %v985 = vsel %vm923, %v873, 0
          %v988 = vsel %vm923, %v874, 0
          %v991 = vsel %vm923, %v875, 0
          %v994 = vsel %vm923, %v876, 0
          %v997 = vsel %vm923, %v877, 0
          %v1000 = vsel %vm923, %v878, 0
          %v1003 = vsel %vm923, %v879, 0
          %v1006 = vsel %vm923, %v880, 0
          %v1009 = vsel %vm923, %v881, 0
          %v1012 = vsel %vm923, %v882, 0
          %v1015 = vsel %vm923, %v883, 0
          %v1018 = vsel %vm923, %v884, 0
          %v1021 = vsel %vm923, %v885, 0
          %v1024 = vsel %vm923, %v886, 0
          %v1027 = vsel %vm923, %v887, 0
          %v1030 = vsel %vm923, %v888, 0
          %v1033 = vsel %vm923, %v889, 0
          %v1036 = vsel %vm923, %v890, 0
          %v1039 = vsel %vm923, %v891, 0
          %v1042 = vsel %vm923, %v892, 0
          %v1045 = vsel %vm923, %v893, 0
          %v1048 = vsel %vm923, %v894, 0
          %v1051 = vsel %vm923, %v895, 0
          %v1054 = vsel %vm923, %v896, 0
          %v1057 = vsel %vm923, %v897, 0
          %v1060 = vsel %vm923, %v898, 0
          %v1063 = vsel %vm923, %v899, 0
          %v1066 = vsel %vm923, %v900, 0
          %v1069 = vsel %vm923, %v901, 0
          %v1072 = vsel %vm923, %v902, 0
          %v1075 = vsel %vm923, %v903, 0
          %v1078 = vsel %vm923, %v904, 0
          %v1081 = vsel %vm923, %v905, 0
          %v1084 = vsel %vm923, %v906, 0
          %v1087 = vsel %vm923, %v907, 0
          %v1090 = vsel %vm923, %v908, 0
          %v1093 = vsel %vm923, %v909, 0
          %v1096 = vsel %vm923, %v910, 0
          %v1099 = vsel %vm923, %v911, 0
          %v1102 = vsel %vm923, %v912, 0
          %v1105 = vsel %vm923, %v913, 0
          %v1108 = vsel %vm923, %v914, 0
          %v1111 = vsel %vm923, %v915, 0
          %v1114 = vsel %vm923, %v916, 0
          %1116 = vmatprep.subr.bf16.mxu0 0
          %1117 = vmatpush1.bf16.msra.mxu0 %v921
          %1118 = vmatprep.subr.bf16.mxu0 0
          %1119 = vmatpush1.bf16.msra.mxu0 0
          %1120 = vmatprep.subr.bf16.mxu0 0
          %1121 = vmatpush1.bf16.msra.mxu0 0
          %1122 = vmatprep.subr.bf16.mxu0 0
          %1123 = vmatpush1.bf16.msra.mxu0 0
          %1124 = vmatprep.subr.bf16.mxu0 0
          %1125 = vmatpush1.bf16.msra.mxu0 0
          %1126 = vmatprep.subr.bf16.mxu0 0
          %1127 = vmatpush1.bf16.msra.mxu0 0
          %1128 = vmatprep.subr.bf16.mxu0 0
          %1129 = vmatpush1.bf16.msra.mxu0 0
          %1130 = vmatprep.subr.bf16.mxu0 0
          %1131 = vmatpush1.bf16.msra.mxu0 0
          %1132 = vmatprep.subr.bf16.mxu0 0
          %1133 = vmatpush1.bf16.msra.mxu0 0
          %1134 = vmatprep.subr.bf16.mxu0 0
          %1135 = vmatpush1.bf16.msra.mxu0 0
          %1136 = vmatprep.subr.bf16.mxu0 0
          %1137 = vmatpush1.bf16.msra.mxu0 0
          %1138 = vmatprep.subr.bf16.mxu0 0
          %1139 = vmatpush1.bf16.msra.mxu0 0
          %1140 = vmatprep.subr.bf16.mxu0 0
          %1141 = vmatpush1.bf16.msra.mxu0 0
          %1142 = vmatprep.subr.bf16.mxu0 0
          %1143 = vmatpush1.bf16.msra.mxu0 0
          %1144 = vmatprep.subr.bf16.mxu0 0
          %1145 = vmatpush1.bf16.msra.mxu0 0
          %1146 = vmatprep.subr.bf16.mxu0 0
          %1147 = vmatpush1.bf16.msra.mxu0 0
          %1148 = vmatprep.mubr.bf16.mxu0 0
          %1149 = vmatmul.mubr.bf16.gmra.mrb[0].mxu0 %v925
          %v1150 = vpop.f32.mrb[0].mxu0
          %v1151 = vadd.f32 0.0, %v1150
          %v1152 = vpop.f32.mrb[0].mxu0
          %v1153 = vpop.f32.mrb[0].mxu0
          %v1154 = vadd.f32 0.0, %v1153
          %v1155 = vpop.f32.mrb[0].mxu0
          %1156 = vmatprep.mubr.bf16.mxu0 0
          %1157 = vmatmul.mubr.bf16.gmra.mrb[0].mxu0 %v928
          %v1158 = vpop.f32.mrb[0].mxu0
          %v1159 = vadd.f32 0.0, %v1158
          %v1160 = vpop.f32.mrb[0].mxu0
          %v1161 = vpop.f32.mrb[0].mxu0
          %v1162 = vadd.f32 0.0, %v1161
          %v1163 = vpop.f32.mrb[0].mxu0
          %1164 = vmatprep.mubr.bf16.mxu0 0
          %1165 = vmatmul.mubr.bf16.gmra.mrb[0].mxu0 %v931
          %v1166 = vpop.f32.mrb[0].mxu0
          %v1167 = vadd.f32 0.0, %v1166
          %v1168 = vpop.f32.mrb[0].mxu0
          %v1169 = vpop.f32.mrb[0].mxu0
          %v1170 = vadd.f32 0.0, %v1169
          %v1171 = vpop.f32.mrb[0].mxu0
          %1172 = vmatprep.mubr.bf16.mxu0 0
          %1173 = vmatmul.mubr.bf16.gmra.mrb[0].mxu0 %v934
          %v1174 = vpop.f32.mrb[0].mxu0
          %v1175 = vadd.f32 0.0, %v1174
          %v1176 = vpop.f32.mrb[0].mxu0
          %v1177 = vpop.f32.mrb[0].mxu0
          %v1178 = vadd.f32 0.0, %v1177
          %v1179 = vpop.f32.mrb[0].mxu0
          %1180 = vmatprep.mubr.bf16.mxu0 0
          %1181 = vmatmul.mubr.bf16.gmra.mrb[0].mxu0 %v937
          %v1182 = vpop.f32.mrb[0].mxu0
          %v1183 = vadd.f32 0.0, %v1182
          %v1184 = vpop.f32.mrb[0].mxu0
          %v1185 = vpop.f32.mrb[0].mxu0
          %v1186 = vadd.f32 0.0, %v1185
          %v1187 = vpop.f32.mrb[0].mxu0
          %1188 = vmatprep.mubr.bf16.mxu0 0
          %1189 = vmatmul.mubr.bf16.gmra.mrb[0].mxu0 %v940
          %v1190 = vpop.f32.mrb[0].mxu0
          %v1191 = vadd.f32 0.0, %v1190
          %v1192 = vpop.f32.mrb[0].mxu0
          %v1193 = vpop.f32.mrb[0].mxu0
          %v1194 = vadd.f32 0.0, %v1193
          %v1195 = vpop.f32.mrb[0].mxu0
          %1196 = vmatprep.mubr.bf16.mxu0 0
          %1197 = vmatmul.mubr.bf16.gmra.mrb[0].mxu0 %v943
          %v1198 = vpop.f32.mrb[0].mxu0
          %v1199 = vadd.f32 0.0, %v1198
          %v1200 = vpop.f32.mrb[0].mxu0
          %v1201 = vpop.f32.mrb[0].mxu0
          %v1202 = vadd.f32 0.0, %v1201
          %v1203 = vpop.f32.mrb[0].mxu0
          %1204 = vmatprep.mubr.bf16.mxu0 0
          %1205 = vmatmul.mubr.bf16.gmra.mrb[0].mxu0 %v946
          %v1206 = vpop.f32.mrb[0].mxu0
          %v1207 = vadd.f32 0.0, %v1206
          %v1208 = vpop.f32.mrb[0].mxu0
          %v1209 = vpop.f32.mrb[0].mxu0
          %v1210 = vadd.f32 0.0, %v1209
          %v1211 = vpop.f32.mrb[0].mxu0
          %1212 = vmatprep.mubr.bf16.mxu0 0
          %1213 = vmatmul.mubr.bf16.gmra.mrb[0].mxu0 %v949
          %v1214 = vpop.f32.mrb[0].mxu0
          %v1215 = vadd.f32 0.0, %v1214
          %v1216 = vpop.f32.mrb[0].mxu0
          %v1217 = vpop.f32.mrb[0].mxu0
          %v1218 = vadd.f32 0.0, %v1217
          %v1219 = vpop.f32.mrb[0].mxu0
          %1220 = vmatprep.mubr.bf16.mxu0 0
          %1221 = vmatmul.mubr.bf16.gmra.mrb[0].mxu0 %v952
          %v1222 = vpop.f32.mrb[0].mxu0
          %v1223 = vadd.f32 0.0, %v1222
          %v1224 = vpop.f32.mrb[0].mxu0
          %v1225 = vpop.f32.mrb[0].mxu0
          %v1226 = vadd.f32 0.0, %v1225
          %v1227 = vpop.f32.mrb[0].mxu0
          %1228 = vmatprep.mubr.bf16.mxu0 0
          %1229 = vmatmul.mubr.bf16.gmra.mrb[0].mxu0 %v955
          %v1230 = vpop.f32.mrb[0].mxu0
          %v1231 = vadd.f32 0.0, %v1230
          %v1232 = vpop.f32.mrb[0].mxu0
          %v1233 = vpop.f32.mrb[0].mxu0
          %v1234 = vadd.f32 0.0, %v1233
          %v1235 = vpop.f32.mrb[0].mxu0
          %1236 = vmatprep.mubr.bf16.mxu0 0
          %1237 = vmatmul.mubr.bf16.gmra.mrb[0].mxu0 %v958
          %v1238 = vpop.f32.mrb[0].mxu0
          %v1239 = vadd.f32 0.0, %v1238
          %v1240 = vpop.f32.mrb[0].mxu0
          %v1241 = vpop.f32.mrb[0].mxu0
          %v1242 = vadd.f32 0.0, %v1241
          %v1243 = vpop.f32.mrb[0].mxu0
          %1244 = vmatprep.mubr.bf16.mxu0 0
          %1245 = vmatmul.mubr.bf16.gmra.mrb[0].mxu0 %v961
          %v1246 = vpop.f32.mrb[0].mxu0
          %v1247 = vadd.f32 0.0, %v1246
          %v1248 = vpop.f32.mrb[0].mxu0
          %v1249 = vpop.f32.mrb[0].mxu0
          %v1250 = vadd.f32 0.0, %v1249
          %v1251 = vpop.f32.mrb[0].mxu0
          %1252 = vmatprep.mubr.bf16.mxu0 0
          %1253 = vmatmul.mubr.bf16.gmra.mrb[0].mxu0 %v964
          %v1254 = vpop.f32.mrb[0].mxu0
          %v1255 = vadd.f32 0.0, %v1254
          %v1256 = vpop.f32.mrb[0].mxu0
          %v1257 = vpop.f32.mrb[0].mxu0
          %v1258 = vadd.f32 0.0, %v1257
          %v1259 = vpop.f32.mrb[0].mxu0
          %1260 = vmatprep.mubr.bf16.mxu0 0
          %1261 = vmatmul.mubr.bf16.gmra.mrb[0].mxu0 %v967
          %v1262 = vpop.f32.mrb[0].mxu0
          %v1263 = vadd.f32 0.0, %v1262
          %v1264 = vpop.f32.mrb[0].mxu0
          %v1265 = vpop.f32.mrb[0].mxu0
          %v1266 = vadd.f32 0.0, %v1265
          %v1267 = vpop.f32.mrb[0].mxu0
          %1268 = vmatprep.mubr.bf16.mxu0 0
          %1269 = vmatmul.mubr.bf16.gmra.mrb[0].mxu0 %v970
          %v1270 = vpop.f32.mrb[0].mxu0
          %v1271 = vadd.f32 0.0, %v1270
          %v1272 = vpop.f32.mrb[0].mxu0
          %v1273 = vpop.f32.mrb[0].mxu0
          %v1274 = vadd.f32 0.0, %v1273
          %v1275 = vpop.f32.mrb[0].mxu0
          %1276 = vmatprep.mubr.bf16.mxu0 0
          %1277 = vmatmul.mubr.bf16.gmra.mrb[0].mxu0 %v973
          %v1278 = vpop.f32.mrb[0].mxu0
          %v1279 = vadd.f32 0.0, %v1278
          %v1280 = vpop.f32.mrb[0].mxu0
          %v1281 = vpop.f32.mrb[0].mxu0
          %v1282 = vadd.f32 0.0, %v1281
          %v1283 = vpop.f32.mrb[0].mxu0
          %1284 = vmatprep.mubr.bf16.mxu0 0
          %1285 = vmatmul.mubr.bf16.gmra.mrb[0].mxu0 %v976
          %v1286 = vpop.f32.mrb[0].mxu0
          %v1287 = vadd.f32 0.0, %v1286
          %v1288 = vpop.f32.mrb[0].mxu0
          %v1289 = vpop.f32.mrb[0].mxu0
          %v1290 = vadd.f32 0.0, %v1289
          %v1291 = vpop.f32.mrb[0].mxu0
          %1292 = vmatprep.mubr.bf16.mxu0 0
          %1293 = vmatmul.mubr.bf16.gmra.mrb[0].mxu0 %v979
          %v1294 = vpop.f32.mrb[0].mxu0
          %v1295 = vadd.f32 0.0, %v1294
          %v1296 = vpop.f32.mrb[0].mxu0
          %v1297 = vpop.f32.mrb[0].mxu0
          %v1298 = vadd.f32 0.0, %v1297
          %v1299 = vpop.f32.mrb[0].mxu0
          %1300 = vmatprep.mubr.bf16.mxu0 0
          %1301 = vmatmul.mubr.bf16.gmra.mrb[0].mxu0 %v982
          %v1302 = vpop.f32.mrb[0].mxu0
          %v1303 = vadd.f32 0.0, %v1302
          %v1304 = vpop.f32.mrb[0].mxu0
          %v1305 = vpop.f32.mrb[0].mxu0
          %v1306 = vadd.f32 0.0, %v1305
          %v1307 = vpop.f32.mrb[0].mxu0
          %1308 = vmatprep.mubr.bf16.mxu0 0
          %1309 = vmatmul.mubr.bf16.gmra.mrb[0].mxu0 %v985
          %v1310 = vpop.f32.mrb[0].mxu0
          %v1311 = vadd.f32 0.0, %v1310
          %v1312 = vpop.f32.mrb[0].mxu0
          %v1313 = vpop.f32.mrb[0].mxu0
          %v1314 = vadd.f32 0.0, %v1313
          %v1315 = vpop.f32.mrb[0].mxu0
          %1316 = vmatprep.mubr.bf16.mxu0 0
          %1317 = vmatmul.mubr.bf16.gmra.mrb[0].mxu0 %v988
          %v1318 = vpop.f32.mrb[0].mxu0
          %v1319 = vadd.f32 0.0, %v1318
          %v1320 = vpop.f32.mrb[0].mxu0
          %v1321 = vpop.f32.mrb[0].mxu0
          %v1322 = vadd.f32 0.0, %v1321
          %v1323 = vpop.f32.mrb[0].mxu0
          %1324 = vmatprep.mubr.bf16.mxu0 0
          %1325 = vmatmul.mubr.bf16.gmra.mrb[0].mxu0 %v991
          %v1326 = vpop.f32.mrb[0].mxu0
          %v1327 = vadd.f32 0.0, %v1326
          %v1328 = vpop.f32.mrb[0].mxu0
          %v1329 = vpop.f32.mrb[0].mxu0
          %v1330 = vadd.f32 0.0, %v1329
          %v1331 = vpop.f32.mrb[0].mxu0
          %1332 = vmatprep.mubr.bf16.mxu0 0
          %1333 = vmatmul.mubr.bf16.gmra.mrb[0].mxu0 %v994
          %v1334 = vpop.f32.mrb[0].mxu0
          %v1335 = vadd.f32 0.0, %v1334
          %v1336 = vpop.f32.mrb[0].mxu0
          %v1337 = vpop.f32.mrb[0].mxu0
          %v1338 = vadd.f32 0.0, %v1337
          %v1339 = vpop.f32.mrb[0].mxu0
          %1340 = vmatprep.mubr.bf16.mxu0 0
          %1341 = vmatmul.mubr.bf16.gmra.mrb[0].mxu0 %v997
          %v1342 = vpop.f32.mrb[0].mxu0
          %v1343 = vadd.f32 0.0, %v1342
          %v1344 = vpop.f32.mrb[0].mxu0
          %v1345 = vpop.f32.mrb[0].mxu0
          %v1346 = vadd.f32 0.0, %v1345
          %v1347 = vpop.f32.mrb[0].mxu0
          %1348 = vmatprep.mubr.bf16.mxu0 0
          %1349 = vmatmul.mubr.bf16.gmra.mrb[0].mxu0 %v1000
          %v1350 = vpop.f32.mrb[0].mxu0
          %v1351 = vadd.f32 0.0, %v1350
          %v1352 = vpop.f32.mrb[0].mxu0
          %v1353 = vpop.f32.mrb[0].mxu0
          %v1354 = vadd.f32 0.0, %v1353
          %v1355 = vpop.f32.mrb[0].mxu0
          %1356 = vmatprep.mubr.bf16.mxu0 0
          %1357 = vmatmul.mubr.bf16.gmra.mrb[0].mxu0 %v1003
          %v1358 = vpop.f32.mrb[0].mxu0
          %v1359 = vadd.f32 0.0, %v1358
          %v1360 = vpop.f32.mrb[0].mxu0
          %v1361 = vpop.f32.mrb[0].mxu0
          %v1362 = vadd.f32 0.0, %v1361
          %v1363 = vpop.f32.mrb[0].mxu0
          %1364 = vmatprep.mubr.bf16.mxu0 0
          %1365 = vmatmul.mubr.bf16.gmra.mrb[0].mxu0 %v1006
          %v1366 = vpop.f32.mrb[0].mxu0
          %v1367 = vadd.f32 0.0, %v1366
          %v1368 = vpop.f32.mrb[0].mxu0
          %v1369 = vpop.f32.mrb[0].mxu0
          %v1370 = vadd.f32 0.0, %v1369
          %v1371 = vpop.f32.mrb[0].mxu0
          %1372 = vmatprep.mubr.bf16.mxu0 0
          %1373 = vmatmul.mubr.bf16.gmra.mrb[0].mxu0 %v1009
          %v1374 = vpop.f32.mrb[0].mxu0
          %v1375 = vadd.f32 0.0, %v1374
          %v1376 = vpop.f32.mrb[0].mxu0
          %v1377 = vpop.f32.mrb[0].mxu0
          %v1378 = vadd.f32 0.0, %v1377
          %v1379 = vpop.f32.mrb[0].mxu0
          %1380 = vmatprep.mubr.bf16.mxu0 0
          %1381 = vmatmul.mubr.bf16.gmra.mrb[0].mxu0 %v1012
          %v1382 = vpop.f32.mrb[0].mxu0
          %v1383 = vadd.f32 0.0, %v1382
          %v1384 = vpop.f32.mrb[0].mxu0
          %v1385 = vpop.f32.mrb[0].mxu0
          %v1386 = vadd.f32 0.0, %v1385
          %v1387 = vpop.f32.mrb[0].mxu0
          %1388 = vmatprep.mubr.bf16.mxu0 0
          %1389 = vmatmul.mubr.bf16.gmra.mrb[0].mxu0 %v1015
          %v1390 = vpop.f32.mrb[0].mxu0
          %v1391 = vadd.f32 0.0, %v1390
          %v1392 = vpop.f32.mrb[0].mxu0
          %v1393 = vpop.f32.mrb[0].mxu0
          %v1394 = vadd.f32 0.0, %v1393
          %v1395 = vpop.f32.mrb[0].mxu0
          %1396 = vmatprep.mubr.bf16.mxu0 0
          %1397 = vmatmul.mubr.bf16.gmra.mrb[0].mxu0 %v1018
          %v1398 = vpop.f32.mrb[0].mxu0
          %v1399 = vadd.f32 0.0, %v1398
          %v1400 = vpop.f32.mrb[0].mxu0
          %v1401 = vpop.f32.mrb[0].mxu0
          %v1402 = vadd.f32 0.0, %v1401
          %v1403 = vpop.f32.mrb[0].mxu0
          %1404 = vmatprep.mubr.bf16.mxu0 0
          %1405 = vmatmul.mubr.bf16.gmra.mrb[0].mxu0 %v1021
          %v1406 = vpop.f32.mrb[0].mxu0
          %v1407 = vadd.f32 0.0, %v1406
          %v1408 = vpop.f32.mrb[0].mxu0
          %v1409 = vpop.f32.mrb[0].mxu0
          %v1410 = vadd.f32 0.0, %v1409
          %v1411 = vpop.f32.mrb[0].mxu0
          %1412 = vmatprep.mubr.bf16.mxu0 0
          %1413 = vmatmul.mubr.bf16.gmra.mrb[0].mxu0 %v1024
          %v1414 = vpop.f32.mrb[0].mxu0
          %v1415 = vadd.f32 0.0, %v1414
          %v1416 = vpop.f32.mrb[0].mxu0
          %v1417 = vpop.f32.mrb[0].mxu0
          %v1418 = vadd.f32 0.0, %v1417
          %v1419 = vpop.f32.mrb[0].mxu0
          %1420 = vmatprep.mubr.bf16.mxu0 0
          %1421 = vmatmul.mubr.bf16.gmra.mrb[0].mxu0 %v1027
          %v1422 = vpop.f32.mrb[0].mxu0
          %v1423 = vadd.f32 0.0, %v1422
          %v1424 = vpop.f32.mrb[0].mxu0
          %v1425 = vpop.f32.mrb[0].mxu0
          %v1426 = vadd.f32 0.0, %v1425
          %v1427 = vpop.f32.mrb[0].mxu0
          %1428 = vmatprep.mubr.bf16.mxu0 0
          %1429 = vmatmul.mubr.bf16.gmra.mrb[0].mxu0 %v1030
          %v1430 = vpop.f32.mrb[0].mxu0
          %v1431 = vadd.f32 0.0, %v1430
          %v1432 = vpop.f32.mrb[0].mxu0
          %v1433 = vpop.f32.mrb[0].mxu0
          %v1434 = vadd.f32 0.0, %v1433
          %v1435 = vpop.f32.mrb[0].mxu0
          %1436 = vmatprep.mubr.bf16.mxu0 0
          %1437 = vmatmul.mubr.bf16.gmra.mrb[0].mxu0 %v1033
          %v1438 = vpop.f32.mrb[0].mxu0
          %v1439 = vadd.f32 0.0, %v1438
          %v1440 = vpop.f32.mrb[0].mxu0
          %v1441 = vpop.f32.mrb[0].mxu0
          %v1442 = vadd.f32 0.0, %v1441
          %v1443 = vpop.f32.mrb[0].mxu0
          %1444 = vmatprep.mubr.bf16.mxu0 0
          %1445 = vmatmul.mubr.bf16.gmra.mrb[0].mxu0 %v1036
          %v1446 = vpop.f32.mrb[0].mxu0
          %v1447 = vadd.f32 0.0, %v1446
          %v1448 = vpop.f32.mrb[0].mxu0
          %v1449 = vpop.f32.mrb[0].mxu0
          %v1450 = vadd.f32 0.0, %v1449
          %v1451 = vpop.f32.mrb[0].mxu0
          %1452 = vmatprep.mubr.bf16.mxu0 0
          %1453 = vmatmul.mubr.bf16.gmra.mrb[0].mxu0 %v1039
          %v1454 = vpop.f32.mrb[0].mxu0
          %v1455 = vadd.f32 0.0, %v1454
          %v1456 = vpop.f32.mrb[0].mxu0
          %v1457 = vpop.f32.mrb[0].mxu0
          %v1458 = vadd.f32 0.0, %v1457
          %v1459 = vpop.f32.mrb[0].mxu0
          %1460 = vmatprep.mubr.bf16.mxu0 0
          %1461 = vmatmul.mubr.bf16.gmra.mrb[0].mxu0 %v1042
          %v1462 = vpop.f32.mrb[0].mxu0
          %v1463 = vadd.f32 0.0, %v1462
          %v1464 = vpop.f32.mrb[0].mxu0
          %v1465 = vpop.f32.mrb[0].mxu0
          %v1466 = vadd.f32 0.0, %v1465
          %v1467 = vpop.f32.mrb[0].mxu0
          %1468 = vmatprep.mubr.bf16.mxu0 0
          %1469 = vmatmul.mubr.bf16.gmra.mrb[0].mxu0 %v1045
          %v1470 = vpop.f32.mrb[0].mxu0
          %v1471 = vadd.f32 0.0, %v1470
          %v1472 = vpop.f32.mrb[0].mxu0
          %v1473 = vpop.f32.mrb[0].mxu0
          %v1474 = vadd.f32 0.0, %v1473
          %v1475 = vpop.f32.mrb[0].mxu0
          %1476 = vmatprep.mubr.bf16.mxu0 0
          %1477 = vmatmul.mubr.bf16.gmra.mrb[0].mxu0 %v1048
          %v1478 = vpop.f32.mrb[0].mxu0
          %v1479 = vadd.f32 0.0, %v1478
          %v1480 = vpop.f32.mrb[0].mxu0
          %v1481 = vpop.f32.mrb[0].mxu0
          %v1482 = vadd.f32 0.0, %v1481
          %v1483 = vpop.f32.mrb[0].mxu0
          %1484 = vmatprep.mubr.bf16.mxu0 0
          %1485 = vmatmul.mubr.bf16.gmra.mrb[0].mxu0 %v1051
          %v1486 = vpop.f32.mrb[0].mxu0
          %v1487 = vadd.f32 0.0, %v1486
          %v1488 = vpop.f32.mrb[0].mxu0
          %v1489 = vpop.f32.mrb[0].mxu0
          %v1490 = vadd.f32 0.0, %v1489
          %v1491 = vpop.f32.mrb[0].mxu0
          %1492 = vmatprep.mubr.bf16.mxu0 0
          %1493 = vmatmul.mubr.bf16.gmra.mrb[0].mxu0 %v1054
          %v1494 = vpop.f32.mrb[0].mxu0
          %v1495 = vadd.f32 0.0, %v1494
          %v1496 = vpop.f32.mrb[0].mxu0
          %v1497 = vpop.f32.mrb[0].mxu0
          %v1498 = vadd.f32 0.0, %v1497
          %v1499 = vpop.f32.mrb[0].mxu0
          %1500 = vmatprep.mubr.bf16.mxu0 0
          %1501 = vmatmul.mubr.bf16.gmra.mrb[0].mxu0 %v1057
          %v1502 = vpop.f32.mrb[0].mxu0
          %v1503 = vadd.f32 0.0, %v1502
          %v1504 = vpop.f32.mrb[0].mxu0
          %v1505 = vpop.f32.mrb[0].mxu0
          %v1506 = vadd.f32 0.0, %v1505
          %v1507 = vpop.f32.mrb[0].mxu0
          %1508 = vmatprep.mubr.bf16.mxu0 0
          %1509 = vmatmul.mubr.bf16.gmra.mrb[0].mxu0 %v1060
          %v1510 = vpop.f32.mrb[0].mxu0
          %v1511 = vadd.f32 0.0, %v1510
          %v1512 = vpop.f32.mrb[0].mxu0
          %v1513 = vpop.f32.mrb[0].mxu0
          %v1514 = vadd.f32 0.0, %v1513
          %v1515 = vpop.f32.mrb[0].mxu0
          %1516 = vmatprep.mubr.bf16.mxu0 0
          %1517 = vmatmul.mubr.bf16.gmra.mrb[0].mxu0 %v1063
          %v1518 = vpop.f32.mrb[0].mxu0
          %v1519 = vadd.f32 0.0, %v1518
          %v1520 = vpop.f32.mrb[0].mxu0
          %v1521 = vpop.f32.mrb[0].mxu0
          %v1522 = vadd.f32 0.0, %v1521
          %v1523 = vpop.f32.mrb[0].mxu0
          %1524 = vmatprep.mubr.bf16.mxu0 0
          %1525 = vmatmul.mubr.bf16.gmra.mrb[0].mxu0 %v1066
          %v1526 = vpop.f32.mrb[0].mxu0
          %v1527 = vadd.f32 0.0, %v1526
          %v1528 = vpop.f32.mrb[0].mxu0
          %v1529 = vpop.f32.mrb[0].mxu0
          %v1530 = vadd.f32 0.0, %v1529
          %v1531 = vpop.f32.mrb[0].mxu0
          %1532 = vmatprep.mubr.bf16.mxu0 0
          %1533 = vmatmul.mubr.bf16.gmra.mrb[0].mxu0 %v1069
          %v1534 = vpop.f32.mrb[0].mxu0
          %v1535 = vadd.f32 0.0, %v1534
          %v1536 = vpop.f32.mrb[0].mxu0
          %v1537 = vpop.f32.mrb[0].mxu0
          %v1538 = vadd.f32 0.0, %v1537
          %v1539 = vpop.f32.mrb[0].mxu0
          %1540 = vmatprep.mubr.bf16.mxu0 0
          %1541 = vmatmul.mubr.bf16.gmra.mrb[0].mxu0 %v1072
          %v1542 = vpop.f32.mrb[0].mxu0
          %v1543 = vadd.f32 0.0, %v1542
          %v1544 = vpop.f32.mrb[0].mxu0
          %v1545 = vpop.f32.mrb[0].mxu0
          %v1546 = vadd.f32 0.0, %v1545
          %v1547 = vpop.f32.mrb[0].mxu0
          %1548 = vmatprep.mubr.bf16.mxu0 0
          %1549 = vmatmul.mubr.bf16.gmra.mrb[0].mxu0 %v1075
          %v1550 = vpop.f32.mrb[0].mxu0
          %v1551 = vadd.f32 0.0, %v1550
          %v1552 = vpop.f32.mrb[0].mxu0
          %v1553 = vpop.f32.mrb[0].mxu0
          %v1554 = vadd.f32 0.0, %v1553
          %v1555 = vpop.f32.mrb[0].mxu0
          %1556 = vmatprep.mubr.bf16.mxu0 0
          %1557 = vmatmul.mubr.bf16.gmra.mrb[0].mxu0 %v1078
          %v1558 = vpop.f32.mrb[0].mxu0
          %v1559 = vadd.f32 0.0, %v1558
          %v1560 = vpop.f32.mrb[0].mxu0
          %v1561 = vpop.f32.mrb[0].mxu0
          %v1562 = vadd.f32 0.0, %v1561
          %v1563 = vpop.f32.mrb[0].mxu0
          %1564 = vmatprep.mubr.bf16.mxu0 0
          %1565 = vmatmul.mubr.bf16.gmra.mrb[0].mxu0 %v1081
          %v1566 = vpop.f32.mrb[0].mxu0
          %v1567 = vadd.f32 0.0, %v1566
          %v1568 = vpop.f32.mrb[0].mxu0
          %v1569 = vpop.f32.mrb[0].mxu0
          %v1570 = vadd.f32 0.0, %v1569
          %v1571 = vpop.f32.mrb[0].mxu0
          %1572 = vmatprep.mubr.bf16.mxu0 0
          %1573 = vmatmul.mubr.bf16.gmra.mrb[0].mxu0 %v1084
          %v1574 = vpop.f32.mrb[0].mxu0
          %v1575 = vadd.f32 0.0, %v1574
          %v1576 = vpop.f32.mrb[0].mxu0
          %v1577 = vpop.f32.mrb[0].mxu0
          %v1578 = vadd.f32 0.0, %v1577
          %v1579 = vpop.f32.mrb[0].mxu0
          %1580 = vmatprep.mubr.bf16.mxu0 0
          %1581 = vmatmul.mubr.bf16.gmra.mrb[0].mxu0 %v1087
          %v1582 = vpop.f32.mrb[0].mxu0
          %v1583 = vadd.f32 0.0, %v1582
          %v1584 = vpop.f32.mrb[0].mxu0
          %v1585 = vpop.f32.mrb[0].mxu0
          %v1586 = vadd.f32 0.0, %v1585
          %v1587 = vpop.f32.mrb[0].mxu0
          %1588 = vmatprep.mubr.bf16.mxu0 0
          %1589 = vmatmul.mubr.bf16.gmra.mrb[0].mxu0 %v1090
          %v1590 = vpop.f32.mrb[0].mxu0
          %v1591 = vadd.f32 0.0, %v1590
          %v1592 = vpop.f32.mrb[0].mxu0
          %v1593 = vpop.f32.mrb[0].mxu0
          %v1594 = vadd.f32 0.0, %v1593
          %v1595 = vpop.f32.mrb[0].mxu0
          %1596 = vmatprep.mubr.bf16.mxu0 0
          %1597 = vmatmul.mubr.bf16.gmra.mrb[0].mxu0 %v1093
          %v1598 = vpop.f32.mrb[0].mxu0
          %v1599 = vadd.f32 0.0, %v1598
          %v1600 = vpop.f32.mrb[0].mxu0
          %v1601 = vpop.f32.mrb[0].mxu0
          %v1602 = vadd.f32 0.0, %v1601
          %v1603 = vpop.f32.mrb[0].mxu0
          %1604 = vmatprep.mubr.bf16.mxu0 0
          %1605 = vmatmul.mubr.bf16.gmra.mrb[0].mxu0 %v1096
          %v1606 = vpop.f32.mrb[0].mxu0
          %v1607 = vadd.f32 0.0, %v1606
          %v1608 = vpop.f32.mrb[0].mxu0
          %v1609 = vpop.f32.mrb[0].mxu0
          %v1610 = vadd.f32 0.0, %v1609
          %v1611 = vpop.f32.mrb[0].mxu0
          %1612 = vmatprep.mubr.bf16.mxu0 0
          %1613 = vmatmul.mubr.bf16.gmra.mrb[0].mxu0 %v1099
          %v1614 = vpop.f32.mrb[0].mxu0
          %v1615 = vadd.f32 0.0, %v1614
          %v1616 = vpop.f32.mrb[0].mxu0
          %v1617 = vpop.f32.mrb[0].mxu0
          %v1618 = vadd.f32 0.0, %v1617
          %v1619 = vpop.f32.mrb[0].mxu0
          %1620 = vmatprep.mubr.bf16.mxu0 0
          %1621 = vmatmul.mubr.bf16.gmra.mrb[0].mxu0 %v1102
          %v1622 = vpop.f32.mrb[0].mxu0
          %v1623 = vadd.f32 0.0, %v1622
          %v1624 = vpop.f32.mrb[0].mxu0
          %v1625 = vpop.f32.mrb[0].mxu0
          %v1626 = vadd.f32 0.0, %v1625
          %v1627 = vpop.f32.mrb[0].mxu0
          %1628 = vmatprep.mubr.bf16.mxu0 0
          %1629 = vmatmul.mubr.bf16.gmra.mrb[0].mxu0 %v1105
          %v1630 = vpop.f32.mrb[0].mxu0
          %v1631 = vadd.f32 0.0, %v1630
          %v1632 = vpop.f32.mrb[0].mxu0
          %v1633 = vpop.f32.mrb[0].mxu0
          %v1634 = vadd.f32 0.0, %v1633
          %v1635 = vpop.f32.mrb[0].mxu0
          %1636 = vmatprep.mubr.bf16.mxu0 0
          %1637 = vmatmul.mubr.bf16.gmra.mrb[0].mxu0 %v1108
          %v1638 = vpop.f32.mrb[0].mxu0
          %v1639 = vadd.f32 0.0, %v1638
          %v1640 = vpop.f32.mrb[0].mxu0
          %v1641 = vpop.f32.mrb[0].mxu0
          %v1642 = vadd.f32 0.0, %v1641
          %v1643 = vpop.f32.mrb[0].mxu0
          %1644 = vmatprep.mubr.bf16.mxu0 0
          %1645 = vmatmul.mubr.bf16.gmra.mrb[0].mxu0 %v1111
          %v1646 = vpop.f32.mrb[0].mxu0
          %v1647 = vadd.f32 0.0, %v1646
          %v1648 = vpop.f32.mrb[0].mxu0
          %v1649 = vpop.f32.mrb[0].mxu0
          %v1650 = vadd.f32 0.0, %v1649
          %v1651 = vpop.f32.mrb[0].mxu0
          %1652 = vmatprep.mubr.bf16.mxu0 0
          %1653 = vmatmul.mubr.bf16.gmra.mrb[0].mxu0 %v1114
          %v1654 = vpop.f32.mrb[0].mxu0
          %v1655 = vadd.f32 0.0, %v1654
          %v1656 = vpop.f32.mrb[0].mxu0
          %v1657 = vpop.f32.mrb[0].mxu0
          %v1658 = vadd.f32 0.0, %v1657
          %v1659 = vpop.f32.mrb[0].mxu0
          %1660 = vdwg.mxu0
          %v1661 = vpack.c.bf16 %v1154, %v1151
          %v1662 = vpack.c.bf16 %v1162, %v1159
          %v1663 = vpack.c.bf16 %v1170, %v1167
          %v1664 = vpack.c.bf16 %v1178, %v1175
          %v1665 = vpack.c.bf16 %v1186, %v1183
          %v1666 = vpack.c.bf16 %v1194, %v1191
          %v1667 = vpack.c.bf16 %v1202, %v1199
          %v1668 = vpack.c.bf16 %v1210, %v1207
          %v1669 = vpack.c.bf16 %v1218, %v1215
          %v1670 = vpack.c.bf16 %v1226, %v1223
          %v1671 = vpack.c.bf16 %v1234, %v1231
          %v1672 = vpack.c.bf16 %v1242, %v1239
          %v1673 = vpack.c.bf16 %v1250, %v1247
          %v1674 = vpack.c.bf16 %v1258, %v1255
          %v1675 = vpack.c.bf16 %v1266, %v1263
          %v1676 = vpack.c.bf16 %v1274, %v1271
          %v1677 = vpack.c.bf16 %v1282, %v1279
          %v1678 = vpack.c.bf16 %v1290, %v1287
          %v1679 = vpack.c.bf16 %v1298, %v1295
          %v1680 = vpack.c.bf16 %v1306, %v1303
          %v1681 = vpack.c.bf16 %v1314, %v1311
          %v1682 = vpack.c.bf16 %v1322, %v1319
          %v1683 = vpack.c.bf16 %v1330, %v1327
          %v1684 = vpack.c.bf16 %v1338, %v1335
          %v1685 = vpack.c.bf16 %v1346, %v1343
          %v1686 = vpack.c.bf16 %v1354, %v1351
          %v1687 = vpack.c.bf16 %v1362, %v1359
          %v1688 = vpack.c.bf16 %v1370, %v1367
          %v1689 = vpack.c.bf16 %v1378, %v1375
          %v1690 = vpack.c.bf16 %v1386, %v1383
          %v1691 = vpack.c.bf16 %v1394, %v1391
          %v1692 = vpack.c.bf16 %v1402, %v1399
          %vm1693 = vcmask 261120
          %1694 = vst.msk [vmem:[#allocation2] sm:$0xff] %vm1693, %v1661
          %1695 = vst.msk [vmem:[#allocation2 + $0x8] sm:$0xff] %vm1693, %v1662
          %1696 = vst.msk [vmem:[#allocation2 + $0x10] sm:$0xff] %vm1693, %v1663
          %1697 = vst.msk [vmem:[#allocation2 + $0x18] sm:$0xff] %vm1693, %v1664
          %1698 = vst.msk [vmem:[#allocation2 + $0x20] sm:$0xff] %vm1693, %v1665
          %1699 = vst.msk [vmem:[#allocation2 + $0x28] sm:$0xff] %vm1693, %v1666
          %1700 = vst.msk [vmem:[#allocation2 + $0x30] sm:$0xff] %vm1693, %v1667
          %1701 = vst.msk [vmem:[#allocation2 + $0x38] sm:$0xff] %vm1693, %v1668
          %1702 = vst.msk [vmem:[#allocation2 + $0x40] sm:$0xff] %vm1693, %v1669
          %1703 = vst.msk [vmem:[#allocation2 + $0x48] sm:$0xff] %vm1693, %v1670
          %1704 = vst.msk [vmem:[#allocation2 + $0x50] sm:$0xff] %vm1693, %v1671
          %1705 = vst.msk [vmem:[#allocation2 + $0x58] sm:$0xff] %vm1693, %v1672
          %1706 = vst.msk [vmem:[#allocation2 + $0x60] sm:$0xff] %vm1693, %v1673
          %1707 = vst.msk [vmem:[#allocation2 + $0x68] sm:$0xff] %vm1693, %v1674
          %1708 = vst.msk [vmem:[#allocation2 + $0x70] sm:$0xff] %vm1693, %v1675
          %1709 = vst.msk [vmem:[#allocation2 + $0x78] sm:$0xff] %vm1693, %v1676
          %1710 = vst.msk [vmem:[#allocation2 + $0x80] sm:$0xff] %vm1693, %v1677
          %1711 = vst.msk [vmem:[#allocation2 + $0x88] sm:$0xff] %vm1693, %v1678
          %1712 = vst.msk [vmem:[#allocation2 + $0x90] sm:$0xff] %vm1693, %v1679
          %1713 = vst.msk [vmem:[#allocation2 + $0x98] sm:$0xff] %vm1693, %v1680
          %1714 = vst.msk [vmem:[#allocation2 + $0xa0] sm:$0xff] %vm1693, %v1681
          %1715 = vst.msk [vmem:[#allocation2 + $0xa8] sm:$0xff] %vm1693, %v1682
          %1716 = vst.msk [vmem:[#allocation2 + $0xb0] sm:$0xff] %vm1693, %v1683
          %1717 = vst.msk [vmem:[#allocation2 + $0xb8] sm:$0xff] %vm1693, %v1684
          %1718 = vst.msk [vmem:[#allocation2 + $0xc0] sm:$0xff] %vm1693, %v1685
          %1719 = vst.msk [vmem:[#allocation2 + $0xc8] sm:$0xff] %vm1693, %v1686
          %1720 = vst.msk [vmem:[#allocation2 + $0xd0] sm:$0xff] %vm1693, %v1687
          %1721 = vst.msk [vmem:[#allocation2 + $0xd8] sm:$0xff] %vm1693, %v1688
          %1722 = vst.msk [vmem:[#allocation2 + $0xe0] sm:$0xff] %vm1693, %v1689
          %1723 = vst.msk [vmem:[#allocation2 + $0xe8] sm:$0xff] %vm1693, %v1690
          %1724 = vst.msk [vmem:[#allocation2 + $0xf0] sm:$0xff] %vm1693, %v1691
          %1725 = vst.msk [vmem:[#allocation2 + $0xf8] sm:$0xff] %vm1693, %v1692
          %1758 = vrot.lane.b32.xlu0 %v1661, 96
          %v1759 = vpop.permute.xlu0 %1758
          %1760 = vrot.lane.b32.xlu0 %v1662, 96
          %v1761 = vpop.permute.xlu0 %1760
          %1762 = vrot.lane.b32.xlu0 %v1663, 96
          %v1763 = vpop.permute.xlu0 %1762
          %1764 = vrot.lane.b32.xlu0 %v1664, 96
          %v1765 = vpop.permute.xlu0 %1764
          %1766 = vrot.lane.b32.xlu0 %v1665, 96
          %v1767 = vpop.permute.xlu0 %1766
          %1768 = vrot.lane.b32.xlu0 %v1666, 96
          %v1769 = vpop.permute.xlu0 %1768
          %1770 = vrot.lane.b32.xlu0 %v1667, 96
          %v1771 = vpop.permute.xlu0 %1770
          %1772 = vrot.lane.b32.xlu0 %v1668, 96
          %v1773 = vpop.permute.xlu0 %1772
          %1774 = vrot.lane.b32.xlu0 %v1669, 96
          %v1775 = vpop.permute.xlu0 %1774
          %1776 = vrot.lane.b32.xlu0 %v1670, 96
          %v1777 = vpop.permute.xlu0 %1776
          %1778 = vrot.lane.b32.xlu0 %v1671, 96
          %v1779 = vpop.permute.xlu0 %1778
          %1780 = vrot.lane.b32.xlu0 %v1672, 96
          %v1781 = vpop.permute.xlu0 %1780
          %1782 = vrot.lane.b32.xlu0 %v1673, 96
          %v1783 = vpop.permute.xlu0 %1782
          %1784 = vrot.lane.b32.xlu0 %v1674, 96
          %v1785 = vpop.permute.xlu0 %1784
          %1786 = vrot.lane.b32.xlu0 %v1675, 96
          %v1787 = vpop.permute.xlu0 %1786
          %1788 = vrot.lane.b32.xlu0 %v1676, 96
          %v1789 = vpop.permute.xlu0 %1788
          %1790 = vrot.lane.b32.xlu0 %v1677, 96
          %v1791 = vpop.permute.xlu0 %1790
          %1792 = vrot.lane.b32.xlu0 %v1678, 96
          %v1793 = vpop.permute.xlu0 %1792
          %1794 = vrot.lane.b32.xlu0 %v1679, 96
          %v1795 = vpop.permute.xlu0 %1794
          %1796 = vrot.lane.b32.xlu0 %v1680, 96
          %v1797 = vpop.permute.xlu0 %1796
          %1798 = vrot.lane.b32.xlu0 %v1681, 96
          %v1799 = vpop.permute.xlu0 %1798
          %1800 = vrot.lane.b32.xlu0 %v1682, 96
          %v1801 = vpop.permute.xlu0 %1800
          %1802 = vrot.lane.b32.xlu0 %v1683, 96
          %v1803 = vpop.permute.xlu0 %1802
          %1804 = vrot.lane.b32.xlu0 %v1684, 96
          %v1805 = vpop.permute.xlu0 %1804
          %1806 = vrot.lane.b32.xlu0 %v1685, 96
          %v1807 = vpop.permute.xlu0 %1806
          %1808 = vrot.lane.b32.xlu0 %v1686, 96
          %v1809 = vpop.permute.xlu0 %1808
          %1810 = vrot.lane.b32.xlu0 %v1687, 96
          %v1811 = vpop.permute.xlu0 %1810
          %1812 = vrot.lane.b32.xlu0 %v1688, 96
          %v1813 = vpop.permute.xlu0 %1812
          %1814 = vrot.lane.b32.xlu0 %v1689, 96
          %v1815 = vpop.permute.xlu0 %1814
          %1816 = vrot.lane.b32.xlu0 %v1690, 96
          %v1817 = vpop.permute.xlu0 %1816
          %1818 = vrot.lane.b32.xlu0 %v1691, 96
          %v1819 = vpop.permute.xlu0 %1818
          %1820 = vrot.lane.b32.xlu0 %v1692, 96
          %v1821 = vpop.permute.xlu0 %1820
          %1854 = vst.msk [vmem:[#allocation2 + $0x100] sm:$0xff] %vm1693, %v1759
          %1855 = vst.msk [vmem:[#allocation2 + $0x108] sm:$0xff] %vm1693, %v1761
          %1856 = vst.msk [vmem:[#allocation2 + $0x110] sm:$0xff] %vm1693, %v1763
          %1857 = vst.msk [vmem:[#allocation2 + $0x118] sm:$0xff] %vm1693, %v1765
          %1858 = vst.msk [vmem:[#allocation2 + $0x120] sm:$0xff] %vm1693, %v1767
          %1859 = vst.msk [vmem:[#allocation2 + $0x128] sm:$0xff] %vm1693, %v1769
          %1860 = vst.msk [vmem:[#allocation2 + $0x130] sm:$0xff] %vm1693, %v1771
          %1861 = vst.msk [vmem:[#allocation2 + $0x138] sm:$0xff] %vm1693, %v1773
          %1862 = vst.msk [vmem:[#allocation2 + $0x140] sm:$0xff] %vm1693, %v1775
          %1863 = vst.msk [vmem:[#allocation2 + $0x148] sm:$0xff] %vm1693, %v1777
          %1864 = vst.msk [vmem:[#allocation2 + $0x150] sm:$0xff] %vm1693, %v1779
          %1865 = vst.msk [vmem:[#allocation2 + $0x158] sm:$0xff] %vm1693, %v1781
          %1866 = vst.msk [vmem:[#allocation2 + $0x160] sm:$0xff] %vm1693, %v1783
          %1867 = vst.msk [vmem:[#allocation2 + $0x168] sm:$0xff] %vm1693, %v1785
          %1868 = vst.msk [vmem:[#allocation2 + $0x170] sm:$0xff] %vm1693, %v1787
          %1869 = vst.msk [vmem:[#allocation2 + $0x178] sm:$0xff] %vm1693, %v1789
          %1870 = vst.msk [vmem:[#allocation2 + $0x180] sm:$0xff] %vm1693, %v1791
          %1871 = vst.msk [vmem:[#allocation2 + $0x188] sm:$0xff] %vm1693, %v1793
          %1872 = vst.msk [vmem:[#allocation2 + $0x190] sm:$0xff] %vm1693, %v1795
          %1873 = vst.msk [vmem:[#allocation2 + $0x198] sm:$0xff] %vm1693, %v1797
          %1874 = vst.msk [vmem:[#allocation2 + $0x1a0] sm:$0xff] %vm1693, %v1799
          %1875 = vst.msk [vmem:[#allocation2 + $0x1a8] sm:$0xff] %vm1693, %v1801
          %1876 = vst.msk [vmem:[#allocation2 + $0x1b0] sm:$0xff] %vm1693, %v1803
          %1877 = vst.msk [vmem:[#allocation2 + $0x1b8] sm:$0xff] %vm1693, %v1805
          %1878 = vst.msk [vmem:[#allocation2 + $0x1c0] sm:$0xff] %vm1693, %v1807
          %1879 = vst.msk [vmem:[#allocation2 + $0x1c8] sm:$0xff] %vm1693, %v1809
          %1880 = vst.msk [vmem:[#allocation2 + $0x1d0] sm:$0xff] %vm1693, %v1811
          %1881 = vst.msk [vmem:[#allocation2 + $0x1d8] sm:$0xff] %vm1693, %v1813
          %1882 = vst.msk [vmem:[#allocation2 + $0x1e0] sm:$0xff] %vm1693, %v1815
          %1883 = vst.msk [vmem:[#allocation2 + $0x1e8] sm:$0xff] %vm1693, %v1817
          %1884 = vst.msk [vmem:[#allocation2 + $0x1f0] sm:$0xff] %vm1693, %v1819
          %1885 = vst.msk [vmem:[#allocation2 + $0x1f8] sm:$0xff] %vm1693, %v1821
          %v1886 = vpack.c.bf16 %v1410, %v1407
          %v1887 = vpack.c.bf16 %v1418, %v1415
          %v1888 = vpack.c.bf16 %v1426, %v1423
          %v1889 = vpack.c.bf16 %v1434, %v1431
          %v1890 = vpack.c.bf16 %v1442, %v1439
          %v1891 = vpack.c.bf16 %v1450, %v1447
          %v1892 = vpack.c.bf16 %v1458, %v1455
          %v1893 = vpack.c.bf16 %v1466, %v1463
          %v1894 = vpack.c.bf16 %v1474, %v1471
          %v1895 = vpack.c.bf16 %v1482, %v1479
          %v1896 = vpack.c.bf16 %v1490, %v1487
          %v1897 = vpack.c.bf16 %v1498, %v1495
          %v1898 = vpack.c.bf16 %v1506, %v1503
          %v1899 = vpack.c.bf16 %v1514, %v1511
          %v1900 = vpack.c.bf16 %v1522, %v1519
          %v1901 = vpack.c.bf16 %v1530, %v1527
          %v1902 = vpack.c.bf16 %v1538, %v1535
          %v1903 = vpack.c.bf16 %v1546, %v1543
          %v1904 = vpack.c.bf16 %v1554, %v1551
          %v1905 = vpack.c.bf16 %v1562, %v1559
          %v1906 = vpack.c.bf16 %v1570, %v1567
          %v1907 = vpack.c.bf16 %v1578, %v1575
          %v1908 = vpack.c.bf16 %v1586, %v1583
          %v1909 = vpack.c.bf16 %v1594, %v1591
          %v1910 = vpack.c.bf16 %v1602, %v1599
          %v1911 = vpack.c.bf16 %v1610, %v1607
          %v1912 = vpack.c.bf16 %v1618, %v1615
          %v1913 = vpack.c.bf16 %v1626, %v1623
          %v1914 = vpack.c.bf16 %v1634, %v1631
          %v1915 = vpack.c.bf16 %v1642, %v1639
          %v1916 = vpack.c.bf16 %v1650, %v1647
          %v1917 = vpack.c.bf16 %v1658, %v1655
          %s1918 = scalar_lea.vmem [#allocation2], 512
          %1919 = vst.msk [vmem:[%s1918] sm:$0xff] %vm1693, %v1886
          %1920 = vst.msk [vmem:[%s1918 + $0x8] sm:$0xff] %vm1693, %v1887
          %1921 = vst.msk [vmem:[%s1918 + $0x10] sm:$0xff] %vm1693, %v1888
          %1922 = vst.msk [vmem:[%s1918 + $0x18] sm:$0xff] %vm1693, %v1889
          %1923 = vst.msk [vmem:[%s1918 + $0x20] sm:$0xff] %vm1693, %v1890
          %1924 = vst.msk [vmem:[%s1918 + $0x28] sm:$0xff] %vm1693, %v1891
          %1925 = vst.msk [vmem:[%s1918 + $0x30] sm:$0xff] %vm1693, %v1892
          %1926 = vst.msk [vmem:[%s1918 + $0x38] sm:$0xff] %vm1693, %v1893
          %1927 = vst.msk [vmem:[%s1918 + $0x40] sm:$0xff] %vm1693, %v1894
          %1928 = vst.msk [vmem:[%s1918 + $0x48] sm:$0xff] %vm1693, %v1895
          %1929 = vst.msk [vmem:[%s1918 + $0x50] sm:$0xff] %vm1693, %v1896
          %1930 = vst.msk [vmem:[%s1918 + $0x58] sm:$0xff] %vm1693, %v1897
          %1931 = vst.msk [vmem:[%s1918 + $0x60] sm:$0xff] %vm1693, %v1898
          %1932 = vst.msk [vmem:[%s1918 + $0x68] sm:$0xff] %vm1693, %v1899
          %1933 = vst.msk [vmem:[%s1918 + $0x70] sm:$0xff] %vm1693, %v1900
          %1934 = vst.msk [vmem:[%s1918 + $0x78] sm:$0xff] %vm1693, %v1901
          %1935 = vst.msk [vmem:[%s1918 + $0x80] sm:$0xff] %vm1693, %v1902
          %1936 = vst.msk [vmem:[%s1918 + $0x88] sm:$0xff] %vm1693, %v1903
          %1937 = vst.msk [vmem:[%s1918 + $0x90] sm:$0xff] %vm1693, %v1904
          %1938 = vst.msk [vmem:[%s1918 + $0x98] sm:$0xff] %vm1693, %v1905
          %1939 = vst.msk [vmem:[%s1918 + $0xa0] sm:$0xff] %vm1693, %v1906
          %1940 = vst.msk [vmem:[%s1918 + $0xa8] sm:$0xff] %vm1693, %v1907
          %1941 = vst.msk [vmem:[%s1918 + $0xb0] sm:$0xff] %vm1693, %v1908
          %1942 = vst.msk [vmem:[%s1918 + $0xb8] sm:$0xff] %vm1693, %v1909
          %1943 = vst.msk [vmem:[%s1918 + $0xc0] sm:$0xff] %vm1693, %v1910
          %1944 = vst.msk [vmem:[%s1918 + $0xc8] sm:$0xff] %vm1693, %v1911
          %1945 = vst.msk [vmem:[%s1918 + $0xd0] sm:$0xff] %vm1693, %v1912
          %1946 = vst.msk [vmem:[%s1918 + $0xd8] sm:$0xff] %vm1693, %v1913
          %1947 = vst.msk [vmem:[%s1918 + $0xe0] sm:$0xff] %vm1693, %v1914
          %1948 = vst.msk [vmem:[%s1918 + $0xe8] sm:$0xff] %vm1693, %v1915
          %1949 = vst.msk [vmem:[%s1918 + $0xf0] sm:$0xff] %vm1693, %v1916
          %1950 = vst.msk [vmem:[%s1918 + $0xf8] sm:$0xff] %vm1693, %v1917
          %1983 = vrot.lane.b32.xlu0 %v1886, 96
          %v1984 = vpop.permute.xlu0 %1983
          %1985 = vrot.lane.b32.xlu0 %v1887, 96
          %v1986 = vpop.permute.xlu0 %1985
          %1987 = vrot.lane.b32.xlu0 %v1888, 96
          %v1988 = vpop.permute.xlu0 %1987
          %1989 = vrot.lane.b32.xlu0 %v1889, 96
          %v1990 = vpop.permute.xlu0 %1989
          %1991 = vrot.lane.b32.xlu0 %v1890, 96
          %v1992 = vpop.permute.xlu0 %1991
          %1993 = vrot.lane.b32.xlu0 %v1891, 96
          %v1994 = vpop.permute.xlu0 %1993
          %1995 = vrot.lane.b32.xlu0 %v1892, 96
          %v1996 = vpop.permute.xlu0 %1995
          %1997 = vrot.lane.b32.xlu0 %v1893, 96
          %v1998 = vpop.permute.xlu0 %1997
          %1999 = vrot.lane.b32.xlu0 %v1894, 96
          %v2000 = vpop.permute.xlu0 %1999
          %2001 = vrot.lane.b32.xlu0 %v1895, 96
          %v2002 = vpop.permute.xlu0 %2001
          %2003 = vrot.lane.b32.xlu0 %v1896, 96
          %v2004 = vpop.permute.xlu0 %2003
          %2005 = vrot.lane.b32.xlu0 %v1897, 96
          %v2006 = vpop.permute.xlu0 %2005
          %2007 = vrot.lane.b32.xlu0 %v1898, 96
          %v2008 = vpop.permute.xlu0 %2007
          %2009 = vrot.lane.b32.xlu0 %v1899, 96
          %v2010 = vpop.permute.xlu0 %2009
          %2011 = vrot.lane.b32.xlu0 %v1900, 96
          %v2012 = vpop.permute.xlu0 %2011
          %2013 = vrot.lane.b32.xlu0 %v1901, 96
          %v2014 = vpop.permute.xlu0 %2013
          %2015 = vrot.lane.b32.xlu0 %v1902, 96
          %v2016 = vpop.permute.xlu0 %2015
          %2017 = vrot.lane.b32.xlu0 %v1903, 96
          %v2018 = vpop.permute.xlu0 %2017
          %2019 = vrot.lane.b32.xlu0 %v1904, 96
          %v2020 = vpop.permute.xlu0 %2019
          %2021 = vrot.lane.b32.xlu0 %v1905, 96
          %v2022 = vpop.permute.xlu0 %2021
          %2023 = vrot.lane.b32.xlu0 %v1906, 96
          %v2024 = vpop.permute.xlu0 %2023
          %2025 = vrot.lane.b32.xlu0 %v1907, 96
          %v2026 = vpop.permute.xlu0 %2025
          %2027 = vrot.lane.b32.xlu0 %v1908, 96
          %v2028 = vpop.permute.xlu0 %2027
          %2029 = vrot.lane.b32.xlu0 %v1909, 96
          %v2030 = vpop.permute.xlu0 %2029
          %2031 = vrot.lane.b32.xlu0 %v1910, 96
          %v2032 = vpop.permute.xlu0 %2031
          %2033 = vrot.lane.b32.xlu0 %v1911, 96
          %v2034 = vpop.permute.xlu0 %2033
          %2035 = vrot.lane.b32.xlu0 %v1912, 96
          %v2036 = vpop.permute.xlu0 %2035
          %2037 = vrot.lane.b32.xlu0 %v1913, 96
          %v2038 = vpop.permute.xlu0 %2037
          %2039 = vrot.lane.b32.xlu0 %v1914, 96
          %v2040 = vpop.permute.xlu0 %2039
          %2041 = vrot.lane.b32.xlu0 %v1915, 96
          %v2042 = vpop.permute.xlu0 %2041
          %2043 = vrot.lane.b32.xlu0 %v1916, 96
          %v2044 = vpop.permute.xlu0 %2043
          %2045 = vrot.lane.b32.xlu0 %v1917, 96
          %v2046 = vpop.permute.xlu0 %2045
          %2079 = vst.msk [vmem:[%s1918 + $0x100] sm:$0xff] %vm1693, %v1984
          %2080 = vst.msk [vmem:[%s1918 + $0x108] sm:$0xff] %vm1693, %v1986
          %2081 = vst.msk [vmem:[%s1918 + $0x110] sm:$0xff] %vm1693, %v1988
          %2082 = vst.msk [vmem:[%s1918 + $0x118] sm:$0xff] %vm1693, %v1990
          %2083 = vst.msk [vmem:[%s1918 + $0x120] sm:$0xff] %vm1693, %v1992
          %2084 = vst.msk [vmem:[%s1918 + $0x128] sm:$0xff] %vm1693, %v1994
          %2085 = vst.msk [vmem:[%s1918 + $0x130] sm:$0xff] %vm1693, %v1996
          %2086 = vst.msk [vmem:[%s1918 + $0x138] sm:$0xff] %vm1693, %v1998
          %2087 = vst.msk [vmem:[%s1918 + $0x140] sm:$0xff] %vm1693, %v2000
          %2088 = vst.msk [vmem:[%s1918 + $0x148] sm:$0xff] %vm1693, %v2002
          %2089 = vst.msk [vmem:[%s1918 + $0x150] sm:$0xff] %vm1693, %v2004
          %2090 = vst.msk [vmem:[%s1918 + $0x158] sm:$0xff] %vm1693, %v2006
          %2091 = vst.msk [vmem:[%s1918 + $0x160] sm:$0xff] %vm1693, %v2008
          %2092 = vst.msk [vmem:[%s1918 + $0x168] sm:$0xff] %vm1693, %v2010
          %2093 = vst.msk [vmem:[%s1918 + $0x170] sm:$0xff] %vm1693, %v2012
          %2094 = vst.msk [vmem:[%s1918 + $0x178] sm:$0xff] %vm1693, %v2014
          %2095 = vst.msk [vmem:[%s1918 + $0x180] sm:$0xff] %vm1693, %v2016
          %2096 = vst.msk [vmem:[%s1918 + $0x188] sm:$0xff] %vm1693, %v2018
          %2097 = vst.msk [vmem:[%s1918 + $0x190] sm:$0xff] %vm1693, %v2020
          %2098 = vst.msk [vmem:[%s1918 + $0x198] sm:$0xff] %vm1693, %v2022
          %2099 = vst.msk [vmem:[%s1918 + $0x1a0] sm:$0xff] %vm1693, %v2024
          %2100 = vst.msk [vmem:[%s1918 + $0x1a8] sm:$0xff] %vm1693, %v2026
          %2101 = vst.msk [vmem:[%s1918 + $0x1b0] sm:$0xff] %vm1693, %v2028
          %2102 = vst.msk [vmem:[%s1918 + $0x1b8] sm:$0xff] %vm1693, %v2030
          %2103 = vst.msk [vmem:[%s1918 + $0x1c0] sm:$0xff] %vm1693, %v2032
          %2104 = vst.msk [vmem:[%s1918 + $0x1c8] sm:$0xff] %vm1693, %v2034
          %2105 = vst.msk [vmem:[%s1918 + $0x1d0] sm:$0xff] %vm1693, %v2036
          %2106 = vst.msk [vmem:[%s1918 + $0x1d8] sm:$0xff] %vm1693, %v2038
          %2107 = vst.msk [vmem:[%s1918 + $0x1e0] sm:$0xff] %vm1693, %v2040
          %2108 = vst.msk [vmem:[%s1918 + $0x1e8] sm:$0xff] %vm1693, %v2042
          %2109 = vst.msk [vmem:[%s1918 + $0x1f0] sm:$0xff] %vm1693, %v2044
          %2110 = vst.msk [vmem:[%s1918 + $0x1f8] sm:$0xff] %vm1693, %v2046
          %2111 = vrot.lane.b32.xlu0 %v1661, 64
          %v2112 = vpop.permute.xlu0 %2111
          %2113 = vrot.lane.b32.xlu0 %v1662, 64
          %v2114 = vpop.permute.xlu0 %2113
          %2115 = vrot.lane.b32.xlu0 %v1663, 64
          %v2116 = vpop.permute.xlu0 %2115
          %2117 = vrot.lane.b32.xlu0 %v1664, 64
          %v2118 = vpop.permute.xlu0 %2117
          %2119 = vrot.lane.b32.xlu0 %v1665, 64
          %v2120 = vpop.permute.xlu0 %2119
          %2121 = vrot.lane.b32.xlu0 %v1666, 64
          %v2122 = vpop.permute.xlu0 %2121
          %2123 = vrot.lane.b32.xlu0 %v1667, 64
          %v2124 = vpop.permute.xlu0 %2123
          %2125 = vrot.lane.b32.xlu0 %v1668, 64
          %v2126 = vpop.permute.xlu0 %2125
          %2127 = vrot.lane.b32.xlu0 %v1669, 64
          %v2128 = vpop.permute.xlu0 %2127
          %2129 = vrot.lane.b32.xlu0 %v1670, 64
          %v2130 = vpop.permute.xlu0 %2129
          %2131 = vrot.lane.b32.xlu0 %v1671, 64
          %v2132 = vpop.permute.xlu0 %2131
          %2133 = vrot.lane.b32.xlu0 %v1672, 64
          %v2134 = vpop.permute.xlu0 %2133
          %2135 = vrot.lane.b32.xlu0 %v1673, 64
          %v2136 = vpop.permute.xlu0 %2135
          %2137 = vrot.lane.b32.xlu0 %v1674, 64
          %v2138 = vpop.permute.xlu0 %2137
          %2139 = vrot.lane.b32.xlu0 %v1675, 64
          %v2140 = vpop.permute.xlu0 %2139
          %2141 = vrot.lane.b32.xlu0 %v1676, 64
          %v2142 = vpop.permute.xlu0 %2141
          %2143 = vrot.lane.b32.xlu0 %v1677, 64
          %v2144 = vpop.permute.xlu0 %2143
          %2145 = vrot.lane.b32.xlu0 %v1678, 64
          %v2146 = vpop.permute.xlu0 %2145
          %2147 = vrot.lane.b32.xlu0 %v1679, 64
          %v2148 = vpop.permute.xlu0 %2147
          %2149 = vrot.lane.b32.xlu0 %v1680, 64
          %v2150 = vpop.permute.xlu0 %2149
          %2151 = vrot.lane.b32.xlu0 %v1681, 64
          %v2152 = vpop.permute.xlu0 %2151
          %2153 = vrot.lane.b32.xlu0 %v1682, 64
          %v2154 = vpop.permute.xlu0 %2153
          %2155 = vrot.lane.b32.xlu0 %v1683, 64
          %v2156 = vpop.permute.xlu0 %2155
          %2157 = vrot.lane.b32.xlu0 %v1684, 64
          %v2158 = vpop.permute.xlu0 %2157
          %2159 = vrot.lane.b32.xlu0 %v1685, 64
          %v2160 = vpop.permute.xlu0 %2159
          %2161 = vrot.lane.b32.xlu0 %v1686, 64
          %v2162 = vpop.permute.xlu0 %2161
          %2163 = vrot.lane.b32.xlu0 %v1687, 64
          %v2164 = vpop.permute.xlu0 %2163
          %2165 = vrot.lane.b32.xlu0 %v1688, 64
          %v2166 = vpop.permute.xlu0 %2165
          %2167 = vrot.lane.b32.xlu0 %v1689, 64
          %v2168 = vpop.permute.xlu0 %2167
          %2169 = vrot.lane.b32.xlu0 %v1690, 64
          %v2170 = vpop.permute.xlu0 %2169
          %2171 = vrot.lane.b32.xlu0 %v1691, 64
          %v2172 = vpop.permute.xlu0 %2171
          %2173 = vrot.lane.b32.xlu0 %v1692, 64
          %v2174 = vpop.permute.xlu0 %2173
          %2175 = vrot.lane.b32.xlu0 %v1886, 64
          %v2176 = vpop.permute.xlu0 %2175
          %2177 = vrot.lane.b32.xlu0 %v1887, 64
          %v2178 = vpop.permute.xlu0 %2177
          %2179 = vrot.lane.b32.xlu0 %v1888, 64
          %v2180 = vpop.permute.xlu0 %2179
          %2181 = vrot.lane.b32.xlu0 %v1889, 64
          %v2182 = vpop.permute.xlu0 %2181
          %2183 = vrot.lane.b32.xlu0 %v1890, 64
          %v2184 = vpop.permute.xlu0 %2183
          %2185 = vrot.lane.b32.xlu0 %v1891, 64
          %v2186 = vpop.permute.xlu0 %2185
          %2187 = vrot.lane.b32.xlu0 %v1892, 64
          %v2188 = vpop.permute.xlu0 %2187
          %2189 = vrot.lane.b32.xlu0 %v1893, 64
          %v2190 = vpop.permute.xlu0 %2189
          %2191 = vrot.lane.b32.xlu0 %v1894, 64
          %v2192 = vpop.permute.xlu0 %2191
          %2193 = vrot.lane.b32.xlu0 %v1895, 64
          %v2194 = vpop.permute.xlu0 %2193
          %2195 = vrot.lane.b32.xlu0 %v1896, 64
          %v2196 = vpop.permute.xlu0 %2195
          %2197 = vrot.lane.b32.xlu0 %v1897, 64
          %v2198 = vpop.permute.xlu0 %2197
          %2199 = vrot.lane.b32.xlu0 %v1898, 64
          %v2200 = vpop.permute.xlu0 %2199
          %2201 = vrot.lane.b32.xlu0 %v1899, 64
          %v2202 = vpop.permute.xlu0 %2201
          %2203 = vrot.lane.b32.xlu0 %v1900, 64
          %v2204 = vpop.permute.xlu0 %2203
          %2205 = vrot.lane.b32.xlu0 %v1901, 64
          %v2206 = vpop.permute.xlu0 %2205
          %2207 = vrot.lane.b32.xlu0 %v1902, 64
          %v2208 = vpop.permute.xlu0 %2207
          %2209 = vrot.lane.b32.xlu0 %v1903, 64
          %v2210 = vpop.permute.xlu0 %2209
          %2211 = vrot.lane.b32.xlu0 %v1904, 64
          %v2212 = vpop.permute.xlu0 %2211
          %2213 = vrot.lane.b32.xlu0 %v1905, 64
          %v2214 = vpop.permute.xlu0 %2213
          %2215 = vrot.lane.b32.xlu0 %v1906, 64
          %v2216 = vpop.permute.xlu0 %2215
          %2217 = vrot.lane.b32.xlu0 %v1907, 64
          %v2218 = vpop.permute.xlu0 %2217
          %2219 = vrot.lane.b32.xlu0 %v1908, 64
          %v2220 = vpop.permute.xlu0 %2219
          %2221 = vrot.lane.b32.xlu0 %v1909, 64
          %v2222 = vpop.permute.xlu0 %2221
          %2223 = vrot.lane.b32.xlu0 %v1910, 64
          %v2224 = vpop.permute.xlu0 %2223
          %2225 = vrot.lane.b32.xlu0 %v1911, 64
          %v2226 = vpop.permute.xlu0 %2225
          %2227 = vrot.lane.b32.xlu0 %v1912, 64
          %v2228 = vpop.permute.xlu0 %2227
          %2229 = vrot.lane.b32.xlu0 %v1913, 64
          %v2230 = vpop.permute.xlu0 %2229
          %2231 = vrot.lane.b32.xlu0 %v1914, 64
          %v2232 = vpop.permute.xlu0 %2231
          %2233 = vrot.lane.b32.xlu0 %v1915, 64
          %v2234 = vpop.permute.xlu0 %2233
          %2235 = vrot.lane.b32.xlu0 %v1916, 64
          %v2236 = vpop.permute.xlu0 %2235
          %2237 = vrot.lane.b32.xlu0 %v1917, 64
          %v2238 = vpop.permute.xlu0 %2237
          %2303 = vst.msk [vmem:[#allocation3] sm:$0xff] %vm1693, %v2112
          %2304 = vst.msk [vmem:[#allocation3 + $0x8] sm:$0xff] %vm1693, %v2114
          %2305 = vst.msk [vmem:[#allocation3 + $0x10] sm:$0xff] %vm1693, %v2116
          %2306 = vst.msk [vmem:[#allocation3 + $0x18] sm:$0xff] %vm1693, %v2118
          %2307 = vst.msk [vmem:[#allocation3 + $0x20] sm:$0xff] %vm1693, %v2120
          %2308 = vst.msk [vmem:[#allocation3 + $0x28] sm:$0xff] %vm1693, %v2122
          %2309 = vst.msk [vmem:[#allocation3 + $0x30] sm:$0xff] %vm1693, %v2124
          %2310 = vst.msk [vmem:[#allocation3 + $0x38] sm:$0xff] %vm1693, %v2126
          %2311 = vst.msk [vmem:[#allocation3 + $0x40] sm:$0xff] %vm1693, %v2128
          %2312 = vst.msk [vmem:[#allocation3 + $0x48] sm:$0xff] %vm1693, %v2130
          %2313 = vst.msk [vmem:[#allocation3 + $0x50] sm:$0xff] %vm1693, %v2132
          %2314 = vst.msk [vmem:[#allocation3 + $0x58] sm:$0xff] %vm1693, %v2134
          %2315 = vst.msk [vmem:[#allocation3 + $0x60] sm:$0xff] %vm1693, %v2136
          %2316 = vst.msk [vmem:[#allocation3 + $0x68] sm:$0xff] %vm1693, %v2138
          %2317 = vst.msk [vmem:[#allocation3 + $0x70] sm:$0xff] %vm1693, %v2140
          %2318 = vst.msk [vmem:[#allocation3 + $0x78] sm:$0xff] %vm1693, %v2142
          %2319 = vst.msk [vmem:[#allocation3 + $0x80] sm:$0xff] %vm1693, %v2144
          %2320 = vst.msk [vmem:[#allocation3 + $0x88] sm:$0xff] %vm1693, %v2146
          %2321 = vst.msk [vmem:[#allocation3 + $0x90] sm:$0xff] %vm1693, %v2148
          %2322 = vst.msk [vmem:[#allocation3 + $0x98] sm:$0xff] %vm1693, %v2150
          %2323 = vst.msk [vmem:[#allocation3 + $0xa0] sm:$0xff] %vm1693, %v2152
          %2324 = vst.msk [vmem:[#allocation3 + $0xa8] sm:$0xff] %vm1693, %v2154
          %2325 = vst.msk [vmem:[#allocation3 + $0xb0] sm:$0xff] %vm1693, %v2156
          %2326 = vst.msk [vmem:[#allocation3 + $0xb8] sm:$0xff] %vm1693, %v2158
          %2327 = vst.msk [vmem:[#allocation3 + $0xc0] sm:$0xff] %vm1693, %v2160
          %2328 = vst.msk [vmem:[#allocation3 + $0xc8] sm:$0xff] %vm1693, %v2162
          %2329 = vst.msk [vmem:[#allocation3 + $0xd0] sm:$0xff] %vm1693, %v2164
          %2330 = vst.msk [vmem:[#allocation3 + $0xd8] sm:$0xff] %vm1693, %v2166
          %2331 = vst.msk [vmem:[#allocation3 + $0xe0] sm:$0xff] %vm1693, %v2168
          %2332 = vst.msk [vmem:[#allocation3 + $0xe8] sm:$0xff] %vm1693, %v2170
          %2333 = vst.msk [vmem:[#allocation3 + $0xf0] sm:$0xff] %vm1693, %v2172
          %2334 = vst.msk [vmem:[#allocation3 + $0xf8] sm:$0xff] %vm1693, %v2174
          %2335 = vst.msk [vmem:[#allocation3 + $0x100] sm:$0xff] %vm1693, %v2176
          %2336 = vst.msk [vmem:[#allocation3 + $0x108] sm:$0xff] %vm1693, %v2178
          %2337 = vst.msk [vmem:[#allocation3 + $0x110] sm:$0xff] %vm1693, %v2180
          %2338 = vst.msk [vmem:[#allocation3 + $0x118] sm:$0xff] %vm1693, %v2182
          %2339 = vst.msk [vmem:[#allocation3 + $0x120] sm:$0xff] %vm1693, %v2184
          %2340 = vst.msk [vmem:[#allocation3 + $0x128] sm:$0xff] %vm1693, %v2186
          %2341 = vst.msk [vmem:[#allocation3 + $0x130] sm:$0xff] %vm1693, %v2188
          %2342 = vst.msk [vmem:[#allocation3 + $0x138] sm:$0xff] %vm1693, %v2190
          %2343 = vst.msk [vmem:[#allocation3 + $0x140] sm:$0xff] %vm1693, %v2192
          %2344 = vst.msk [vmem:[#allocation3 + $0x148] sm:$0xff] %vm1693, %v2194
          %2345 = vst.msk [vmem:[#allocation3 + $0x150] sm:$0xff] %vm1693, %v2196
          %2346 = vst.msk [vmem:[#allocation3 + $0x158] sm:$0xff] %vm1693, %v2198
          %2347 = vst.msk [vmem:[#allocation3 + $0x160] sm:$0xff] %vm1693, %v2200
          %2348 = vst.msk [vmem:[#allocation3 + $0x168] sm:$0xff] %vm1693, %v2202
          %2349 = vst.msk [vmem:[#allocation3 + $0x170] sm:$0xff] %vm1693, %v2204
          %2350 = vst.msk [vmem:[#allocation3 + $0x178] sm:$0xff] %vm1693, %v2206
          %2351 = vst.msk [vmem:[#allocation3 + $0x180] sm:$0xff] %vm1693, %v2208
          %2352 = vst.msk [vmem:[#allocation3 + $0x188] sm:$0xff] %vm1693, %v2210
          %2353 = vst.msk [vmem:[#allocation3 + $0x190] sm:$0xff] %vm1693, %v2212
          %2354 = vst.msk [vmem:[#allocation3 + $0x198] sm:$0xff] %vm1693, %v2214
          %2355 = vst.msk [vmem:[#allocation3 + $0x1a0] sm:$0xff] %vm1693, %v2216
          %2356 = vst.msk [vmem:[#allocation3 + $0x1a8] sm:$0xff] %vm1693, %v2218
          %2357 = vst.msk [vmem:[#allocation3 + $0x1b0] sm:$0xff] %vm1693, %v2220
          %2358 = vst.msk [vmem:[#allocation3 + $0x1b8] sm:$0xff] %vm1693, %v2222
          %2359 = vst.msk [vmem:[#allocation3 + $0x1c0] sm:$0xff] %vm1693, %v2224
          %2360 = vst.msk [vmem:[#allocation3 + $0x1c8] sm:$0xff] %vm1693, %v2226
          %2361 = vst.msk [vmem:[#allocation3 + $0x1d0] sm:$0xff] %vm1693, %v2228
          %2362 = vst.msk [vmem:[#allocation3 + $0x1d8] sm:$0xff] %vm1693, %v2230
          %2363 = vst.msk [vmem:[#allocation3 + $0x1e0] sm:$0xff] %vm1693, %v2232
          %2364 = vst.msk [vmem:[#allocation3 + $0x1e8] sm:$0xff] %vm1693, %v2234
          %2365 = vst.msk [vmem:[#allocation3 + $0x1f0] sm:$0xff] %vm1693, %v2236
          %2366 = vst.msk [vmem:[#allocation3 + $0x1f8] sm:$0xff] %vm1693, %v2238
          %2367 = vst.msk [vmem:[#allocation4] sm:$0xff] %vm1693, 0.0
          %2368 = vst.msk [vmem:[#allocation4 + $0x8] sm:$0xff] %vm1693, 0.0
          %2369 = vst.msk [vmem:[#allocation4 + $0x10] sm:$0xff] %vm1693, 0.0
          %2370 = vst.msk [vmem:[#allocation4 + $0x18] sm:$0xff] %vm1693, 0.0
          %2371 = vst.msk [vmem:[#allocation4 + $0x20] sm:$0xff] %vm1693, 0.0
          %2372 = vst.msk [vmem:[#allocation4 + $0x28] sm:$0xff] %vm1693, 0.0
          %2373 = vst.msk [vmem:[#allocation4 + $0x30] sm:$0xff] %vm1693, 0.0
          %2374 = vst.msk [vmem:[#allocation4 + $0x38] sm:$0xff] %vm1693, 0.0
          %2375 = vst.msk [vmem:[#allocation4 + $0x40] sm:$0xff] %vm1693, 0.0
          %2376 = vst.msk [vmem:[#allocation4 + $0x48] sm:$0xff] %vm1693, 0.0
          %2377 = vst.msk [vmem:[#allocation4 + $0x50] sm:$0xff] %vm1693, 0.0
          %2378 = vst.msk [vmem:[#allocation4 + $0x58] sm:$0xff] %vm1693, 0.0
          %2379 = vst.msk [vmem:[#allocation4 + $0x60] sm:$0xff] %vm1693, 0.0
          %2380 = vst.msk [vmem:[#allocation4 + $0x68] sm:$0xff] %vm1693, 0.0
          %2381 = vst.msk [vmem:[#allocation4 + $0x70] sm:$0xff] %vm1693, 0.0
          %2382 = vst.msk [vmem:[#allocation4 + $0x78] sm:$0xff] %vm1693, 0.0
          %2383 = vst.msk [vmem:[#allocation4 + $0x80] sm:$0xff] %vm1693, 0.0
          %2384 = vst.msk [vmem:[#allocation4 + $0x88] sm:$0xff] %vm1693, 0.0
          %2385 = vst.msk [vmem:[#allocation4 + $0x90] sm:$0xff] %vm1693, 0.0
          %2386 = vst.msk [vmem:[#allocation4 + $0x98] sm:$0xff] %vm1693, 0.0
          %2387 = vst.msk [vmem:[#allocation4 + $0xa0] sm:$0xff] %vm1693, 0.0
          %2388 = vst.msk [vmem:[#allocation4 + $0xa8] sm:$0xff] %vm1693, 0.0
          %2389 = vst.msk [vmem:[#allocation4 + $0xb0] sm:$0xff] %vm1693, 0.0
          %2390 = vst.msk [vmem:[#allocation4 + $0xb8] sm:$0xff] %vm1693, 0.0
          %2391 = vst.msk [vmem:[#allocation4 + $0xc0] sm:$0xff] %vm1693, 0.0
          %2392 = vst.msk [vmem:[#allocation4 + $0xc8] sm:$0xff] %vm1693, 0.0
          %2393 = vst.msk [vmem:[#allocation4 + $0xd0] sm:$0xff] %vm1693, 0.0
          %2394 = vst.msk [vmem:[#allocation4 + $0xd8] sm:$0xff] %vm1693, 0.0
          %2395 = vst.msk [vmem:[#allocation4 + $0xe0] sm:$0xff] %vm1693, 0.0
          %2396 = vst.msk [vmem:[#allocation4 + $0xe8] sm:$0xff] %vm1693, 0.0
          %2397 = vst.msk [vmem:[#allocation4 + $0xf0] sm:$0xff] %vm1693, 0.0
          %2398 = vst.msk [vmem:[#allocation4 + $0xf8] sm:$0xff] %vm1693, 0.0
          %2399 = vst.msk [vmem:[#allocation4 + $0x100] sm:$0xff] %vm1693, 0.0
          %2400 = vst.msk [vmem:[#allocation4 + $0x108] sm:$0xff] %vm1693, 0.0
          %2401 = vst.msk [vmem:[#allocation4 + $0x110] sm:$0xff] %vm1693, 0.0
          %2402 = vst.msk [vmem:[#allocation4 + $0x118] sm:$0xff] %vm1693, 0.0
          %2403 = vst.msk [vmem:[#allocation4 + $0x120] sm:$0xff] %vm1693, 0.0
          %2404 = vst.msk [vmem:[#allocation4 + $0x128] sm:$0xff] %vm1693, 0.0
          %2405 = vst.msk [vmem:[#allocation4 + $0x130] sm:$0xff] %vm1693, 0.0
          %2406 = vst.msk [vmem:[#allocation4 + $0x138] sm:$0xff] %vm1693, 0.0
          %2407 = vst.msk [vmem:[#allocation4 + $0x140] sm:$0xff] %vm1693, 0.0
          %2408 = vst.msk [vmem:[#allocation4 + $0x148] sm:$0xff] %vm1693, 0.0
          %2409 = vst.msk [vmem:[#allocation4 + $0x150] sm:$0xff] %vm1693, 0.0
          %2410 = vst.msk [vmem:[#allocation4 + $0x158] sm:$0xff] %vm1693, 0.0
          %2411 = vst.msk [vmem:[#allocation4 + $0x160] sm:$0xff] %vm1693, 0.0
          %2412 = vst.msk [vmem:[#allocation4 + $0x168] sm:$0xff] %vm1693, 0.0
          %2413 = vst.msk [vmem:[#allocation4 + $0x170] sm:$0xff] %vm1693, 0.0
          %2414 = vst.msk [vmem:[#allocation4 + $0x178] sm:$0xff] %vm1693, 0.0
          %2415 = vst.msk [vmem:[#allocation4 + $0x180] sm:$0xff] %vm1693, 0.0
          %2416 = vst.msk [vmem:[#allocation4 + $0x188] sm:$0xff] %vm1693, 0.0
          %2417 = vst.msk [vmem:[#allocation4 + $0x190] sm:$0xff] %vm1693, 0.0
          %2418 = vst.msk [vmem:[#allocation4 + $0x198] sm:$0xff] %vm1693, 0.0
          %2419 = vst.msk [vmem:[#allocation4 + $0x1a0] sm:$0xff] %vm1693, 0.0
          %2420 = vst.msk [vmem:[#allocation4 + $0x1a8] sm:$0xff] %vm1693, 0.0
          %2421 = vst.msk [vmem:[#allocation4 + $0x1b0] sm:$0xff] %vm1693, 0.0
          %2422 = vst.msk [vmem:[#allocation4 + $0x1b8] sm:$0xff] %vm1693, 0.0
          %2423 = vst.msk [vmem:[#allocation4 + $0x1c0] sm:$0xff] %vm1693, 0.0
          %2424 = vst.msk [vmem:[#allocation4 + $0x1c8] sm:$0xff] %vm1693, 0.0
          %2425 = vst.msk [vmem:[#allocation4 + $0x1d0] sm:$0xff] %vm1693, 0.0
          %2426 = vst.msk [vmem:[#allocation4 + $0x1d8] sm:$0xff] %vm1693, 0.0
          %2427 = vst.msk [vmem:[#allocation4 + $0x1e0] sm:$0xff] %vm1693, 0.0
          %2428 = vst.msk [vmem:[#allocation4 + $0x1e8] sm:$0xff] %vm1693, 0.0
          %2429 = vst.msk [vmem:[#allocation4 + $0x1f0] sm:$0xff] %vm1693, 0.0
          %2430 = vst.msk [vmem:[#allocation4 + $0x1f8] sm:$0xff] %vm1693, 0.0
          %2431 = vst.msk [vmem:[#allocation4 + $0x200] sm:$0xff] %vm1693, 0.0
          %2432 = vst.msk [vmem:[#allocation4 + $0x208] sm:$0xff] %vm1693, 0.0
          %2433 = vst.msk [vmem:[#allocation4 + $0x210] sm:$0xff] %vm1693, 0.0
          %2434 = vst.msk [vmem:[#allocation4 + $0x218] sm:$0xff] %vm1693, 0.0
          %2435 = vst.msk [vmem:[#allocation4 + $0x220] sm:$0xff] %vm1693, 0.0
          %2436 = vst.msk [vmem:[#allocation4 + $0x228] sm:$0xff] %vm1693, 0.0
          %2437 = vst.msk [vmem:[#allocation4 + $0x230] sm:$0xff] %vm1693, 0.0
          %2438 = vst.msk [vmem:[#allocation4 + $0x238] sm:$0xff] %vm1693, 0.0
          %2439 = vst.msk [vmem:[#allocation4 + $0x240] sm:$0xff] %vm1693, 0.0
          %2440 = vst.msk [vmem:[#allocation4 + $0x248] sm:$0xff] %vm1693, 0.0
          %2441 = vst.msk [vmem:[#allocation4 + $0x250] sm:$0xff] %vm1693, 0.0
          %2442 = vst.msk [vmem:[#allocation4 + $0x258] sm:$0xff] %vm1693, 0.0
          %2443 = vst.msk [vmem:[#allocation4 + $0x260] sm:$0xff] %vm1693, 0.0
          %2444 = vst.msk [vmem:[#allocation4 + $0x268] sm:$0xff] %vm1693, 0.0
          %2445 = vst.msk [vmem:[#allocation4 + $0x270] sm:$0xff] %vm1693, 0.0
          %2446 = vst.msk [vmem:[#allocation4 + $0x278] sm:$0xff] %vm1693, 0.0
          %2447 = vst.msk [vmem:[#allocation4 + $0x280] sm:$0xff] %vm1693, 0.0
          %2448 = vst.msk [vmem:[#allocation4 + $0x288] sm:$0xff] %vm1693, 0.0
          %2449 = vst.msk [vmem:[#allocation4 + $0x290] sm:$0xff] %vm1693, 0.0
          %2450 = vst.msk [vmem:[#allocation4 + $0x298] sm:$0xff] %vm1693, 0.0
          %2451 = vst.msk [vmem:[#allocation4 + $0x2a0] sm:$0xff] %vm1693, 0.0
          %2452 = vst.msk [vmem:[#allocation4 + $0x2a8] sm:$0xff] %vm1693, 0.0
          %2453 = vst.msk [vmem:[#allocation4 + $0x2b0] sm:$0xff] %vm1693, 0.0
          %2454 = vst.msk [vmem:[#allocation4 + $0x2b8] sm:$0xff] %vm1693, 0.0
          %2455 = vst.msk [vmem:[#allocation4 + $0x2c0] sm:$0xff] %vm1693, 0.0
          %2456 = vst.msk [vmem:[#allocation4 + $0x2c8] sm:$0xff] %vm1693, 0.0
          %2457 = vst.msk [vmem:[#allocation4 + $0x2d0] sm:$0xff] %vm1693, 0.0
          %2458 = vst.msk [vmem:[#allocation4 + $0x2d8] sm:$0xff] %vm1693, 0.0
          %2459 = vst.msk [vmem:[#allocation4 + $0x2e0] sm:$0xff] %vm1693, 0.0
          %2460 = vst.msk [vmem:[#allocation4 + $0x2e8] sm:$0xff] %vm1693, 0.0
          %2461 = vst.msk [vmem:[#allocation4 + $0x2f0] sm:$0xff] %vm1693, 0.0
          %2462 = vst.msk [vmem:[#allocation4 + $0x2f8] sm:$0xff] %vm1693, 0.0
          %2463 = vst.msk [vmem:[#allocation4 + $0x300] sm:$0xff] %vm1693, 0.0
          %2464 = vst.msk [vmem:[#allocation4 + $0x308] sm:$0xff] %vm1693, 0.0
          %2465 = vst.msk [vmem:[#allocation4 + $0x310] sm:$0xff] %vm1693, 0.0
          %2466 = vst.msk [vmem:[#allocation4 + $0x318] sm:$0xff] %vm1693, 0.0
          %2467 = vst.msk [vmem:[#allocation4 + $0x320] sm:$0xff] %vm1693, 0.0
          %2468 = vst.msk [vmem:[#allocation4 + $0x328] sm:$0xff] %vm1693, 0.0
          %2469 = vst.msk [vmem:[#allocation4 + $0x330] sm:$0xff] %vm1693, 0.0
          %2470 = vst.msk [vmem:[#allocation4 + $0x338] sm:$0xff] %vm1693, 0.0
          %2471 = vst.msk [vmem:[#allocation4 + $0x340] sm:$0xff] %vm1693, 0.0
          %2472 = vst.msk [vmem:[#allocation4 + $0x348] sm:$0xff] %vm1693, 0.0
          %2473 = vst.msk [vmem:[#allocation4 + $0x350] sm:$0xff] %vm1693, 0.0
          %2474 = vst.msk [vmem:[#allocation4 + $0x358] sm:$0xff] %vm1693, 0.0
          %2475 = vst.msk [vmem:[#allocation4 + $0x360] sm:$0xff] %vm1693, 0.0
          %2476 = vst.msk [vmem:[#allocation4 + $0x368] sm:$0xff] %vm1693, 0.0
          %2477 = vst.msk [vmem:[#allocation4 + $0x370] sm:$0xff] %vm1693, 0.0
          %2478 = vst.msk [vmem:[#allocation4 + $0x378] sm:$0xff] %vm1693, 0.0
          %2479 = vst.msk [vmem:[#allocation4 + $0x380] sm:$0xff] %vm1693, 0.0
          %2480 = vst.msk [vmem:[#allocation4 + $0x388] sm:$0xff] %vm1693, 0.0
          %2481 = vst.msk [vmem:[#allocation4 + $0x390] sm:$0xff] %vm1693, 0.0
          %2482 = vst.msk [vmem:[#allocation4 + $0x398] sm:$0xff] %vm1693, 0.0
          %2483 = vst.msk [vmem:[#allocation4 + $0x3a0] sm:$0xff] %vm1693, 0.0
          %2484 = vst.msk [vmem:[#allocation4 + $0x3a8] sm:$0xff] %vm1693, 0.0
          %2485 = vst.msk [vmem:[#allocation4 + $0x3b0] sm:$0xff] %vm1693, 0.0
          %2486 = vst.msk [vmem:[#allocation4 + $0x3b8] sm:$0xff] %vm1693, 0.0
          %2487 = vst.msk [vmem:[#allocation4 + $0x3c0] sm:$0xff] %vm1693, 0.0
          %2488 = vst.msk [vmem:[#allocation4 + $0x3c8] sm:$0xff] %vm1693, 0.0
          %2489 = vst.msk [vmem:[#allocation4 + $0x3d0] sm:$0xff] %vm1693, 0.0
          %2490 = vst.msk [vmem:[#allocation4 + $0x3d8] sm:$0xff] %vm1693, 0.0
          %2491 = vst.msk [vmem:[#allocation4 + $0x3e0] sm:$0xff] %vm1693, 0.0
          %2492 = vst.msk [vmem:[#allocation4 + $0x3e8] sm:$0xff] %vm1693, 0.0
          %2493 = vst.msk [vmem:[#allocation4 + $0x3f0] sm:$0xff] %vm1693, 0.0
          %2494 = vst.msk [vmem:[#allocation4 + $0x3f8] sm:$0xff] %vm1693, 0.0
        $region72: #{tpu_custom_call.1} parent=67 // pred_fallthru
          _
        %v2495 = vld [vmem:[%s10] sm:$0xff]
        %v2496 = vld [vmem:[%s11] sm:$0xff]
        %v2497 = vld [vmem:[%s454] ss:$2 sm:$0x3]
        %s2498 = scalar_lea.vmem %s454, 1
        %v2499 = vld [vmem:[%s2498] ss:$2 sm:$0x3]
        loop: start=0, step=1, limit=2
        $region73: #{tpu_custom_call.1} parent=67 // loop_pre_header
          _
        $region74: #{tpu_custom_call.1} parent=67 // loop_header
          %s2501 = sphi 0, %s2505
          %p2502 = scmp.ge.s32.totalorder %s2501, 2
          %v2506 = vphi 0.0, %v4727
          %v2507 = vphi 0.0, %v4728
          %v2508 = vphi 0.0, %v4729
          %v2509 = vphi 0.0, %v4730
          %v2510 = vphi 0.0, %v4731
          %v2511 = vphi 0.0, %v4732
          %v2512 = vphi 0.0, %v4733
          %v2513 = vphi 0.0, %v4734
          %v2514 = vphi 0.0, %v4735
          %v2515 = vphi 0.0, %v4736
          %v2516 = vphi 0.0, %v4737
          %v2517 = vphi 0.0, %v4738
          %v2518 = vphi 0.0, %v4739
          %v2519 = vphi 0.0, %v4740
          %v2520 = vphi 0.0, %v4741
          %v2521 = vphi 0.0, %v4742
          %v2522 = vphi 0.0, %v4743
          %v2523 = vphi 0.0, %v4744
          %v2524 = vphi 0.0, %v4745
          %v2525 = vphi 0.0, %v4746
          %v2526 = vphi 0.0, %v4747
          %v2527 = vphi 0.0, %v4748
          %v2528 = vphi 0.0, %v4749
          %v2529 = vphi 0.0, %v4750
          %v2530 = vphi 0.0, %v4751
          %v2531 = vphi 0.0, %v4752
          %v2532 = vphi 0.0, %v4753
          %v2533 = vphi 0.0, %v4754
          %v2534 = vphi 0.0, %v4755
          %v2535 = vphi 0.0, %v4756
          %v2536 = vphi 0.0, %v4757
          %v2537 = vphi 0.0, %v4758
        $region75: #{tpu_custom_call.1} parent=67 // loop_header_branch
          %2504 = sbr.rel (%p2502) target = $region79
        $region76: #{tpu_custom_call.1} parent=67 // loop_body
          %s2538 = smul.u32 %s2501, 512
          %v2539 = vlaneseq
          %v2540 = vand.u32 %v2539, 127
          %v2541 = vadd.s32 %v2540, 128
          %v2542 = vadd.s32 %v2540, 256
          %v2543 = vadd.s32 %v2540, 384
          %v2544 = vadd.s32 %v2540, 512
          %v2545 = vadd.s32 %v2540, 640
          %v2546 = vadd.s32 %v2540, 768
          %v2547 = vadd.s32 %v2540, 896
          %vm2548 = vcmp.lt.s32.totalorder %v2540, 512
          %vm2549 = vcmp.lt.s32.totalorder %v2541, 512
          %vm2550 = vcmp.lt.s32.totalorder %v2542, 512
          %vm2551 = vcmp.lt.s32.totalorder %v2543, 512
          %vm2552 = vcmp.lt.s32.totalorder %v2544, 512
          %vm2553 = vcmp.lt.s32.totalorder %v2545, 512
          %vm2554 = vcmp.lt.s32.totalorder %v2546, 512
          %vm2555 = vcmp.lt.s32.totalorder %v2547, 512
          %v2556 = vsub.s32 %v2540, 512
          %v2557 = vsub.s32 %v2541, 512
          %v2558 = vsub.s32 %v2542, 512
          %v2559 = vsub.s32 %v2543, 512
          %v2560 = vsub.s32 %v2545, 512
          %v2561 = vsub.s32 %v2546, 512
          %v2562 = vsub.s32 %v2547, 512
          %v2563 = vsel %vm2548, %v2540, %v2556
          %v2564 = vsel %vm2549, %v2541, %v2557
          %v2565 = vsel %vm2550, %v2542, %v2558
          %v2566 = vsel %vm2551, %v2543, %v2559
          %v2567 = vsel %vm2552, %v2544, %v2540
          %v2568 = vsel %vm2553, %v2545, %v2560
          %v2569 = vsel %vm2554, %v2546, %v2561
          %v2570 = vsel %vm2555, %v2547, %v2562
          %v2571 = vstv %s2538
          %v2572 = vadd.s32 %v2563, %v2571
          %v2573 = vadd.s32 %v2564, %v2571
          %v2574 = vadd.s32 %v2565, %v2571
          %v2575 = vadd.s32 %v2566, %v2571
          %v2576 = vadd.s32 %v2567, %v2571
          %v2577 = vadd.s32 %v2568, %v2571
          %v2578 = vadd.s32 %v2569, %v2571
          %v2579 = vadd.s32 %v2570, %v2571
          %v2580 = vlaneseq
          %v2581 = vshrl.u32 %v2580, 7
          %v2582 = vsub.s32 0, %v2581
          %v2583 = vrot.slane %v2497, %v2582
          %v2584 = vlaneseq
          %v2585 = vshrl.u32 %v2584, 7
          %v2586 = vsub.s32 1, %v2585
          %v2587 = vrot.slane %v2497, %v2586
          %v2588 = vlaneseq
          %v2589 = vshrl.u32 %v2588, 7
          %v2590 = vsub.s32 0, %v2589
          %v2591 = vrot.slane %v2583, %v2590
          %2593 = vbcast.lane.b32.xlu0 %v2591, 256
          %v2594 = vpop.permute.xlu0 %2593
          %s2596 = sor.u32 256, 8
          %2597 = vbcast.lane.b32.xlu0 %v2591, %s2596
          %v2598 = vpop.permute.xlu0 %2597
          %s2600 = sor.u32 256, 16
          %2601 = vbcast.lane.b32.xlu0 %v2591, %s2600
          %v2602 = vpop.permute.xlu0 %2601
          %s2604 = sor.u32 256, 24
          %2605 = vbcast.lane.b32.xlu0 %v2591, %s2604
          %v2606 = vpop.permute.xlu0 %2605
          %s2608 = sor.u32 256, 32
          %2609 = vbcast.lane.b32.xlu0 %v2591, %s2608
          %v2610 = vpop.permute.xlu0 %2609
          %s2612 = sor.u32 256, 40
          %2613 = vbcast.lane.b32.xlu0 %v2591, %s2612
          %v2614 = vpop.permute.xlu0 %2613
          %s2616 = sor.u32 256, 48
          %2617 = vbcast.lane.b32.xlu0 %v2591, %s2616
          %v2618 = vpop.permute.xlu0 %2617
          %s2620 = sor.u32 256, 56
          %2621 = vbcast.lane.b32.xlu0 %v2591, %s2620
          %v2622 = vpop.permute.xlu0 %2621
          %s2624 = sor.u32 256, 64
          %2625 = vbcast.lane.b32.xlu0 %v2591, %s2624
          %v2626 = vpop.permute.xlu0 %2625
          %s2628 = sor.u32 256, 72
          %2629 = vbcast.lane.b32.xlu0 %v2591, %s2628
          %v2630 = vpop.permute.xlu0 %2629
          %s2632 = sor.u32 256, 80
          %2633 = vbcast.lane.b32.xlu0 %v2591, %s2632
          %v2634 = vpop.permute.xlu0 %2633
          %s2636 = sor.u32 256, 88
          %2637 = vbcast.lane.b32.xlu0 %v2591, %s2636
          %v2638 = vpop.permute.xlu0 %2637
          %s2640 = sor.u32 256, 96
          %2641 = vbcast.lane.b32.xlu0 %v2591, %s2640
          %v2642 = vpop.permute.xlu0 %2641
          %s2644 = sor.u32 256, 104
          %2645 = vbcast.lane.b32.xlu0 %v2591, %s2644
          %v2646 = vpop.permute.xlu0 %2645
          %s2648 = sor.u32 256, 112
          %2649 = vbcast.lane.b32.xlu0 %v2591, %s2648
          %v2650 = vpop.permute.xlu0 %2649
          %s2652 = sor.u32 256, 120
          %2653 = vbcast.lane.b32.xlu0 %v2591, %s2652
          %v2654 = vpop.permute.xlu0 %2653
          %v2655 = vlaneseq
          %v2656 = vshrl.u32 %v2655, 7
          %v2657 = vsub.s32 0, %v2656
          %v2658 = vrot.slane %v2587, %v2657
          %2660 = vbcast.lane.b32.xlu0 %v2658, 256
          %v2661 = vpop.permute.xlu0 %2660
          %s2663 = sor.u32 256, 8
          %2664 = vbcast.lane.b32.xlu0 %v2658, %s2663
          %v2665 = vpop.permute.xlu0 %2664
          %s2667 = sor.u32 256, 16
          %2668 = vbcast.lane.b32.xlu0 %v2658, %s2667
          %v2669 = vpop.permute.xlu0 %2668
          %s2671 = sor.u32 256, 24
          %2672 = vbcast.lane.b32.xlu0 %v2658, %s2671
          %v2673 = vpop.permute.xlu0 %2672
          %s2675 = sor.u32 256, 32
          %2676 = vbcast.lane.b32.xlu0 %v2658, %s2675
          %v2677 = vpop.permute.xlu0 %2676
          %s2679 = sor.u32 256, 40
          %2680 = vbcast.lane.b32.xlu0 %v2658, %s2679
          %v2681 = vpop.permute.xlu0 %2680
          %s2683 = sor.u32 256, 48
          %2684 = vbcast.lane.b32.xlu0 %v2658, %s2683
          %v2685 = vpop.permute.xlu0 %2684
          %s2687 = sor.u32 256, 56
          %2688 = vbcast.lane.b32.xlu0 %v2658, %s2687
          %v2689 = vpop.permute.xlu0 %2688
          %s2691 = sor.u32 256, 64
          %2692 = vbcast.lane.b32.xlu0 %v2658, %s2691
          %v2693 = vpop.permute.xlu0 %2692
          %s2695 = sor.u32 256, 72
          %2696 = vbcast.lane.b32.xlu0 %v2658, %s2695
          %v2697 = vpop.permute.xlu0 %2696
          %s2699 = sor.u32 256, 80
          %2700 = vbcast.lane.b32.xlu0 %v2658, %s2699
          %v2701 = vpop.permute.xlu0 %2700
          %s2703 = sor.u32 256, 88
          %2704 = vbcast.lane.b32.xlu0 %v2658, %s2703
          %v2705 = vpop.permute.xlu0 %2704
          %s2707 = sor.u32 256, 96
          %2708 = vbcast.lane.b32.xlu0 %v2658, %s2707
          %v2709 = vpop.permute.xlu0 %2708
          %s2711 = sor.u32 256, 104
          %2712 = vbcast.lane.b32.xlu0 %v2658, %s2711
          %v2713 = vpop.permute.xlu0 %2712
          %s2715 = sor.u32 256, 112
          %2716 = vbcast.lane.b32.xlu0 %v2658, %s2715
          %v2717 = vpop.permute.xlu0 %2716
          %s2719 = sor.u32 256, 120
          %2720 = vbcast.lane.b32.xlu0 %v2658, %s2719
          %v2721 = vpop.permute.xlu0 %2720
          %v2722 = vlaneseq
          %v2723 = vshrl.u32 %v2722, 7
          %v2724 = vsub.s32 0, %v2723
          %v2725 = vrot.slane %v2499, %v2724
          %v2726 = vlaneseq
          %v2727 = vshrl.u32 %v2726, 7
          %v2728 = vsub.s32 1, %v2727
          %v2729 = vrot.slane %v2499, %v2728
          %v2730 = vlaneseq
          %v2731 = vshrl.u32 %v2730, 7
          %v2732 = vsub.s32 0, %v2731
          %v2733 = vrot.slane %v2725, %v2732
          %2735 = vbcast.lane.b32.xlu0 %v2733, 256
          %v2736 = vpop.permute.xlu0 %2735
          %s2738 = sor.u32 256, 8
          %2739 = vbcast.lane.b32.xlu0 %v2733, %s2738
          %v2740 = vpop.permute.xlu0 %2739
          %s2742 = sor.u32 256, 16
          %2743 = vbcast.lane.b32.xlu0 %v2733, %s2742
          %v2744 = vpop.permute.xlu0 %2743
          %s2746 = sor.u32 256, 24
          %2747 = vbcast.lane.b32.xlu0 %v2733, %s2746
          %v2748 = vpop.permute.xlu0 %2747
          %s2750 = sor.u32 256, 32
          %2751 = vbcast.lane.b32.xlu0 %v2733, %s2750
          %v2752 = vpop.permute.xlu0 %2751
          %s2754 = sor.u32 256, 40
          %2755 = vbcast.lane.b32.xlu0 %v2733, %s2754
          %v2756 = vpop.permute.xlu0 %2755
          %s2758 = sor.u32 256, 48
          %2759 = vbcast.lane.b32.xlu0 %v2733, %s2758
          %v2760 = vpop.permute.xlu0 %2759
          %s2762 = sor.u32 256, 56
          %2763 = vbcast.lane.b32.xlu0 %v2733, %s2762
          %v2764 = vpop.permute.xlu0 %2763
          %s2766 = sor.u32 256, 64
          %2767 = vbcast.lane.b32.xlu0 %v2733, %s2766
          %v2768 = vpop.permute.xlu0 %2767
          %s2770 = sor.u32 256, 72
          %2771 = vbcast.lane.b32.xlu0 %v2733, %s2770
          %v2772 = vpop.permute.xlu0 %2771
          %s2774 = sor.u32 256, 80
          %2775 = vbcast.lane.b32.xlu0 %v2733, %s2774
          %v2776 = vpop.permute.xlu0 %2775
          %s2778 = sor.u32 256, 88
          %2779 = vbcast.lane.b32.xlu0 %v2733, %s2778
          %v2780 = vpop.permute.xlu0 %2779
          %s2782 = sor.u32 256, 96
          %2783 = vbcast.lane.b32.xlu0 %v2733, %s2782
          %v2784 = vpop.permute.xlu0 %2783
          %s2786 = sor.u32 256, 104
          %2787 = vbcast.lane.b32.xlu0 %v2733, %s2786
          %v2788 = vpop.permute.xlu0 %2787
          %s2790 = sor.u32 256, 112
          %2791 = vbcast.lane.b32.xlu0 %v2733, %s2790
          %v2792 = vpop.permute.xlu0 %2791
          %s2794 = sor.u32 256, 120
          %2795 = vbcast.lane.b32.xlu0 %v2733, %s2794
          %v2796 = vpop.permute.xlu0 %2795
          %v2797 = vlaneseq
          %v2798 = vshrl.u32 %v2797, 7
          %v2799 = vsub.s32 0, %v2798
          %v2800 = vrot.slane %v2729, %v2799
          %2802 = vbcast.lane.b32.xlu0 %v2800, 256
          %v2803 = vpop.permute.xlu0 %2802
          %s2805 = sor.u32 256, 8
          %2806 = vbcast.lane.b32.xlu0 %v2800, %s2805
          %v2807 = vpop.permute.xlu0 %2806
          %s2809 = sor.u32 256, 16
          %2810 = vbcast.lane.b32.xlu0 %v2800, %s2809
          %v2811 = vpop.permute.xlu0 %2810
          %s2813 = sor.u32 256, 24
          %2814 = vbcast.lane.b32.xlu0 %v2800, %s2813
          %v2815 = vpop.permute.xlu0 %2814
          %s2817 = sor.u32 256, 32
          %2818 = vbcast.lane.b32.xlu0 %v2800, %s2817
          %v2819 = vpop.permute.xlu0 %2818
          %s2821 = sor.u32 256, 40
          %2822 = vbcast.lane.b32.xlu0 %v2800, %s2821
          %v2823 = vpop.permute.xlu0 %2822
          %s2825 = sor.u32 256, 48
          %2826 = vbcast.lane.b32.xlu0 %v2800, %s2825
          %v2827 = vpop.permute.xlu0 %2826
          %s2829 = sor.u32 256, 56
          %2830 = vbcast.lane.b32.xlu0 %v2800, %s2829
          %v2831 = vpop.permute.xlu0 %2830
          %s2833 = sor.u32 256, 64
          %2834 = vbcast.lane.b32.xlu0 %v2800, %s2833
          %v2835 = vpop.permute.xlu0 %2834
          %s2837 = sor.u32 256, 72
          %2838 = vbcast.lane.b32.xlu0 %v2800, %s2837
          %v2839 = vpop.permute.xlu0 %2838
          %s2841 = sor.u32 256, 80
          %2842 = vbcast.lane.b32.xlu0 %v2800, %s2841
          %v2843 = vpop.permute.xlu0 %2842
          %s2845 = sor.u32 256, 88
          %2846 = vbcast.lane.b32.xlu0 %v2800, %s2845
          %v2847 = vpop.permute.xlu0 %2846
          %s2849 = sor.u32 256, 96
          %2850 = vbcast.lane.b32.xlu0 %v2800, %s2849
          %v2851 = vpop.permute.xlu0 %2850
          %s2853 = sor.u32 256, 104
          %2854 = vbcast.lane.b32.xlu0 %v2800, %s2853
          %v2855 = vpop.permute.xlu0 %2854
          %s2857 = sor.u32 256, 112
          %2858 = vbcast.lane.b32.xlu0 %v2800, %s2857
          %v2859 = vpop.permute.xlu0 %2858
          %s2861 = sor.u32 256, 120
          %2862 = vbcast.lane.b32.xlu0 %v2800, %s2861
          %v2863 = vpop.permute.xlu0 %2862
          %v2864 = vsel %vm2548, %v2594, %v2736
          %v2865 = vsel %vm2549, %v2594, %v2736
          %v2866 = vsel %vm2550, %v2594, %v2736
          %v2867 = vsel %vm2551, %v2594, %v2736
          %v2868 = vsel %vm2552, %v2594, %v2736
          %v2869 = vsel %vm2553, %v2594, %v2736
          %v2870 = vsel %vm2554, %v2594, %v2736
          %v2871 = vsel %vm2555, %v2594, %v2736
          %v2872 = vsel %vm2548, %v2598, %v2740
          %v2873 = vsel %vm2549, %v2598, %v2740
          %v2874 = vsel %vm2550, %v2598, %v2740
          %v2875 = vsel %vm2551, %v2598, %v2740
          %v2876 = vsel %vm2552, %v2598, %v2740
          %v2877 = vsel %vm2553, %v2598, %v2740
          %v2878 = vsel %vm2554, %v2598, %v2740
          %v2879 = vsel %vm2555, %v2598, %v2740
          %v2880 = vsel %vm2548, %v2602, %v2744
          %v2881 = vsel %vm2549, %v2602, %v2744
          %v2882 = vsel %vm2550, %v2602, %v2744
          %v2883 = vsel %vm2551, %v2602, %v2744
          %v2884 = vsel %vm2552, %v2602, %v2744
          %v2885 = vsel %vm2553, %v2602, %v2744
          %v2886 = vsel %vm2554, %v2602, %v2744
          %v2887 = vsel %vm2555, %v2602, %v2744
          %v2888 = vsel %vm2548, %v2606, %v2748
          %v2889 = vsel %vm2549, %v2606, %v2748
          %v2890 = vsel %vm2550, %v2606, %v2748
          %v2891 = vsel %vm2551, %v2606, %v2748
          %v2892 = vsel %vm2552, %v2606, %v2748
          %v2893 = vsel %vm2553, %v2606, %v2748
          %v2894 = vsel %vm2554, %v2606, %v2748
          %v2895 = vsel %vm2555, %v2606, %v2748
          %v2896 = vsel %vm2548, %v2610, %v2752
          %v2897 = vsel %vm2549, %v2610, %v2752
          %v2898 = vsel %vm2550, %v2610, %v2752
          %v2899 = vsel %vm2551, %v2610, %v2752
          %v2900 = vsel %vm2552, %v2610, %v2752
          %v2901 = vsel %vm2553, %v2610, %v2752
          %v2902 = vsel %vm2554, %v2610, %v2752
          %v2903 = vsel %vm2555, %v2610, %v2752
          %v2904 = vsel %vm2548, %v2614, %v2756
          %v2905 = vsel %vm2549, %v2614, %v2756
          %v2906 = vsel %vm2550, %v2614, %v2756
          %v2907 = vsel %vm2551, %v2614, %v2756
          %v2908 = vsel %vm2552, %v2614, %v2756
          %v2909 = vsel %vm2553, %v2614, %v2756
          %v2910 = vsel %vm2554, %v2614, %v2756
          %v2911 = vsel %vm2555, %v2614, %v2756
          %v2912 = vsel %vm2548, %v2618, %v2760
          %v2913 = vsel %vm2549, %v2618, %v2760
          %v2914 = vsel %vm2550, %v2618, %v2760
          %v2915 = vsel %vm2551, %v2618, %v2760
          %v2916 = vsel %vm2552, %v2618, %v2760
          %v2917 = vsel %vm2553, %v2618, %v2760
          %v2918 = vsel %vm2554, %v2618, %v2760
          %v2919 = vsel %vm2555, %v2618, %v2760
          %v2920 = vsel %vm2548, %v2622, %v2764
          %v2921 = vsel %vm2549, %v2622, %v2764
          %v2922 = vsel %vm2550, %v2622, %v2764
          %v2923 = vsel %vm2551, %v2622, %v2764
          %v2924 = vsel %vm2552, %v2622, %v2764
          %v2925 = vsel %vm2553, %v2622, %v2764
          %v2926 = vsel %vm2554, %v2622, %v2764
          %v2927 = vsel %vm2555, %v2622, %v2764
          %v2928 = vsel %vm2548, %v2626, %v2768
          %v2929 = vsel %vm2549, %v2626, %v2768
          %v2930 = vsel %vm2550, %v2626, %v2768
          %v2931 = vsel %vm2551, %v2626, %v2768
          %v2932 = vsel %vm2552, %v2626, %v2768
          %v2933 = vsel %vm2553, %v2626, %v2768
          %v2934 = vsel %vm2554, %v2626, %v2768
          %v2935 = vsel %vm2555, %v2626, %v2768
          %v2936 = vsel %vm2548, %v2630, %v2772
          %v2937 = vsel %vm2549, %v2630, %v2772
          %v2938 = vsel %vm2550, %v2630, %v2772
          %v2939 = vsel %vm2551, %v2630, %v2772
          %v2940 = vsel %vm2552, %v2630, %v2772
          %v2941 = vsel %vm2553, %v2630, %v2772
          %v2942 = vsel %vm2554, %v2630, %v2772
          %v2943 = vsel %vm2555, %v2630, %v2772
          %v2944 = vsel %vm2548, %v2634, %v2776
          %v2945 = vsel %vm2549, %v2634, %v2776
          %v2946 = vsel %vm2550, %v2634, %v2776
          %v2947 = vsel %vm2551, %v2634, %v2776
          %v2948 = vsel %vm2552, %v2634, %v2776
          %v2949 = vsel %vm2553, %v2634, %v2776
          %v2950 = vsel %vm2554, %v2634, %v2776
          %v2951 = vsel %vm2555, %v2634, %v2776
          %v2952 = vsel %vm2548, %v2638, %v2780
          %v2953 = vsel %vm2549, %v2638, %v2780
          %v2954 = vsel %vm2550, %v2638, %v2780
          %v2955 = vsel %vm2551, %v2638, %v2780
          %v2956 = vsel %vm2552, %v2638, %v2780
          %v2957 = vsel %vm2553, %v2638, %v2780
          %v2958 = vsel %vm2554, %v2638, %v2780
          %v2959 = vsel %vm2555, %v2638, %v2780
          %v2960 = vsel %vm2548, %v2642, %v2784
          %v2961 = vsel %vm2549, %v2642, %v2784
          %v2962 = vsel %vm2550, %v2642, %v2784
          %v2963 = vsel %vm2551, %v2642, %v2784
          %v2964 = vsel %vm2552, %v2642, %v2784
          %v2965 = vsel %vm2553, %v2642, %v2784
          %v2966 = vsel %vm2554, %v2642, %v2784
          %v2967 = vsel %vm2555, %v2642, %v2784
          %v2968 = vsel %vm2548, %v2646, %v2788
          %v2969 = vsel %vm2549, %v2646, %v2788
          %v2970 = vsel %vm2550, %v2646, %v2788
          %v2971 = vsel %vm2551, %v2646, %v2788
          %v2972 = vsel %vm2552, %v2646, %v2788
          %v2973 = vsel %vm2553, %v2646, %v2788
          %v2974 = vsel %vm2554, %v2646, %v2788
          %v2975 = vsel %vm2555, %v2646, %v2788
          %v2976 = vsel %vm2548, %v2650, %v2792
          %v2977 = vsel %vm2549, %v2650, %v2792
          %v2978 = vsel %vm2550, %v2650, %v2792
          %v2979 = vsel %vm2551, %v2650, %v2792
          %v2980 = vsel %vm2552, %v2650, %v2792
          %v2981 = vsel %vm2553, %v2650, %v2792
          %v2982 = vsel %vm2554, %v2650, %v2792
          %v2983 = vsel %vm2555, %v2650, %v2792
          %v2984 = vsel %vm2548, %v2654, %v2796
          %v2985 = vsel %vm2549, %v2654, %v2796
          %v2986 = vsel %vm2550, %v2654, %v2796
          %v2987 = vsel %vm2551, %v2654, %v2796
          %v2988 = vsel %vm2552, %v2654, %v2796
          %v2989 = vsel %vm2553, %v2654, %v2796
          %v2990 = vsel %vm2554, %v2654, %v2796
          %v2991 = vsel %vm2555, %v2654, %v2796
          %v2992 = vsel %vm2548, %v2661, %v2803
          %v2993 = vsel %vm2549, %v2661, %v2803
          %v2994 = vsel %vm2550, %v2661, %v2803
          %v2995 = vsel %vm2551, %v2661, %v2803
          %v2996 = vsel %vm2552, %v2661, %v2803
          %v2997 = vsel %vm2553, %v2661, %v2803
          %v2998 = vsel %vm2554, %v2661, %v2803
          %v2999 = vsel %vm2555, %v2661, %v2803
          %v3000 = vsel %vm2548, %v2665, %v2807
          %v3001 = vsel %vm2549, %v2665, %v2807
          %v3002 = vsel %vm2550, %v2665, %v2807
          %v3003 = vsel %vm2551, %v2665, %v2807
          %v3004 = vsel %vm2552, %v2665, %v2807
          %v3005 = vsel %vm2553, %v2665, %v2807
          %v3006 = vsel %vm2554, %v2665, %v2807
          %v3007 = vsel %vm2555, %v2665, %v2807
          %v3008 = vsel %vm2548, %v2669, %v2811
          %v3009 = vsel %vm2549, %v2669, %v2811
          %v3010 = vsel %vm2550, %v2669, %v2811
          %v3011 = vsel %vm2551, %v2669, %v2811
          %v3012 = vsel %vm2552, %v2669, %v2811
          %v3013 = vsel %vm2553, %v2669, %v2811
          %v3014 = vsel %vm2554, %v2669, %v2811
          %v3015 = vsel %vm2555, %v2669, %v2811
          %v3016 = vsel %vm2548, %v2673, %v2815
          %v3017 = vsel %vm2549, %v2673, %v2815
          %v3018 = vsel %vm2550, %v2673, %v2815
          %v3019 = vsel %vm2551, %v2673, %v2815
          %v3020 = vsel %vm2552, %v2673, %v2815
          %v3021 = vsel %vm2553, %v2673, %v2815
          %v3022 = vsel %vm2554, %v2673, %v2815
          %v3023 = vsel %vm2555, %v2673, %v2815
          %v3024 = vsel %vm2548, %v2677, %v2819
          %v3025 = vsel %vm2549, %v2677, %v2819
          %v3026 = vsel %vm2550, %v2677, %v2819
          %v3027 = vsel %vm2551, %v2677, %v2819
          %v3028 = vsel %vm2552, %v2677, %v2819
          %v3029 = vsel %vm2553, %v2677, %v2819
          %v3030 = vsel %vm2554, %v2677, %v2819
          %v3031 = vsel %vm2555, %v2677, %v2819
          %v3032 = vsel %vm2548, %v2681, %v2823
          %v3033 = vsel %vm2549, %v2681, %v2823
          %v3034 = vsel %vm2550, %v2681, %v2823
          %v3035 = vsel %vm2551, %v2681, %v2823
          %v3036 = vsel %vm2552, %v2681, %v2823
          %v3037 = vsel %vm2553, %v2681, %v2823
          %v3038 = vsel %vm2554, %v2681, %v2823
          %v3039 = vsel %vm2555, %v2681, %v2823
          %v3040 = vsel %vm2548, %v2685, %v2827
          %v3041 = vsel %vm2549, %v2685, %v2827
          %v3042 = vsel %vm2550, %v2685, %v2827
          %v3043 = vsel %vm2551, %v2685, %v2827
          %v3044 = vsel %vm2552, %v2685, %v2827
          %v3045 = vsel %vm2553, %v2685, %v2827
          %v3046 = vsel %vm2554, %v2685, %v2827
          %v3047 = vsel %vm2555, %v2685, %v2827
          %v3048 = vsel %vm2548, %v2689, %v2831
          %v3049 = vsel %vm2549, %v2689, %v2831
          %v3050 = vsel %vm2550, %v2689, %v2831
          %v3051 = vsel %vm2551, %v2689, %v2831
          %v3052 = vsel %vm2552, %v2689, %v2831
          %v3053 = vsel %vm2553, %v2689, %v2831
          %v3054 = vsel %vm2554, %v2689, %v2831
          %v3055 = vsel %vm2555, %v2689, %v2831
          %v3056 = vsel %vm2548, %v2693, %v2835
          %v3057 = vsel %vm2549, %v2693, %v2835
          %v3058 = vsel %vm2550, %v2693, %v2835
          %v3059 = vsel %vm2551, %v2693, %v2835
          %v3060 = vsel %vm2552, %v2693, %v2835
          %v3061 = vsel %vm2553, %v2693, %v2835
          %v3062 = vsel %vm2554, %v2693, %v2835
          %v3063 = vsel %vm2555, %v2693, %v2835
          %v3064 = vsel %vm2548, %v2697, %v2839
          %v3065 = vsel %vm2549, %v2697, %v2839
          %v3066 = vsel %vm2550, %v2697, %v2839
          %v3067 = vsel %vm2551, %v2697, %v2839
          %v3068 = vsel %vm2552, %v2697, %v2839
          %v3069 = vsel %vm2553, %v2697, %v2839
          %v3070 = vsel %vm2554, %v2697, %v2839
          %v3071 = vsel %vm2555, %v2697, %v2839
          %v3072 = vsel %vm2548, %v2701, %v2843
          %v3073 = vsel %vm2549, %v2701, %v2843
          %v3074 = vsel %vm2550, %v2701, %v2843
          %v3075 = vsel %vm2551, %v2701, %v2843
          %v3076 = vsel %vm2552, %v2701, %v2843
          %v3077 = vsel %vm2553, %v2701, %v2843
          %v3078 = vsel %vm2554, %v2701, %v2843
          %v3079 = vsel %vm2555, %v2701, %v2843
          %v3080 = vsel %vm2548, %v2705, %v2847
          %v3081 = vsel %vm2549, %v2705, %v2847
          %v3082 = vsel %vm2550, %v2705, %v2847
          %v3083 = vsel %vm2551, %v2705, %v2847
          %v3084 = vsel %vm2552, %v2705, %v2847
          %v3085 = vsel %vm2553, %v2705, %v2847
          %v3086 = vsel %vm2554, %v2705, %v2847
          %v3087 = vsel %vm2555, %v2705, %v2847
          %v3088 = vsel %vm2548, %v2709, %v2851
          %v3089 = vsel %vm2549, %v2709, %v2851
          %v3090 = vsel %vm2550, %v2709, %v2851
          %v3091 = vsel %vm2551, %v2709, %v2851
          %v3092 = vsel %vm2552, %v2709, %v2851
          %v3093 = vsel %vm2553, %v2709, %v2851
          %v3094 = vsel %vm2554, %v2709, %v2851
          %v3095 = vsel %vm2555, %v2709, %v2851
          %v3096 = vsel %vm2548, %v2713, %v2855
          %v3097 = vsel %vm2549, %v2713, %v2855
          %v3098 = vsel %vm2550, %v2713, %v2855
          %v3099 = vsel %vm2551, %v2713, %v2855
          %v3100 = vsel %vm2552, %v2713, %v2855
          %v3101 = vsel %vm2553, %v2713, %v2855
          %v3102 = vsel %vm2554, %v2713, %v2855
          %v3103 = vsel %vm2555, %v2713, %v2855
          %v3104 = vsel %vm2548, %v2717, %v2859
          %v3105 = vsel %vm2549, %v2717, %v2859
          %v3106 = vsel %vm2550, %v2717, %v2859
          %v3107 = vsel %vm2551, %v2717, %v2859
          %v3108 = vsel %vm2552, %v2717, %v2859
          %v3109 = vsel %vm2553, %v2717, %v2859
          %v3110 = vsel %vm2554, %v2717, %v2859
          %v3111 = vsel %vm2555, %v2717, %v2859
          %v3112 = vsel %vm2548, %v2721, %v2863
          %v3113 = vsel %vm2549, %v2721, %v2863
          %v3114 = vsel %vm2550, %v2721, %v2863
          %v3115 = vsel %vm2551, %v2721, %v2863
          %v3116 = vsel %vm2552, %v2721, %v2863
          %v3117 = vsel %vm2553, %v2721, %v2863
          %v3118 = vsel %vm2554, %v2721, %v2863
          %v3119 = vsel %vm2555, %v2721, %v2863
          %vm3120 = vcmp.eq.s32.totalorder %v2572, %v2864
          %vm3121 = vcmp.eq.s32.totalorder %v2573, %v2865
          %vm3122 = vcmp.eq.s32.totalorder %v2574, %v2866
          %vm3123 = vcmp.eq.s32.totalorder %v2575, %v2867
          %vm3124 = vcmp.eq.s32.totalorder %v2576, %v2868
          %vm3125 = vcmp.eq.s32.totalorder %v2577, %v2869
          %vm3126 = vcmp.eq.s32.totalorder %v2578, %v2870
          %vm3127 = vcmp.eq.s32.totalorder %v2579, %v2871
          %vm3128 = vcmp.eq.s32.totalorder %v2572, %v2872
          %vm3129 = vcmp.eq.s32.totalorder %v2573, %v2873
          %vm3130 = vcmp.eq.s32.totalorder %v2574, %v2874
          %vm3131 = vcmp.eq.s32.totalorder %v2575, %v2875
          %vm3132 = vcmp.eq.s32.totalorder %v2576, %v2876
          %vm3133 = vcmp.eq.s32.totalorder %v2577, %v2877
          %vm3134 = vcmp.eq.s32.totalorder %v2578, %v2878
          %vm3135 = vcmp.eq.s32.totalorder %v2579, %v2879
          %vm3136 = vcmp.eq.s32.totalorder %v2572, %v2880
          %vm3137 = vcmp.eq.s32.totalorder %v2573, %v2881
          %vm3138 = vcmp.eq.s32.totalorder %v2574, %v2882
          %vm3139 = vcmp.eq.s32.totalorder %v2575, %v2883
          %vm3140 = vcmp.eq.s32.totalorder %v2576, %v2884
          %vm3141 = vcmp.eq.s32.totalorder %v2577, %v2885
          %vm3142 = vcmp.eq.s32.totalorder %v2578, %v2886
          %vm3143 = vcmp.eq.s32.totalorder %v2579, %v2887
          %vm3144 = vcmp.eq.s32.totalorder %v2572, %v2888
          %vm3145 = vcmp.eq.s32.totalorder %v2573, %v2889
          %vm3146 = vcmp.eq.s32.totalorder %v2574, %v2890
          %vm3147 = vcmp.eq.s32.totalorder %v2575, %v2891
          %vm3148 = vcmp.eq.s32.totalorder %v2576, %v2892
          %vm3149 = vcmp.eq.s32.totalorder %v2577, %v2893
          %vm3150 = vcmp.eq.s32.totalorder %v2578, %v2894
          %vm3151 = vcmp.eq.s32.totalorder %v2579, %v2895
          %vm3152 = vcmp.eq.s32.totalorder %v2572, %v2896
          %vm3153 = vcmp.eq.s32.totalorder %v2573, %v2897
          %vm3154 = vcmp.eq.s32.totalorder %v2574, %v2898
          %vm3155 = vcmp.eq.s32.totalorder %v2575, %v2899
          %vm3156 = vcmp.eq.s32.totalorder %v2576, %v2900
          %vm3157 = vcmp.eq.s32.totalorder %v2577, %v2901
          %vm3158 = vcmp.eq.s32.totalorder %v2578, %v2902
          %vm3159 = vcmp.eq.s32.totalorder %v2579, %v2903
          %vm3160 = vcmp.eq.s32.totalorder %v2572, %v2904
          %vm3161 = vcmp.eq.s32.totalorder %v2573, %v2905
          %vm3162 = vcmp.eq.s32.totalorder %v2574, %v2906
          %vm3163 = vcmp.eq.s32.totalorder %v2575, %v2907
          %vm3164 = vcmp.eq.s32.totalorder %v2576, %v2908
          %vm3165 = vcmp.eq.s32.totalorder %v2577, %v2909
          %vm3166 = vcmp.eq.s32.totalorder %v2578, %v2910
          %vm3167 = vcmp.eq.s32.totalorder %v2579, %v2911
          %vm3168 = vcmp.eq.s32.totalorder %v2572, %v2912
          %vm3169 = vcmp.eq.s32.totalorder %v2573, %v2913
          %vm3170 = vcmp.eq.s32.totalorder %v2574, %v2914
          %vm3171 = vcmp.eq.s32.totalorder %v2575, %v2915
          %vm3172 = vcmp.eq.s32.totalorder %v2576, %v2916
          %vm3173 = vcmp.eq.s32.totalorder %v2577, %v2917
          %vm3174 = vcmp.eq.s32.totalorder %v2578, %v2918
          %vm3175 = vcmp.eq.s32.totalorder %v2579, %v2919
          %vm3176 = vcmp.eq.s32.totalorder %v2572, %v2920
          %vm3177 = vcmp.eq.s32.totalorder %v2573, %v2921
          %vm3178 = vcmp.eq.s32.totalorder %v2574, %v2922
          %vm3179 = vcmp.eq.s32.totalorder %v2575, %v2923
          %vm3180 = vcmp.eq.s32.totalorder %v2576, %v2924
          %vm3181 = vcmp.eq.s32.totalorder %v2577, %v2925
          %vm3182 = vcmp.eq.s32.totalorder %v2578, %v2926
          %vm3183 = vcmp.eq.s32.totalorder %v2579, %v2927
          %vm3184 = vcmp.eq.s32.totalorder %v2572, %v2928
          %vm3185 = vcmp.eq.s32.totalorder %v2573, %v2929
          %vm3186 = vcmp.eq.s32.totalorder %v2574, %v2930
          %vm3187 = vcmp.eq.s32.totalorder %v2575, %v2931
          %vm3188 = vcmp.eq.s32.totalorder %v2576, %v2932
          %vm3189 = vcmp.eq.s32.totalorder %v2577, %v2933
          %vm3190 = vcmp.eq.s32.totalorder %v2578, %v2934
          %vm3191 = vcmp.eq.s32.totalorder %v2579, %v2935
          %vm3192 = vcmp.eq.s32.totalorder %v2572, %v2936
          %vm3193 = vcmp.eq.s32.totalorder %v2573, %v2937
          %vm3194 = vcmp.eq.s32.totalorder %v2574, %v2938
          %vm3195 = vcmp.eq.s32.totalorder %v2575, %v2939
          %vm3196 = vcmp.eq.s32.totalorder %v2576, %v2940
          %vm3197 = vcmp.eq.s32.totalorder %v2577, %v2941
          %vm3198 = vcmp.eq.s32.totalorder %v2578, %v2942
          %vm3199 = vcmp.eq.s32.totalorder %v2579, %v2943
          %vm3200 = vcmp.eq.s32.totalorder %v2572, %v2944
          %vm3201 = vcmp.eq.s32.totalorder %v2573, %v2945
          %vm3202 = vcmp.eq.s32.totalorder %v2574, %v2946
          %vm3203 = vcmp.eq.s32.totalorder %v2575, %v2947
          %vm3204 = vcmp.eq.s32.totalorder %v2576, %v2948
          %vm3205 = vcmp.eq.s32.totalorder %v2577, %v2949
          %vm3206 = vcmp.eq.s32.totalorder %v2578, %v2950
          %vm3207 = vcmp.eq.s32.totalorder %v2579, %v2951
          %vm3208 = vcmp.eq.s32.totalorder %v2572, %v2952
          %vm3209 = vcmp.eq.s32.totalorder %v2573, %v2953
          %vm3210 = vcmp.eq.s32.totalorder %v2574, %v2954
          %vm3211 = vcmp.eq.s32.totalorder %v2575, %v2955
          %vm3212 = vcmp.eq.s32.totalorder %v2576, %v2956
          %vm3213 = vcmp.eq.s32.totalorder %v2577, %v2957
          %vm3214 = vcmp.eq.s32.totalorder %v2578, %v2958
          %vm3215 = vcmp.eq.s32.totalorder %v2579, %v2959
          %vm3216 = vcmp.eq.s32.totalorder %v2572, %v2960
          %vm3217 = vcmp.eq.s32.totalorder %v2573, %v2961
          %vm3218 = vcmp.eq.s32.totalorder %v2574, %v2962
          %vm3219 = vcmp.eq.s32.totalorder %v2575, %v2963
          %vm3220 = vcmp.eq.s32.totalorder %v2576, %v2964
          %vm3221 = vcmp.eq.s32.totalorder %v2577, %v2965
          %vm3222 = vcmp.eq.s32.totalorder %v2578, %v2966
          %vm3223 = vcmp.eq.s32.totalorder %v2579, %v2967
          %vm3224 = vcmp.eq.s32.totalorder %v2572, %v2968
          %vm3225 = vcmp.eq.s32.totalorder %v2573, %v2969
          %vm3226 = vcmp.eq.s32.totalorder %v2574, %v2970
          %vm3227 = vcmp.eq.s32.totalorder %v2575, %v2971
          %vm3228 = vcmp.eq.s32.totalorder %v2576, %v2972
          %vm3229 = vcmp.eq.s32.totalorder %v2577, %v2973
          %vm3230 = vcmp.eq.s32.totalorder %v2578, %v2974
          %vm3231 = vcmp.eq.s32.totalorder %v2579, %v2975
          %vm3232 = vcmp.eq.s32.totalorder %v2572, %v2976
          %vm3233 = vcmp.eq.s32.totalorder %v2573, %v2977
          %vm3234 = vcmp.eq.s32.totalorder %v2574, %v2978
          %vm3235 = vcmp.eq.s32.totalorder %v2575, %v2979
          %vm3236 = vcmp.eq.s32.totalorder %v2576, %v2980
          %vm3237 = vcmp.eq.s32.totalorder %v2577, %v2981
          %vm3238 = vcmp.eq.s32.totalorder %v2578, %v2982
          %vm3239 = vcmp.eq.s32.totalorder %v2579, %v2983
          %vm3240 = vcmp.eq.s32.totalorder %v2572, %v2984
          %vm3241 = vcmp.eq.s32.totalorder %v2573, %v2985
          %vm3242 = vcmp.eq.s32.totalorder %v2574, %v2986
          %vm3243 = vcmp.eq.s32.totalorder %v2575, %v2987
          %vm3244 = vcmp.eq.s32.totalorder %v2576, %v2988
          %vm3245 = vcmp.eq.s32.totalorder %v2577, %v2989
          %vm3246 = vcmp.eq.s32.totalorder %v2578, %v2990
          %vm3247 = vcmp.eq.s32.totalorder %v2579, %v2991
          %vm3248 = vcmp.eq.s32.totalorder %v2572, %v2992
          %vm3249 = vcmp.eq.s32.totalorder %v2573, %v2993
          %vm3250 = vcmp.eq.s32.totalorder %v2574, %v2994
          %vm3251 = vcmp.eq.s32.totalorder %v2575, %v2995
          %vm3252 = vcmp.eq.s32.totalorder %v2576, %v2996
          %vm3253 = vcmp.eq.s32.totalorder %v2577, %v2997
          %vm3254 = vcmp.eq.s32.totalorder %v2578, %v2998
          %vm3255 = vcmp.eq.s32.totalorder %v2579, %v2999
          %vm3256 = vcmp.eq.s32.totalorder %v2572, %v3000
          %vm3257 = vcmp.eq.s32.totalorder %v2573, %v3001
          %vm3258 = vcmp.eq.s32.totalorder %v2574, %v3002
          %vm3259 = vcmp.eq.s32.totalorder %v2575, %v3003
          %vm3260 = vcmp.eq.s32.totalorder %v2576, %v3004
          %vm3261 = vcmp.eq.s32.totalorder %v2577, %v3005
          %vm3262 = vcmp.eq.s32.totalorder %v2578, %v3006
          %vm3263 = vcmp.eq.s32.totalorder %v2579, %v3007
          %vm3264 = vcmp.eq.s32.totalorder %v2572, %v3008
          %vm3265 = vcmp.eq.s32.totalorder %v2573, %v3009
          %vm3266 = vcmp.eq.s32.totalorder %v2574, %v3010
          %vm3267 = vcmp.eq.s32.totalorder %v2575, %v3011
          %vm3268 = vcmp.eq.s32.totalorder %v2576, %v3012
          %vm3269 = vcmp.eq.s32.totalorder %v2577, %v3013
          %vm3270 = vcmp.eq.s32.totalorder %v2578, %v3014
          %vm3271 = vcmp.eq.s32.totalorder %v2579, %v3015
          %vm3272 = vcmp.eq.s32.totalorder %v2572, %v3016
          %vm3273 = vcmp.eq.s32.totalorder %v2573, %v3017
          %vm3274 = vcmp.eq.s32.totalorder %v2574, %v3018
          %vm3275 = vcmp.eq.s32.totalorder %v2575, %v3019
          %vm3276 = vcmp.eq.s32.totalorder %v2576, %v3020
          %vm3277 = vcmp.eq.s32.totalorder %v2577, %v3021
          %vm3278 = vcmp.eq.s32.totalorder %v2578, %v3022
          %vm3279 = vcmp.eq.s32.totalorder %v2579, %v3023
          %vm3280 = vcmp.eq.s32.totalorder %v2572, %v3024
          %vm3281 = vcmp.eq.s32.totalorder %v2573, %v3025
          %vm3282 = vcmp.eq.s32.totalorder %v2574, %v3026
          %vm3283 = vcmp.eq.s32.totalorder %v2575, %v3027
          %vm3284 = vcmp.eq.s32.totalorder %v2576, %v3028
          %vm3285 = vcmp.eq.s32.totalorder %v2577, %v3029
          %vm3286 = vcmp.eq.s32.totalorder %v2578, %v3030
          %vm3287 = vcmp.eq.s32.totalorder %v2579, %v3031
          %vm3288 = vcmp.eq.s32.totalorder %v2572, %v3032
          %vm3289 = vcmp.eq.s32.totalorder %v2573, %v3033
          %vm3290 = vcmp.eq.s32.totalorder %v2574, %v3034
          %vm3291 = vcmp.eq.s32.totalorder %v2575, %v3035
          %vm3292 = vcmp.eq.s32.totalorder %v2576, %v3036
          %vm3293 = vcmp.eq.s32.totalorder %v2577, %v3037
          %vm3294 = vcmp.eq.s32.totalorder %v2578, %v3038
          %vm3295 = vcmp.eq.s32.totalorder %v2579, %v3039
          %vm3296 = vcmp.eq.s32.totalorder %v2572, %v3040
          %vm3297 = vcmp.eq.s32.totalorder %v2573, %v3041
          %vm3298 = vcmp.eq.s32.totalorder %v2574, %v3042
          %vm3299 = vcmp.eq.s32.totalorder %v2575, %v3043
          %vm3300 = vcmp.eq.s32.totalorder %v2576, %v3044
          %vm3301 = vcmp.eq.s32.totalorder %v2577, %v3045
          %vm3302 = vcmp.eq.s32.totalorder %v2578, %v3046
          %vm3303 = vcmp.eq.s32.totalorder %v2579, %v3047
          %vm3304 = vcmp.eq.s32.totalorder %v2572, %v3048
          %vm3305 = vcmp.eq.s32.totalorder %v2573, %v3049
          %vm3306 = vcmp.eq.s32.totalorder %v2574, %v3050
          %vm3307 = vcmp.eq.s32.totalorder %v2575, %v3051
          %vm3308 = vcmp.eq.s32.totalorder %v2576, %v3052
          %vm3309 = vcmp.eq.s32.totalorder %v2577, %v3053
          %vm3310 = vcmp.eq.s32.totalorder %v2578, %v3054
          %vm3311 = vcmp.eq.s32.totalorder %v2579, %v3055
          %vm3312 = vcmp.eq.s32.totalorder %v2572, %v3056
          %vm3313 = vcmp.eq.s32.totalorder %v2573, %v3057
          %vm3314 = vcmp.eq.s32.totalorder %v2574, %v3058
          %vm3315 = vcmp.eq.s32.totalorder %v2575, %v3059
          %vm3316 = vcmp.eq.s32.totalorder %v2576, %v3060
          %vm3317 = vcmp.eq.s32.totalorder %v2577, %v3061
          %vm3318 = vcmp.eq.s32.totalorder %v2578, %v3062
          %vm3319 = vcmp.eq.s32.totalorder %v2579, %v3063
          %vm3320 = vcmp.eq.s32.totalorder %v2572, %v3064
          %vm3321 = vcmp.eq.s32.totalorder %v2573, %v3065
          %vm3322 = vcmp.eq.s32.totalorder %v2574, %v3066
          %vm3323 = vcmp.eq.s32.totalorder %v2575, %v3067
          %vm3324 = vcmp.eq.s32.totalorder %v2576, %v3068
          %vm3325 = vcmp.eq.s32.totalorder %v2577, %v3069
          %vm3326 = vcmp.eq.s32.totalorder %v2578, %v3070
          %vm3327 = vcmp.eq.s32.totalorder %v2579, %v3071
          %vm3328 = vcmp.eq.s32.totalorder %v2572, %v3072
          %vm3329 = vcmp.eq.s32.totalorder %v2573, %v3073
          %vm3330 = vcmp.eq.s32.totalorder %v2574, %v3074
          %vm3331 = vcmp.eq.s32.totalorder %v2575, %v3075
          %vm3332 = vcmp.eq.s32.totalorder %v2576, %v3076
          %vm3333 = vcmp.eq.s32.totalorder %v2577, %v3077
          %vm3334 = vcmp.eq.s32.totalorder %v2578, %v3078
          %vm3335 = vcmp.eq.s32.totalorder %v2579, %v3079
          %vm3336 = vcmp.eq.s32.totalorder %v2572, %v3080
          %vm3337 = vcmp.eq.s32.totalorder %v2573, %v3081
          %vm3338 = vcmp.eq.s32.totalorder %v2574, %v3082
          %vm3339 = vcmp.eq.s32.totalorder %v2575, %v3083
          %vm3340 = vcmp.eq.s32.totalorder %v2576, %v3084
          %vm3341 = vcmp.eq.s32.totalorder %v2577, %v3085
          %vm3342 = vcmp.eq.s32.totalorder %v2578, %v3086
          %vm3343 = vcmp.eq.s32.totalorder %v2579, %v3087
          %vm3344 = vcmp.eq.s32.totalorder %v2572, %v3088
          %vm3345 = vcmp.eq.s32.totalorder %v2573, %v3089
          %vm3346 = vcmp.eq.s32.totalorder %v2574, %v3090
          %vm3347 = vcmp.eq.s32.totalorder %v2575, %v3091
          %vm3348 = vcmp.eq.s32.totalorder %v2576, %v3092
          %vm3349 = vcmp.eq.s32.totalorder %v2577, %v3093
          %vm3350 = vcmp.eq.s32.totalorder %v2578, %v3094
          %vm3351 = vcmp.eq.s32.totalorder %v2579, %v3095
          %vm3352 = vcmp.eq.s32.totalorder %v2572, %v3096
          %vm3353 = vcmp.eq.s32.totalorder %v2573, %v3097
          %vm3354 = vcmp.eq.s32.totalorder %v2574, %v3098
          %vm3355 = vcmp.eq.s32.totalorder %v2575, %v3099
          %vm3356 = vcmp.eq.s32.totalorder %v2576, %v3100
          %vm3357 = vcmp.eq.s32.totalorder %v2577, %v3101
          %vm3358 = vcmp.eq.s32.totalorder %v2578, %v3102
          %vm3359 = vcmp.eq.s32.totalorder %v2579, %v3103
          %vm3360 = vcmp.eq.s32.totalorder %v2572, %v3104
          %vm3361 = vcmp.eq.s32.totalorder %v2573, %v3105
          %vm3362 = vcmp.eq.s32.totalorder %v2574, %v3106
          %vm3363 = vcmp.eq.s32.totalorder %v2575, %v3107
          %vm3364 = vcmp.eq.s32.totalorder %v2576, %v3108
          %vm3365 = vcmp.eq.s32.totalorder %v2577, %v3109
          %vm3366 = vcmp.eq.s32.totalorder %v2578, %v3110
          %vm3367 = vcmp.eq.s32.totalorder %v2579, %v3111
          %vm3368 = vcmp.eq.s32.totalorder %v2572, %v3112
          %vm3369 = vcmp.eq.s32.totalorder %v2573, %v3113
          %vm3370 = vcmp.eq.s32.totalorder %v2574, %v3114
          %vm3371 = vcmp.eq.s32.totalorder %v2575, %v3115
          %vm3372 = vcmp.eq.s32.totalorder %v2576, %v3116
          %vm3373 = vcmp.eq.s32.totalorder %v2577, %v3117
          %vm3374 = vcmp.eq.s32.totalorder %v2578, %v3118
          %vm3375 = vcmp.eq.s32.totalorder %v2579, %v3119
          %v3376 = vsel %vm3120, 1, 0
          %v3377 = vsel %vm3121, 1, 0
          %v3378 = vsel %vm3122, 1, 0
          %v3379 = vsel %vm3123, 1, 0
          %v3380 = vsel %vm3124, 1, 0
          %v3381 = vsel %vm3125, 1, 0
          %v3382 = vsel %vm3126, 1, 0
          %v3383 = vsel %vm3127, 1, 0
          %v3384 = vsel %vm3128, 1, 0
          %v3385 = vsel %vm3129, 1, 0
          %v3386 = vsel %vm3130, 1, 0
          %v3387 = vsel %vm3131, 1, 0
          %v3388 = vsel %vm3132, 1, 0
          %v3389 = vsel %vm3133, 1, 0
          %v3390 = vsel %vm3134, 1, 0
          %v3391 = vsel %vm3135, 1, 0
          %v3392 = vsel %vm3136, 1, 0
          %v3393 = vsel %vm3137, 1, 0
          %v3394 = vsel %vm3138, 1, 0
          %v3395 = vsel %vm3139, 1, 0
          %v3396 = vsel %vm3140, 1, 0
          %v3397 = vsel %vm3141, 1, 0
          %v3398 = vsel %vm3142, 1, 0
          %v3399 = vsel %vm3143, 1, 0
          %v3400 = vsel %vm3144, 1, 0
          %v3401 = vsel %vm3145, 1, 0
          %v3402 = vsel %vm3146, 1, 0
          %v3403 = vsel %vm3147, 1, 0
          %v3404 = vsel %vm3148, 1, 0
          %v3405 = vsel %vm3149, 1, 0
          %v3406 = vsel %vm3150, 1, 0
          %v3407 = vsel %vm3151, 1, 0
          %v3408 = vsel %vm3152, 1, 0
          %v3409 = vsel %vm3153, 1, 0
          %v3410 = vsel %vm3154, 1, 0
          %v3411 = vsel %vm3155, 1, 0
          %v3412 = vsel %vm3156, 1, 0
          %v3413 = vsel %vm3157, 1, 0
          %v3414 = vsel %vm3158, 1, 0
          %v3415 = vsel %vm3159, 1, 0
          %v3416 = vsel %vm3160, 1, 0
          %v3417 = vsel %vm3161, 1, 0
          %v3418 = vsel %vm3162, 1, 0
          %v3419 = vsel %vm3163, 1, 0
          %v3420 = vsel %vm3164, 1, 0
          %v3421 = vsel %vm3165, 1, 0
          %v3422 = vsel %vm3166, 1, 0
          %v3423 = vsel %vm3167, 1, 0
          %v3424 = vsel %vm3168, 1, 0
          %v3425 = vsel %vm3169, 1, 0
          %v3426 = vsel %vm3170, 1, 0
          %v3427 = vsel %vm3171, 1, 0
          %v3428 = vsel %vm3172, 1, 0
          %v3429 = vsel %vm3173, 1, 0
          %v3430 = vsel %vm3174, 1, 0
          %v3431 = vsel %vm3175, 1, 0
          %v3432 = vsel %vm3176, 1, 0
          %v3433 = vsel %vm3177, 1, 0
          %v3434 = vsel %vm3178, 1, 0
          %v3435 = vsel %vm3179, 1, 0
          %v3436 = vsel %vm3180, 1, 0
          %v3437 = vsel %vm3181, 1, 0
          %v3438 = vsel %vm3182, 1, 0
          %v3439 = vsel %vm3183, 1, 0
          %v3440 = vsel %vm3184, 1, 0
          %v3441 = vsel %vm3185, 1, 0
          %v3442 = vsel %vm3186, 1, 0
          %v3443 = vsel %vm3187, 1, 0
          %v3444 = vsel %vm3188, 1, 0
          %v3445 = vsel %vm3189, 1, 0
          %v3446 = vsel %vm3190, 1, 0
          %v3447 = vsel %vm3191, 1, 0
          %v3448 = vsel %vm3192, 1, 0
          %v3449 = vsel %vm3193, 1, 0
          %v3450 = vsel %vm3194, 1, 0
          %v3451 = vsel %vm3195, 1, 0
          %v3452 = vsel %vm3196, 1, 0
          %v3453 = vsel %vm3197, 1, 0
          %v3454 = vsel %vm3198, 1, 0
          %v3455 = vsel %vm3199, 1, 0
          %v3456 = vsel %vm3200, 1, 0
          %v3457 = vsel %vm3201, 1, 0
          %v3458 = vsel %vm3202, 1, 0
          %v3459 = vsel %vm3203, 1, 0
          %v3460 = vsel %vm3204, 1, 0
          %v3461 = vsel %vm3205, 1, 0
          %v3462 = vsel %vm3206, 1, 0
          %v3463 = vsel %vm3207, 1, 0
          %v3464 = vsel %vm3208, 1, 0
          %v3465 = vsel %vm3209, 1, 0
          %v3466 = vsel %vm3210, 1, 0
          %v3467 = vsel %vm3211, 1, 0
          %v3468 = vsel %vm3212, 1, 0
          %v3469 = vsel %vm3213, 1, 0
          %v3470 = vsel %vm3214, 1, 0
          %v3471 = vsel %vm3215, 1, 0
          %v3472 = vsel %vm3216, 1, 0
          %v3473 = vsel %vm3217, 1, 0
          %v3474 = vsel %vm3218, 1, 0
          %v3475 = vsel %vm3219, 1, 0
          %v3476 = vsel %vm3220, 1, 0
          %v3477 = vsel %vm3221, 1, 0
          %v3478 = vsel %vm3222, 1, 0
          %v3479 = vsel %vm3223, 1, 0
          %v3480 = vsel %vm3224, 1, 0
          %v3481 = vsel %vm3225, 1, 0
          %v3482 = vsel %vm3226, 1, 0
          %v3483 = vsel %vm3227, 1, 0
          %v3484 = vsel %vm3228, 1, 0
          %v3485 = vsel %vm3229, 1, 0
          %v3486 = vsel %vm3230, 1, 0
          %v3487 = vsel %vm3231, 1, 0
          %v3488 = vsel %vm3232, 1, 0
          %v3489 = vsel %vm3233, 1, 0
          %v3490 = vsel %vm3234, 1, 0
          %v3491 = vsel %vm3235, 1, 0
          %v3492 = vsel %vm3236, 1, 0
          %v3493 = vsel %vm3237, 1, 0
          %v3494 = vsel %vm3238, 1, 0
          %v3495 = vsel %vm3239, 1, 0
          %v3496 = vsel %vm3240, 1, 0
          %v3497 = vsel %vm3241, 1, 0
          %v3498 = vsel %vm3242, 1, 0
          %v3499 = vsel %vm3243, 1, 0
          %v3500 = vsel %vm3244, 1, 0
          %v3501 = vsel %vm3245, 1, 0
          %v3502 = vsel %vm3246, 1, 0
          %v3503 = vsel %vm3247, 1, 0
          %v3504 = vsel %vm3248, 1, 0
          %v3505 = vsel %vm3249, 1, 0
          %v3506 = vsel %vm3250, 1, 0
          %v3507 = vsel %vm3251, 1, 0
          %v3508 = vsel %vm3252, 1, 0
          %v3509 = vsel %vm3253, 1, 0
          %v3510 = vsel %vm3254, 1, 0
          %v3511 = vsel %vm3255, 1, 0
          %v3512 = vsel %vm3256, 1, 0
          %v3513 = vsel %vm3257, 1, 0
          %v3514 = vsel %vm3258, 1, 0
          %v3515 = vsel %vm3259, 1, 0
          %v3516 = vsel %vm3260, 1, 0
          %v3517 = vsel %vm3261, 1, 0
          %v3518 = vsel %vm3262, 1, 0
          %v3519 = vsel %vm3263, 1, 0
          %v3520 = vsel %vm3264, 1, 0
          %v3521 = vsel %vm3265, 1, 0
          %v3522 = vsel %vm3266, 1, 0
          %v3523 = vsel %vm3267, 1, 0
          %v3524 = vsel %vm3268, 1, 0
          %v3525 = vsel %vm3269, 1, 0
          %v3526 = vsel %vm3270, 1, 0
          %v3527 = vsel %vm3271, 1, 0
          %v3528 = vsel %vm3272, 1, 0
          %v3529 = vsel %vm3273, 1, 0
          %v3530 = vsel %vm3274, 1, 0
          %v3531 = vsel %vm3275, 1, 0
          %v3532 = vsel %vm3276, 1, 0
          %v3533 = vsel %vm3277, 1, 0
          %v3534 = vsel %vm3278, 1, 0
          %v3535 = vsel %vm3279, 1, 0
          %v3536 = vsel %vm3280, 1, 0
          %v3537 = vsel %vm3281, 1, 0
          %v3538 = vsel %vm3282, 1, 0
          %v3539 = vsel %vm3283, 1, 0
          %v3540 = vsel %vm3284, 1, 0
          %v3541 = vsel %vm3285, 1, 0
          %v3542 = vsel %vm3286, 1, 0
          %v3543 = vsel %vm3287, 1, 0
          %v3544 = vsel %vm3288, 1, 0
          %v3545 = vsel %vm3289, 1, 0
          %v3546 = vsel %vm3290, 1, 0
          %v3547 = vsel %vm3291, 1, 0
          %v3548 = vsel %vm3292, 1, 0
          %v3549 = vsel %vm3293, 1, 0
          %v3550 = vsel %vm3294, 1, 0
          %v3551 = vsel %vm3295, 1, 0
          %v3552 = vsel %vm3296, 1, 0
          %v3553 = vsel %vm3297, 1, 0
          %v3554 = vsel %vm3298, 1, 0
          %v3555 = vsel %vm3299, 1, 0
          %v3556 = vsel %vm3300, 1, 0
          %v3557 = vsel %vm3301, 1, 0
          %v3558 = vsel %vm3302, 1, 0
          %v3559 = vsel %vm3303, 1, 0
          %v3560 = vsel %vm3304, 1, 0
          %v3561 = vsel %vm3305, 1, 0
          %v3562 = vsel %vm3306, 1, 0
          %v3563 = vsel %vm3307, 1, 0
          %v3564 = vsel %vm3308, 1, 0
          %v3565 = vsel %vm3309, 1, 0
          %v3566 = vsel %vm3310, 1, 0
          %v3567 = vsel %vm3311, 1, 0
          %v3568 = vsel %vm3312, 1, 0
          %v3569 = vsel %vm3313, 1, 0
          %v3570 = vsel %vm3314, 1, 0
          %v3571 = vsel %vm3315, 1, 0
          %v3572 = vsel %vm3316, 1, 0
          %v3573 = vsel %vm3317, 1, 0
          %v3574 = vsel %vm3318, 1, 0
          %v3575 = vsel %vm3319, 1, 0
          %v3576 = vsel %vm3320, 1, 0
          %v3577 = vsel %vm3321, 1, 0
          %v3578 = vsel %vm3322, 1, 0
          %v3579 = vsel %vm3323, 1, 0
          %v3580 = vsel %vm3324, 1, 0
          %v3581 = vsel %vm3325, 1, 0
          %v3582 = vsel %vm3326, 1, 0
          %v3583 = vsel %vm3327, 1, 0
          %v3584 = vsel %vm3328, 1, 0
          %v3585 = vsel %vm3329, 1, 0
          %v3586 = vsel %vm3330, 1, 0
          %v3587 = vsel %vm3331, 1, 0
          %v3588 = vsel %vm3332, 1, 0
          %v3589 = vsel %vm3333, 1, 0
          %v3590 = vsel %vm3334, 1, 0
          %v3591 = vsel %vm3335, 1, 0
          %v3592 = vsel %vm3336, 1, 0
          %v3593 = vsel %vm3337, 1, 0
          %v3594 = vsel %vm3338, 1, 0
          %v3595 = vsel %vm3339, 1, 0
          %v3596 = vsel %vm3340, 1, 0
          %v3597 = vsel %vm3341, 1, 0
          %v3598 = vsel %vm3342, 1, 0
          %v3599 = vsel %vm3343, 1, 0
          %v3600 = vsel %vm3344, 1, 0
          %v3601 = vsel %vm3345, 1, 0
          %v3602 = vsel %vm3346, 1, 0
          %v3603 = vsel %vm3347, 1, 0
          %v3604 = vsel %vm3348, 1, 0
          %v3605 = vsel %vm3349, 1, 0
          %v3606 = vsel %vm3350, 1, 0
          %v3607 = vsel %vm3351, 1, 0
          %v3608 = vsel %vm3352, 1, 0
          %v3609 = vsel %vm3353, 1, 0
          %v3610 = vsel %vm3354, 1, 0
          %v3611 = vsel %vm3355, 1, 0
          %v3612 = vsel %vm3356, 1, 0
          %v3613 = vsel %vm3357, 1, 0
          %v3614 = vsel %vm3358, 1, 0
          %v3615 = vsel %vm3359, 1, 0
          %v3616 = vsel %vm3360, 1, 0
          %v3617 = vsel %vm3361, 1, 0
          %v3618 = vsel %vm3362, 1, 0
          %v3619 = vsel %vm3363, 1, 0
          %v3620 = vsel %vm3364, 1, 0
          %v3621 = vsel %vm3365, 1, 0
          %v3622 = vsel %vm3366, 1, 0
          %v3623 = vsel %vm3367, 1, 0
          %v3624 = vsel %vm3368, 1, 0
          %v3625 = vsel %vm3369, 1, 0
          %v3626 = vsel %vm3370, 1, 0
          %v3627 = vsel %vm3371, 1, 0
          %v3628 = vsel %vm3372, 1, 0
          %v3629 = vsel %vm3373, 1, 0
          %v3630 = vsel %vm3374, 1, 0
          %v3631 = vsel %vm3375, 1, 0
          %v3632 = vcvt.s32.f32 %v3376
          %v3633 = vcvt.s32.f32 %v3377
          %v3634 = vcvt.s32.f32 %v3378
          %v3635 = vcvt.s32.f32 %v3379
          %v3636 = vcvt.s32.f32 %v3380
          %v3637 = vcvt.s32.f32 %v3381
          %v3638 = vcvt.s32.f32 %v3382
          %v3639 = vcvt.s32.f32 %v3383
          %v3640 = vcvt.s32.f32 %v3384
          %v3641 = vcvt.s32.f32 %v3385
          %v3642 = vcvt.s32.f32 %v3386
          %v3643 = vcvt.s32.f32 %v3387
          %v3644 = vcvt.s32.f32 %v3388
          %v3645 = vcvt.s32.f32 %v3389
          %v3646 = vcvt.s32.f32 %v3390
          %v3647 = vcvt.s32.f32 %v3391
          %v3648 = vcvt.s32.f32 %v3392
          %v3649 = vcvt.s32.f32 %v3393
          %v3650 = vcvt.s32.f32 %v3394
          %v3651 = vcvt.s32.f32 %v3395
          %v3652 = vcvt.s32.f32 %v3396
          %v3653 = vcvt.s32.f32 %v3397
          %v3654 = vcvt.s32.f32 %v3398
          %v3655 = vcvt.s32.f32 %v3399
          %v3656 = vcvt.s32.f32 %v3400
          %v3657 = vcvt.s32.f32 %v3401
          %v3658 = vcvt.s32.f32 %v3402
          %v3659 = vcvt.s32.f32 %v3403
          %v3660 = vcvt.s32.f32 %v3404
          %v3661 = vcvt.s32.f32 %v3405
          %v3662 = vcvt.s32.f32 %v3406
          %v3663 = vcvt.s32.f32 %v3407
          %v3664 = vcvt.s32.f32 %v3408
          %v3665 = vcvt.s32.f32 %v3409
          %v3666 = vcvt.s32.f32 %v3410
          %v3667 = vcvt.s32.f32 %v3411
          %v3668 = vcvt.s32.f32 %v3412
          %v3669 = vcvt.s32.f32 %v3413
          %v3670 = vcvt.s32.f32 %v3414
          %v3671 = vcvt.s32.f32 %v3415
          %v3672 = vcvt.s32.f32 %v3416
          %v3673 = vcvt.s32.f32 %v3417
          %v3674 = vcvt.s32.f32 %v3418
          %v3675 = vcvt.s32.f32 %v3419
          %v3676 = vcvt.s32.f32 %v3420
          %v3677 = vcvt.s32.f32 %v3421
          %v3678 = vcvt.s32.f32 %v3422
          %v3679 = vcvt.s32.f32 %v3423
          %v3680 = vcvt.s32.f32 %v3424
          %v3681 = vcvt.s32.f32 %v3425
          %v3682 = vcvt.s32.f32 %v3426
          %v3683 = vcvt.s32.f32 %v3427
          %v3684 = vcvt.s32.f32 %v3428
          %v3685 = vcvt.s32.f32 %v3429
          %v3686 = vcvt.s32.f32 %v3430
          %v3687 = vcvt.s32.f32 %v3431
          %v3688 = vcvt.s32.f32 %v3432
          %v3689 = vcvt.s32.f32 %v3433
          %v3690 = vcvt.s32.f32 %v3434
          %v3691 = vcvt.s32.f32 %v3435
          %v3692 = vcvt.s32.f32 %v3436
          %v3693 = vcvt.s32.f32 %v3437
          %v3694 = vcvt.s32.f32 %v3438
          %v3695 = vcvt.s32.f32 %v3439
          %v3696 = vcvt.s32.f32 %v3440
          %v3697 = vcvt.s32.f32 %v3441
          %v3698 = vcvt.s32.f32 %v3442
          %v3699 = vcvt.s32.f32 %v3443
          %v3700 = vcvt.s32.f32 %v3444
          %v3701 = vcvt.s32.f32 %v3445
          %v3702 = vcvt.s32.f32 %v3446
          %v3703 = vcvt.s32.f32 %v3447
          %v3704 = vcvt.s32.f32 %v3448
          %v3705 = vcvt.s32.f32 %v3449
          %v3706 = vcvt.s32.f32 %v3450
          %v3707 = vcvt.s32.f32 %v3451
          %v3708 = vcvt.s32.f32 %v3452
          %v3709 = vcvt.s32.f32 %v3453
          %v3710 = vcvt.s32.f32 %v3454
          %v3711 = vcvt.s32.f32 %v3455
          %v3712 = vcvt.s32.f32 %v3456
          %v3713 = vcvt.s32.f32 %v3457
          %v3714 = vcvt.s32.f32 %v3458
          %v3715 = vcvt.s32.f32 %v3459
          %v3716 = vcvt.s32.f32 %v3460
          %v3717 = vcvt.s32.f32 %v3461
          %v3718 = vcvt.s32.f32 %v3462
          %v3719 = vcvt.s32.f32 %v3463
          %v3720 = vcvt.s32.f32 %v3464
          %v3721 = vcvt.s32.f32 %v3465
          %v3722 = vcvt.s32.f32 %v3466
          %v3723 = vcvt.s32.f32 %v3467
          %v3724 = vcvt.s32.f32 %v3468
          %v3725 = vcvt.s32.f32 %v3469
          %v3726 = vcvt.s32.f32 %v3470
          %v3727 = vcvt.s32.f32 %v3471
          %v3728 = vcvt.s32.f32 %v3472
          %v3729 = vcvt.s32.f32 %v3473
          %v3730 = vcvt.s32.f32 %v3474
          %v3731 = vcvt.s32.f32 %v3475
          %v3732 = vcvt.s32.f32 %v3476
          %v3733 = vcvt.s32.f32 %v3477
          %v3734 = vcvt.s32.f32 %v3478
          %v3735 = vcvt.s32.f32 %v3479
          %v3736 = vcvt.s32.f32 %v3480
          %v3737 = vcvt.s32.f32 %v3481
          %v3738 = vcvt.s32.f32 %v3482
          %v3739 = vcvt.s32.f32 %v3483
          %v3740 = vcvt.s32.f32 %v3484
          %v3741 = vcvt.s32.f32 %v3485
          %v3742 = vcvt.s32.f32 %v3486
          %v3743 = vcvt.s32.f32 %v3487
          %v3744 = vcvt.s32.f32 %v3488
          %v3745 = vcvt.s32.f32 %v3489
          %v3746 = vcvt.s32.f32 %v3490
          %v3747 = vcvt.s32.f32 %v3491
          %v3748 = vcvt.s32.f32 %v3492
          %v3749 = vcvt.s32.f32 %v3493
          %v3750 = vcvt.s32.f32 %v3494
          %v3751 = vcvt.s32.f32 %v3495
          %v3752 = vcvt.s32.f32 %v3496
          %v3753 = vcvt.s32.f32 %v3497
          %v3754 = vcvt.s32.f32 %v3498
          %v3755 = vcvt.s32.f32 %v3499
          %v3756 = vcvt.s32.f32 %v3500
          %v3757 = vcvt.s32.f32 %v3501
          %v3758 = vcvt.s32.f32 %v3502
          %v3759 = vcvt.s32.f32 %v3503
          %v3760 = vcvt.s32.f32 %v3504
          %v3761 = vcvt.s32.f32 %v3505
          %v3762 = vcvt.s32.f32 %v3506
          %v3763 = vcvt.s32.f32 %v3507
          %v3764 = vcvt.s32.f32 %v3508
          %v3765 = vcvt.s32.f32 %v3509
          %v3766 = vcvt.s32.f32 %v3510
          %v3767 = vcvt.s32.f32 %v3511
          %v3768 = vcvt.s32.f32 %v3512
          %v3769 = vcvt.s32.f32 %v3513
          %v3770 = vcvt.s32.f32 %v3514
          %v3771 = vcvt.s32.f32 %v3515
          %v3772 = vcvt.s32.f32 %v3516
          %v3773 = vcvt.s32.f32 %v3517
          %v3774 = vcvt.s32.f32 %v3518
          %v3775 = vcvt.s32.f32 %v3519
          %v3776 = vcvt.s32.f32 %v3520
          %v3777 = vcvt.s32.f32 %v3521
          %v3778 = vcvt.s32.f32 %v3522
          %v3779 = vcvt.s32.f32 %v3523
          %v3780 = vcvt.s32.f32 %v3524
          %v3781 = vcvt.s32.f32 %v3525
          %v3782 = vcvt.s32.f32 %v3526
          %v3783 = vcvt.s32.f32 %v3527
          %v3784 = vcvt.s32.f32 %v3528
          %v3785 = vcvt.s32.f32 %v3529
          %v3786 = vcvt.s32.f32 %v3530
          %v3787 = vcvt.s32.f32 %v3531
          %v3788 = vcvt.s32.f32 %v3532
          %v3789 = vcvt.s32.f32 %v3533
          %v3790 = vcvt.s32.f32 %v3534
          %v3791 = vcvt.s32.f32 %v3535
          %v3792 = vcvt.s32.f32 %v3536
          %v3793 = vcvt.s32.f32 %v3537
          %v3794 = vcvt.s32.f32 %v3538
          %v3795 = vcvt.s32.f32 %v3539
          %v3796 = vcvt.s32.f32 %v3540
          %v3797 = vcvt.s32.f32 %v3541
          %v3798 = vcvt.s32.f32 %v3542
          %v3799 = vcvt.s32.f32 %v3543
          %v3800 = vcvt.s32.f32 %v3544
          %v3801 = vcvt.s32.f32 %v3545
          %v3802 = vcvt.s32.f32 %v3546
          %v3803 = vcvt.s32.f32 %v3547
          %v3804 = vcvt.s32.f32 %v3548
          %v3805 = vcvt.s32.f32 %v3549
          %v3806 = vcvt.s32.f32 %v3550
          %v3807 = vcvt.s32.f32 %v3551
          %v3808 = vcvt.s32.f32 %v3552
          %v3809 = vcvt.s32.f32 %v3553
          %v3810 = vcvt.s32.f32 %v3554
          %v3811 = vcvt.s32.f32 %v3555
          %v3812 = vcvt.s32.f32 %v3556
          %v3813 = vcvt.s32.f32 %v3557
          %v3814 = vcvt.s32.f32 %v3558
          %v3815 = vcvt.s32.f32 %v3559
          %v3816 = vcvt.s32.f32 %v3560
          %v3817 = vcvt.s32.f32 %v3561
          %v3818 = vcvt.s32.f32 %v3562
          %v3819 = vcvt.s32.f32 %v3563
          %v3820 = vcvt.s32.f32 %v3564
          %v3821 = vcvt.s32.f32 %v3565
          %v3822 = vcvt.s32.f32 %v3566
          %v3823 = vcvt.s32.f32 %v3567
          %v3824 = vcvt.s32.f32 %v3568
          %v3825 = vcvt.s32.f32 %v3569
          %v3826 = vcvt.s32.f32 %v3570
          %v3827 = vcvt.s32.f32 %v3571
          %v3828 = vcvt.s32.f32 %v3572
          %v3829 = vcvt.s32.f32 %v3573
          %v3830 = vcvt.s32.f32 %v3574
          %v3831 = vcvt.s32.f32 %v3575
          %v3832 = vcvt.s32.f32 %v3576
          %v3833 = vcvt.s32.f32 %v3577
          %v3834 = vcvt.s32.f32 %v3578
          %v3835 = vcvt.s32.f32 %v3579
          %v3836 = vcvt.s32.f32 %v3580
          %v3837 = vcvt.s32.f32 %v3581
          %v3838 = vcvt.s32.f32 %v3582
          %v3839 = vcvt.s32.f32 %v3583
          %v3840 = vcvt.s32.f32 %v3584
          %v3841 = vcvt.s32.f32 %v3585
          %v3842 = vcvt.s32.f32 %v3586
          %v3843 = vcvt.s32.f32 %v3587
          %v3844 = vcvt.s32.f32 %v3588
          %v3845 = vcvt.s32.f32 %v3589
          %v3846 = vcvt.s32.f32 %v3590
          %v3847 = vcvt.s32.f32 %v3591
          %v3848 = vcvt.s32.f32 %v3592
          %v3849 = vcvt.s32.f32 %v3593
          %v3850 = vcvt.s32.f32 %v3594
          %v3851 = vcvt.s32.f32 %v3595
          %v3852 = vcvt.s32.f32 %v3596
          %v3853 = vcvt.s32.f32 %v3597
          %v3854 = vcvt.s32.f32 %v3598
          %v3855 = vcvt.s32.f32 %v3599
          %v3856 = vcvt.s32.f32 %v3600
          %v3857 = vcvt.s32.f32 %v3601
          %v3858 = vcvt.s32.f32 %v3602
          %v3859 = vcvt.s32.f32 %v3603
          %v3860 = vcvt.s32.f32 %v3604
          %v3861 = vcvt.s32.f32 %v3605
          %v3862 = vcvt.s32.f32 %v3606
          %v3863 = vcvt.s32.f32 %v3607
          %v3864 = vcvt.s32.f32 %v3608
          %v3865 = vcvt.s32.f32 %v3609
          %v3866 = vcvt.s32.f32 %v3610
          %v3867 = vcvt.s32.f32 %v3611
          %v3868 = vcvt.s32.f32 %v3612
          %v3869 = vcvt.s32.f32 %v3613
          %v3870 = vcvt.s32.f32 %v3614
          %v3871 = vcvt.s32.f32 %v3615
          %v3872 = vcvt.s32.f32 %v3616
          %v3873 = vcvt.s32.f32 %v3617
          %v3874 = vcvt.s32.f32 %v3618
          %v3875 = vcvt.s32.f32 %v3619
          %v3876 = vcvt.s32.f32 %v3620
          %v3877 = vcvt.s32.f32 %v3621
          %v3878 = vcvt.s32.f32 %v3622
          %v3879 = vcvt.s32.f32 %v3623
          %v3880 = vcvt.s32.f32 %v3624
          %v3881 = vcvt.s32.f32 %v3625
          %v3882 = vcvt.s32.f32 %v3626
          %v3883 = vcvt.s32.f32 %v3627
          %v3884 = vcvt.s32.f32 %v3628
          %v3885 = vcvt.s32.f32 %v3629
          %v3886 = vcvt.s32.f32 %v3630
          %v3887 = vcvt.s32.f32 %v3631
          %v3888 = vpack.c.bf16 %v3640, %v3632
          %v3889 = vpack.c.bf16 %v3641, %v3633
          %v3890 = vpack.c.bf16 %v3642, %v3634
          %v3891 = vpack.c.bf16 %v3643, %v3635
          %v3892 = vpack.c.bf16 %v3644, %v3636
          %v3893 = vpack.c.bf16 %v3645, %v3637
          %v3894 = vpack.c.bf16 %v3646, %v3638
          %v3895 = vpack.c.bf16 %v3647, %v3639
          %v3896 = vpack.c.bf16 %v3656, %v3648
          %v3897 = vpack.c.bf16 %v3657, %v3649
          %v3898 = vpack.c.bf16 %v3658, %v3650
          %v3899 = vpack.c.bf16 %v3659, %v3651
          %v3900 = vpack.c.bf16 %v3660, %v3652
          %v3901 = vpack.c.bf16 %v3661, %v3653
          %v3902 = vpack.c.bf16 %v3662, %v3654
          %v3903 = vpack.c.bf16 %v3663, %v3655
          %v3904 = vpack.c.bf16 %v3672, %v3664
          %v3905 = vpack.c.bf16 %v3673, %v3665
          %v3906 = vpack.c.bf16 %v3674, %v3666
          %v3907 = vpack.c.bf16 %v3675, %v3667
          %v3908 = vpack.c.bf16 %v3676, %v3668
          %v3909 = vpack.c.bf16 %v3677, %v3669
          %v3910 = vpack.c.bf16 %v3678, %v3670
          %v3911 = vpack.c.bf16 %v3679, %v3671
          %v3912 = vpack.c.bf16 %v3688, %v3680
          %v3913 = vpack.c.bf16 %v3689, %v3681
          %v3914 = vpack.c.bf16 %v3690, %v3682
          %v3915 = vpack.c.bf16 %v3691, %v3683
          %v3916 = vpack.c.bf16 %v3692, %v3684
          %v3917 = vpack.c.bf16 %v3693, %v3685
          %v3918 = vpack.c.bf16 %v3694, %v3686
          %v3919 = vpack.c.bf16 %v3695, %v3687
          %v3920 = vpack.c.bf16 %v3704, %v3696
          %v3921 = vpack.c.bf16 %v3705, %v3697
          %v3922 = vpack.c.bf16 %v3706, %v3698
          %v3923 = vpack.c.bf16 %v3707, %v3699
          %v3924 = vpack.c.bf16 %v3708, %v3700
          %v3925 = vpack.c.bf16 %v3709, %v3701
          %v3926 = vpack.c.bf16 %v3710, %v3702
          %v3927 = vpack.c.bf16 %v3711, %v3703
          %v3928 = vpack.c.bf16 %v3720, %v3712
          %v3929 = vpack.c.bf16 %v3721, %v3713
          %v3930 = vpack.c.bf16 %v3722, %v3714
          %v3931 = vpack.c.bf16 %v3723, %v3715
          %v3932 = vpack.c.bf16 %v3724, %v3716
          %v3933 = vpack.c.bf16 %v3725, %v3717
          %v3934 = vpack.c.bf16 %v3726, %v3718
          %v3935 = vpack.c.bf16 %v3727, %v3719
          %v3936 = vpack.c.bf16 %v3736, %v3728
          %v3937 = vpack.c.bf16 %v3737, %v3729
          %v3938 = vpack.c.bf16 %v3738, %v3730
          %v3939 = vpack.c.bf16 %v3739, %v3731
          %v3940 = vpack.c.bf16 %v3740, %v3732
          %v3941 = vpack.c.bf16 %v3741, %v3733
          %v3942 = vpack.c.bf16 %v3742, %v3734
          %v3943 = vpack.c.bf16 %v3743, %v3735
          %v3944 = vpack.c.bf16 %v3752, %v3744
          %v3945 = vpack.c.bf16 %v3753, %v3745
          %v3946 = vpack.c.bf16 %v3754, %v3746
          %v3947 = vpack.c.bf16 %v3755, %v3747
          %v3948 = vpack.c.bf16 %v3756, %v3748
          %v3949 = vpack.c.bf16 %v3757, %v3749
          %v3950 = vpack.c.bf16 %v3758, %v3750
          %v3951 = vpack.c.bf16 %v3759, %v3751
          %v3952 = vpack.c.bf16 %v3768, %v3760
          %v3953 = vpack.c.bf16 %v3769, %v3761
          %v3954 = vpack.c.bf16 %v3770, %v3762
          %v3955 = vpack.c.bf16 %v3771, %v3763
          %v3956 = vpack.c.bf16 %v3772, %v3764
          %v3957 = vpack.c.bf16 %v3773, %v3765
          %v3958 = vpack.c.bf16 %v3774, %v3766
          %v3959 = vpack.c.bf16 %v3775, %v3767
          %v3960 = vpack.c.bf16 %v3784, %v3776
          %v3961 = vpack.c.bf16 %v3785, %v3777
          %v3962 = vpack.c.bf16 %v3786, %v3778
          %v3963 = vpack.c.bf16 %v3787, %v3779
          %v3964 = vpack.c.bf16 %v3788, %v3780
          %v3965 = vpack.c.bf16 %v3789, %v3781
          %v3966 = vpack.c.bf16 %v3790, %v3782
          %v3967 = vpack.c.bf16 %v3791, %v3783
          %v3968 = vpack.c.bf16 %v3800, %v3792
          %v3969 = vpack.c.bf16 %v3801, %v3793
          %v3970 = vpack.c.bf16 %v3802, %v3794
          %v3971 = vpack.c.bf16 %v3803, %v3795
          %v3972 = vpack.c.bf16 %v3804, %v3796
          %v3973 = vpack.c.bf16 %v3805, %v3797
          %v3974 = vpack.c.bf16 %v3806, %v3798
          %v3975 = vpack.c.bf16 %v3807, %v3799
          %v3976 = vpack.c.bf16 %v3816, %v3808
          %v3977 = vpack.c.bf16 %v3817, %v3809
          %v3978 = vpack.c.bf16 %v3818, %v3810
          %v3979 = vpack.c.bf16 %v3819, %v3811
          %v3980 = vpack.c.bf16 %v3820, %v3812
          %v3981 = vpack.c.bf16 %v3821, %v3813
          %v3982 = vpack.c.bf16 %v3822, %v3814
          %v3983 = vpack.c.bf16 %v3823, %v3815
          %v3984 = vpack.c.bf16 %v3832, %v3824
          %v3985 = vpack.c.bf16 %v3833, %v3825
          %v3986 = vpack.c.bf16 %v3834, %v3826
          %v3987 = vpack.c.bf16 %v3835, %v3827
          %v3988 = vpack.c.bf16 %v3836, %v3828
          %v3989 = vpack.c.bf16 %v3837, %v3829
          %v3990 = vpack.c.bf16 %v3838, %v3830
          %v3991 = vpack.c.bf16 %v3839, %v3831
          %v3992 = vpack.c.bf16 %v3848, %v3840
          %v3993 = vpack.c.bf16 %v3849, %v3841
          %v3994 = vpack.c.bf16 %v3850, %v3842
          %v3995 = vpack.c.bf16 %v3851, %v3843
          %v3996 = vpack.c.bf16 %v3852, %v3844
          %v3997 = vpack.c.bf16 %v3853, %v3845
          %v3998 = vpack.c.bf16 %v3854, %v3846
          %v3999 = vpack.c.bf16 %v3855, %v3847
          %v4000 = vpack.c.bf16 %v3864, %v3856
          %v4001 = vpack.c.bf16 %v3865, %v3857
          %v4002 = vpack.c.bf16 %v3866, %v3858
          %v4003 = vpack.c.bf16 %v3867, %v3859
          %v4004 = vpack.c.bf16 %v3868, %v3860
          %v4005 = vpack.c.bf16 %v3869, %v3861
          %v4006 = vpack.c.bf16 %v3870, %v3862
          %v4007 = vpack.c.bf16 %v3871, %v3863
          %v4008 = vpack.c.bf16 %v3880, %v3872
          %v4009 = vpack.c.bf16 %v3881, %v3873
          %v4010 = vpack.c.bf16 %v3882, %v3874
          %v4011 = vpack.c.bf16 %v3883, %v3875
          %v4012 = vpack.c.bf16 %v3884, %v3876
          %v4013 = vpack.c.bf16 %v3885, %v3877
          %v4014 = vpack.c.bf16 %v3886, %v3878
          %v4015 = vpack.c.bf16 %v3887, %v3879
          %s4016 = smul.u32 %s2501, 64
          %s4017 = smul.addr %s4016, 8
          %s4018 = scalar_lea.vmem [#allocation2], %s4017
          %v4019 = vld [vmem:[%s4018] sm:$0xff]
          %v4020 = vld [vmem:[%s4018 + $0x8] sm:$0xff]
          %v4021 = vld [vmem:[%s4018 + $0x10] sm:$0xff]
          %v4022 = vld [vmem:[%s4018 + $0x18] sm:$0xff]
          %v4023 = vld [vmem:[%s4018 + $0x20] sm:$0xff]
          %v4024 = vld [vmem:[%s4018 + $0x28] sm:$0xff]
          %v4025 = vld [vmem:[%s4018 + $0x30] sm:$0xff]
          %v4026 = vld [vmem:[%s4018 + $0x38] sm:$0xff]
          %v4027 = vld [vmem:[%s4018 + $0x40] sm:$0xff]
          %v4028 = vld [vmem:[%s4018 + $0x48] sm:$0xff]
          %v4029 = vld [vmem:[%s4018 + $0x50] sm:$0xff]
          %v4030 = vld [vmem:[%s4018 + $0x58] sm:$0xff]
          %v4031 = vld [vmem:[%s4018 + $0x60] sm:$0xff]
          %v4032 = vld [vmem:[%s4018 + $0x68] sm:$0xff]
          %v4033 = vld [vmem:[%s4018 + $0x70] sm:$0xff]
          %v4034 = vld [vmem:[%s4018 + $0x78] sm:$0xff]
          %v4035 = vld [vmem:[%s4018 + $0x80] sm:$0xff]
          %v4036 = vld [vmem:[%s4018 + $0x88] sm:$0xff]
          %v4037 = vld [vmem:[%s4018 + $0x90] sm:$0xff]
          %v4038 = vld [vmem:[%s4018 + $0x98] sm:$0xff]
          %v4039 = vld [vmem:[%s4018 + $0xa0] sm:$0xff]
          %v4040 = vld [vmem:[%s4018 + $0xa8] sm:$0xff]
          %v4041 = vld [vmem:[%s4018 + $0xb0] sm:$0xff]
          %v4042 = vld [vmem:[%s4018 + $0xb8] sm:$0xff]
          %v4043 = vld [vmem:[%s4018 + $0xc0] sm:$0xff]
          %v4044 = vld [vmem:[%s4018 + $0xc8] sm:$0xff]
          %v4045 = vld [vmem:[%s4018 + $0xd0] sm:$0xff]
          %v4046 = vld [vmem:[%s4018 + $0xd8] sm:$0xff]
          %v4047 = vld [vmem:[%s4018 + $0xe0] sm:$0xff]
          %v4048 = vld [vmem:[%s4018 + $0xe8] sm:$0xff]
          %v4049 = vld [vmem:[%s4018 + $0xf0] sm:$0xff]
          %v4050 = vld [vmem:[%s4018 + $0xf8] sm:$0xff]
          %v4051 = vld [vmem:[%s4018 + $0x100] sm:$0xff]
          %v4052 = vld [vmem:[%s4018 + $0x108] sm:$0xff]
          %v4053 = vld [vmem:[%s4018 + $0x110] sm:$0xff]
          %v4054 = vld [vmem:[%s4018 + $0x118] sm:$0xff]
          %v4055 = vld [vmem:[%s4018 + $0x120] sm:$0xff]
          %v4056 = vld [vmem:[%s4018 + $0x128] sm:$0xff]
          %v4057 = vld [vmem:[%s4018 + $0x130] sm:$0xff]
          %v4058 = vld [vmem:[%s4018 + $0x138] sm:$0xff]
          %v4059 = vld [vmem:[%s4018 + $0x140] sm:$0xff]
          %v4060 = vld [vmem:[%s4018 + $0x148] sm:$0xff]
          %v4061 = vld [vmem:[%s4018 + $0x150] sm:$0xff]
          %v4062 = vld [vmem:[%s4018 + $0x158] sm:$0xff]
          %v4063 = vld [vmem:[%s4018 + $0x160] sm:$0xff]
          %v4064 = vld [vmem:[%s4018 + $0x168] sm:$0xff]
          %v4065 = vld [vmem:[%s4018 + $0x170] sm:$0xff]
          %v4066 = vld [vmem:[%s4018 + $0x178] sm:$0xff]
          %v4067 = vld [vmem:[%s4018 + $0x180] sm:$0xff]
          %v4068 = vld [vmem:[%s4018 + $0x188] sm:$0xff]
          %v4069 = vld [vmem:[%s4018 + $0x190] sm:$0xff]
          %v4070 = vld [vmem:[%s4018 + $0x198] sm:$0xff]
          %v4071 = vld [vmem:[%s4018 + $0x1a0] sm:$0xff]
          %v4072 = vld [vmem:[%s4018 + $0x1a8] sm:$0xff]
          %v4073 = vld [vmem:[%s4018 + $0x1b0] sm:$0xff]
          %v4074 = vld [vmem:[%s4018 + $0x1b8] sm:$0xff]
          %v4075 = vld [vmem:[%s4018 + $0x1c0] sm:$0xff]
          %v4076 = vld [vmem:[%s4018 + $0x1c8] sm:$0xff]
          %v4077 = vld [vmem:[%s4018 + $0x1d0] sm:$0xff]
          %v4078 = vld [vmem:[%s4018 + $0x1d8] sm:$0xff]
          %v4079 = vld [vmem:[%s4018 + $0x1e0] sm:$0xff]
          %v4080 = vld [vmem:[%s4018 + $0x1e8] sm:$0xff]
          %v4081 = vld [vmem:[%s4018 + $0x1f0] sm:$0xff]
          %v4082 = vld [vmem:[%s4018 + $0x1f8] sm:$0xff]
          %4083 = vmatprep.subr.bf16.mxu0 0
          %4084 = vmatpush1.bf16.msra.mxu0 %v4019
          %4085 = vmatprep.subr.bf16.mxu0 0
          %4086 = vmatpush1.bf16.msra.mxu0 %v4020
          %4087 = vmatprep.subr.bf16.mxu0 0
          %4088 = vmatpush1.bf16.msra.mxu0 %v4021
          %4089 = vmatprep.subr.bf16.mxu0 0
          %4090 = vmatpush1.bf16.msra.mxu0 %v4022
          %4091 = vmatprep.subr.bf16.mxu0 0
          %4092 = vmatpush1.bf16.msra.mxu0 %v4023
          %4093 = vmatprep.subr.bf16.mxu0 0
          %4094 = vmatpush1.bf16.msra.mxu0 %v4024
          %4095 = vmatprep.subr.bf16.mxu0 0
          %4096 = vmatpush1.bf16.msra.mxu0 %v4025
          %4097 = vmatprep.subr.bf16.mxu0 0
          %4098 = vmatpush1.bf16.msra.mxu0 %v4026
          %4099 = vmatprep.subr.bf16.mxu0 0
          %4100 = vmatpush1.bf16.msra.mxu0 %v4027
          %4101 = vmatprep.subr.bf16.mxu0 0
          %4102 = vmatpush1.bf16.msra.mxu0 %v4028
          %4103 = vmatprep.subr.bf16.mxu0 0
          %4104 = vmatpush1.bf16.msra.mxu0 %v4029
          %4105 = vmatprep.subr.bf16.mxu0 0
          %4106 = vmatpush1.bf16.msra.mxu0 %v4030
          %4107 = vmatprep.subr.bf16.mxu0 0
          %4108 = vmatpush1.bf16.msra.mxu0 %v4031
          %4109 = vmatprep.subr.bf16.mxu0 0
          %4110 = vmatpush1.bf16.msra.mxu0 %v4032
          %4111 = vmatprep.subr.bf16.mxu0 0
          %4112 = vmatpush1.bf16.msra.mxu0 %v4033
          %4113 = vmatprep.subr.bf16.mxu0 0
          %4114 = vmatpush1.bf16.msra.mxu0 %v4034
          %4115 = vmatprep.mubr.bf16.mxu0 %v3889
          %4116 = vmatmul.mubr.bf16.gmra.mrb[0].mxu0 %v3888
          %v4117 = vpop.f32.mrb[0].mxu0
          %v4118 = vadd.f32 0.0, %v4117
          %v4119 = vpop.f32.mrb[0].mxu0
          %v4120 = vpop.f32.mrb[0].mxu0
          %v4121 = vadd.f32 0.0, %v4120
          %v4122 = vpop.f32.mrb[0].mxu0
          %4123 = vmatprep.mubr.bf16.mxu0 %v3897
          %4124 = vmatmul.mubr.bf16.gmra.mrb[0].mxu0 %v3896
          %v4125 = vpop.f32.mrb[0].mxu0
          %v4126 = vadd.f32 0.0, %v4125
          %v4127 = vpop.f32.mrb[0].mxu0
          %v4128 = vpop.f32.mrb[0].mxu0
          %v4129 = vadd.f32 0.0, %v4128
          %v4130 = vpop.f32.mrb[0].mxu0
          %4131 = vmatprep.mubr.bf16.mxu0 %v3905
          %4132 = vmatmul.mubr.bf16.gmra.mrb[0].mxu0 %v3904
          %v4133 = vpop.f32.mrb[0].mxu0
          %v4134 = vadd.f32 0.0, %v4133
          %v4135 = vpop.f32.mrb[0].mxu0
          %v4136 = vpop.f32.mrb[0].mxu0
          %v4137 = vadd.f32 0.0, %v4136
          %v4138 = vpop.f32.mrb[0].mxu0
          %4139 = vmatprep.mubr.bf16.mxu0 %v3913
          %4140 = vmatmul.mubr.bf16.gmra.mrb[0].mxu0 %v3912
          %v4141 = vpop.f32.mrb[0].mxu0
          %v4142 = vadd.f32 0.0, %v4141
          %v4143 = vpop.f32.mrb[0].mxu0
          %v4144 = vpop.f32.mrb[0].mxu0
          %v4145 = vadd.f32 0.0, %v4144
          %v4146 = vpop.f32.mrb[0].mxu0
          %4147 = vmatprep.mubr.bf16.mxu0 %v3921
          %4148 = vmatmul.mubr.bf16.gmra.mrb[0].mxu0 %v3920
          %v4149 = vpop.f32.mrb[0].mxu0
          %v4150 = vadd.f32 0.0, %v4149
          %v4151 = vpop.f32.mrb[0].mxu0
          %v4152 = vpop.f32.mrb[0].mxu0
          %v4153 = vadd.f32 0.0, %v4152
          %v4154 = vpop.f32.mrb[0].mxu0
          %4155 = vmatprep.mubr.bf16.mxu0 %v3929
          %4156 = vmatmul.mubr.bf16.gmra.mrb[0].mxu0 %v3928
          %v4157 = vpop.f32.mrb[0].mxu0
          %v4158 = vadd.f32 0.0, %v4157
          %v4159 = vpop.f32.mrb[0].mxu0
          %v4160 = vpop.f32.mrb[0].mxu0
          %v4161 = vadd.f32 0.0, %v4160
          %v4162 = vpop.f32.mrb[0].mxu0
          %4163 = vmatprep.mubr.bf16.mxu0 %v3937
          %4164 = vmatmul.mubr.bf16.gmra.mrb[0].mxu0 %v3936
          %v4165 = vpop.f32.mrb[0].mxu0
          %v4166 = vadd.f32 0.0, %v4165
          %v4167 = vpop.f32.mrb[0].mxu0
          %v4168 = vpop.f32.mrb[0].mxu0
          %v4169 = vadd.f32 0.0, %v4168
          %v4170 = vpop.f32.mrb[0].mxu0
          %4171 = vmatprep.mubr.bf16.mxu0 %v3945
          %4172 = vmatmul.mubr.bf16.gmra.mrb[0].mxu0 %v3944
          %v4173 = vpop.f32.mrb[0].mxu0
          %v4174 = vadd.f32 0.0, %v4173
          %v4175 = vpop.f32.mrb[0].mxu0
          %v4176 = vpop.f32.mrb[0].mxu0
          %v4177 = vadd.f32 0.0, %v4176
          %v4178 = vpop.f32.mrb[0].mxu0
          %4179 = vmatprep.mubr.bf16.mxu0 %v3953
          %4180 = vmatmul.mubr.bf16.gmra.mrb[0].mxu0 %v3952
          %v4181 = vpop.f32.mrb[0].mxu0
          %v4182 = vadd.f32 0.0, %v4181
          %v4183 = vpop.f32.mrb[0].mxu0
          %v4184 = vpop.f32.mrb[0].mxu0
          %v4185 = vadd.f32 0.0, %v4184
          %v4186 = vpop.f32.mrb[0].mxu0
          %4187 = vmatprep.mubr.bf16.mxu0 %v3961
          %4188 = vmatmul.mubr.bf16.gmra.mrb[0].mxu0 %v3960
          %v4189 = vpop.f32.mrb[0].mxu0
          %v4190 = vadd.f32 0.0, %v4189
          %v4191 = vpop.f32.mrb[0].mxu0
          %v4192 = vpop.f32.mrb[0].mxu0
          %v4193 = vadd.f32 0.0, %v4192
          %v4194 = vpop.f32.mrb[0].mxu0
          %4195 = vmatprep.mubr.bf16.mxu0 %v3969
          %4196 = vmatmul.mubr.bf16.gmra.mrb[0].mxu0 %v3968
          %v4197 = vpop.f32.mrb[0].mxu0
          %v4198 = vadd.f32 0.0, %v4197
          %v4199 = vpop.f32.mrb[0].mxu0
          %v4200 = vpop.f32.mrb[0].mxu0
          %v4201 = vadd.f32 0.0, %v4200
          %v4202 = vpop.f32.mrb[0].mxu0
          %4203 = vmatprep.mubr.bf16.mxu0 %v3977
          %4204 = vmatmul.mubr.bf16.gmra.mrb[0].mxu0 %v3976
          %v4205 = vpop.f32.mrb[0].mxu0
          %v4206 = vadd.f32 0.0, %v4205
          %v4207 = vpop.f32.mrb[0].mxu0
          %v4208 = vpop.f32.mrb[0].mxu0
          %v4209 = vadd.f32 0.0, %v4208
          %v4210 = vpop.f32.mrb[0].mxu0
          %4211 = vmatprep.mubr.bf16.mxu0 %v3985
          %4212 = vmatmul.mubr.bf16.gmra.mrb[0].mxu0 %v3984
          %v4213 = vpop.f32.mrb[0].mxu0
          %v4214 = vadd.f32 0.0, %v4213
          %v4215 = vpop.f32.mrb[0].mxu0
          %v4216 = vpop.f32.mrb[0].mxu0
          %v4217 = vadd.f32 0.0, %v4216
          %v4218 = vpop.f32.mrb[0].mxu0
          %4219 = vmatprep.mubr.bf16.mxu0 %v3993
          %4220 = vmatmul.mubr.bf16.gmra.mrb[0].mxu0 %v3992
          %v4221 = vpop.f32.mrb[0].mxu0
          %v4222 = vadd.f32 0.0, %v4221
          %v4223 = vpop.f32.mrb[0].mxu0
          %v4224 = vpop.f32.mrb[0].mxu0
          %v4225 = vadd.f32 0.0, %v4224
          %v4226 = vpop.f32.mrb[0].mxu0
          %4227 = vmatprep.mubr.bf16.mxu0 %v4001
          %4228 = vmatmul.mubr.bf16.gmra.mrb[0].mxu0 %v4000
          %v4229 = vpop.f32.mrb[0].mxu0
          %v4230 = vadd.f32 0.0, %v4229
          %v4231 = vpop.f32.mrb[0].mxu0
          %v4232 = vpop.f32.mrb[0].mxu0
          %v4233 = vadd.f32 0.0, %v4232
          %v4234 = vpop.f32.mrb[0].mxu0
          %4235 = vmatprep.mubr.bf16.mxu0 %v4009
          %4236 = vmatmul.mubr.bf16.gmra.mrb[0].mxu0 %v4008
          %v4237 = vpop.f32.mrb[0].mxu0
          %v4238 = vadd.f32 0.0, %v4237
          %v4239 = vpop.f32.mrb[0].mxu0
          %v4240 = vpop.f32.mrb[0].mxu0
          %v4241 = vadd.f32 0.0, %v4240
          %v4242 = vpop.f32.mrb[0].mxu0
          %4243 = vdwg.mxu0
          %4244 = vmatprep.subr.bf16.mxu0 0
          %4245 = vmatpush1.bf16.msra.mxu0 %v4035
          %4246 = vmatprep.subr.bf16.mxu0 0
          %4247 = vmatpush1.bf16.msra.mxu0 %v4036
          %4248 = vmatprep.subr.bf16.mxu0 0
          %4249 = vmatpush1.bf16.msra.mxu0 %v4037
          %4250 = vmatprep.subr.bf16.mxu0 0
          %4251 = vmatpush1.bf16.msra.mxu0 %v4038
          %4252 = vmatprep.subr.bf16.mxu0 0
          %4253 = vmatpush1.bf16.msra.mxu0 %v4039
          %4254 = vmatprep.subr.bf16.mxu0 0
          %4255 = vmatpush1.bf16.msra.mxu0 %v4040
          %4256 = vmatprep.subr.bf16.mxu0 0
          %4257 = vmatpush1.bf16.msra.mxu0 %v4041
          %4258 = vmatprep.subr.bf16.mxu0 0
          %4259 = vmatpush1.bf16.msra.mxu0 %v4042
          %4260 = vmatprep.subr.bf16.mxu0 0
          %4261 = vmatpush1.bf16.msra.mxu0 %v4043
          %4262 = vmatprep.subr.bf16.mxu0 0
          %4263 = vmatpush1.bf16.msra.mxu0 %v4044
          %4264 = vmatprep.subr.bf16.mxu0 0
          %4265 = vmatpush1.bf16.msra.mxu0 %v4045
          %4266 = vmatprep.subr.bf16.mxu0 0
          %4267 = vmatpush1.bf16.msra.mxu0 %v4046
          %4268 = vmatprep.subr.bf16.mxu0 0
          %4269 = vmatpush1.bf16.msra.mxu0 %v4047
          %4270 = vmatprep.subr.bf16.mxu0 0
          %4271 = vmatpush1.bf16.msra.mxu0 %v4048
          %4272 = vmatprep.subr.bf16.mxu0 0
          %4273 = vmatpush1.bf16.msra.mxu0 %v4049
          %4274 = vmatprep.subr.bf16.mxu0 0
          %4275 = vmatpush1.bf16.msra.mxu0 %v4050
          %4276 = vmatprep.mubr.bf16.mxu0 %v3891
          %4277 = vmatmul.mubr.bf16.gmra.mrb[0].mxu0 %v3890
          %v4278 = vpop.f32.mrb[0].mxu0
          %v4279 = vadd.f32 %v4118, %v4278
          %v4280 = vpop.f32.mrb[0].mxu0
          %v4281 = vpop.f32.mrb[0].mxu0
          %v4282 = vadd.f32 %v4121, %v4281
          %v4283 = vpop.f32.mrb[0].mxu0
          %4284 = vmatprep.mubr.bf16.mxu0 %v3899
          %4285 = vmatmul.mubr.bf16.gmra.mrb[0].mxu0 %v3898
          %v4286 = vpop.f32.mrb[0].mxu0
          %v4287 = vadd.f32 %v4126, %v4286
          %v4288 = vpop.f32.mrb[0].mxu0
          %v4289 = vpop.f32.mrb[0].mxu0
          %v4290 = vadd.f32 %v4129, %v4289
          %v4291 = vpop.f32.mrb[0].mxu0
          %4292 = vmatprep.mubr.bf16.mxu0 %v3907
          %4293 = vmatmul.mubr.bf16.gmra.mrb[0].mxu0 %v3906
          %v4294 = vpop.f32.mrb[0].mxu0
          %v4295 = vadd.f32 %v4134, %v4294
          %v4296 = vpop.f32.mrb[0].mxu0
          %v4297 = vpop.f32.mrb[0].mxu0
          %v4298 = vadd.f32 %v4137, %v4297
          %v4299 = vpop.f32.mrb[0].mxu0
          %4300 = vmatprep.mubr.bf16.mxu0 %v3915
          %4301 = vmatmul.mubr.bf16.gmra.mrb[0].mxu0 %v3914
          %v4302 = vpop.f32.mrb[0].mxu0
          %v4303 = vadd.f32 %v4142, %v4302
          %v4304 = vpop.f32.mrb[0].mxu0
          %v4305 = vpop.f32.mrb[0].mxu0
          %v4306 = vadd.f32 %v4145, %v4305
          %v4307 = vpop.f32.mrb[0].mxu0
          %4308 = vmatprep.mubr.bf16.mxu0 %v3923
          %4309 = vmatmul.mubr.bf16.gmra.mrb[0].mxu0 %v3922
          %v4310 = vpop.f32.mrb[0].mxu0
          %v4311 = vadd.f32 %v4150, %v4310
          %v4312 = vpop.f32.mrb[0].mxu0
          %v4313 = vpop.f32.mrb[0].mxu0
          %v4314 = vadd.f32 %v4153, %v4313
          %v4315 = vpop.f32.mrb[0].mxu0
          %4316 = vmatprep.mubr.bf16.mxu0 %v3931
          %4317 = vmatmul.mubr.bf16.gmra.mrb[0].mxu0 %v3930
          %v4318 = vpop.f32.mrb[0].mxu0
          %v4319 = vadd.f32 %v4158, %v4318
          %v4320 = vpop.f32.mrb[0].mxu0
          %v4321 = vpop.f32.mrb[0].mxu0
          %v4322 = vadd.f32 %v4161, %v4321
          %v4323 = vpop.f32.mrb[0].mxu0
          %4324 = vmatprep.mubr.bf16.mxu0 %v3939
          %4325 = vmatmul.mubr.bf16.gmra.mrb[0].mxu0 %v3938
          %v4326 = vpop.f32.mrb[0].mxu0
          %v4327 = vadd.f32 %v4166, %v4326
          %v4328 = vpop.f32.mrb[0].mxu0
          %v4329 = vpop.f32.mrb[0].mxu0
          %v4330 = vadd.f32 %v4169, %v4329
          %v4331 = vpop.f32.mrb[0].mxu0
          %4332 = vmatprep.mubr.bf16.mxu0 %v3947
          %4333 = vmatmul.mubr.bf16.gmra.mrb[0].mxu0 %v3946
          %v4334 = vpop.f32.mrb[0].mxu0
          %v4335 = vadd.f32 %v4174, %v4334
          %v4336 = vpop.f32.mrb[0].mxu0
          %v4337 = vpop.f32.mrb[0].mxu0
          %v4338 = vadd.f32 %v4177, %v4337
          %v4339 = vpop.f32.mrb[0].mxu0
          %4340 = vmatprep.mubr.bf16.mxu0 %v3955
          %4341 = vmatmul.mubr.bf16.gmra.mrb[0].mxu0 %v3954
          %v4342 = vpop.f32.mrb[0].mxu0
          %v4343 = vadd.f32 %v4182, %v4342
          %v4344 = vpop.f32.mrb[0].mxu0
          %v4345 = vpop.f32.mrb[0].mxu0
          %v4346 = vadd.f32 %v4185, %v4345
          %v4347 = vpop.f32.mrb[0].mxu0
          %4348 = vmatprep.mubr.bf16.mxu0 %v3963
          %4349 = vmatmul.mubr.bf16.gmra.mrb[0].mxu0 %v3962
          %v4350 = vpop.f32.mrb[0].mxu0
          %v4351 = vadd.f32 %v4190, %v4350
          %v4352 = vpop.f32.mrb[0].mxu0
          %v4353 = vpop.f32.mrb[0].mxu0
          %v4354 = vadd.f32 %v4193, %v4353
          %v4355 = vpop.f32.mrb[0].mxu0
          %4356 = vmatprep.mubr.bf16.mxu0 %v3971
          %4357 = vmatmul.mubr.bf16.gmra.mrb[0].mxu0 %v3970
          %v4358 = vpop.f32.mrb[0].mxu0
          %v4359 = vadd.f32 %v4198, %v4358
          %v4360 = vpop.f32.mrb[0].mxu0
          %v4361 = vpop.f32.mrb[0].mxu0
          %v4362 = vadd.f32 %v4201, %v4361
          %v4363 = vpop.f32.mrb[0].mxu0
          %4364 = vmatprep.mubr.bf16.mxu0 %v3979
          %4365 = vmatmul.mubr.bf16.gmra.mrb[0].mxu0 %v3978
          %v4366 = vpop.f32.mrb[0].mxu0
          %v4367 = vadd.f32 %v4206, %v4366
          %v4368 = vpop.f32.mrb[0].mxu0
          %v4369 = vpop.f32.mrb[0].mxu0
          %v4370 = vadd.f32 %v4209, %v4369
          %v4371 = vpop.f32.mrb[0].mxu0
          %4372 = vmatprep.mubr.bf16.mxu0 %v3987
          %4373 = vmatmul.mubr.bf16.gmra.mrb[0].mxu0 %v3986
          %v4374 = vpop.f32.mrb[0].mxu0
          %v4375 = vadd.f32 %v4214, %v4374
          %v4376 = vpop.f32.mrb[0].mxu0
          %v4377 = vpop.f32.mrb[0].mxu0
          %v4378 = vadd.f32 %v4217, %v4377
          %v4379 = vpop.f32.mrb[0].mxu0
          %4380 = vmatprep.mubr.bf16.mxu0 %v3995
          %4381 = vmatmul.mubr.bf16.gmra.mrb[0].mxu0 %v3994
          %v4382 = vpop.f32.mrb[0].mxu0
          %v4383 = vadd.f32 %v4222, %v4382
          %v4384 = vpop.f32.mrb[0].mxu0
          %v4385 = vpop.f32.mrb[0].mxu0
          %v4386 = vadd.f32 %v4225, %v4385
          %v4387 = vpop.f32.mrb[0].mxu0
          %4388 = vmatprep.mubr.bf16.mxu0 %v4003
          %4389 = vmatmul.mubr.bf16.gmra.mrb[0].mxu0 %v4002
          %v4390 = vpop.f32.mrb[0].mxu0
          %v4391 = vadd.f32 %v4230, %v4390
          %v4392 = vpop.f32.mrb[0].mxu0
          %v4393 = vpop.f32.mrb[0].mxu0
          %v4394 = vadd.f32 %v4233, %v4393
          %v4395 = vpop.f32.mrb[0].mxu0
          %4396 = vmatprep.mubr.bf16.mxu0 %v4011
          %4397 = vmatmul.mubr.bf16.gmra.mrb[0].mxu0 %v4010
          %v4398 = vpop.f32.mrb[0].mxu0
          %v4399 = vadd.f32 %v4238, %v4398
          %v4400 = vpop.f32.mrb[0].mxu0
          %v4401 = vpop.f32.mrb[0].mxu0
          %v4402 = vadd.f32 %v4241, %v4401
          %v4403 = vpop.f32.mrb[0].mxu0
          %4404 = vdwg.mxu0
          %4405 = vmatprep.subr.bf16.mxu0 0
          %4406 = vmatpush1.bf16.msra.mxu0 %v4051
          %4407 = vmatprep.subr.bf16.mxu0 0
          %4408 = vmatpush1.bf16.msra.mxu0 %v4052
          %4409 = vmatprep.subr.bf16.mxu0 0
          %4410 = vmatpush1.bf16.msra.mxu0 %v4053
          %4411 = vmatprep.subr.bf16.mxu0 0
          %4412 = vmatpush1.bf16.msra.mxu0 %v4054
          %4413 = vmatprep.subr.bf16.mxu0 0
          %4414 = vmatpush1.bf16.msra.mxu0 %v4055
          %4415 = vmatprep.subr.bf16.mxu0 0
          %4416 = vmatpush1.bf16.msra.mxu0 %v4056
          %4417 = vmatprep.subr.bf16.mxu0 0
          %4418 = vmatpush1.bf16.msra.mxu0 %v4057
          %4419 = vmatprep.subr.bf16.mxu0 0
          %4420 = vmatpush1.bf16.msra.mxu0 %v4058
          %4421 = vmatprep.subr.bf16.mxu0 0
          %4422 = vmatpush1.bf16.msra.mxu0 %v4059
          %4423 = vmatprep.subr.bf16.mxu0 0
          %4424 = vmatpush1.bf16.msra.mxu0 %v4060
          %4425 = vmatprep.subr.bf16.mxu0 0
          %4426 = vmatpush1.bf16.msra.mxu0 %v4061
          %4427 = vmatprep.subr.bf16.mxu0 0
          %4428 = vmatpush1.bf16.msra.mxu0 %v4062
          %4429 = vmatprep.subr.bf16.mxu0 0
          %4430 = vmatpush1.bf16.msra.mxu0 %v4063
          %4431 = vmatprep.subr.bf16.mxu0 0
          %4432 = vmatpush1.bf16.msra.mxu0 %v4064
          %4433 = vmatprep.subr.bf16.mxu0 0
          %4434 = vmatpush1.bf16.msra.mxu0 %v4065
          %4435 = vmatprep.subr.bf16.mxu0 0
          %4436 = vmatpush1.bf16.msra.mxu0 %v4066
          %4437 = vmatprep.mubr.bf16.mxu0 %v3893
          %4438 = vmatmul.mubr.bf16.gmra.mrb[0].mxu0 %v3892
          %v4439 = vpop.f32.mrb[0].mxu0
          %v4440 = vadd.f32 %v4279, %v4439
          %v4441 = vpop.f32.mrb[0].mxu0
          %v4442 = vpop.f32.mrb[0].mxu0
          %v4443 = vadd.f32 %v4282, %v4442
          %v4444 = vpop.f32.mrb[0].mxu0
          %4445 = vmatprep.mubr.bf16.mxu0 %v3901
          %4446 = vmatmul.mubr.bf16.gmra.mrb[0].mxu0 %v3900
          %v4447 = vpop.f32.mrb[0].mxu0
          %v4448 = vadd.f32 %v4287, %v4447
          %v4449 = vpop.f32.mrb[0].mxu0
          %v4450 = vpop.f32.mrb[0].mxu0
          %v4451 = vadd.f32 %v4290, %v4450
          %v4452 = vpop.f32.mrb[0].mxu0
          %4453 = vmatprep.mubr.bf16.mxu0 %v3909
          %4454 = vmatmul.mubr.bf16.gmra.mrb[0].mxu0 %v3908
          %v4455 = vpop.f32.mrb[0].mxu0
          %v4456 = vadd.f32 %v4295, %v4455
          %v4457 = vpop.f32.mrb[0].mxu0
          %v4458 = vpop.f32.mrb[0].mxu0
          %v4459 = vadd.f32 %v4298, %v4458
          %v4460 = vpop.f32.mrb[0].mxu0
          %4461 = vmatprep.mubr.bf16.mxu0 %v3917
          %4462 = vmatmul.mubr.bf16.gmra.mrb[0].mxu0 %v3916
          %v4463 = vpop.f32.mrb[0].mxu0
          %v4464 = vadd.f32 %v4303, %v4463
          %v4465 = vpop.f32.mrb[0].mxu0
          %v4466 = vpop.f32.mrb[0].mxu0
          %v4467 = vadd.f32 %v4306, %v4466
          %v4468 = vpop.f32.mrb[0].mxu0
          %4469 = vmatprep.mubr.bf16.mxu0 %v3925
          %4470 = vmatmul.mubr.bf16.gmra.mrb[0].mxu0 %v3924
          %v4471 = vpop.f32.mrb[0].mxu0
          %v4472 = vadd.f32 %v4311, %v4471
          %v4473 = vpop.f32.mrb[0].mxu0
          %v4474 = vpop.f32.mrb[0].mxu0
          %v4475 = vadd.f32 %v4314, %v4474
          %v4476 = vpop.f32.mrb[0].mxu0
          %4477 = vmatprep.mubr.bf16.mxu0 %v3933
          %4478 = vmatmul.mubr.bf16.gmra.mrb[0].mxu0 %v3932
          %v4479 = vpop.f32.mrb[0].mxu0
          %v4480 = vadd.f32 %v4319, %v4479
          %v4481 = vpop.f32.mrb[0].mxu0
          %v4482 = vpop.f32.mrb[0].mxu0
          %v4483 = vadd.f32 %v4322, %v4482
          %v4484 = vpop.f32.mrb[0].mxu0
          %4485 = vmatprep.mubr.bf16.mxu0 %v3941
          %4486 = vmatmul.mubr.bf16.gmra.mrb[0].mxu0 %v3940
          %v4487 = vpop.f32.mrb[0].mxu0
          %v4488 = vadd.f32 %v4327, %v4487
          %v4489 = vpop.f32.mrb[0].mxu0
          %v4490 = vpop.f32.mrb[0].mxu0
          %v4491 = vadd.f32 %v4330, %v4490
          %v4492 = vpop.f32.mrb[0].mxu0
          %4493 = vmatprep.mubr.bf16.mxu0 %v3949
          %4494 = vmatmul.mubr.bf16.gmra.mrb[0].mxu0 %v3948
          %v4495 = vpop.f32.mrb[0].mxu0
          %v4496 = vadd.f32 %v4335, %v4495
          %v4497 = vpop.f32.mrb[0].mxu0
          %v4498 = vpop.f32.mrb[0].mxu0
          %v4499 = vadd.f32 %v4338, %v4498
          %v4500 = vpop.f32.mrb[0].mxu0
          %4501 = vmatprep.mubr.bf16.mxu0 %v3957
          %4502 = vmatmul.mubr.bf16.gmra.mrb[0].mxu0 %v3956
          %v4503 = vpop.f32.mrb[0].mxu0
          %v4504 = vadd.f32 %v4343, %v4503
          %v4505 = vpop.f32.mrb[0].mxu0
          %v4506 = vpop.f32.mrb[0].mxu0
          %v4507 = vadd.f32 %v4346, %v4506
          %v4508 = vpop.f32.mrb[0].mxu0
          %4509 = vmatprep.mubr.bf16.mxu0 %v3965
          %4510 = vmatmul.mubr.bf16.gmra.mrb[0].mxu0 %v3964
          %v4511 = vpop.f32.mrb[0].mxu0
          %v4512 = vadd.f32 %v4351, %v4511
          %v4513 = vpop.f32.mrb[0].mxu0
          %v4514 = vpop.f32.mrb[0].mxu0
          %v4515 = vadd.f32 %v4354, %v4514
          %v4516 = vpop.f32.mrb[0].mxu0
          %4517 = vmatprep.mubr.bf16.mxu0 %v3973
          %4518 = vmatmul.mubr.bf16.gmra.mrb[0].mxu0 %v3972
          %v4519 = vpop.f32.mrb[0].mxu0
          %v4520 = vadd.f32 %v4359, %v4519
          %v4521 = vpop.f32.mrb[0].mxu0
          %v4522 = vpop.f32.mrb[0].mxu0
          %v4523 = vadd.f32 %v4362, %v4522
          %v4524 = vpop.f32.mrb[0].mxu0
          %4525 = vmatprep.mubr.bf16.mxu0 %v3981
          %4526 = vmatmul.mubr.bf16.gmra.mrb[0].mxu0 %v3980
          %v4527 = vpop.f32.mrb[0].mxu0
          %v4528 = vadd.f32 %v4367, %v4527
          %v4529 = vpop.f32.mrb[0].mxu0
          %v4530 = vpop.f32.mrb[0].mxu0
          %v4531 = vadd.f32 %v4370, %v4530
          %v4532 = vpop.f32.mrb[0].mxu0
          %4533 = vmatprep.mubr.bf16.mxu0 %v3989
          %4534 = vmatmul.mubr.bf16.gmra.mrb[0].mxu0 %v3988
          %v4535 = vpop.f32.mrb[0].mxu0
          %v4536 = vadd.f32 %v4375, %v4535
          %v4537 = vpop.f32.mrb[0].mxu0
          %v4538 = vpop.f32.mrb[0].mxu0
          %v4539 = vadd.f32 %v4378, %v4538
          %v4540 = vpop.f32.mrb[0].mxu0
          %4541 = vmatprep.mubr.bf16.mxu0 %v3997
          %4542 = vmatmul.mubr.bf16.gmra.mrb[0].mxu0 %v3996
          %v4543 = vpop.f32.mrb[0].mxu0
          %v4544 = vadd.f32 %v4383, %v4543
          %v4545 = vpop.f32.mrb[0].mxu0
          %v4546 = vpop.f32.mrb[0].mxu0
          %v4547 = vadd.f32 %v4386, %v4546
          %v4548 = vpop.f32.mrb[0].mxu0
          %4549 = vmatprep.mubr.bf16.mxu0 %v4005
          %4550 = vmatmul.mubr.bf16.gmra.mrb[0].mxu0 %v4004
          %v4551 = vpop.f32.mrb[0].mxu0
          %v4552 = vadd.f32 %v4391, %v4551
          %v4553 = vpop.f32.mrb[0].mxu0
          %v4554 = vpop.f32.mrb[0].mxu0
          %v4555 = vadd.f32 %v4394, %v4554
          %v4556 = vpop.f32.mrb[0].mxu0
          %4557 = vmatprep.mubr.bf16.mxu0 %v4013
          %4558 = vmatmul.mubr.bf16.gmra.mrb[0].mxu0 %v4012
          %v4559 = vpop.f32.mrb[0].mxu0
          %v4560 = vadd.f32 %v4399, %v4559
          %v4561 = vpop.f32.mrb[0].mxu0
          %v4562 = vpop.f32.mrb[0].mxu0
          %v4563 = vadd.f32 %v4402, %v4562
          %v4564 = vpop.f32.mrb[0].mxu0
          %4565 = vdwg.mxu0
          %4566 = vmatprep.subr.bf16.mxu0 0
          %4567 = vmatpush1.bf16.msra.mxu0 %v4067
          %4568 = vmatprep.subr.bf16.mxu0 0
          %4569 = vmatpush1.bf16.msra.mxu0 %v4068
          %4570 = vmatprep.subr.bf16.mxu0 0
          %4571 = vmatpush1.bf16.msra.mxu0 %v4069
          %4572 = vmatprep.subr.bf16.mxu0 0
          %4573 = vmatpush1.bf16.msra.mxu0 %v4070
          %4574 = vmatprep.subr.bf16.mxu0 0
          %4575 = vmatpush1.bf16.msra.mxu0 %v4071
          %4576 = vmatprep.subr.bf16.mxu0 0
          %4577 = vmatpush1.bf16.msra.mxu0 %v4072
          %4578 = vmatprep.subr.bf16.mxu0 0
          %4579 = vmatpush1.bf16.msra.mxu0 %v4073
          %4580 = vmatprep.subr.bf16.mxu0 0
          %4581 = vmatpush1.bf16.msra.mxu0 %v4074
          %4582 = vmatprep.subr.bf16.mxu0 0
          %4583 = vmatpush1.bf16.msra.mxu0 %v4075
          %4584 = vmatprep.subr.bf16.mxu0 0
          %4585 = vmatpush1.bf16.msra.mxu0 %v4076
          %4586 = vmatprep.subr.bf16.mxu0 0
          %4587 = vmatpush1.bf16.msra.mxu0 %v4077
          %4588 = vmatprep.subr.bf16.mxu0 0
          %4589 = vmatpush1.bf16.msra.mxu0 %v4078
          %4590 = vmatprep.subr.bf16.mxu0 0
          %4591 = vmatpush1.bf16.msra.mxu0 %v4079
          %4592 = vmatprep.subr.bf16.mxu0 0
          %4593 = vmatpush1.bf16.msra.mxu0 %v4080
          %4594 = vmatprep.subr.bf16.mxu0 0
          %4595 = vmatpush1.bf16.msra.mxu0 %v4081
          %4596 = vmatprep.subr.bf16.mxu0 0
          %4597 = vmatpush1.bf16.msra.mxu0 %v4082
          %4598 = vmatprep.mubr.bf16.mxu0 %v3895
          %4599 = vmatmul.mubr.bf16.gmra.mrb[0].mxu0 %v3894
          %v4600 = vpop.f32.mrb[0].mxu0
          %v4601 = vadd.f32 %v4440, %v4600
          %v4602 = vpop.f32.mrb[0].mxu0
          %v4603 = vpop.f32.mrb[0].mxu0
          %v4604 = vadd.f32 %v4443, %v4603
          %v4605 = vpop.f32.mrb[0].mxu0
          %4606 = vmatprep.mubr.bf16.mxu0 %v3903
          %4607 = vmatmul.mubr.bf16.gmra.mrb[0].mxu0 %v3902
          %v4608 = vpop.f32.mrb[0].mxu0
          %v4609 = vadd.f32 %v4448, %v4608
          %v4610 = vpop.f32.mrb[0].mxu0
          %v4611 = vpop.f32.mrb[0].mxu0
          %v4612 = vadd.f32 %v4451, %v4611
          %v4613 = vpop.f32.mrb[0].mxu0
          %4614 = vmatprep.mubr.bf16.mxu0 %v3911
          %4615 = vmatmul.mubr.bf16.gmra.mrb[0].mxu0 %v3910
          %v4616 = vpop.f32.mrb[0].mxu0
          %v4617 = vadd.f32 %v4456, %v4616
          %v4618 = vpop.f32.mrb[0].mxu0
          %v4619 = vpop.f32.mrb[0].mxu0
          %v4620 = vadd.f32 %v4459, %v4619
          %v4621 = vpop.f32.mrb[0].mxu0
          %4622 = vmatprep.mubr.bf16.mxu0 %v3919
          %4623 = vmatmul.mubr.bf16.gmra.mrb[0].mxu0 %v3918
          %v4624 = vpop.f32.mrb[0].mxu0
          %v4625 = vadd.f32 %v4464, %v4624
          %v4626 = vpop.f32.mrb[0].mxu0
          %v4627 = vpop.f32.mrb[0].mxu0
          %v4628 = vadd.f32 %v4467, %v4627
          %v4629 = vpop.f32.mrb[0].mxu0
          %4630 = vmatprep.mubr.bf16.mxu0 %v3927
          %4631 = vmatmul.mubr.bf16.gmra.mrb[0].mxu0 %v3926
          %v4632 = vpop.f32.mrb[0].mxu0
          %v4633 = vadd.f32 %v4472, %v4632
          %v4634 = vpop.f32.mrb[0].mxu0
          %v4635 = vpop.f32.mrb[0].mxu0
          %v4636 = vadd.f32 %v4475, %v4635
          %v4637 = vpop.f32.mrb[0].mxu0
          %4638 = vmatprep.mubr.bf16.mxu0 %v3935
          %4639 = vmatmul.mubr.bf16.gmra.mrb[0].mxu0 %v3934
          %v4640 = vpop.f32.mrb[0].mxu0
          %v4641 = vadd.f32 %v4480, %v4640
          %v4642 = vpop.f32.mrb[0].mxu0
          %v4643 = vpop.f32.mrb[0].mxu0
          %v4644 = vadd.f32 %v4483, %v4643
          %v4645 = vpop.f32.mrb[0].mxu0
          %4646 = vmatprep.mubr.bf16.mxu0 %v3943
          %4647 = vmatmul.mubr.bf16.gmra.mrb[0].mxu0 %v3942
          %v4648 = vpop.f32.mrb[0].mxu0
          %v4649 = vadd.f32 %v4488, %v4648
          %v4650 = vpop.f32.mrb[0].mxu0
          %v4651 = vpop.f32.mrb[0].mxu0
          %v4652 = vadd.f32 %v4491, %v4651
          %v4653 = vpop.f32.mrb[0].mxu0
          %4654 = vmatprep.mubr.bf16.mxu0 %v3951
          %4655 = vmatmul.mubr.bf16.gmra.mrb[0].mxu0 %v3950
          %v4656 = vpop.f32.mrb[0].mxu0
          %v4657 = vadd.f32 %v4496, %v4656
          %v4658 = vpop.f32.mrb[0].mxu0
          %v4659 = vpop.f32.mrb[0].mxu0
          %v4660 = vadd.f32 %v4499, %v4659
          %v4661 = vpop.f32.mrb[0].mxu0
          %4662 = vmatprep.mubr.bf16.mxu0 %v3959
          %4663 = vmatmul.mubr.bf16.gmra.mrb[0].mxu0 %v3958
          %v4664 = vpop.f32.mrb[0].mxu0
          %v4665 = vadd.f32 %v4504, %v4664
          %v4666 = vpop.f32.mrb[0].mxu0
          %v4667 = vpop.f32.mrb[0].mxu0
          %v4668 = vadd.f32 %v4507, %v4667
          %v4669 = vpop.f32.mrb[0].mxu0
          %4670 = vmatprep.mubr.bf16.mxu0 %v3967
          %4671 = vmatmul.mubr.bf16.gmra.mrb[0].mxu0 %v3966
          %v4672 = vpop.f32.mrb[0].mxu0
          %v4673 = vadd.f32 %v4512, %v4672
          %v4674 = vpop.f32.mrb[0].mxu0
          %v4675 = vpop.f32.mrb[0].mxu0
          %v4676 = vadd.f32 %v4515, %v4675
          %v4677 = vpop.f32.mrb[0].mxu0
          %4678 = vmatprep.mubr.bf16.mxu0 %v3975
          %4679 = vmatmul.mubr.bf16.gmra.mrb[0].mxu0 %v3974
          %v4680 = vpop.f32.mrb[0].mxu0
          %v4681 = vadd.f32 %v4520, %v4680
          %v4682 = vpop.f32.mrb[0].mxu0
          %v4683 = vpop.f32.mrb[0].mxu0
          %v4684 = vadd.f32 %v4523, %v4683
          %v4685 = vpop.f32.mrb[0].mxu0
          %4686 = vmatprep.mubr.bf16.mxu0 %v3983
          %4687 = vmatmul.mubr.bf16.gmra.mrb[0].mxu0 %v3982
          %v4688 = vpop.f32.mrb[0].mxu0
          %v4689 = vadd.f32 %v4528, %v4688
          %v4690 = vpop.f32.mrb[0].mxu0
          %v4691 = vpop.f32.mrb[0].mxu0
          %v4692 = vadd.f32 %v4531, %v4691
          %v4693 = vpop.f32.mrb[0].mxu0
          %4694 = vmatprep.mubr.bf16.mxu0 %v3991
          %4695 = vmatmul.mubr.bf16.gmra.mrb[0].mxu0 %v3990
          %v4696 = vpop.f32.mrb[0].mxu0
          %v4697 = vadd.f32 %v4536, %v4696
          %v4698 = vpop.f32.mrb[0].mxu0
          %v4699 = vpop.f32.mrb[0].mxu0
          %v4700 = vadd.f32 %v4539, %v4699
          %v4701 = vpop.f32.mrb[0].mxu0
          %4702 = vmatprep.mubr.bf16.mxu0 %v3999
          %4703 = vmatmul.mubr.bf16.gmra.mrb[0].mxu0 %v3998
          %v4704 = vpop.f32.mrb[0].mxu0
          %v4705 = vadd.f32 %v4544, %v4704
          %v4706 = vpop.f32.mrb[0].mxu0
          %v4707 = vpop.f32.mrb[0].mxu0
          %v4708 = vadd.f32 %v4547, %v4707
          %v4709 = vpop.f32.mrb[0].mxu0
          %4710 = vmatprep.mubr.bf16.mxu0 %v4007
          %4711 = vmatmul.mubr.bf16.gmra.mrb[0].mxu0 %v4006
          %v4712 = vpop.f32.mrb[0].mxu0
          %v4713 = vadd.f32 %v4552, %v4712
          %v4714 = vpop.f32.mrb[0].mxu0
          %v4715 = vpop.f32.mrb[0].mxu0
          %v4716 = vadd.f32 %v4555, %v4715
          %v4717 = vpop.f32.mrb[0].mxu0
          %4718 = vmatprep.mubr.bf16.mxu0 %v4015
          %4719 = vmatmul.mubr.bf16.gmra.mrb[0].mxu0 %v4014
          %v4720 = vpop.f32.mrb[0].mxu0
          %v4721 = vadd.f32 %v4560, %v4720
          %v4722 = vpop.f32.mrb[0].mxu0
          %v4723 = vpop.f32.mrb[0].mxu0
          %v4724 = vadd.f32 %v4563, %v4723
          %v4725 = vpop.f32.mrb[0].mxu0
          %4726 = vdwg.mxu0
          %v4727 = vadd.f32 %v2506, %v4601
          %v4728 = vadd.f32 %v2507, %v4604
          %v4729 = vadd.f32 %v2508, %v4609
          %v4730 = vadd.f32 %v2509, %v4612
          %v4731 = vadd.f32 %v2510, %v4617
          %v4732 = vadd.f32 %v2511, %v4620
          %v4733 = vadd.f32 %v2512, %v4625
          %v4734 = vadd.f32 %v2513, %v4628
          %v4735 = vadd.f32 %v2514, %v4633
          %v4736 = vadd.f32 %v2515, %v4636
          %v4737 = vadd.f32 %v2516, %v4641
          %v4738 = vadd.f32 %v2517, %v4644
          %v4739 = vadd.f32 %v2518, %v4649
          %v4740 = vadd.f32 %v2519, %v4652
          %v4741 = vadd.f32 %v2520, %v4657
          %v4742 = vadd.f32 %v2521, %v4660
          %v4743 = vadd.f32 %v2522, %v4665
          %v4744 = vadd.f32 %v2523, %v4668
          %v4745 = vadd.f32 %v2524, %v4673
          %v4746 = vadd.f32 %v2525, %v4676
          %v4747 = vadd.f32 %v2526, %v4681
          %v4748 = vadd.f32 %v2527, %v4684
          %v4749 = vadd.f32 %v2528, %v4689
          %v4750 = vadd.f32 %v2529, %v4692
          %v4751 = vadd.f32 %v2530, %v4697
          %v4752 = vadd.f32 %v2531, %v4700
          %v4753 = vadd.f32 %v2532, %v4705
          %v4754 = vadd.f32 %v2533, %v4708
          %v4755 = vadd.f32 %v2534, %v4713
          %v4756 = vadd.f32 %v2535, %v4716
          %v4757 = vadd.f32 %v2536, %v4721
          %v4758 = vadd.f32 %v2537, %v4724
        $region77: #{tpu_custom_call.1} parent=67 // loop_footer
          %s2505 = sadd.s32 1, %s2501
        $region78: #{tpu_custom_call.1} parent=67 // loop_footer_branch
          %2500 = sbr.rel target = $region74
        $region79: #{tpu_custom_call.1} parent=67 // loop_exit
          _
        %v4759 = vld [vmem:[%s460] sm:$0xf]
        %v4760 = vld [vmem:[%s460 + $0x4] sm:$0xf]
        %v4761 = vld [vmem:[%s460 + $0x8] sm:$0xf]
        %v4762 = vld [vmem:[%s460 + $0xc] sm:$0xf]
        %v4763 = vld [vmem:[%s460 + $0x10] sm:$0xf]
        %v4764 = vld [vmem:[%s460 + $0x14] sm:$0xf]
        %v4765 = vld [vmem:[%s460 + $0x18] sm:$0xf]
        %v4766 = vld [vmem:[%s460 + $0x1c] sm:$0xf]
        %v4767 = vld [vmem:[%s460 + $0x20] sm:$0xf]
        %v4768 = vld [vmem:[%s460 + $0x24] sm:$0xf]
        %v4769 = vld [vmem:[%s460 + $0x28] sm:$0xf]
        %v4770 = vld [vmem:[%s460 + $0x2c] sm:$0xf]
        %v4771 = vld [vmem:[%s460 + $0x30] sm:$0xf]
        %v4772 = vld [vmem:[%s460 + $0x34] sm:$0xf]
        %v4773 = vld [vmem:[%s460 + $0x38] sm:$0xf]
        %v4774 = vld [vmem:[%s460 + $0x3c] sm:$0xf]
        %v4775 = vld [vmem:[%s460 + $0x40] sm:$0xf]
        %v4776 = vld [vmem:[%s460 + $0x44] sm:$0xf]
        %v4777 = vld [vmem:[%s460 + $0x48] sm:$0xf]
        %v4778 = vld [vmem:[%s460 + $0x4c] sm:$0xf]
        %v4779 = vld [vmem:[%s460 + $0x50] sm:$0xf]
        %v4780 = vld [vmem:[%s460 + $0x54] sm:$0xf]
        %v4781 = vld [vmem:[%s460 + $0x58] sm:$0xf]
        %v4782 = vld [vmem:[%s460 + $0x5c] sm:$0xf]
        %v4783 = vld [vmem:[%s460 + $0x60] sm:$0xf]
        %v4784 = vld [vmem:[%s460 + $0x64] sm:$0xf]
        %v4785 = vld [vmem:[%s460 + $0x68] sm:$0xf]
        %v4786 = vld [vmem:[%s460 + $0x6c] sm:$0xf]
        %v4787 = vld [vmem:[%s460 + $0x70] sm:$0xf]
        %v4788 = vld [vmem:[%s460 + $0x74] sm:$0xf]
        %v4789 = vld [vmem:[%s460 + $0x78] sm:$0xf]
        %v4790 = vld [vmem:[%s460 + $0x7c] sm:$0xf]
        %v4791 = vld [vmem:[%s4] sm:$0xf]
        %v4824 = vunpack.c.l.b16 %v4759
        %v4825 = vunpack.c.l.b16 %v4760
        %v4826 = vunpack.c.l.b16 %v4761
        %v4827 = vunpack.c.l.b16 %v4762
        %v4828 = vunpack.c.l.b16 %v4763
        %v4829 = vunpack.c.l.b16 %v4764
        %v4830 = vunpack.c.l.b16 %v4765
        %v4831 = vunpack.c.l.b16 %v4766
        %v4832 = vunpack.c.l.b16 %v4767
        %v4833 = vunpack.c.l.b16 %v4768
        %v4834 = vunpack.c.l.b16 %v4769
        %v4835 = vunpack.c.l.b16 %v4770
        %v4836 = vunpack.c.l.b16 %v4771
        %v4837 = vunpack.c.l.b16 %v4772
        %v4838 = vunpack.c.l.b16 %v4773
        %v4839 = vunpack.c.l.b16 %v4774
        %v4840 = vunpack.c.l.b16 %v4775
        %v4841 = vunpack.c.l.b16 %v4776
        %v4842 = vunpack.c.l.b16 %v4777
        %v4843 = vunpack.c.l.b16 %v4778
        %v4844 = vunpack.c.l.b16 %v4779
        %v4845 = vunpack.c.l.b16 %v4780
        %v4846 = vunpack.c.l.b16 %v4781
        %v4847 = vunpack.c.l.b16 %v4782
        %v4848 = vunpack.c.l.b16 %v4783
        %v4849 = vunpack.c.l.b16 %v4784
        %v4850 = vunpack.c.l.b16 %v4785
        %v4851 = vunpack.c.l.b16 %v4786
        %v4852 = vunpack.c.l.b16 %v4787
        %v4853 = vunpack.c.l.b16 %v4788
        %v4854 = vunpack.c.l.b16 %v4789
        %v4855 = vunpack.c.l.b16 %v4790
        %v4856 = vpack.c.b16 %v4825, %v4824
        %v4857 = vpack.c.b16 %v4827, %v4826
        %v4858 = vpack.c.b16 %v4829, %v4828
        %v4859 = vpack.c.b16 %v4831, %v4830
        %v4860 = vpack.c.b16 %v4833, %v4832
        %v4861 = vpack.c.b16 %v4835, %v4834
        %v4862 = vpack.c.b16 %v4837, %v4836
        %v4863 = vpack.c.b16 %v4839, %v4838
        %v4864 = vpack.c.b16 %v4841, %v4840
        %v4865 = vpack.c.b16 %v4843, %v4842
        %v4866 = vpack.c.b16 %v4845, %v4844
        %v4867 = vpack.c.b16 %v4847, %v4846
        %v4868 = vpack.c.b16 %v4849, %v4848
        %v4869 = vpack.c.b16 %v4851, %v4850
        %v4870 = vpack.c.b16 %v4853, %v4852
        %v4871 = vpack.c.b16 %v4855, %v4854
        %vm4872 = vcmask 64512
        %v4874 = vsel %vm4872, %v4856, 0
        %v4877 = vsel %vm4872, %v4857, 0
        %v4880 = vsel %vm4872, %v4858, 0
        %v4883 = vsel %vm4872, %v4859, 0
        %v4886 = vsel %vm4872, %v4860, 0
        %v4889 = vsel %vm4872, %v4861, 0
        %v4892 = vsel %vm4872, %v4862, 0
        %v4895 = vsel %vm4872, %v4863, 0
        %v4898 = vsel %vm4872, %v4864, 0
        %v4901 = vsel %vm4872, %v4865, 0
        %v4904 = vsel %vm4872, %v4866, 0
        %v4907 = vsel %vm4872, %v4867, 0
        %v4910 = vsel %vm4872, %v4868, 0
        %v4913 = vsel %vm4872, %v4869, 0
        %v4916 = vsel %vm4872, %v4870, 0
        %v4919 = vsel %vm4872, %v4871, 0
        %vm4921 = vcmask 1043456
        %v4923 = vsel %vm4921, %v4791, 0
        %4925 = vmatprep.subr.bf16.mxu0 0
        %4926 = vmatpush1.bf16.msra.mxu0 %v4923
        %4927 = vmatprep.subr.bf16.mxu0 0
        %4928 = vmatpush1.bf16.msra.mxu0 0
        %4929 = vmatprep.subr.bf16.mxu0 0
        %4930 = vmatpush1.bf16.msra.mxu0 0
        %4931 = vmatprep.subr.bf16.mxu0 0
        %4932 = vmatpush1.bf16.msra.mxu0 0
        %4933 = vmatprep.subr.bf16.mxu0 0
        %4934 = vmatpush1.bf16.msra.mxu0 0
        %4935 = vmatprep.subr.bf16.mxu0 0
        %4936 = vmatpush1.bf16.msra.mxu0 0
        %4937 = vmatprep.subr.bf16.mxu0 0
        %4938 = vmatpush1.bf16.msra.mxu0 0
        %4939 = vmatprep.subr.bf16.mxu0 0
        %4940 = vmatpush1.bf16.msra.mxu0 0
        %4941 = vmatprep.subr.bf16.mxu0 0
        %4942 = vmatpush1.bf16.msra.mxu0 0
        %4943 = vmatprep.subr.bf16.mxu0 0
        %4944 = vmatpush1.bf16.msra.mxu0 0
        %4945 = vmatprep.subr.bf16.mxu0 0
        %4946 = vmatpush1.bf16.msra.mxu0 0
        %4947 = vmatprep.subr.bf16.mxu0 0
        %4948 = vmatpush1.bf16.msra.mxu0 0
        %4949 = vmatprep.subr.bf16.mxu0 0
        %4950 = vmatpush1.bf16.msra.mxu0 0
        %4951 = vmatprep.subr.bf16.mxu0 0
        %4952 = vmatpush1.bf16.msra.mxu0 0
        %4953 = vmatprep.subr.bf16.mxu0 0
        %4954 = vmatpush1.bf16.msra.mxu0 0
        %4955 = vmatprep.subr.bf16.mxu0 0
        %4956 = vmatpush1.bf16.msra.mxu0 0
        %4957 = vmatprep.mubr.bf16.mxu0 0
        %4958 = vmatmul.mubr.bf16.gmra.mrb[0].mxu0 %v4874
        %v4959 = vpop.f32.mrb[0].mxu0
        %v4960 = vadd.f32 0.0, %v4959
        %v4961 = vpop.f32.mrb[0].mxu0
        %v4962 = vpop.f32.mrb[0].mxu0
        %v4963 = vadd.f32 0.0, %v4962
        %v4964 = vpop.f32.mrb[0].mxu0
        %4965 = vmatprep.mubr.bf16.mxu0 0
        %4966 = vmatmul.mubr.bf16.gmra.mrb[0].mxu0 %v4877
        %v4967 = vpop.f32.mrb[0].mxu0
        %v4968 = vadd.f32 0.0, %v4967
        %v4969 = vpop.f32.mrb[0].mxu0
        %v4970 = vpop.f32.mrb[0].mxu0
        %v4971 = vadd.f32 0.0, %v4970
        %v4972 = vpop.f32.mrb[0].mxu0
        %4973 = vmatprep.mubr.bf16.mxu0 0
        %4974 = vmatmul.mubr.bf16.gmra.mrb[0].mxu0 %v4880
        %v4975 = vpop.f32.mrb[0].mxu0
        %v4976 = vadd.f32 0.0, %v4975
        %v4977 = vpop.f32.mrb[0].mxu0
        %v4978 = vpop.f32.mrb[0].mxu0
        %v4979 = vadd.f32 0.0, %v4978
        %v4980 = vpop.f32.mrb[0].mxu0
        %4981 = vmatprep.mubr.bf16.mxu0 0
        %4982 = vmatmul.mubr.bf16.gmra.mrb[0].mxu0 %v4883
        %v4983 = vpop.f32.mrb[0].mxu0
        %v4984 = vadd.f32 0.0, %v4983
        %v4985 = vpop.f32.mrb[0].mxu0
        %v4986 = vpop.f32.mrb[0].mxu0
        %v4987 = vadd.f32 0.0, %v4986
        %v4988 = vpop.f32.mrb[0].mxu0
        %4989 = vmatprep.mubr.bf16.mxu0 0
        %4990 = vmatmul.mubr.bf16.gmra.mrb[0].mxu0 %v4886
        %v4991 = vpop.f32.mrb[0].mxu0
        %v4992 = vadd.f32 0.0, %v4991
        %v4993 = vpop.f32.mrb[0].mxu0
        %v4994 = vpop.f32.mrb[0].mxu0
        %v4995 = vadd.f32 0.0, %v4994
        %v4996 = vpop.f32.mrb[0].mxu0
        %4997 = vmatprep.mubr.bf16.mxu0 0
        %4998 = vmatmul.mubr.bf16.gmra.mrb[0].mxu0 %v4889
        %v4999 = vpop.f32.mrb[0].mxu0
        %v5000 = vadd.f32 0.0, %v4999
        %v5001 = vpop.f32.mrb[0].mxu0
        %v5002 = vpop.f32.mrb[0].mxu0
        %v5003 = vadd.f32 0.0, %v5002
        %v5004 = vpop.f32.mrb[0].mxu0
        %5005 = vmatprep.mubr.bf16.mxu0 0
        %5006 = vmatmul.mubr.bf16.gmra.mrb[0].mxu0 %v4892
        %v5007 = vpop.f32.mrb[0].mxu0
        %v5008 = vadd.f32 0.0, %v5007
        %v5009 = vpop.f32.mrb[0].mxu0
        %v5010 = vpop.f32.mrb[0].mxu0
        %v5011 = vadd.f32 0.0, %v5010
        %v5012 = vpop.f32.mrb[0].mxu0
        %5013 = vmatprep.mubr.bf16.mxu0 0
        %5014 = vmatmul.mubr.bf16.gmra.mrb[0].mxu0 %v4895
        %v5015 = vpop.f32.mrb[0].mxu0
        %v5016 = vadd.f32 0.0, %v5015
        %v5017 = vpop.f32.mrb[0].mxu0
        %v5018 = vpop.f32.mrb[0].mxu0
        %v5019 = vadd.f32 0.0, %v5018
        %v5020 = vpop.f32.mrb[0].mxu0
        %5021 = vmatprep.mubr.bf16.mxu0 0
        %5022 = vmatmul.mubr.bf16.gmra.mrb[0].mxu0 %v4898
        %v5023 = vpop.f32.mrb[0].mxu0
        %v5024 = vadd.f32 0.0, %v5023
        %v5025 = vpop.f32.mrb[0].mxu0
        %v5026 = vpop.f32.mrb[0].mxu0
        %v5027 = vadd.f32 0.0, %v5026
        %v5028 = vpop.f32.mrb[0].mxu0
        %5029 = vmatprep.mubr.bf16.mxu0 0
        %5030 = vmatmul.mubr.bf16.gmra.mrb[0].mxu0 %v4901
        %v5031 = vpop.f32.mrb[0].mxu0
        %v5032 = vadd.f32 0.0, %v5031
        %v5033 = vpop.f32.mrb[0].mxu0
        %v5034 = vpop.f32.mrb[0].mxu0
        %v5035 = vadd.f32 0.0, %v5034
        %v5036 = vpop.f32.mrb[0].mxu0
        %5037 = vmatprep.mubr.bf16.mxu0 0
        %5038 = vmatmul.mubr.bf16.gmra.mrb[0].mxu0 %v4904
        %v5039 = vpop.f32.mrb[0].mxu0
        %v5040 = vadd.f32 0.0, %v5039
        %v5041 = vpop.f32.mrb[0].mxu0
        %v5042 = vpop.f32.mrb[0].mxu0
        %v5043 = vadd.f32 0.0, %v5042
        %v5044 = vpop.f32.mrb[0].mxu0
        %5045 = vmatprep.mubr.bf16.mxu0 0
        %5046 = vmatmul.mubr.bf16.gmra.mrb[0].mxu0 %v4907
        %v5047 = vpop.f32.mrb[0].mxu0
        %v5048 = vadd.f32 0.0, %v5047
        %v5049 = vpop.f32.mrb[0].mxu0
        %v5050 = vpop.f32.mrb[0].mxu0
        %v5051 = vadd.f32 0.0, %v5050
        %v5052 = vpop.f32.mrb[0].mxu0
        %5053 = vmatprep.mubr.bf16.mxu0 0
        %5054 = vmatmul.mubr.bf16.gmra.mrb[0].mxu0 %v4910
        %v5055 = vpop.f32.mrb[0].mxu0
        %v5056 = vadd.f32 0.0, %v5055
        %v5057 = vpop.f32.mrb[0].mxu0
        %v5058 = vpop.f32.mrb[0].mxu0
        %v5059 = vadd.f32 0.0, %v5058
        %v5060 = vpop.f32.mrb[0].mxu0
        %5061 = vmatprep.mubr.bf16.mxu0 0
        %5062 = vmatmul.mubr.bf16.gmra.mrb[0].mxu0 %v4913
        %v5063 = vpop.f32.mrb[0].mxu0
        %v5064 = vadd.f32 0.0, %v5063
        %v5065 = vpop.f32.mrb[0].mxu0
        %v5066 = vpop.f32.mrb[0].mxu0
        %v5067 = vadd.f32 0.0, %v5066
        %v5068 = vpop.f32.mrb[0].mxu0
        %5069 = vmatprep.mubr.bf16.mxu0 0
        %5070 = vmatmul.mubr.bf16.gmra.mrb[0].mxu0 %v4916
        %v5071 = vpop.f32.mrb[0].mxu0
        %v5072 = vadd.f32 0.0, %v5071
        %v5073 = vpop.f32.mrb[0].mxu0
        %v5074 = vpop.f32.mrb[0].mxu0
        %v5075 = vadd.f32 0.0, %v5074
        %v5076 = vpop.f32.mrb[0].mxu0
        %5077 = vmatprep.mubr.bf16.mxu0 0
        %5078 = vmatmul.mubr.bf16.gmra.mrb[0].mxu0 %v4919
        %v5079 = vpop.f32.mrb[0].mxu0
        %v5080 = vadd.f32 0.0, %v5079
        %v5081 = vpop.f32.mrb[0].mxu0
        %v5082 = vpop.f32.mrb[0].mxu0
        %v5083 = vadd.f32 0.0, %v5082
        %v5084 = vpop.f32.mrb[0].mxu0
        %5085 = vdwg.mxu0
        %v5086 = vadd.f32 %v2506, %v4960
        %v5087 = vadd.f32 %v2507, %v4963
        %v5088 = vadd.f32 %v2508, %v4968
        %v5089 = vadd.f32 %v2509, %v4971
        %v5090 = vadd.f32 %v2510, %v4976
        %v5091 = vadd.f32 %v2511, %v4979
        %v5092 = vadd.f32 %v2512, %v4984
        %v5093 = vadd.f32 %v2513, %v4987
        %v5094 = vadd.f32 %v2514, %v4992
        %v5095 = vadd.f32 %v2515, %v4995
        %v5096 = vadd.f32 %v2516, %v5000
        %v5097 = vadd.f32 %v2517, %v5003
        %v5098 = vadd.f32 %v2518, %v5008
        %v5099 = vadd.f32 %v2519, %v5011
        %v5100 = vadd.f32 %v2520, %v5016
        %v5101 = vadd.f32 %v2521, %v5019
        %v5102 = vadd.f32 %v2522, %v5024
        %v5103 = vadd.f32 %v2523, %v5027
        %v5104 = vadd.f32 %v2524, %v5032
        %v5105 = vadd.f32 %v2525, %v5035
        %v5106 = vadd.f32 %v2526, %v5040
        %v5107 = vadd.f32 %v2527, %v5043
        %v5108 = vadd.f32 %v2528, %v5048
        %v5109 = vadd.f32 %v2529, %v5051
        %v5110 = vadd.f32 %v2530, %v5056
        %v5111 = vadd.f32 %v2531, %v5059
        %v5112 = vadd.f32 %v2532, %v5064
        %v5113 = vadd.f32 %v2533, %v5067
        %v5114 = vadd.f32 %v2534, %v5072
        %v5115 = vadd.f32 %v2535, %v5075
        %v5116 = vadd.f32 %v2536, %v5080
        %v5117 = vadd.f32 %v2537, %v5083
        %v5118 = vlaneseq
        %v5119 = vshrl.u32 %v5118, 7
        %v5120 = vsub.s32 0, %v5119
        %v5121 = vrot.slane %v2495, %v5120
        %v5122 = vadd.f32 %v5086, %v5121
        %v5123 = vadd.f32 %v5087, %v5121
        %v5124 = vadd.f32 %v5088, %v5121
        %v5125 = vadd.f32 %v5089, %v5121
        %v5126 = vadd.f32 %v5090, %v5121
        %v5127 = vadd.f32 %v5091, %v5121
        %v5128 = vadd.f32 %v5092, %v5121
        %v5129 = vadd.f32 %v5093, %v5121
        %v5130 = vadd.f32 %v5094, %v5121
        %v5131 = vadd.f32 %v5095, %v5121
        %v5132 = vadd.f32 %v5096, %v5121
        %v5133 = vadd.f32 %v5097, %v5121
        %v5134 = vadd.f32 %v5098, %v5121
        %v5135 = vadd.f32 %v5099, %v5121
        %v5136 = vadd.f32 %v5100, %v5121
        %v5137 = vadd.f32 %v5101, %v5121
        %v5138 = vadd.f32 %v5102, %v5121
        %v5139 = vadd.f32 %v5103, %v5121
        %v5140 = vadd.f32 %v5104, %v5121
        %v5141 = vadd.f32 %v5105, %v5121
        %v5142 = vadd.f32 %v5106, %v5121
        %v5143 = vadd.f32 %v5107, %v5121
        %v5144 = vadd.f32 %v5108, %v5121
        %v5145 = vadd.f32 %v5109, %v5121
        %v5146 = vadd.f32 %v5110, %v5121
        %v5147 = vadd.f32 %v5111, %v5121
        %v5148 = vadd.f32 %v5112, %v5121
        %v5149 = vadd.f32 %v5113, %v5121
        %v5150 = vadd.f32 %v5114, %v5121
        %v5151 = vadd.f32 %v5115, %v5121
        %v5152 = vadd.f32 %v5116, %v5121
        %v5153 = vadd.f32 %v5117, %v5121
        %v5154 = vmax.f32 %v5122, 0.0
        %v5155 = vmax.f32 %v5123, 0.0
        %v5156 = vmax.f32 %v5124, 0.0
        %v5157 = vmax.f32 %v5125, 0.0
        %v5158 = vmax.f32 %v5126, 0.0
        %v5159 = vmax.f32 %v5127, 0.0
        %v5160 = vmax.f32 %v5128, 0.0
        %v5161 = vmax.f32 %v5129, 0.0
        %v5162 = vmax.f32 %v5130, 0.0
        %v5163 = vmax.f32 %v5131, 0.0
        %v5164 = vmax.f32 %v5132, 0.0
        %v5165 = vmax.f32 %v5133, 0.0
        %v5166 = vmax.f32 %v5134, 0.0
        %v5167 = vmax.f32 %v5135, 0.0
        %v5168 = vmax.f32 %v5136, 0.0
        %v5169 = vmax.f32 %v5137, 0.0
        %v5170 = vmax.f32 %v5138, 0.0
        %v5171 = vmax.f32 %v5139, 0.0
        %v5172 = vmax.f32 %v5140, 0.0
        %v5173 = vmax.f32 %v5141, 0.0
        %v5174 = vmax.f32 %v5142, 0.0
        %v5175 = vmax.f32 %v5143, 0.0
        %v5176 = vmax.f32 %v5144, 0.0
        %v5177 = vmax.f32 %v5145, 0.0
        %v5178 = vmax.f32 %v5146, 0.0
        %v5179 = vmax.f32 %v5147, 0.0
        %v5180 = vmax.f32 %v5148, 0.0
        %v5181 = vmax.f32 %v5149, 0.0
        %v5182 = vmax.f32 %v5150, 0.0
        %v5183 = vmax.f32 %v5151, 0.0
        %v5184 = vmax.f32 %v5152, 0.0
        %v5185 = vmax.f32 %v5153, 0.0
        %v5186 = vld [vmem:[%s5] sm:$0xff]
        %v5187 = vld [vmem:[%s5 + $0x8] sm:$0xff]
        %v5188 = vld [vmem:[%s5 + $0x10] sm:$0xff]
        %v5189 = vld [vmem:[%s5 + $0x18] sm:$0xff]
        %v5190 = vlaneseq
        %v5191 = vshrl.u32 %v5190, 7
        %v5192 = vsub.s32 1, %v5191
        %v5193 = vrot.slane %v2495, %v5192
        %vm5194 = vcmask 261120
        %v5196 = vsel %vm5194, %v5154, 0
        %v5199 = vsel %vm5194, %v5155, 0
        %v5202 = vsel %vm5194, %v5156, 0
        %v5205 = vsel %vm5194, %v5157, 0
        %v5208 = vsel %vm5194, %v5158, 0
        %v5211 = vsel %vm5194, %v5159, 0
        %v5214 = vsel %vm5194, %v5160, 0
        %v5217 = vsel %vm5194, %v5161, 0
        %v5220 = vsel %vm5194, %v5162, 0
        %v5223 = vsel %vm5194, %v5163, 0
        %v5226 = vsel %vm5194, %v5164, 0
        %v5229 = vsel %vm5194, %v5165, 0
        %v5232 = vsel %vm5194, %v5166, 0
        %v5235 = vsel %vm5194, %v5167, 0
        %v5238 = vsel %vm5194, %v5168, 0
        %v5241 = vsel %vm5194, %v5169, 0
        %v5244 = vsel %vm5194, %v5170, 0
        %v5247 = vsel %vm5194, %v5171, 0
        %v5250 = vsel %vm5194, %v5172, 0
        %v5253 = vsel %vm5194, %v5173, 0
        %v5256 = vsel %vm5194, %v5174, 0
        %v5259 = vsel %vm5194, %v5175, 0
        %v5262 = vsel %vm5194, %v5176, 0
        %v5265 = vsel %vm5194, %v5177, 0
        %v5268 = vsel %vm5194, %v5178, 0
        %v5271 = vsel %vm5194, %v5179, 0
        %v5274 = vsel %vm5194, %v5180, 0
        %v5277 = vsel %vm5194, %v5181, 0
        %v5280 = vsel %vm5194, %v5182, 0
        %v5283 = vsel %vm5194, %v5183, 0
        %v5286 = vsel %vm5194, %v5184, 0
        %v5289 = vsel %vm5194, %v5185, 0
        %5291 = vmatprep.subr.mxu0 0.0
        %5292 = vmatpush1.msra.mxu0 %v5186
        %5293 = vmatprep.subr.mxu0 0.0
        %5294 = vmatpush1.msra.mxu0 %v5187
        %5295 = vmatprep.subr.mxu0 0.0
        %5296 = vmatpush1.msra.mxu0 %v5188
        %5297 = vmatprep.subr.mxu0 0.0
        %5298 = vmatpush1.msra.mxu0 %v5189
        %5299 = vmatprep.subr.mxu0 0.0
        %5300 = vmatpush1.msra.mxu0 0.0
        %5301 = vmatprep.subr.mxu0 0.0
        %5302 = vmatpush1.msra.mxu0 0.0
        %5303 = vmatprep.subr.mxu0 0.0
        %5304 = vmatpush1.msra.mxu0 0.0
        %5305 = vmatprep.subr.mxu0 0.0
        %5306 = vmatpush1.msra.mxu0 0.0
        %5307 = vmatprep.subr.mxu0 0.0
        %5308 = vmatpush1.msra.mxu0 0.0
        %5309 = vmatprep.subr.mxu0 0.0
        %5310 = vmatpush1.msra.mxu0 0.0
        %5311 = vmatprep.subr.mxu0 0.0
        %5312 = vmatpush1.msra.mxu0 0.0
        %5313 = vmatprep.subr.mxu0 0.0
        %5314 = vmatpush1.msra.mxu0 0.0
        %5315 = vmatprep.subr.mxu0 0.0
        %5316 = vmatpush1.msra.mxu0 0.0
        %5317 = vmatprep.subr.mxu0 0.0
        %5318 = vmatpush1.msra.mxu0 0.0
        %5319 = vmatprep.subr.mxu0 0.0
        %5320 = vmatpush1.msra.mxu0 0.0
        %5321 = vmatprep.subr.mxu0 0.0
        %5322 = vmatpush1.msra.mxu0 0.0
        %5323 = vmatprep.subr.mxu0 0.0
        %5324 = vmatpush1.msra.mxu0 0.0
        %5325 = vmatprep.subr.mxu0 0.0
        %5326 = vmatpush1.msra.mxu0 0.0
        %5327 = vmatprep.subr.mxu0 0.0
        %5328 = vmatpush1.msra.mxu0 0.0
        %5329 = vmatprep.subr.mxu0 0.0
        %5330 = vmatpush1.msra.mxu0 0.0
        %5331 = vmatprep.subr.mxu0 0.0
        %5332 = vmatpush1.msra.mxu0 0.0
        %5333 = vmatprep.subr.mxu0 0.0
        %5334 = vmatpush1.msra.mxu0 0.0
        %5335 = vmatprep.subr.mxu0 0.0
        %5336 = vmatpush1.msra.mxu0 0.0
        %5337 = vmatprep.subr.mxu0 0.0
        %5338 = vmatpush1.msra.mxu0 0.0
        %5339 = vmatprep.subr.mxu0 0.0
        %5340 = vmatpush1.msra.mxu0 0.0
        %5341 = vmatprep.subr.mxu0 0.0
        %5342 = vmatpush1.msra.mxu0 0.0
        %5343 = vmatprep.subr.mxu0 0.0
        %5344 = vmatpush1.msra.mxu0 0.0
        %5345 = vmatprep.subr.mxu0 0.0
        %5346 = vmatpush1.msra.mxu0 0.0
        %5347 = vmatprep.subr.mxu0 0.0
        %5348 = vmatpush1.msra.mxu0 0.0
        %5349 = vmatprep.subr.mxu0 0.0
        %5350 = vmatpush1.msra.mxu0 0.0
        %5351 = vmatprep.subr.mxu0 0.0
        %5352 = vmatpush1.msra.mxu0 0.0
        %5353 = vmatprep.subr.mxu0 0.0
        %5354 = vmatpush1.msra.mxu0 0.0
        %5355 = vmatprep.mubr.f32.mxu0 0.0
        %5356 = vmatmul.mubr.f32.gmra.mrb[0].mxu0 %v5196
        %v5357 = vpop.f32.mrb[0].mxu0
        %v5358 = vadd.f32 %v5193, %v5357
        %v5359 = vpop.f32.mrb[0].mxu0
        %5360 = vmatprep.mubr.f32.mxu0 0.0
        %5361 = vmatmul.mubr.f32.gmra.mrb[0].mxu0 %v5199
        %v5362 = vpop.f32.mrb[0].mxu0
        %v5363 = vadd.f32 %v5193, %v5362
        %v5364 = vpop.f32.mrb[0].mxu0
        %5365 = vmatprep.mubr.f32.mxu0 0.0
        %5366 = vmatmul.mubr.f32.gmra.mrb[0].mxu0 %v5202
        %v5367 = vpop.f32.mrb[0].mxu0
        %v5368 = vadd.f32 %v5193, %v5367
        %v5369 = vpop.f32.mrb[0].mxu0
        %5370 = vmatprep.mubr.f32.mxu0 0.0
        %5371 = vmatmul.mubr.f32.gmra.mrb[0].mxu0 %v5205
        %v5372 = vpop.f32.mrb[0].mxu0
        %v5373 = vadd.f32 %v5193, %v5372
        %v5374 = vpop.f32.mrb[0].mxu0
        %5375 = vmatprep.mubr.f32.mxu0 0.0
        %5376 = vmatmul.mubr.f32.gmra.mrb[0].mxu0 %v5208
        %v5377 = vpop.f32.mrb[0].mxu0
        %v5378 = vadd.f32 %v5193, %v5377
        %v5379 = vpop.f32.mrb[0].mxu0
        %5380 = vmatprep.mubr.f32.mxu0 0.0
        %5381 = vmatmul.mubr.f32.gmra.mrb[0].mxu0 %v5211
        %v5382 = vpop.f32.mrb[0].mxu0
        %v5383 = vadd.f32 %v5193, %v5382
        %v5384 = vpop.f32.mrb[0].mxu0
        %5385 = vmatprep.mubr.f32.mxu0 0.0
        %5386 = vmatmul.mubr.f32.gmra.mrb[0].mxu0 %v5214
        %v5387 = vpop.f32.mrb[0].mxu0
        %v5388 = vadd.f32 %v5193, %v5387
        %v5389 = vpop.f32.mrb[0].mxu0
        %5390 = vmatprep.mubr.f32.mxu0 0.0
        %5391 = vmatmul.mubr.f32.gmra.mrb[0].mxu0 %v5217
        %v5392 = vpop.f32.mrb[0].mxu0
        %v5393 = vadd.f32 %v5193, %v5392
        %v5394 = vpop.f32.mrb[0].mxu0
        %5395 = vmatprep.mubr.f32.mxu0 0.0
        %5396 = vmatmul.mubr.f32.gmra.mrb[0].mxu0 %v5220
        %v5397 = vpop.f32.mrb[0].mxu0
        %v5398 = vadd.f32 %v5193, %v5397
        %v5399 = vpop.f32.mrb[0].mxu0
        %5400 = vmatprep.mubr.f32.mxu0 0.0
        %5401 = vmatmul.mubr.f32.gmra.mrb[0].mxu0 %v5223
        %v5402 = vpop.f32.mrb[0].mxu0
        %v5403 = vadd.f32 %v5193, %v5402
        %v5404 = vpop.f32.mrb[0].mxu0
        %5405 = vmatprep.mubr.f32.mxu0 0.0
        %5406 = vmatmul.mubr.f32.gmra.mrb[0].mxu0 %v5226
        %v5407 = vpop.f32.mrb[0].mxu0
        %v5408 = vadd.f32 %v5193, %v5407
        %v5409 = vpop.f32.mrb[0].mxu0
        %5410 = vmatprep.mubr.f32.mxu0 0.0
        %5411 = vmatmul.mubr.f32.gmra.mrb[0].mxu0 %v5229
        %v5412 = vpop.f32.mrb[0].mxu0
        %v5413 = vadd.f32 %v5193, %v5412
        %v5414 = vpop.f32.mrb[0].mxu0
        %5415 = vmatprep.mubr.f32.mxu0 0.0
        %5416 = vmatmul.mubr.f32.gmra.mrb[0].mxu0 %v5232
        %v5417 = vpop.f32.mrb[0].mxu0
        %v5418 = vadd.f32 %v5193, %v5417
        %v5419 = vpop.f32.mrb[0].mxu0
        %5420 = vmatprep.mubr.f32.mxu0 0.0
        %5421 = vmatmul.mubr.f32.gmra.mrb[0].mxu0 %v5235
        %v5422 = vpop.f32.mrb[0].mxu0
        %v5423 = vadd.f32 %v5193, %v5422
        %v5424 = vpop.f32.mrb[0].mxu0
        %5425 = vmatprep.mubr.f32.mxu0 0.0
        %5426 = vmatmul.mubr.f32.gmra.mrb[0].mxu0 %v5238
        %v5427 = vpop.f32.mrb[0].mxu0
        %v5428 = vadd.f32 %v5193, %v5427
        %v5429 = vpop.f32.mrb[0].mxu0
        %5430 = vmatprep.mubr.f32.mxu0 0.0
        %5431 = vmatmul.mubr.f32.gmra.mrb[0].mxu0 %v5241
        %v5432 = vpop.f32.mrb[0].mxu0
        %v5433 = vadd.f32 %v5193, %v5432
        %v5434 = vpop.f32.mrb[0].mxu0
        %5435 = vmatprep.mubr.f32.mxu0 0.0
        %5436 = vmatmul.mubr.f32.gmra.mrb[0].mxu0 %v5244
        %v5437 = vpop.f32.mrb[0].mxu0
        %v5438 = vadd.f32 %v5193, %v5437
        %v5439 = vpop.f32.mrb[0].mxu0
        %5440 = vmatprep.mubr.f32.mxu0 0.0
        %5441 = vmatmul.mubr.f32.gmra.mrb[0].mxu0 %v5247
        %v5442 = vpop.f32.mrb[0].mxu0
        %v5443 = vadd.f32 %v5193, %v5442
        %v5444 = vpop.f32.mrb[0].mxu0
        %5445 = vmatprep.mubr.f32.mxu0 0.0
        %5446 = vmatmul.mubr.f32.gmra.mrb[0].mxu0 %v5250
        %v5447 = vpop.f32.mrb[0].mxu0
        %v5448 = vadd.f32 %v5193, %v5447
        %v5449 = vpop.f32.mrb[0].mxu0
        %5450 = vmatprep.mubr.f32.mxu0 0.0
        %5451 = vmatmul.mubr.f32.gmra.mrb[0].mxu0 %v5253
        %v5452 = vpop.f32.mrb[0].mxu0
        %v5453 = vadd.f32 %v5193, %v5452
        %v5454 = vpop.f32.mrb[0].mxu0
        %5455 = vmatprep.mubr.f32.mxu0 0.0
        %5456 = vmatmul.mubr.f32.gmra.mrb[0].mxu0 %v5256
        %v5457 = vpop.f32.mrb[0].mxu0
        %v5458 = vadd.f32 %v5193, %v5457
        %v5459 = vpop.f32.mrb[0].mxu0
        %5460 = vmatprep.mubr.f32.mxu0 0.0
        %5461 = vmatmul.mubr.f32.gmra.mrb[0].mxu0 %v5259
        %v5462 = vpop.f32.mrb[0].mxu0
        %v5463 = vadd.f32 %v5193, %v5462
        %v5464 = vpop.f32.mrb[0].mxu0
        %5465 = vmatprep.mubr.f32.mxu0 0.0
        %5466 = vmatmul.mubr.f32.gmra.mrb[0].mxu0 %v5262
        %v5467 = vpop.f32.mrb[0].mxu0
        %v5468 = vadd.f32 %v5193, %v5467
        %v5469 = vpop.f32.mrb[0].mxu0
        %5470 = vmatprep.mubr.f32.mxu0 0.0
        %5471 = vmatmul.mubr.f32.gmra.mrb[0].mxu0 %v5265
        %v5472 = vpop.f32.mrb[0].mxu0
        %v5473 = vadd.f32 %v5193, %v5472
        %v5474 = vpop.f32.mrb[0].mxu0
        %5475 = vmatprep.mubr.f32.mxu0 0.0
        %5476 = vmatmul.mubr.f32.gmra.mrb[0].mxu0 %v5268
        %v5477 = vpop.f32.mrb[0].mxu0
        %v5478 = vadd.f32 %v5193, %v5477
        %v5479 = vpop.f32.mrb[0].mxu0
        %5480 = vmatprep.mubr.f32.mxu0 0.0
        %5481 = vmatmul.mubr.f32.gmra.mrb[0].mxu0 %v5271
        %v5482 = vpop.f32.mrb[0].mxu0
        %v5483 = vadd.f32 %v5193, %v5482
        %v5484 = vpop.f32.mrb[0].mxu0
        %5485 = vmatprep.mubr.f32.mxu0 0.0
        %5486 = vmatmul.mubr.f32.gmra.mrb[0].mxu0 %v5274
        %v5487 = vpop.f32.mrb[0].mxu0
        %v5488 = vadd.f32 %v5193, %v5487
        %v5489 = vpop.f32.mrb[0].mxu0
        %5490 = vmatprep.mubr.f32.mxu0 0.0
        %5491 = vmatmul.mubr.f32.gmra.mrb[0].mxu0 %v5277
        %v5492 = vpop.f32.mrb[0].mxu0
        %v5493 = vadd.f32 %v5193, %v5492
        %v5494 = vpop.f32.mrb[0].mxu0
        %5495 = vmatprep.mubr.f32.mxu0 0.0
        %5496 = vmatmul.mubr.f32.gmra.mrb[0].mxu0 %v5280
        %v5497 = vpop.f32.mrb[0].mxu0
        %v5498 = vadd.f32 %v5193, %v5497
        %v5499 = vpop.f32.mrb[0].mxu0
        %5500 = vmatprep.mubr.f32.mxu0 0.0
        %5501 = vmatmul.mubr.f32.gmra.mrb[0].mxu0 %v5283
        %v5502 = vpop.f32.mrb[0].mxu0
        %v5503 = vadd.f32 %v5193, %v5502
        %v5504 = vpop.f32.mrb[0].mxu0
        %5505 = vmatprep.mubr.f32.mxu0 0.0
        %5506 = vmatmul.mubr.f32.gmra.mrb[0].mxu0 %v5286
        %v5507 = vpop.f32.mrb[0].mxu0
        %v5508 = vadd.f32 %v5193, %v5507
        %v5509 = vpop.f32.mrb[0].mxu0
        %5510 = vmatprep.mubr.f32.mxu0 0.0
        %5511 = vmatmul.mubr.f32.gmra.mrb[0].mxu0 %v5289
        %v5512 = vpop.f32.mrb[0].mxu0
        %v5513 = vadd.f32 %v5193, %v5512
        %v5514 = vpop.f32.mrb[0].mxu0
        %5515 = vdwg.mxu0
        %v5516 = vmax.f32 %v5358, 0.0
        %v5517 = vmax.f32 %v5363, 0.0
        %v5518 = vmax.f32 %v5368, 0.0
        %v5519 = vmax.f32 %v5373, 0.0
        %v5520 = vmax.f32 %v5378, 0.0
        %v5521 = vmax.f32 %v5383, 0.0
        %v5522 = vmax.f32 %v5388, 0.0
        %v5523 = vmax.f32 %v5393, 0.0
        %v5524 = vmax.f32 %v5398, 0.0
        %v5525 = vmax.f32 %v5403, 0.0
        %v5526 = vmax.f32 %v5408, 0.0
        %v5527 = vmax.f32 %v5413, 0.0
        %v5528 = vmax.f32 %v5418, 0.0
        %v5529 = vmax.f32 %v5423, 0.0
        %v5530 = vmax.f32 %v5428, 0.0
        %v5531 = vmax.f32 %v5433, 0.0
        %v5532 = vmax.f32 %v5438, 0.0
        %v5533 = vmax.f32 %v5443, 0.0
        %v5534 = vmax.f32 %v5448, 0.0
        %v5535 = vmax.f32 %v5453, 0.0
        %v5536 = vmax.f32 %v5458, 0.0
        %v5537 = vmax.f32 %v5463, 0.0
        %v5538 = vmax.f32 %v5468, 0.0
        %v5539 = vmax.f32 %v5473, 0.0
        %v5540 = vmax.f32 %v5478, 0.0
        %v5541 = vmax.f32 %v5483, 0.0
        %v5542 = vmax.f32 %v5488, 0.0
        %v5543 = vmax.f32 %v5493, 0.0
        %v5544 = vmax.f32 %v5498, 0.0
        %v5545 = vmax.f32 %v5503, 0.0
        %v5546 = vmax.f32 %v5508, 0.0
        %v5547 = vmax.f32 %v5513, 0.0
        %v5548 = vld [vmem:[%s9] sm:$0xff]
        %5550 = vset.pattern.permute.xlu0 0
        %5551 = vperm.xlu0 %5550, %v2496
        %v5552 = vpop.permute.xlu0 %5551
        %v5555 = vsel %vm5194, %v5548, 0
        %v5558 = vsel %vm5194, %v5516, 0
        %v5561 = vsel %vm5194, %v5517, 0
        %v5564 = vsel %vm5194, %v5518, 0
        %v5567 = vsel %vm5194, %v5519, 0
        %v5570 = vsel %vm5194, %v5520, 0
        %v5573 = vsel %vm5194, %v5521, 0
        %v5576 = vsel %vm5194, %v5522, 0
        %v5579 = vsel %vm5194, %v5523, 0
        %v5582 = vsel %vm5194, %v5524, 0
        %v5585 = vsel %vm5194, %v5525, 0
        %v5588 = vsel %vm5194, %v5526, 0
        %v5591 = vsel %vm5194, %v5527, 0
        %v5594 = vsel %vm5194, %v5528, 0
        %v5597 = vsel %vm5194, %v5529, 0
        %v5600 = vsel %vm5194, %v5530, 0
        %v5603 = vsel %vm5194, %v5531, 0
        %v5606 = vsel %vm5194, %v5532, 0
        %v5609 = vsel %vm5194, %v5533, 0
        %v5612 = vsel %vm5194, %v5534, 0
        %v5615 = vsel %vm5194, %v5535, 0
        %v5618 = vsel %vm5194, %v5536, 0
        %v5621 = vsel %vm5194, %v5537, 0
        %v5624 = vsel %vm5194, %v5538, 0
        %v5627 = vsel %vm5194, %v5539, 0
        %v5630 = vsel %vm5194, %v5540, 0
        %v5633 = vsel %vm5194, %v5541, 0
        %v5636 = vsel %vm5194, %v5542, 0
        %v5639 = vsel %vm5194, %v5543, 0
        %v5642 = vsel %vm5194, %v5544, 0
        %v5645 = vsel %vm5194, %v5545, 0
        %v5648 = vsel %vm5194, %v5546, 0
        %v5651 = vsel %vm5194, %v5547, 0
        %5653 = vmatprep.subr.mxu0 0.0
        %5654 = vmatpush1.xpose.msra.mxu0 %v5558
        %5655 = vmatprep.subr.mxu0 0.0
        %5656 = vmatpush1.xpose.msra.mxu0 %v5561
        %5657 = vmatprep.subr.mxu0 0.0
        %5658 = vmatpush1.xpose.msra.mxu0 %v5564
        %5659 = vmatprep.subr.mxu0 0.0
        %5660 = vmatpush1.xpose.msra.mxu0 %v5567
        %5661 = vmatprep.subr.mxu0 0.0
        %5662 = vmatpush1.xpose.msra.mxu0 %v5570
        %5663 = vmatprep.subr.mxu0 0.0
        %5664 = vmatpush1.xpose.msra.mxu0 %v5573
        %5665 = vmatprep.subr.mxu0 0.0
        %5666 = vmatpush1.xpose.msra.mxu0 %v5576
        %5667 = vmatprep.subr.mxu0 0.0
        %5668 = vmatpush1.xpose.msra.mxu0 %v5579
        %5669 = vmatprep.subr.mxu0 0.0
        %5670 = vmatpush1.xpose.msra.mxu0 %v5582
        %5671 = vmatprep.subr.mxu0 0.0
        %5672 = vmatpush1.xpose.msra.mxu0 %v5585
        %5673 = vmatprep.subr.mxu0 0.0
        %5674 = vmatpush1.xpose.msra.mxu0 %v5588
        %5675 = vmatprep.subr.mxu0 0.0
        %5676 = vmatpush1.xpose.msra.mxu0 %v5591
        %5677 = vmatprep.subr.mxu0 0.0
        %5678 = vmatpush1.xpose.msra.mxu0 %v5594
        %5679 = vmatprep.subr.mxu0 0.0
        %5680 = vmatpush1.xpose.msra.mxu0 %v5597
        %5681 = vmatprep.subr.mxu0 0.0
        %5682 = vmatpush1.xpose.msra.mxu0 %v5600
        %5683 = vmatprep.subr.mxu0 0.0
        %5684 = vmatpush1.xpose.msra.mxu0 %v5603
        %5685 = vmatprep.subr.mxu0 0.0
        %5686 = vmatpush1.xpose.msra.mxu0 %v5606
        %5687 = vmatprep.subr.mxu0 0.0
        %5688 = vmatpush1.xpose.msra.mxu0 %v5609
        %5689 = vmatprep.subr.mxu0 0.0
        %5690 = vmatpush1.xpose.msra.mxu0 %v5612
        %5691 = vmatprep.subr.mxu0 0.0
        %5692 = vmatpush1.xpose.msra.mxu0 %v5615
        %5693 = vmatprep.subr.mxu0 0.0
        %5694 = vmatpush1.xpose.msra.mxu0 %v5618
        %5695 = vmatprep.subr.mxu0 0.0
        %5696 = vmatpush1.xpose.msra.mxu0 %v5621
        %5697 = vmatprep.subr.mxu0 0.0
        %5698 = vmatpush1.xpose.msra.mxu0 %v5624
        %5699 = vmatprep.subr.mxu0 0.0
        %5700 = vmatpush1.xpose.msra.mxu0 %v5627
        %5701 = vmatprep.subr.mxu0 0.0
        %5702 = vmatpush1.xpose.msra.mxu0 %v5630
        %5703 = vmatprep.subr.mxu0 0.0
        %5704 = vmatpush1.xpose.msra.mxu0 %v5633
        %5705 = vmatprep.subr.mxu0 0.0
        %5706 = vmatpush1.xpose.msra.mxu0 %v5636
        %5707 = vmatprep.subr.mxu0 0.0
        %5708 = vmatpush1.xpose.msra.mxu0 %v5639
        %5709 = vmatprep.subr.mxu0 0.0
        %5710 = vmatpush1.xpose.msra.mxu0 %v5642
        %5711 = vmatprep.subr.mxu0 0.0
        %5712 = vmatpush1.xpose.msra.mxu0 %v5645
        %5713 = vmatprep.subr.mxu0 0.0
        %5714 = vmatpush1.xpose.msra.mxu0 %v5648
        %5715 = vmatprep.subr.mxu0 0.0
        %5716 = vmatpush1.xpose.msra.mxu0 %v5651
        %5717 = vmatprep.mubr.f32.mxu0 0.0
        %5718 = vmatmul.mubr.f32.gmra.mrb[0].mxu0 %v5555
        %v5719 = vpop.f32.mrb[0].mxu0
        %v5720 = vadd.f32 %v5552, %v5719
        %v5721 = vpop.f32.mrb[0].mxu0
        %v5722 = vadd.f32 %v5552, %v5721
        %5723 = vdwg.mxu0
        %5724 = vst [vmem:[%s449] sm:$0xff] %v5720
        %5725 = vst [vmem:[%s449 + $0x8] sm:$0xff] %v5722
        %v5726 = vpack.c.bf16 %v5517, %v5516
        %v5727 = vpack.c.bf16 %v5519, %v5518
        %v5728 = vpack.c.bf16 %v5521, %v5520
        %v5729 = vpack.c.bf16 %v5523, %v5522
        %v5730 = vpack.c.bf16 %v5525, %v5524
        %v5731 = vpack.c.bf16 %v5527, %v5526
        %v5732 = vpack.c.bf16 %v5529, %v5528
        %v5733 = vpack.c.bf16 %v5531, %v5530
        %v5734 = vpack.c.bf16 %v5533, %v5532
        %v5735 = vpack.c.bf16 %v5535, %v5534
        %v5736 = vpack.c.bf16 %v5537, %v5536
        %v5737 = vpack.c.bf16 %v5539, %v5538
        %v5738 = vpack.c.bf16 %v5541, %v5540
        %v5739 = vpack.c.bf16 %v5543, %v5542
        %v5740 = vpack.c.bf16 %v5545, %v5544
        %v5741 = vpack.c.bf16 %v5547, %v5546
        loop: start=0, step=1, limit=2
        $region80: #{tpu_custom_call.1} parent=67 // loop_pre_header
          _
        $region81: #{tpu_custom_call.1} parent=67 // loop_header
          %s5743 = sphi 0, %s5747
          %p5744 = scmp.ge.s32.totalorder %s5743, 2
        $region82: #{tpu_custom_call.1} parent=67 // loop_header_branch
          %5746 = sbr.rel (%p5744) target = $region86
        $region83: #{tpu_custom_call.1} parent=67 // loop_body
          %s5748 = smul.u32 %s5743, 512
          %v5749 = vlaneseq
          %v5750 = vand.u32 %v5749, 127
          %v5751 = vadd.s32 %v5750, 128
          %v5752 = vadd.s32 %v5750, 256
          %v5753 = vadd.s32 %v5750, 384
          %v5754 = vstv %s5748
          %v5755 = vadd.s32 %v5750, %v5754
          %v5756 = vadd.s32 %v5751, %v5754
          %v5757 = vadd.s32 %v5752, %v5754
          %v5758 = vadd.s32 %v5753, %v5754
          %v5759 = vlaneseq
          %v5760 = vshrl.u32 %v5759, 7
          %v5761 = vsub.s32 0, %v5760
          %v5762 = vrot.slane %v2499, %v5761
          %v5763 = vlaneseq
          %v5764 = vshrl.u32 %v5763, 7
          %v5765 = vsub.s32 1, %v5764
          %v5766 = vrot.slane %v2499, %v5765
          %v5767 = vlaneseq
          %v5768 = vshrl.u32 %v5767, 7
          %v5769 = vsub.s32 0, %v5768
          %v5770 = vrot.slane %v5762, %v5769
          %5772 = vbcast.lane.b32.xlu0 %v5770, 256
          %v5773 = vpop.permute.xlu0 %5772
          %s5775 = sor.u32 256, 8
          %5776 = vbcast.lane.b32.xlu0 %v5770, %s5775
          %v5777 = vpop.permute.xlu0 %5776
          %s5779 = sor.u32 256, 16
          %5780 = vbcast.lane.b32.xlu0 %v5770, %s5779
          %v5781 = vpop.permute.xlu0 %5780
          %s5783 = sor.u32 256, 24
          %5784 = vbcast.lane.b32.xlu0 %v5770, %s5783
          %v5785 = vpop.permute.xlu0 %5784
          %s5787 = sor.u32 256, 32
          %5788 = vbcast.lane.b32.xlu0 %v5770, %s5787
          %v5789 = vpop.permute.xlu0 %5788
          %s5791 = sor.u32 256, 40
          %5792 = vbcast.lane.b32.xlu0 %v5770, %s5791
          %v5793 = vpop.permute.xlu0 %5792
          %s5795 = sor.u32 256, 48
          %5796 = vbcast.lane.b32.xlu0 %v5770, %s5795
          %v5797 = vpop.permute.xlu0 %5796
          %s5799 = sor.u32 256, 56
          %5800 = vbcast.lane.b32.xlu0 %v5770, %s5799
          %v5801 = vpop.permute.xlu0 %5800
          %s5803 = sor.u32 256, 64
          %5804 = vbcast.lane.b32.xlu0 %v5770, %s5803
          %v5805 = vpop.permute.xlu0 %5804
          %s5807 = sor.u32 256, 72
          %5808 = vbcast.lane.b32.xlu0 %v5770, %s5807
          %v5809 = vpop.permute.xlu0 %5808
          %s5811 = sor.u32 256, 80
          %5812 = vbcast.lane.b32.xlu0 %v5770, %s5811
          %v5813 = vpop.permute.xlu0 %5812
          %s5815 = sor.u32 256, 88
          %5816 = vbcast.lane.b32.xlu0 %v5770, %s5815
          %v5817 = vpop.permute.xlu0 %5816
          %s5819 = sor.u32 256, 96
          %5820 = vbcast.lane.b32.xlu0 %v5770, %s5819
          %v5821 = vpop.permute.xlu0 %5820
          %s5823 = sor.u32 256, 104
          %5824 = vbcast.lane.b32.xlu0 %v5770, %s5823
          %v5825 = vpop.permute.xlu0 %5824
          %s5827 = sor.u32 256, 112
          %5828 = vbcast.lane.b32.xlu0 %v5770, %s5827
          %v5829 = vpop.permute.xlu0 %5828
          %s5831 = sor.u32 256, 120
          %5832 = vbcast.lane.b32.xlu0 %v5770, %s5831
          %v5833 = vpop.permute.xlu0 %5832
          %v5834 = vlaneseq
          %v5835 = vshrl.u32 %v5834, 7
          %v5836 = vsub.s32 0, %v5835
          %v5837 = vrot.slane %v5766, %v5836
          %5839 = vbcast.lane.b32.xlu0 %v5837, 256
          %v5840 = vpop.permute.xlu0 %5839
          %s5842 = sor.u32 256, 8
          %5843 = vbcast.lane.b32.xlu0 %v5837, %s5842
          %v5844 = vpop.permute.xlu0 %5843
          %s5846 = sor.u32 256, 16
          %5847 = vbcast.lane.b32.xlu0 %v5837, %s5846
          %v5848 = vpop.permute.xlu0 %5847
          %s5850 = sor.u32 256, 24
          %5851 = vbcast.lane.b32.xlu0 %v5837, %s5850
          %v5852 = vpop.permute.xlu0 %5851
          %s5854 = sor.u32 256, 32
          %5855 = vbcast.lane.b32.xlu0 %v5837, %s5854
          %v5856 = vpop.permute.xlu0 %5855
          %s5858 = sor.u32 256, 40
          %5859 = vbcast.lane.b32.xlu0 %v5837, %s5858
          %v5860 = vpop.permute.xlu0 %5859
          %s5862 = sor.u32 256, 48
          %5863 = vbcast.lane.b32.xlu0 %v5837, %s5862
          %v5864 = vpop.permute.xlu0 %5863
          %s5866 = sor.u32 256, 56
          %5867 = vbcast.lane.b32.xlu0 %v5837, %s5866
          %v5868 = vpop.permute.xlu0 %5867
          %s5870 = sor.u32 256, 64
          %5871 = vbcast.lane.b32.xlu0 %v5837, %s5870
          %v5872 = vpop.permute.xlu0 %5871
          %s5874 = sor.u32 256, 72
          %5875 = vbcast.lane.b32.xlu0 %v5837, %s5874
          %v5876 = vpop.permute.xlu0 %5875
          %s5878 = sor.u32 256, 80
          %5879 = vbcast.lane.b32.xlu0 %v5837, %s5878
          %v5880 = vpop.permute.xlu0 %5879
          %s5882 = sor.u32 256, 88
          %5883 = vbcast.lane.b32.xlu0 %v5837, %s5882
          %v5884 = vpop.permute.xlu0 %5883
          %s5886 = sor.u32 256, 96
          %5887 = vbcast.lane.b32.xlu0 %v5837, %s5886
          %v5888 = vpop.permute.xlu0 %5887
          %s5890 = sor.u32 256, 104
          %5891 = vbcast.lane.b32.xlu0 %v5837, %s5890
          %v5892 = vpop.permute.xlu0 %5891
          %s5894 = sor.u32 256, 112
          %5895 = vbcast.lane.b32.xlu0 %v5837, %s5894
          %v5896 = vpop.permute.xlu0 %5895
          %s5898 = sor.u32 256, 120
          %5899 = vbcast.lane.b32.xlu0 %v5837, %s5898
          %v5900 = vpop.permute.xlu0 %5899
          %vm5901 = vcmp.eq.s32.totalorder %v5755, %v5773
          %vm5902 = vcmp.eq.s32.totalorder %v5756, %v5773
          %vm5903 = vcmp.eq.s32.totalorder %v5757, %v5773
          %vm5904 = vcmp.eq.s32.totalorder %v5758, %v5773
          %vm5905 = vcmp.eq.s32.totalorder %v5755, %v5777
          %vm5906 = vcmp.eq.s32.totalorder %v5756, %v5777
          %vm5907 = vcmp.eq.s32.totalorder %v5757, %v5777
          %vm5908 = vcmp.eq.s32.totalorder %v5758, %v5777
          %vm5909 = vcmp.eq.s32.totalorder %v5755, %v5781
          %vm5910 = vcmp.eq.s32.totalorder %v5756, %v5781
          %vm5911 = vcmp.eq.s32.totalorder %v5757, %v5781
          %vm5912 = vcmp.eq.s32.totalorder %v5758, %v5781
          %vm5913 = vcmp.eq.s32.totalorder %v5755, %v5785
          %vm5914 = vcmp.eq.s32.totalorder %v5756, %v5785
          %vm5915 = vcmp.eq.s32.totalorder %v5757, %v5785
          %vm5916 = vcmp.eq.s32.totalorder %v5758, %v5785
          %vm5917 = vcmp.eq.s32.totalorder %v5755, %v5789
          %vm5918 = vcmp.eq.s32.totalorder %v5756, %v5789
          %vm5919 = vcmp.eq.s32.totalorder %v5757, %v5789
          %vm5920 = vcmp.eq.s32.totalorder %v5758, %v5789
          %vm5921 = vcmp.eq.s32.totalorder %v5755, %v5793
          %vm5922 = vcmp.eq.s32.totalorder %v5756, %v5793
          %vm5923 = vcmp.eq.s32.totalorder %v5757, %v5793
          %vm5924 = vcmp.eq.s32.totalorder %v5758, %v5793
          %vm5925 = vcmp.eq.s32.totalorder %v5755, %v5797
          %vm5926 = vcmp.eq.s32.totalorder %v5756, %v5797
          %vm5927 = vcmp.eq.s32.totalorder %v5757, %v5797
          %vm5928 = vcmp.eq.s32.totalorder %v5758, %v5797
          %vm5929 = vcmp.eq.s32.totalorder %v5755, %v5801
          %vm5930 = vcmp.eq.s32.totalorder %v5756, %v5801
          %vm5931 = vcmp.eq.s32.totalorder %v5757, %v5801
          %vm5932 = vcmp.eq.s32.totalorder %v5758, %v5801
          %vm5933 = vcmp.eq.s32.totalorder %v5755, %v5805
          %vm5934 = vcmp.eq.s32.totalorder %v5756, %v5805
          %vm5935 = vcmp.eq.s32.totalorder %v5757, %v5805
          %vm5936 = vcmp.eq.s32.totalorder %v5758, %v5805
          %vm5937 = vcmp.eq.s32.totalorder %v5755, %v5809
          %vm5938 = vcmp.eq.s32.totalorder %v5756, %v5809
          %vm5939 = vcmp.eq.s32.totalorder %v5757, %v5809
          %vm5940 = vcmp.eq.s32.totalorder %v5758, %v5809
          %vm5941 = vcmp.eq.s32.totalorder %v5755, %v5813
          %vm5942 = vcmp.eq.s32.totalorder %v5756, %v5813
          %vm5943 = vcmp.eq.s32.totalorder %v5757, %v5813
          %vm5944 = vcmp.eq.s32.totalorder %v5758, %v5813
          %vm5945 = vcmp.eq.s32.totalorder %v5755, %v5817
          %vm5946 = vcmp.eq.s32.totalorder %v5756, %v5817
          %vm5947 = vcmp.eq.s32.totalorder %v5757, %v5817
          %vm5948 = vcmp.eq.s32.totalorder %v5758, %v5817
          %vm5949 = vcmp.eq.s32.totalorder %v5755, %v5821
          %vm5950 = vcmp.eq.s32.totalorder %v5756, %v5821
          %vm5951 = vcmp.eq.s32.totalorder %v5757, %v5821
          %vm5952 = vcmp.eq.s32.totalorder %v5758, %v5821
          %vm5953 = vcmp.eq.s32.totalorder %v5755, %v5825
          %vm5954 = vcmp.eq.s32.totalorder %v5756, %v5825
          %vm5955 = vcmp.eq.s32.totalorder %v5757, %v5825
          %vm5956 = vcmp.eq.s32.totalorder %v5758, %v5825
          %vm5957 = vcmp.eq.s32.totalorder %v5755, %v5829
          %vm5958 = vcmp.eq.s32.totalorder %v5756, %v5829
          %vm5959 = vcmp.eq.s32.totalorder %v5757, %v5829
          %vm5960 = vcmp.eq.s32.totalorder %v5758, %v5829
          %vm5961 = vcmp.eq.s32.totalorder %v5755, %v5833
          %vm5962 = vcmp.eq.s32.totalorder %v5756, %v5833
          %vm5963 = vcmp.eq.s32.totalorder %v5757, %v5833
          %vm5964 = vcmp.eq.s32.totalorder %v5758, %v5833
          %vm5965 = vcmp.eq.s32.totalorder %v5755, %v5840
          %vm5966 = vcmp.eq.s32.totalorder %v5756, %v5840
          %vm5967 = vcmp.eq.s32.totalorder %v5757, %v5840
          %vm5968 = vcmp.eq.s32.totalorder %v5758, %v5840
          %vm5969 = vcmp.eq.s32.totalorder %v5755, %v5844
          %vm5970 = vcmp.eq.s32.totalorder %v5756, %v5844
          %vm5971 = vcmp.eq.s32.totalorder %v5757, %v5844
          %vm5972 = vcmp.eq.s32.totalorder %v5758, %v5844
          %vm5973 = vcmp.eq.s32.totalorder %v5755, %v5848
          %vm5974 = vcmp.eq.s32.totalorder %v5756, %v5848
          %vm5975 = vcmp.eq.s32.totalorder %v5757, %v5848
          %vm5976 = vcmp.eq.s32.totalorder %v5758, %v5848
          %vm5977 = vcmp.eq.s32.totalorder %v5755, %v5852
          %vm5978 = vcmp.eq.s32.totalorder %v5756, %v5852
          %vm5979 = vcmp.eq.s32.totalorder %v5757, %v5852
          %vm5980 = vcmp.eq.s32.totalorder %v5758, %v5852
          %vm5981 = vcmp.eq.s32.totalorder %v5755, %v5856
          %vm5982 = vcmp.eq.s32.totalorder %v5756, %v5856
          %vm5983 = vcmp.eq.s32.totalorder %v5757, %v5856
          %vm5984 = vcmp.eq.s32.totalorder %v5758, %v5856
          %vm5985 = vcmp.eq.s32.totalorder %v5755, %v5860
          %vm5986 = vcmp.eq.s32.totalorder %v5756, %v5860
          %vm5987 = vcmp.eq.s32.totalorder %v5757, %v5860
          %vm5988 = vcmp.eq.s32.totalorder %v5758, %v5860
          %vm5989 = vcmp.eq.s32.totalorder %v5755, %v5864
          %vm5990 = vcmp.eq.s32.totalorder %v5756, %v5864
          %vm5991 = vcmp.eq.s32.totalorder %v5757, %v5864
          %vm5992 = vcmp.eq.s32.totalorder %v5758, %v5864
          %vm5993 = vcmp.eq.s32.totalorder %v5755, %v5868
          %vm5994 = vcmp.eq.s32.totalorder %v5756, %v5868
          %vm5995 = vcmp.eq.s32.totalorder %v5757, %v5868
          %vm5996 = vcmp.eq.s32.totalorder %v5758, %v5868
          %vm5997 = vcmp.eq.s32.totalorder %v5755, %v5872
          %vm5998 = vcmp.eq.s32.totalorder %v5756, %v5872
          %vm5999 = vcmp.eq.s32.totalorder %v5757, %v5872
          %vm6000 = vcmp.eq.s32.totalorder %v5758, %v5872
          %vm6001 = vcmp.eq.s32.totalorder %v5755, %v5876
          %vm6002 = vcmp.eq.s32.totalorder %v5756, %v5876
          %vm6003 = vcmp.eq.s32.totalorder %v5757, %v5876
          %vm6004 = vcmp.eq.s32.totalorder %v5758, %v5876
          %vm6005 = vcmp.eq.s32.totalorder %v5755, %v5880
          %vm6006 = vcmp.eq.s32.totalorder %v5756, %v5880
          %vm6007 = vcmp.eq.s32.totalorder %v5757, %v5880
          %vm6008 = vcmp.eq.s32.totalorder %v5758, %v5880
          %vm6009 = vcmp.eq.s32.totalorder %v5755, %v5884
          %vm6010 = vcmp.eq.s32.totalorder %v5756, %v5884
          %vm6011 = vcmp.eq.s32.totalorder %v5757, %v5884
          %vm6012 = vcmp.eq.s32.totalorder %v5758, %v5884
          %vm6013 = vcmp.eq.s32.totalorder %v5755, %v5888
          %vm6014 = vcmp.eq.s32.totalorder %v5756, %v5888
          %vm6015 = vcmp.eq.s32.totalorder %v5757, %v5888
          %vm6016 = vcmp.eq.s32.totalorder %v5758, %v5888
          %vm6017 = vcmp.eq.s32.totalorder %v5755, %v5892
          %vm6018 = vcmp.eq.s32.totalorder %v5756, %v5892
          %vm6019 = vcmp.eq.s32.totalorder %v5757, %v5892
          %vm6020 = vcmp.eq.s32.totalorder %v5758, %v5892
          %vm6021 = vcmp.eq.s32.totalorder %v5755, %v5896
          %vm6022 = vcmp.eq.s32.totalorder %v5756, %v5896
          %vm6023 = vcmp.eq.s32.totalorder %v5757, %v5896
          %vm6024 = vcmp.eq.s32.totalorder %v5758, %v5896
          %vm6025 = vcmp.eq.s32.totalorder %v5755, %v5900
          %vm6026 = vcmp.eq.s32.totalorder %v5756, %v5900
          %vm6027 = vcmp.eq.s32.totalorder %v5757, %v5900
          %vm6028 = vcmp.eq.s32.totalorder %v5758, %v5900
          %v6029 = vsel %vm5901, 1, 0
          %v6030 = vsel %vm5902, 1, 0
          %v6031 = vsel %vm5903, 1, 0
          %v6032 = vsel %vm5904, 1, 0
          %v6033 = vsel %vm5905, 1, 0
          %v6034 = vsel %vm5906, 1, 0
          %v6035 = vsel %vm5907, 1, 0
          %v6036 = vsel %vm5908, 1, 0
          %v6037 = vsel %vm5909, 1, 0
          %v6038 = vsel %vm5910, 1, 0
          %v6039 = vsel %vm5911, 1, 0
          %v6040 = vsel %vm5912, 1, 0
          %v6041 = vsel %vm5913, 1, 0
          %v6042 = vsel %vm5914, 1, 0
          %v6043 = vsel %vm5915, 1, 0
          %v6044 = vsel %vm5916, 1, 0
          %v6045 = vsel %vm5917, 1, 0
          %v6046 = vsel %vm5918, 1, 0
          %v6047 = vsel %vm5919, 1, 0
          %v6048 = vsel %vm5920, 1, 0
          %v6049 = vsel %vm5921, 1, 0
          %v6050 = vsel %vm5922, 1, 0
          %v6051 = vsel %vm5923, 1, 0
          %v6052 = vsel %vm5924, 1, 0
          %v6053 = vsel %vm5925, 1, 0
          %v6054 = vsel %vm5926, 1, 0
          %v6055 = vsel %vm5927, 1, 0
          %v6056 = vsel %vm5928, 1, 0
          %v6057 = vsel %vm5929, 1, 0
          %v6058 = vsel %vm5930, 1, 0
          %v6059 = vsel %vm5931, 1, 0
          %v6060 = vsel %vm5932, 1, 0
          %v6061 = vsel %vm5933, 1, 0
          %v6062 = vsel %vm5934, 1, 0
          %v6063 = vsel %vm5935, 1, 0
          %v6064 = vsel %vm5936, 1, 0
          %v6065 = vsel %vm5937, 1, 0
          %v6066 = vsel %vm5938, 1, 0
          %v6067 = vsel %vm5939, 1, 0
          %v6068 = vsel %vm5940, 1, 0
          %v6069 = vsel %vm5941, 1, 0
          %v6070 = vsel %vm5942, 1, 0
          %v6071 = vsel %vm5943, 1, 0
          %v6072 = vsel %vm5944, 1, 0
          %v6073 = vsel %vm5945, 1, 0
          %v6074 = vsel %vm5946, 1, 0
          %v6075 = vsel %vm5947, 1, 0
          %v6076 = vsel %vm5948, 1, 0
          %v6077 = vsel %vm5949, 1, 0
          %v6078 = vsel %vm5950, 1, 0
          %v6079 = vsel %vm5951, 1, 0
          %v6080 = vsel %vm5952, 1, 0
          %v6081 = vsel %vm5953, 1, 0
          %v6082 = vsel %vm5954, 1, 0
          %v6083 = vsel %vm5955, 1, 0
          %v6084 = vsel %vm5956, 1, 0
          %v6085 = vsel %vm5957, 1, 0
          %v6086 = vsel %vm5958, 1, 0
          %v6087 = vsel %vm5959, 1, 0
          %v6088 = vsel %vm5960, 1, 0
          %v6089 = vsel %vm5961, 1, 0
          %v6090 = vsel %vm5962, 1, 0
          %v6091 = vsel %vm5963, 1, 0
          %v6092 = vsel %vm5964, 1, 0
          %v6093 = vsel %vm5965, 1, 0
          %v6094 = vsel %vm5966, 1, 0
          %v6095 = vsel %vm5967, 1, 0
          %v6096 = vsel %vm5968, 1, 0
          %v6097 = vsel %vm5969, 1, 0
          %v6098 = vsel %vm5970, 1, 0
          %v6099 = vsel %vm5971, 1, 0
          %v6100 = vsel %vm5972, 1, 0
          %v6101 = vsel %vm5973, 1, 0
          %v6102 = vsel %vm5974, 1, 0
          %v6103 = vsel %vm5975, 1, 0
          %v6104 = vsel %vm5976, 1, 0
          %v6105 = vsel %vm5977, 1, 0
          %v6106 = vsel %vm5978, 1, 0
          %v6107 = vsel %vm5979, 1, 0
          %v6108 = vsel %vm5980, 1, 0
          %v6109 = vsel %vm5981, 1, 0
          %v6110 = vsel %vm5982, 1, 0
          %v6111 = vsel %vm5983, 1, 0
          %v6112 = vsel %vm5984, 1, 0
          %v6113 = vsel %vm5985, 1, 0
          %v6114 = vsel %vm5986, 1, 0
          %v6115 = vsel %vm5987, 1, 0
          %v6116 = vsel %vm5988, 1, 0
          %v6117 = vsel %vm5989, 1, 0
          %v6118 = vsel %vm5990, 1, 0
          %v6119 = vsel %vm5991, 1, 0
          %v6120 = vsel %vm5992, 1, 0
          %v6121 = vsel %vm5993, 1, 0
          %v6122 = vsel %vm5994, 1, 0
          %v6123 = vsel %vm5995, 1, 0
          %v6124 = vsel %vm5996, 1, 0
          %v6125 = vsel %vm5997, 1, 0
          %v6126 = vsel %vm5998, 1, 0
          %v6127 = vsel %vm5999, 1, 0
          %v6128 = vsel %vm6000, 1, 0
          %v6129 = vsel %vm6001, 1, 0
          %v6130 = vsel %vm6002, 1, 0
          %v6131 = vsel %vm6003, 1, 0
          %v6132 = vsel %vm6004, 1, 0
          %v6133 = vsel %vm6005, 1, 0
          %v6134 = vsel %vm6006, 1, 0
          %v6135 = vsel %vm6007, 1, 0
          %v6136 = vsel %vm6008, 1, 0
          %v6137 = vsel %vm6009, 1, 0
          %v6138 = vsel %vm6010, 1, 0
          %v6139 = vsel %vm6011, 1, 0
          %v6140 = vsel %vm6012, 1, 0
          %v6141 = vsel %vm6013, 1, 0
          %v6142 = vsel %vm6014, 1, 0
          %v6143 = vsel %vm6015, 1, 0
          %v6144 = vsel %vm6016, 1, 0
          %v6145 = vsel %vm6017, 1, 0
          %v6146 = vsel %vm6018, 1, 0
          %v6147 = vsel %vm6019, 1, 0
          %v6148 = vsel %vm6020, 1, 0
          %v6149 = vsel %vm6021, 1, 0
          %v6150 = vsel %vm6022, 1, 0
          %v6151 = vsel %vm6023, 1, 0
          %v6152 = vsel %vm6024, 1, 0
          %v6153 = vsel %vm6025, 1, 0
          %v6154 = vsel %vm6026, 1, 0
          %v6155 = vsel %vm6027, 1, 0
          %v6156 = vsel %vm6028, 1, 0
          %v6157 = vcvt.s32.f32 %v6029
          %v6158 = vcvt.s32.f32 %v6030
          %v6159 = vcvt.s32.f32 %v6031
          %v6160 = vcvt.s32.f32 %v6032
          %v6161 = vcvt.s32.f32 %v6033
          %v6162 = vcvt.s32.f32 %v6034
          %v6163 = vcvt.s32.f32 %v6035
          %v6164 = vcvt.s32.f32 %v6036
          %v6165 = vcvt.s32.f32 %v6037
          %v6166 = vcvt.s32.f32 %v6038
          %v6167 = vcvt.s32.f32 %v6039
          %v6168 = vcvt.s32.f32 %v6040
          %v6169 = vcvt.s32.f32 %v6041
          %v6170 = vcvt.s32.f32 %v6042
          %v6171 = vcvt.s32.f32 %v6043
          %v6172 = vcvt.s32.f32 %v6044
          %v6173 = vcvt.s32.f32 %v6045
          %v6174 = vcvt.s32.f32 %v6046
          %v6175 = vcvt.s32.f32 %v6047
          %v6176 = vcvt.s32.f32 %v6048
          %v6177 = vcvt.s32.f32 %v6049
          %v6178 = vcvt.s32.f32 %v6050
          %v6179 = vcvt.s32.f32 %v6051
          %v6180 = vcvt.s32.f32 %v6052
          %v6181 = vcvt.s32.f32 %v6053
          %v6182 = vcvt.s32.f32 %v6054
          %v6183 = vcvt.s32.f32 %v6055
          %v6184 = vcvt.s32.f32 %v6056
          %v6185 = vcvt.s32.f32 %v6057
          %v6186 = vcvt.s32.f32 %v6058
          %v6187 = vcvt.s32.f32 %v6059
          %v6188 = vcvt.s32.f32 %v6060
          %v6189 = vcvt.s32.f32 %v6061
          %v6190 = vcvt.s32.f32 %v6062
          %v6191 = vcvt.s32.f32 %v6063
          %v6192 = vcvt.s32.f32 %v6064
          %v6193 = vcvt.s32.f32 %v6065
          %v6194 = vcvt.s32.f32 %v6066
          %v6195 = vcvt.s32.f32 %v6067
          %v6196 = vcvt.s32.f32 %v6068
          %v6197 = vcvt.s32.f32 %v6069
          %v6198 = vcvt.s32.f32 %v6070
          %v6199 = vcvt.s32.f32 %v6071
          %v6200 = vcvt.s32.f32 %v6072
          %v6201 = vcvt.s32.f32 %v6073
          %v6202 = vcvt.s32.f32 %v6074
          %v6203 = vcvt.s32.f32 %v6075
          %v6204 = vcvt.s32.f32 %v6076
          %v6205 = vcvt.s32.f32 %v6077
          %v6206 = vcvt.s32.f32 %v6078
          %v6207 = vcvt.s32.f32 %v6079
          %v6208 = vcvt.s32.f32 %v6080
          %v6209 = vcvt.s32.f32 %v6081
          %v6210 = vcvt.s32.f32 %v6082
          %v6211 = vcvt.s32.f32 %v6083
          %v6212 = vcvt.s32.f32 %v6084
          %v6213 = vcvt.s32.f32 %v6085
          %v6214 = vcvt.s32.f32 %v6086
          %v6215 = vcvt.s32.f32 %v6087
          %v6216 = vcvt.s32.f32 %v6088
          %v6217 = vcvt.s32.f32 %v6089
          %v6218 = vcvt.s32.f32 %v6090
          %v6219 = vcvt.s32.f32 %v6091
          %v6220 = vcvt.s32.f32 %v6092
          %v6221 = vcvt.s32.f32 %v6093
          %v6222 = vcvt.s32.f32 %v6094
          %v6223 = vcvt.s32.f32 %v6095
          %v6224 = vcvt.s32.f32 %v6096
          %v6225 = vcvt.s32.f32 %v6097
          %v6226 = vcvt.s32.f32 %v6098
          %v6227 = vcvt.s32.f32 %v6099
          %v6228 = vcvt.s32.f32 %v6100
          %v6229 = vcvt.s32.f32 %v6101
          %v6230 = vcvt.s32.f32 %v6102
          %v6231 = vcvt.s32.f32 %v6103
          %v6232 = vcvt.s32.f32 %v6104
          %v6233 = vcvt.s32.f32 %v6105
          %v6234 = vcvt.s32.f32 %v6106
          %v6235 = vcvt.s32.f32 %v6107
          %v6236 = vcvt.s32.f32 %v6108
          %v6237 = vcvt.s32.f32 %v6109
          %v6238 = vcvt.s32.f32 %v6110
          %v6239 = vcvt.s32.f32 %v6111
          %v6240 = vcvt.s32.f32 %v6112
          %v6241 = vcvt.s32.f32 %v6113
          %v6242 = vcvt.s32.f32 %v6114
          %v6243 = vcvt.s32.f32 %v6115
          %v6244 = vcvt.s32.f32 %v6116
          %v6245 = vcvt.s32.f32 %v6117
          %v6246 = vcvt.s32.f32 %v6118
          %v6247 = vcvt.s32.f32 %v6119
          %v6248 = vcvt.s32.f32 %v6120
          %v6249 = vcvt.s32.f32 %v6121
          %v6250 = vcvt.s32.f32 %v6122
          %v6251 = vcvt.s32.f32 %v6123
          %v6252 = vcvt.s32.f32 %v6124
          %v6253 = vcvt.s32.f32 %v6125
          %v6254 = vcvt.s32.f32 %v6126
          %v6255 = vcvt.s32.f32 %v6127
          %v6256 = vcvt.s32.f32 %v6128
          %v6257 = vcvt.s32.f32 %v6129
          %v6258 = vcvt.s32.f32 %v6130
          %v6259 = vcvt.s32.f32 %v6131
          %v6260 = vcvt.s32.f32 %v6132
          %v6261 = vcvt.s32.f32 %v6133
          %v6262 = vcvt.s32.f32 %v6134
          %v6263 = vcvt.s32.f32 %v6135
          %v6264 = vcvt.s32.f32 %v6136
          %v6265 = vcvt.s32.f32 %v6137
          %v6266 = vcvt.s32.f32 %v6138
          %v6267 = vcvt.s32.f32 %v6139
          %v6268 = vcvt.s32.f32 %v6140
          %v6269 = vcvt.s32.f32 %v6141
          %v6270 = vcvt.s32.f32 %v6142
          %v6271 = vcvt.s32.f32 %v6143
          %v6272 = vcvt.s32.f32 %v6144
          %v6273 = vcvt.s32.f32 %v6145
          %v6274 = vcvt.s32.f32 %v6146
          %v6275 = vcvt.s32.f32 %v6147
          %v6276 = vcvt.s32.f32 %v6148
          %v6277 = vcvt.s32.f32 %v6149
          %v6278 = vcvt.s32.f32 %v6150
          %v6279 = vcvt.s32.f32 %v6151
          %v6280 = vcvt.s32.f32 %v6152
          %v6281 = vcvt.s32.f32 %v6153
          %v6282 = vcvt.s32.f32 %v6154
          %v6283 = vcvt.s32.f32 %v6155
          %v6284 = vcvt.s32.f32 %v6156
          %v6285 = vpack.c.bf16 %v6161, %v6157
          %v6286 = vpack.c.bf16 %v6162, %v6158
          %v6287 = vpack.c.bf16 %v6163, %v6159
          %v6288 = vpack.c.bf16 %v6164, %v6160
          %v6289 = vpack.c.bf16 %v6169, %v6165
          %v6290 = vpack.c.bf16 %v6170, %v6166
          %v6291 = vpack.c.bf16 %v6171, %v6167
          %v6292 = vpack.c.bf16 %v6172, %v6168
          %v6293 = vpack.c.bf16 %v6177, %v6173
          %v6294 = vpack.c.bf16 %v6178, %v6174
          %v6295 = vpack.c.bf16 %v6179, %v6175
          %v6296 = vpack.c.bf16 %v6180, %v6176
          %v6297 = vpack.c.bf16 %v6185, %v6181
          %v6298 = vpack.c.bf16 %v6186, %v6182
          %v6299 = vpack.c.bf16 %v6187, %v6183
          %v6300 = vpack.c.bf16 %v6188, %v6184
          %v6301 = vpack.c.bf16 %v6193, %v6189
          %v6302 = vpack.c.bf16 %v6194, %v6190
          %v6303 = vpack.c.bf16 %v6195, %v6191
          %v6304 = vpack.c.bf16 %v6196, %v6192
          %v6305 = vpack.c.bf16 %v6201, %v6197
          %v6306 = vpack.c.bf16 %v6202, %v6198
          %v6307 = vpack.c.bf16 %v6203, %v6199
          %v6308 = vpack.c.bf16 %v6204, %v6200
          %v6309 = vpack.c.bf16 %v6209, %v6205
          %v6310 = vpack.c.bf16 %v6210, %v6206
          %v6311 = vpack.c.bf16 %v6211, %v6207
          %v6312 = vpack.c.bf16 %v6212, %v6208
          %v6313 = vpack.c.bf16 %v6217, %v6213
          %v6314 = vpack.c.bf16 %v6218, %v6214
          %v6315 = vpack.c.bf16 %v6219, %v6215
          %v6316 = vpack.c.bf16 %v6220, %v6216
          %v6317 = vpack.c.bf16 %v6225, %v6221
          %v6318 = vpack.c.bf16 %v6226, %v6222
          %v6319 = vpack.c.bf16 %v6227, %v6223
          %v6320 = vpack.c.bf16 %v6228, %v6224
          %v6321 = vpack.c.bf16 %v6233, %v6229
          %v6322 = vpack.c.bf16 %v6234, %v6230
          %v6323 = vpack.c.bf16 %v6235, %v6231
          %v6324 = vpack.c.bf16 %v6236, %v6232
          %v6325 = vpack.c.bf16 %v6241, %v6237
          %v6326 = vpack.c.bf16 %v6242, %v6238
          %v6327 = vpack.c.bf16 %v6243, %v6239
          %v6328 = vpack.c.bf16 %v6244, %v6240
          %v6329 = vpack.c.bf16 %v6249, %v6245
          %v6330 = vpack.c.bf16 %v6250, %v6246
          %v6331 = vpack.c.bf16 %v6251, %v6247
          %v6332 = vpack.c.bf16 %v6252, %v6248
          %v6333 = vpack.c.bf16 %v6257, %v6253
          %v6334 = vpack.c.bf16 %v6258, %v6254
          %v6335 = vpack.c.bf16 %v6259, %v6255
          %v6336 = vpack.c.bf16 %v6260, %v6256
          %v6337 = vpack.c.bf16 %v6265, %v6261
          %v6338 = vpack.c.bf16 %v6266, %v6262
          %v6339 = vpack.c.bf16 %v6267, %v6263
          %v6340 = vpack.c.bf16 %v6268, %v6264
          %v6341 = vpack.c.bf16 %v6273, %v6269
          %v6342 = vpack.c.bf16 %v6274, %v6270
          %v6343 = vpack.c.bf16 %v6275, %v6271
          %v6344 = vpack.c.bf16 %v6276, %v6272
          %v6345 = vpack.c.bf16 %v6281, %v6277
          %v6346 = vpack.c.bf16 %v6282, %v6278
          %v6347 = vpack.c.bf16 %v6283, %v6279
          %v6348 = vpack.c.bf16 %v6284, %v6280
          %6349 = vxpose.xlu0.c.b16.start [1/8] %v6285, 128
          %6350 = vxpose.xlu0.c.b16.cont [2/8] %v6289, 128
          %6351 = vxpose.xlu0.c.b16.cont [3/8] %v6293, 128
          %6352 = vxpose.xlu0.c.b16.cont [4/8] %v6297, 128
          %6353 = vxpose.xlu0.c.b16.cont [5/8] %v6301, 128
          %6354 = vxpose.xlu0.c.b16.cont [6/8] %v6305, 128
          %6355 = vxpose.xlu0.c.b16.cont [7/8] %v6309, 128
          %6356 = vxpose.xlu0.c.b16.end [8/8] %v6313, 128
          %v6357 = vpop.trf.xlu0
          %v6358 = vpop.trf.xlu0
          %v6359 = vpop.trf.xlu0
          %v6360 = vpop.trf.xlu0
          %v6361 = vpop.trf.xlu0
          %v6362 = vpop.trf.xlu0
          %v6363 = vpop.trf.xlu0
          %v6364 = vpop.trf.xlu0
          %6365 = vxpose.xlu0.c.b16.start [1/8] %v6286, 128
          %6366 = vxpose.xlu0.c.b16.cont [2/8] %v6290, 128
          %6367 = vxpose.xlu0.c.b16.cont [3/8] %v6294, 128
          %6368 = vxpose.xlu0.c.b16.cont [4/8] %v6298, 128
          %6369 = vxpose.xlu0.c.b16.cont [5/8] %v6302, 128
          %6370 = vxpose.xlu0.c.b16.cont [6/8] %v6306, 128
          %6371 = vxpose.xlu0.c.b16.cont [7/8] %v6310, 128
          %6372 = vxpose.xlu0.c.b16.end [8/8] %v6314, 128
          %v6373 = vpop.trf.xlu0
          %v6374 = vpop.trf.xlu0
          %v6375 = vpop.trf.xlu0
          %v6376 = vpop.trf.xlu0
          %v6377 = vpop.trf.xlu0
          %v6378 = vpop.trf.xlu0
          %v6379 = vpop.trf.xlu0
          %v6380 = vpop.trf.xlu0
          %6381 = vxpose.xlu0.c.b16.start [1/8] %v6287, 128
          %6382 = vxpose.xlu0.c.b16.cont [2/8] %v6291, 128
          %6383 = vxpose.xlu0.c.b16.cont [3/8] %v6295, 128
          %6384 = vxpose.xlu0.c.b16.cont [4/8] %v6299, 128
          %6385 = vxpose.xlu0.c.b16.cont [5/8] %v6303, 128
          %6386 = vxpose.xlu0.c.b16.cont [6/8] %v6307, 128
          %6387 = vxpose.xlu0.c.b16.cont [7/8] %v6311, 128
          %6388 = vxpose.xlu0.c.b16.end [8/8] %v6315, 128
          %v6389 = vpop.trf.xlu0
          %v6390 = vpop.trf.xlu0
          %v6391 = vpop.trf.xlu0
          %v6392 = vpop.trf.xlu0
          %v6393 = vpop.trf.xlu0
          %v6394 = vpop.trf.xlu0
          %v6395 = vpop.trf.xlu0
          %v6396 = vpop.trf.xlu0
          %6397 = vxpose.xlu0.c.b16.start [1/8] %v6288, 128
          %6398 = vxpose.xlu0.c.b16.cont [2/8] %v6292, 128
          %6399 = vxpose.xlu0.c.b16.cont [3/8] %v6296, 128
          %6400 = vxpose.xlu0.c.b16.cont [4/8] %v6300, 128
          %6401 = vxpose.xlu0.c.b16.cont [5/8] %v6304, 128
          %6402 = vxpose.xlu0.c.b16.cont [6/8] %v6308, 128
          %6403 = vxpose.xlu0.c.b16.cont [7/8] %v6312, 128
          %6404 = vxpose.xlu0.c.b16.end [8/8] %v6316, 128
          %v6405 = vpop.trf.xlu0
          %v6406 = vpop.trf.xlu0
          %v6407 = vpop.trf.xlu0
          %v6408 = vpop.trf.xlu0
          %v6409 = vpop.trf.xlu0
          %v6410 = vpop.trf.xlu0
          %v6411 = vpop.trf.xlu0
          %v6412 = vpop.trf.xlu0
          %6413 = vxpose.xlu0.c.b16.start [1/8] %v6317, 128
          %6414 = vxpose.xlu0.c.b16.cont [2/8] %v6321, 128
          %6415 = vxpose.xlu0.c.b16.cont [3/8] %v6325, 128
          %6416 = vxpose.xlu0.c.b16.cont [4/8] %v6329, 128
          %6417 = vxpose.xlu0.c.b16.cont [5/8] %v6333, 128
          %6418 = vxpose.xlu0.c.b16.cont [6/8] %v6337, 128
          %6419 = vxpose.xlu0.c.b16.cont [7/8] %v6341, 128
          %6420 = vxpose.xlu0.c.b16.end [8/8] %v6345, 128
          %v6421 = vpop.trf.xlu0
          %v6422 = vpop.trf.xlu0
          %v6423 = vpop.trf.xlu0
          %v6424 = vpop.trf.xlu0
          %v6425 = vpop.trf.xlu0
          %v6426 = vpop.trf.xlu0
          %v6427 = vpop.trf.xlu0
          %v6428 = vpop.trf.xlu0
          %6429 = vxpose.xlu0.c.b16.start [1/8] %v6318, 128
          %6430 = vxpose.xlu0.c.b16.cont [2/8] %v6322, 128
          %6431 = vxpose.xlu0.c.b16.cont [3/8] %v6326, 128
          %6432 = vxpose.xlu0.c.b16.cont [4/8] %v6330, 128
          %6433 = vxpose.xlu0.c.b16.cont [5/8] %v6334, 128
          %6434 = vxpose.xlu0.c.b16.cont [6/8] %v6338, 128
          %6435 = vxpose.xlu0.c.b16.cont [7/8] %v6342, 128
          %6436 = vxpose.xlu0.c.b16.end [8/8] %v6346, 128
          %v6437 = vpop.trf.xlu0
          %v6438 = vpop.trf.xlu0
          %v6439 = vpop.trf.xlu0
          %v6440 = vpop.trf.xlu0
          %v6441 = vpop.trf.xlu0
          %v6442 = vpop.trf.xlu0
          %v6443 = vpop.trf.xlu0
          %v6444 = vpop.trf.xlu0
          %6445 = vxpose.xlu0.c.b16.start [1/8] %v6319, 128
          %6446 = vxpose.xlu0.c.b16.cont [2/8] %v6323, 128
          %6447 = vxpose.xlu0.c.b16.cont [3/8] %v6327, 128
          %6448 = vxpose.xlu0.c.b16.cont [4/8] %v6331, 128
          %6449 = vxpose.xlu0.c.b16.cont [5/8] %v6335, 128
          %6450 = vxpose.xlu0.c.b16.cont [6/8] %v6339, 128
          %6451 = vxpose.xlu0.c.b16.cont [7/8] %v6343, 128
          %6452 = vxpose.xlu0.c.b16.end [8/8] %v6347, 128
          %v6453 = vpop.trf.xlu0
          %v6454 = vpop.trf.xlu0
          %v6455 = vpop.trf.xlu0
          %v6456 = vpop.trf.xlu0
          %v6457 = vpop.trf.xlu0
          %v6458 = vpop.trf.xlu0
          %v6459 = vpop.trf.xlu0
          %v6460 = vpop.trf.xlu0
          %6461 = vxpose.xlu0.c.b16.start [1/8] %v6320, 128
          %6462 = vxpose.xlu0.c.b16.cont [2/8] %v6324, 128
          %6463 = vxpose.xlu0.c.b16.cont [3/8] %v6328, 128
          %6464 = vxpose.xlu0.c.b16.cont [4/8] %v6332, 128
          %6465 = vxpose.xlu0.c.b16.cont [5/8] %v6336, 128
          %6466 = vxpose.xlu0.c.b16.cont [6/8] %v6340, 128
          %6467 = vxpose.xlu0.c.b16.cont [7/8] %v6344, 128
          %6468 = vxpose.xlu0.c.b16.end [8/8] %v6348, 128
          %v6469 = vpop.trf.xlu0
          %v6470 = vpop.trf.xlu0
          %v6471 = vpop.trf.xlu0
          %v6472 = vpop.trf.xlu0
          %v6473 = vpop.trf.xlu0
          %v6474 = vpop.trf.xlu0
          %v6475 = vpop.trf.xlu0
          %v6476 = vpop.trf.xlu0
          %6477 = vmatprep.subr.bf16.mxu0 0
          %6478 = vmatpush1.bf16.msra.mxu0 %v5726
          %6479 = vmatprep.subr.bf16.mxu0 0
          %6480 = vmatpush1.bf16.msra.mxu0 %v5727
          %6481 = vmatprep.subr.bf16.mxu0 0
          %6482 = vmatpush1.bf16.msra.mxu0 %v5728
          %6483 = vmatprep.subr.bf16.mxu0 0
          %6484 = vmatpush1.bf16.msra.mxu0 %v5729
          %6485 = vmatprep.subr.bf16.mxu0 0
          %6486 = vmatpush1.bf16.msra.mxu0 %v5730
          %6487 = vmatprep.subr.bf16.mxu0 0
          %6488 = vmatpush1.bf16.msra.mxu0 %v5731
          %6489 = vmatprep.subr.bf16.mxu0 0
          %6490 = vmatpush1.bf16.msra.mxu0 %v5732
          %6491 = vmatprep.subr.bf16.mxu0 0
          %6492 = vmatpush1.bf16.msra.mxu0 %v5733
          %6493 = vmatprep.subr.bf16.mxu0 0
          %6494 = vmatpush1.bf16.msra.mxu0 %v5734
          %6495 = vmatprep.subr.bf16.mxu0 0
          %6496 = vmatpush1.bf16.msra.mxu0 %v5735
          %6497 = vmatprep.subr.bf16.mxu0 0
          %6498 = vmatpush1.bf16.msra.mxu0 %v5736
          %6499 = vmatprep.subr.bf16.mxu0 0
          %6500 = vmatpush1.bf16.msra.mxu0 %v5737
          %6501 = vmatprep.subr.bf16.mxu0 0
          %6502 = vmatpush1.bf16.msra.mxu0 %v5738
          %6503 = vmatprep.subr.bf16.mxu0 0
          %6504 = vmatpush1.bf16.msra.mxu0 %v5739
          %6505 = vmatprep.subr.bf16.mxu0 0
          %6506 = vmatpush1.bf16.msra.mxu0 %v5740
          %6507 = vmatprep.subr.bf16.mxu0 0
          %6508 = vmatpush1.bf16.msra.mxu0 %v5741
          %6509 = vmatprep.mubr.bf16.mxu0 %v6421
          %6510 = vmatmul.mubr.bf16.gmra.mrb[0].mxu0 %v6357
          %v6511 = vpop.f32.mrb[0].mxu0
          %v6512 = vadd.f32 0.0, %v6511
          %v6513 = vpop.f32.mrb[0].mxu0
          %v6514 = vpop.f32.mrb[0].mxu0
          %v6515 = vadd.f32 0.0, %v6514
          %v6516 = vpop.f32.mrb[0].mxu0
          %6517 = vmatprep.mubr.bf16.mxu0 %v6422
          %6518 = vmatmul.mubr.bf16.gmra.mrb[0].mxu0 %v6358
          %v6519 = vpop.f32.mrb[0].mxu0
          %v6520 = vadd.f32 0.0, %v6519
          %v6521 = vpop.f32.mrb[0].mxu0
          %v6522 = vpop.f32.mrb[0].mxu0
          %v6523 = vadd.f32 0.0, %v6522
          %v6524 = vpop.f32.mrb[0].mxu0
          %6525 = vmatprep.mubr.bf16.mxu0 %v6423
          %6526 = vmatmul.mubr.bf16.gmra.mrb[0].mxu0 %v6359
          %v6527 = vpop.f32.mrb[0].mxu0
          %v6528 = vadd.f32 0.0, %v6527
          %v6529 = vpop.f32.mrb[0].mxu0
          %v6530 = vpop.f32.mrb[0].mxu0
          %v6531 = vadd.f32 0.0, %v6530
          %v6532 = vpop.f32.mrb[0].mxu0
          %6533 = vmatprep.mubr.bf16.mxu0 %v6424
          %6534 = vmatmul.mubr.bf16.gmra.mrb[0].mxu0 %v6360
          %v6535 = vpop.f32.mrb[0].mxu0
          %v6536 = vadd.f32 0.0, %v6535
          %v6537 = vpop.f32.mrb[0].mxu0
          %v6538 = vpop.f32.mrb[0].mxu0
          %v6539 = vadd.f32 0.0, %v6538
          %v6540 = vpop.f32.mrb[0].mxu0
          %6541 = vmatprep.mubr.bf16.mxu0 %v6425
          %6542 = vmatmul.mubr.bf16.gmra.mrb[0].mxu0 %v6361
          %v6543 = vpop.f32.mrb[0].mxu0
          %v6544 = vadd.f32 0.0, %v6543
          %v6545 = vpop.f32.mrb[0].mxu0
          %v6546 = vpop.f32.mrb[0].mxu0
          %v6547 = vadd.f32 0.0, %v6546
          %v6548 = vpop.f32.mrb[0].mxu0
          %6549 = vmatprep.mubr.bf16.mxu0 %v6426
          %6550 = vmatmul.mubr.bf16.gmra.mrb[0].mxu0 %v6362
          %v6551 = vpop.f32.mrb[0].mxu0
          %v6552 = vadd.f32 0.0, %v6551
          %v6553 = vpop.f32.mrb[0].mxu0
          %v6554 = vpop.f32.mrb[0].mxu0
          %v6555 = vadd.f32 0.0, %v6554
          %v6556 = vpop.f32.mrb[0].mxu0
          %6557 = vmatprep.mubr.bf16.mxu0 %v6427
          %6558 = vmatmul.mubr.bf16.gmra.mrb[0].mxu0 %v6363
          %v6559 = vpop.f32.mrb[0].mxu0
          %v6560 = vadd.f32 0.0, %v6559
          %v6561 = vpop.f32.mrb[0].mxu0
          %v6562 = vpop.f32.mrb[0].mxu0
          %v6563 = vadd.f32 0.0, %v6562
          %v6564 = vpop.f32.mrb[0].mxu0
          %6565 = vmatprep.mubr.bf16.mxu0 %v6428
          %6566 = vmatmul.mubr.bf16.gmra.mrb[0].mxu0 %v6364
          %v6567 = vpop.f32.mrb[0].mxu0
          %v6568 = vadd.f32 0.0, %v6567
          %v6569 = vpop.f32.mrb[0].mxu0
          %v6570 = vpop.f32.mrb[0].mxu0
          %v6571 = vadd.f32 0.0, %v6570
          %v6572 = vpop.f32.mrb[0].mxu0
          %6573 = vmatprep.mubr.bf16.mxu0 %v6437
          %6574 = vmatmul.mubr.bf16.gmra.mrb[0].mxu0 %v6373
          %v6575 = vpop.f32.mrb[0].mxu0
          %v6576 = vadd.f32 0.0, %v6575
          %v6577 = vpop.f32.mrb[0].mxu0
          %v6578 = vpop.f32.mrb[0].mxu0
          %v6579 = vadd.f32 0.0, %v6578
          %v6580 = vpop.f32.mrb[0].mxu0
          %6581 = vmatprep.mubr.bf16.mxu0 %v6438
          %6582 = vmatmul.mubr.bf16.gmra.mrb[0].mxu0 %v6374
          %v6583 = vpop.f32.mrb[0].mxu0
          %v6584 = vadd.f32 0.0, %v6583
          %v6585 = vpop.f32.mrb[0].mxu0
          %v6586 = vpop.f32.mrb[0].mxu0
          %v6587 = vadd.f32 0.0, %v6586
          %v6588 = vpop.f32.mrb[0].mxu0
          %6589 = vmatprep.mubr.bf16.mxu0 %v6439
          %6590 = vmatmul.mubr.bf16.gmra.mrb[0].mxu0 %v6375
          %v6591 = vpop.f32.mrb[0].mxu0
          %v6592 = vadd.f32 0.0, %v6591
          %v6593 = vpop.f32.mrb[0].mxu0
          %v6594 = vpop.f32.mrb[0].mxu0
          %v6595 = vadd.f32 0.0, %v6594
          %v6596 = vpop.f32.mrb[0].mxu0
          %6597 = vmatprep.mubr.bf16.mxu0 %v6440
          %6598 = vmatmul.mubr.bf16.gmra.mrb[0].mxu0 %v6376
          %v6599 = vpop.f32.mrb[0].mxu0
          %v6600 = vadd.f32 0.0, %v6599
          %v6601 = vpop.f32.mrb[0].mxu0
          %v6602 = vpop.f32.mrb[0].mxu0
          %v6603 = vadd.f32 0.0, %v6602
          %v6604 = vpop.f32.mrb[0].mxu0
          %6605 = vmatprep.mubr.bf16.mxu0 %v6441
          %6606 = vmatmul.mubr.bf16.gmra.mrb[0].mxu0 %v6377
          %v6607 = vpop.f32.mrb[0].mxu0
          %v6608 = vadd.f32 0.0, %v6607
          %v6609 = vpop.f32.mrb[0].mxu0
          %v6610 = vpop.f32.mrb[0].mxu0
          %v6611 = vadd.f32 0.0, %v6610
          %v6612 = vpop.f32.mrb[0].mxu0
          %6613 = vmatprep.mubr.bf16.mxu0 %v6442
          %6614 = vmatmul.mubr.bf16.gmra.mrb[0].mxu0 %v6378
          %v6615 = vpop.f32.mrb[0].mxu0
          %v6616 = vadd.f32 0.0, %v6615
          %v6617 = vpop.f32.mrb[0].mxu0
          %v6618 = vpop.f32.mrb[0].mxu0
          %v6619 = vadd.f32 0.0, %v6618
          %v6620 = vpop.f32.mrb[0].mxu0
          %6621 = vmatprep.mubr.bf16.mxu0 %v6443
          %6622 = vmatmul.mubr.bf16.gmra.mrb[0].mxu0 %v6379
          %v6623 = vpop.f32.mrb[0].mxu0
          %v6624 = vadd.f32 0.0, %v6623
          %v6625 = vpop.f32.mrb[0].mxu0
          %v6626 = vpop.f32.mrb[0].mxu0
          %v6627 = vadd.f32 0.0, %v6626
          %v6628 = vpop.f32.mrb[0].mxu0
          %6629 = vmatprep.mubr.bf16.mxu0 %v6444
          %6630 = vmatmul.mubr.bf16.gmra.mrb[0].mxu0 %v6380
          %v6631 = vpop.f32.mrb[0].mxu0
          %v6632 = vadd.f32 0.0, %v6631
          %v6633 = vpop.f32.mrb[0].mxu0
          %v6634 = vpop.f32.mrb[0].mxu0
          %v6635 = vadd.f32 0.0, %v6634
          %v6636 = vpop.f32.mrb[0].mxu0
          %6637 = vmatprep.mubr.bf16.mxu0 %v6453
          %6638 = vmatmul.mubr.bf16.gmra.mrb[0].mxu0 %v6389
          %v6639 = vpop.f32.mrb[0].mxu0
          %v6640 = vadd.f32 0.0, %v6639
          %v6641 = vpop.f32.mrb[0].mxu0
          %v6642 = vpop.f32.mrb[0].mxu0
          %v6643 = vadd.f32 0.0, %v6642
          %v6644 = vpop.f32.mrb[0].mxu0
          %6645 = vmatprep.mubr.bf16.mxu0 %v6454
          %6646 = vmatmul.mubr.bf16.gmra.mrb[0].mxu0 %v6390
          %v6647 = vpop.f32.mrb[0].mxu0
          %v6648 = vadd.f32 0.0, %v6647
          %v6649 = vpop.f32.mrb[0].mxu0
          %v6650 = vpop.f32.mrb[0].mxu0
          %v6651 = vadd.f32 0.0, %v6650
          %v6652 = vpop.f32.mrb[0].mxu0
          %6653 = vmatprep.mubr.bf16.mxu0 %v6455
          %6654 = vmatmul.mubr.bf16.gmra.mrb[0].mxu0 %v6391
          %v6655 = vpop.f32.mrb[0].mxu0
          %v6656 = vadd.f32 0.0, %v6655
          %v6657 = vpop.f32.mrb[0].mxu0
          %v6658 = vpop.f32.mrb[0].mxu0
          %v6659 = vadd.f32 0.0, %v6658
          %v6660 = vpop.f32.mrb[0].mxu0
          %6661 = vmatprep.mubr.bf16.mxu0 %v6456
          %6662 = vmatmul.mubr.bf16.gmra.mrb[0].mxu0 %v6392
          %v6663 = vpop.f32.mrb[0].mxu0
          %v6664 = vadd.f32 0.0, %v6663
          %v6665 = vpop.f32.mrb[0].mxu0
          %v6666 = vpop.f32.mrb[0].mxu0
          %v6667 = vadd.f32 0.0, %v6666
          %v6668 = vpop.f32.mrb[0].mxu0
          %6669 = vmatprep.mubr.bf16.mxu0 %v6457
          %6670 = vmatmul.mubr.bf16.gmra.mrb[0].mxu0 %v6393
          %v6671 = vpop.f32.mrb[0].mxu0
          %v6672 = vadd.f32 0.0, %v6671
          %v6673 = vpop.f32.mrb[0].mxu0
          %v6674 = vpop.f32.mrb[0].mxu0
          %v6675 = vadd.f32 0.0, %v6674
          %v6676 = vpop.f32.mrb[0].mxu0
          %6677 = vmatprep.mubr.bf16.mxu0 %v6458
          %6678 = vmatmul.mubr.bf16.gmra.mrb[0].mxu0 %v6394
          %v6679 = vpop.f32.mrb[0].mxu0
          %v6680 = vadd.f32 0.0, %v6679
          %v6681 = vpop.f32.mrb[0].mxu0
          %v6682 = vpop.f32.mrb[0].mxu0
          %v6683 = vadd.f32 0.0, %v6682
          %v6684 = vpop.f32.mrb[0].mxu0
          %6685 = vmatprep.mubr.bf16.mxu0 %v6459
          %6686 = vmatmul.mubr.bf16.gmra.mrb[0].mxu0 %v6395
          %v6687 = vpop.f32.mrb[0].mxu0
          %v6688 = vadd.f32 0.0, %v6687
          %v6689 = vpop.f32.mrb[0].mxu0
          %v6690 = vpop.f32.mrb[0].mxu0
          %v6691 = vadd.f32 0.0, %v6690
          %v6692 = vpop.f32.mrb[0].mxu0
          %6693 = vmatprep.mubr.bf16.mxu0 %v6460
          %6694 = vmatmul.mubr.bf16.gmra.mrb[0].mxu0 %v6396
          %v6695 = vpop.f32.mrb[0].mxu0
          %v6696 = vadd.f32 0.0, %v6695
          %v6697 = vpop.f32.mrb[0].mxu0
          %v6698 = vpop.f32.mrb[0].mxu0
          %v6699 = vadd.f32 0.0, %v6698
          %v6700 = vpop.f32.mrb[0].mxu0
          %6701 = vmatprep.mubr.bf16.mxu0 %v6469
          %6702 = vmatmul.mubr.bf16.gmra.mrb[0].mxu0 %v6405
          %v6703 = vpop.f32.mrb[0].mxu0
          %v6704 = vadd.f32 0.0, %v6703
          %v6705 = vpop.f32.mrb[0].mxu0
          %v6706 = vpop.f32.mrb[0].mxu0
          %v6707 = vadd.f32 0.0, %v6706
          %v6708 = vpop.f32.mrb[0].mxu0
          %6709 = vmatprep.mubr.bf16.mxu0 %v6470
          %6710 = vmatmul.mubr.bf16.gmra.mrb[0].mxu0 %v6406
          %v6711 = vpop.f32.mrb[0].mxu0
          %v6712 = vadd.f32 0.0, %v6711
          %v6713 = vpop.f32.mrb[0].mxu0
          %v6714 = vpop.f32.mrb[0].mxu0
          %v6715 = vadd.f32 0.0, %v6714
          %v6716 = vpop.f32.mrb[0].mxu0
          %6717 = vmatprep.mubr.bf16.mxu0 %v6471
          %6718 = vmatmul.mubr.bf16.gmra.mrb[0].mxu0 %v6407
          %v6719 = vpop.f32.mrb[0].mxu0
          %v6720 = vadd.f32 0.0, %v6719
          %v6721 = vpop.f32.mrb[0].mxu0
          %v6722 = vpop.f32.mrb[0].mxu0
          %v6723 = vadd.f32 0.0, %v6722
          %v6724 = vpop.f32.mrb[0].mxu0
          %6725 = vmatprep.mubr.bf16.mxu0 %v6472
          %6726 = vmatmul.mubr.bf16.gmra.mrb[0].mxu0 %v6408
          %v6727 = vpop.f32.mrb[0].mxu0
          %v6728 = vadd.f32 0.0, %v6727
          %v6729 = vpop.f32.mrb[0].mxu0
          %v6730 = vpop.f32.mrb[0].mxu0
          %v6731 = vadd.f32 0.0, %v6730
          %v6732 = vpop.f32.mrb[0].mxu0
          %6733 = vmatprep.mubr.bf16.mxu0 %v6473
          %6734 = vmatmul.mubr.bf16.gmra.mrb[0].mxu0 %v6409
          %v6735 = vpop.f32.mrb[0].mxu0
          %v6736 = vadd.f32 0.0, %v6735
          %v6737 = vpop.f32.mrb[0].mxu0
          %v6738 = vpop.f32.mrb[0].mxu0
          %v6739 = vadd.f32 0.0, %v6738
          %v6740 = vpop.f32.mrb[0].mxu0
          %6741 = vmatprep.mubr.bf16.mxu0 %v6474
          %6742 = vmatmul.mubr.bf16.gmra.mrb[0].mxu0 %v6410
          %v6743 = vpop.f32.mrb[0].mxu0
          %v6744 = vadd.f32 0.0, %v6743
          %v6745 = vpop.f32.mrb[0].mxu0
          %v6746 = vpop.f32.mrb[0].mxu0
          %v6747 = vadd.f32 0.0, %v6746
          %v6748 = vpop.f32.mrb[0].mxu0
          %6749 = vmatprep.mubr.bf16.mxu0 %v6475
          %6750 = vmatmul.mubr.bf16.gmra.mrb[0].mxu0 %v6411
          %v6751 = vpop.f32.mrb[0].mxu0
          %v6752 = vadd.f32 0.0, %v6751
          %v6753 = vpop.f32.mrb[0].mxu0
          %v6754 = vpop.f32.mrb[0].mxu0
          %v6755 = vadd.f32 0.0, %v6754
          %v6756 = vpop.f32.mrb[0].mxu0
          %6757 = vmatprep.mubr.bf16.mxu0 %v6476
          %6758 = vmatmul.mubr.bf16.gmra.mrb[0].mxu0 %v6412
          %v6759 = vpop.f32.mrb[0].mxu0
          %v6760 = vadd.f32 0.0, %v6759
          %v6761 = vpop.f32.mrb[0].mxu0
          %v6762 = vpop.f32.mrb[0].mxu0
          %v6763 = vadd.f32 0.0, %v6762
          %v6764 = vpop.f32.mrb[0].mxu0
          %6765 = vdwg.mxu0
          %s6766 = scalar_lea.vmem [#allocation4], %s5748
          %v6767 = vld [vmem:[%s6766] sm:$0xff]
          %v6768 = vld [vmem:[%s6766 + $0x8] sm:$0xff]
          %v6769 = vld [vmem:[%s6766 + $0x10] sm:$0xff]
          %v6770 = vld [vmem:[%s6766 + $0x18] sm:$0xff]
          %v6771 = vld [vmem:[%s6766 + $0x20] sm:$0xff]
          %v6772 = vld [vmem:[%s6766 + $0x28] sm:$0xff]
          %v6773 = vld [vmem:[%s6766 + $0x30] sm:$0xff]
          %v6774 = vld [vmem:[%s6766 + $0x38] sm:$0xff]
          %v6775 = vld [vmem:[%s6766 + $0x40] sm:$0xff]
          %v6776 = vld [vmem:[%s6766 + $0x48] sm:$0xff]
          %v6777 = vld [vmem:[%s6766 + $0x50] sm:$0xff]
          %v6778 = vld [vmem:[%s6766 + $0x58] sm:$0xff]
          %v6779 = vld [vmem:[%s6766 + $0x60] sm:$0xff]
          %v6780 = vld [vmem:[%s6766 + $0x68] sm:$0xff]
          %v6781 = vld [vmem:[%s6766 + $0x70] sm:$0xff]
          %v6782 = vld [vmem:[%s6766 + $0x78] sm:$0xff]
          %v6783 = vld [vmem:[%s6766 + $0x80] sm:$0xff]
          %v6784 = vld [vmem:[%s6766 + $0x88] sm:$0xff]
          %v6785 = vld [vmem:[%s6766 + $0x90] sm:$0xff]
          %v6786 = vld [vmem:[%s6766 + $0x98] sm:$0xff]
          %v6787 = vld [vmem:[%s6766 + $0xa0] sm:$0xff]
          %v6788 = vld [vmem:[%s6766 + $0xa8] sm:$0xff]
          %v6789 = vld [vmem:[%s6766 + $0xb0] sm:$0xff]
          %v6790 = vld [vmem:[%s6766 + $0xb8] sm:$0xff]
          %v6791 = vld [vmem:[%s6766 + $0xc0] sm:$0xff]
          %v6792 = vld [vmem:[%s6766 + $0xc8] sm:$0xff]
          %v6793 = vld [vmem:[%s6766 + $0xd0] sm:$0xff]
          %v6794 = vld [vmem:[%s6766 + $0xd8] sm:$0xff]
          %v6795 = vld [vmem:[%s6766 + $0xe0] sm:$0xff]
          %v6796 = vld [vmem:[%s6766 + $0xe8] sm:$0xff]
          %v6797 = vld [vmem:[%s6766 + $0xf0] sm:$0xff]
          %v6798 = vld [vmem:[%s6766 + $0xf8] sm:$0xff]
          %v6799 = vld [vmem:[%s6766 + $0x100] sm:$0xff]
          %v6800 = vld [vmem:[%s6766 + $0x108] sm:$0xff]
          %v6801 = vld [vmem:[%s6766 + $0x110] sm:$0xff]
          %v6802 = vld [vmem:[%s6766 + $0x118] sm:$0xff]
          %v6803 = vld [vmem:[%s6766 + $0x120] sm:$0xff]
          %v6804 = vld [vmem:[%s6766 + $0x128] sm:$0xff]
          %v6805 = vld [vmem:[%s6766 + $0x130] sm:$0xff]
          %v6806 = vld [vmem:[%s6766 + $0x138] sm:$0xff]
          %v6807 = vld [vmem:[%s6766 + $0x140] sm:$0xff]
          %v6808 = vld [vmem:[%s6766 + $0x148] sm:$0xff]
          %v6809 = vld [vmem:[%s6766 + $0x150] sm:$0xff]
          %v6810 = vld [vmem:[%s6766 + $0x158] sm:$0xff]
          %v6811 = vld [vmem:[%s6766 + $0x160] sm:$0xff]
          %v6812 = vld [vmem:[%s6766 + $0x168] sm:$0xff]
          %v6813 = vld [vmem:[%s6766 + $0x170] sm:$0xff]
          %v6814 = vld [vmem:[%s6766 + $0x178] sm:$0xff]
          %v6815 = vld [vmem:[%s6766 + $0x180] sm:$0xff]
          %v6816 = vld [vmem:[%s6766 + $0x188] sm:$0xff]
          %v6817 = vld [vmem:[%s6766 + $0x190] sm:$0xff]
          %v6818 = vld [vmem:[%s6766 + $0x198] sm:$0xff]
          %v6819 = vld [vmem:[%s6766 + $0x1a0] sm:$0xff]
          %v6820 = vld [vmem:[%s6766 + $0x1a8] sm:$0xff]
          %v6821 = vld [vmem:[%s6766 + $0x1b0] sm:$0xff]
          %v6822 = vld [vmem:[%s6766 + $0x1b8] sm:$0xff]
          %v6823 = vld [vmem:[%s6766 + $0x1c0] sm:$0xff]
          %v6824 = vld [vmem:[%s6766 + $0x1c8] sm:$0xff]
          %v6825 = vld [vmem:[%s6766 + $0x1d0] sm:$0xff]
          %v6826 = vld [vmem:[%s6766 + $0x1d8] sm:$0xff]
          %v6827 = vld [vmem:[%s6766 + $0x1e0] sm:$0xff]
          %v6828 = vld [vmem:[%s6766 + $0x1e8] sm:$0xff]
          %v6829 = vld [vmem:[%s6766 + $0x1f0] sm:$0xff]
          %v6830 = vld [vmem:[%s6766 + $0x1f8] sm:$0xff]
          %v6831 = vadd.f32 %v6767, %v6512
          %v6832 = vadd.f32 %v6768, %v6515
          %v6833 = vadd.f32 %v6769, %v6520
          %v6834 = vadd.f32 %v6770, %v6523
          %v6835 = vadd.f32 %v6771, %v6528
          %v6836 = vadd.f32 %v6772, %v6531
          %v6837 = vadd.f32 %v6773, %v6536
          %v6838 = vadd.f32 %v6774, %v6539
          %v6839 = vadd.f32 %v6775, %v6544
          %v6840 = vadd.f32 %v6776, %v6547
          %v6841 = vadd.f32 %v6777, %v6552
          %v6842 = vadd.f32 %v6778, %v6555
          %v6843 = vadd.f32 %v6779, %v6560
          %v6844 = vadd.f32 %v6780, %v6563
          %v6845 = vadd.f32 %v6781, %v6568
          %v6846 = vadd.f32 %v6782, %v6571
          %v6847 = vadd.f32 %v6783, %v6576
          %v6848 = vadd.f32 %v6784, %v6579
          %v6849 = vadd.f32 %v6785, %v6584
          %v6850 = vadd.f32 %v6786, %v6587
          %v6851 = vadd.f32 %v6787, %v6592
          %v6852 = vadd.f32 %v6788, %v6595
          %v6853 = vadd.f32 %v6789, %v6600
          %v6854 = vadd.f32 %v6790, %v6603
          %v6855 = vadd.f32 %v6791, %v6608
          %v6856 = vadd.f32 %v6792, %v6611
          %v6857 = vadd.f32 %v6793, %v6616
          %v6858 = vadd.f32 %v6794, %v6619
          %v6859 = vadd.f32 %v6795, %v6624
          %v6860 = vadd.f32 %v6796, %v6627
          %v6861 = vadd.f32 %v6797, %v6632
          %v6862 = vadd.f32 %v6798, %v6635
          %v6863 = vadd.f32 %v6799, %v6640
          %v6864 = vadd.f32 %v6800, %v6643
          %v6865 = vadd.f32 %v6801, %v6648
          %v6866 = vadd.f32 %v6802, %v6651
          %v6867 = vadd.f32 %v6803, %v6656
          %v6868 = vadd.f32 %v6804, %v6659
          %v6869 = vadd.f32 %v6805, %v6664
          %v6870 = vadd.f32 %v6806, %v6667
          %v6871 = vadd.f32 %v6807, %v6672
          %v6872 = vadd.f32 %v6808, %v6675
          %v6873 = vadd.f32 %v6809, %v6680
          %v6874 = vadd.f32 %v6810, %v6683
          %v6875 = vadd.f32 %v6811, %v6688
          %v6876 = vadd.f32 %v6812, %v6691
          %v6877 = vadd.f32 %v6813, %v6696
          %v6878 = vadd.f32 %v6814, %v6699
          %v6879 = vadd.f32 %v6815, %v6704
          %v6880 = vadd.f32 %v6816, %v6707
          %v6881 = vadd.f32 %v6817, %v6712
          %v6882 = vadd.f32 %v6818, %v6715
          %v6883 = vadd.f32 %v6819, %v6720
          %v6884 = vadd.f32 %v6820, %v6723
          %v6885 = vadd.f32 %v6821, %v6728
          %v6886 = vadd.f32 %v6822, %v6731
          %v6887 = vadd.f32 %v6823, %v6736
          %v6888 = vadd.f32 %v6824, %v6739
          %v6889 = vadd.f32 %v6825, %v6744
          %v6890 = vadd.f32 %v6826, %v6747
          %v6891 = vadd.f32 %v6827, %v6752
          %v6892 = vadd.f32 %v6828, %v6755
          %v6893 = vadd.f32 %v6829, %v6760
          %v6894 = vadd.f32 %v6830, %v6763
          %6895 = vst.msk [vmem:[%s6766] sm:$0xff] %vm5194, %v6831
          %6896 = vst.msk [vmem:[%s6766 + $0x8] sm:$0xff] %vm5194, %v6832
          %6897 = vst.msk [vmem:[%s6766 + $0x10] sm:$0xff] %vm5194, %v6833
          %6898 = vst.msk [vmem:[%s6766 + $0x18] sm:$0xff] %vm5194, %v6834
          %6899 = vst.msk [vmem:[%s6766 + $0x20] sm:$0xff] %vm5194, %v6835
          %6900 = vst.msk [vmem:[%s6766 + $0x28] sm:$0xff] %vm5194, %v6836
          %6901 = vst.msk [vmem:[%s6766 + $0x30] sm:$0xff] %vm5194, %v6837
          %6902 = vst.msk [vmem:[%s6766 + $0x38] sm:$0xff] %vm5194, %v6838
          %6903 = vst.msk [vmem:[%s6766 + $0x40] sm:$0xff] %vm5194, %v6839
          %6904 = vst.msk [vmem:[%s6766 + $0x48] sm:$0xff] %vm5194, %v6840
          %6905 = vst.msk [vmem:[%s6766 + $0x50] sm:$0xff] %vm5194, %v6841
          %6906 = vst.msk [vmem:[%s6766 + $0x58] sm:$0xff] %vm5194, %v6842
          %6907 = vst.msk [vmem:[%s6766 + $0x60] sm:$0xff] %vm5194, %v6843
          %6908 = vst.msk [vmem:[%s6766 + $0x68] sm:$0xff] %vm5194, %v6844
          %6909 = vst.msk [vmem:[%s6766 + $0x70] sm:$0xff] %vm5194, %v6845
          %6910 = vst.msk [vmem:[%s6766 + $0x78] sm:$0xff] %vm5194, %v6846
          %6911 = vst.msk [vmem:[%s6766 + $0x80] sm:$0xff] %vm5194, %v6847
          %6912 = vst.msk [vmem:[%s6766 + $0x88] sm:$0xff] %vm5194, %v6848
          %6913 = vst.msk [vmem:[%s6766 + $0x90] sm:$0xff] %vm5194, %v6849
          %6914 = vst.msk [vmem:[%s6766 + $0x98] sm:$0xff] %vm5194, %v6850
          %6915 = vst.msk [vmem:[%s6766 + $0xa0] sm:$0xff] %vm5194, %v6851
          %6916 = vst.msk [vmem:[%s6766 + $0xa8] sm:$0xff] %vm5194, %v6852
          %6917 = vst.msk [vmem:[%s6766 + $0xb0] sm:$0xff] %vm5194, %v6853
          %6918 = vst.msk [vmem:[%s6766 + $0xb8] sm:$0xff] %vm5194, %v6854
          %6919 = vst.msk [vmem:[%s6766 + $0xc0] sm:$0xff] %vm5194, %v6855
          %6920 = vst.msk [vmem:[%s6766 + $0xc8] sm:$0xff] %vm5194, %v6856
          %6921 = vst.msk [vmem:[%s6766 + $0xd0] sm:$0xff] %vm5194, %v6857
          %6922 = vst.msk [vmem:[%s6766 + $0xd8] sm:$0xff] %vm5194, %v6858
          %6923 = vst.msk [vmem:[%s6766 + $0xe0] sm:$0xff] %vm5194, %v6859
          %6924 = vst.msk [vmem:[%s6766 + $0xe8] sm:$0xff] %vm5194, %v6860
          %6925 = vst.msk [vmem:[%s6766 + $0xf0] sm:$0xff] %vm5194, %v6861
          %6926 = vst.msk [vmem:[%s6766 + $0xf8] sm:$0xff] %vm5194, %v6862
          %6927 = vst.msk [vmem:[%s6766 + $0x100] sm:$0xff] %vm5194, %v6863
          %6928 = vst.msk [vmem:[%s6766 + $0x108] sm:$0xff] %vm5194, %v6864
          %6929 = vst.msk [vmem:[%s6766 + $0x110] sm:$0xff] %vm5194, %v6865
          %6930 = vst.msk [vmem:[%s6766 + $0x118] sm:$0xff] %vm5194, %v6866
          %6931 = vst.msk [vmem:[%s6766 + $0x120] sm:$0xff] %vm5194, %v6867
          %6932 = vst.msk [vmem:[%s6766 + $0x128] sm:$0xff] %vm5194, %v6868
          %6933 = vst.msk [vmem:[%s6766 + $0x130] sm:$0xff] %vm5194, %v6869
          %6934 = vst.msk [vmem:[%s6766 + $0x138] sm:$0xff] %vm5194, %v6870
          %6935 = vst.msk [vmem:[%s6766 + $0x140] sm:$0xff] %vm5194, %v6871
          %6936 = vst.msk [vmem:[%s6766 + $0x148] sm:$0xff] %vm5194, %v6872
          %6937 = vst.msk [vmem:[%s6766 + $0x150] sm:$0xff] %vm5194, %v6873
          %6938 = vst.msk [vmem:[%s6766 + $0x158] sm:$0xff] %vm5194, %v6874
          %6939 = vst.msk [vmem:[%s6766 + $0x160] sm:$0xff] %vm5194, %v6875
          %6940 = vst.msk [vmem:[%s6766 + $0x168] sm:$0xff] %vm5194, %v6876
          %6941 = vst.msk [vmem:[%s6766 + $0x170] sm:$0xff] %vm5194, %v6877
          %6942 = vst.msk [vmem:[%s6766 + $0x178] sm:$0xff] %vm5194, %v6878
          %6943 = vst.msk [vmem:[%s6766 + $0x180] sm:$0xff] %vm5194, %v6879
          %6944 = vst.msk [vmem:[%s6766 + $0x188] sm:$0xff] %vm5194, %v6880
          %6945 = vst.msk [vmem:[%s6766 + $0x190] sm:$0xff] %vm5194, %v6881
          %6946 = vst.msk [vmem:[%s6766 + $0x198] sm:$0xff] %vm5194, %v6882
          %6947 = vst.msk [vmem:[%s6766 + $0x1a0] sm:$0xff] %vm5194, %v6883
          %6948 = vst.msk [vmem:[%s6766 + $0x1a8] sm:$0xff] %vm5194, %v6884
          %6949 = vst.msk [vmem:[%s6766 + $0x1b0] sm:$0xff] %vm5194, %v6885
          %6950 = vst.msk [vmem:[%s6766 + $0x1b8] sm:$0xff] %vm5194, %v6886
          %6951 = vst.msk [vmem:[%s6766 + $0x1c0] sm:$0xff] %vm5194, %v6887
          %6952 = vst.msk [vmem:[%s6766 + $0x1c8] sm:$0xff] %vm5194, %v6888
          %6953 = vst.msk [vmem:[%s6766 + $0x1d0] sm:$0xff] %vm5194, %v6889
          %6954 = vst.msk [vmem:[%s6766 + $0x1d8] sm:$0xff] %vm5194, %v6890
          %6955 = vst.msk [vmem:[%s6766 + $0x1e0] sm:$0xff] %vm5194, %v6891
          %6956 = vst.msk [vmem:[%s6766 + $0x1e8] sm:$0xff] %vm5194, %v6892
          %6957 = vst.msk [vmem:[%s6766 + $0x1f0] sm:$0xff] %vm5194, %v6893
          %6958 = vst.msk [vmem:[%s6766 + $0x1f8] sm:$0xff] %vm5194, %v6894
        $region84: #{tpu_custom_call.1} parent=67 // loop_footer
          %s5747 = sadd.s32 1, %s5743
        $region85: #{tpu_custom_call.1} parent=67 // loop_footer_branch
          %5742 = sbr.rel target = $region81
        $region86: #{tpu_custom_call.1} parent=67 // loop_exit
          _
        %p6959 = scmp.eq.s32.totalorder %s29, 2
        // Predicated region
        $region87: #{tpu_custom_call.1} parent=67 // pred_check
          %p6960 = pneg %p6959
        $region88: #{tpu_custom_call.1} parent=67 // pred_check_branch
          %6962 = sbr.rel (%p6960) target = $region90
        $region89: #{tpu_custom_call.1} parent=67 // pred_region
          %v6963 = vld [vmem:[#allocation3] sm:$0xff]
          %v6964 = vld [vmem:[#allocation3 + $0x8] sm:$0xff]
          %v6965 = vld [vmem:[#allocation3 + $0x10] sm:$0xff]
          %v6966 = vld [vmem:[#allocation3 + $0x18] sm:$0xff]
          %v6967 = vld [vmem:[#allocation3 + $0x20] sm:$0xff]
          %v6968 = vld [vmem:[#allocation3 + $0x28] sm:$0xff]
          %v6969 = vld [vmem:[#allocation3 + $0x30] sm:$0xff]
          %v6970 = vld [vmem:[#allocation3 + $0x38] sm:$0xff]
          %v6971 = vld [vmem:[#allocation3 + $0x40] sm:$0xff]
          %v6972 = vld [vmem:[#allocation3 + $0x48] sm:$0xff]
          %v6973 = vld [vmem:[#allocation3 + $0x50] sm:$0xff]
          %v6974 = vld [vmem:[#allocation3 + $0x58] sm:$0xff]
          %v6975 = vld [vmem:[#allocation3 + $0x60] sm:$0xff]
          %v6976 = vld [vmem:[#allocation3 + $0x68] sm:$0xff]
          %v6977 = vld [vmem:[#allocation3 + $0x70] sm:$0xff]
          %v6978 = vld [vmem:[#allocation3 + $0x78] sm:$0xff]
          %v6979 = vld [vmem:[#allocation3 + $0x80] sm:$0xff]
          %v6980 = vld [vmem:[#allocation3 + $0x88] sm:$0xff]
          %v6981 = vld [vmem:[#allocation3 + $0x90] sm:$0xff]
          %v6982 = vld [vmem:[#allocation3 + $0x98] sm:$0xff]
          %v6983 = vld [vmem:[#allocation3 + $0xa0] sm:$0xff]
          %v6984 = vld [vmem:[#allocation3 + $0xa8] sm:$0xff]
          %v6985 = vld [vmem:[#allocation3 + $0xb0] sm:$0xff]
          %v6986 = vld [vmem:[#allocation3 + $0xb8] sm:$0xff]
          %v6987 = vld [vmem:[#allocation3 + $0xc0] sm:$0xff]
          %v6988 = vld [vmem:[#allocation3 + $0xc8] sm:$0xff]
          %v6989 = vld [vmem:[#allocation3 + $0xd0] sm:$0xff]
          %v6990 = vld [vmem:[#allocation3 + $0xd8] sm:$0xff]
          %v6991 = vld [vmem:[#allocation3 + $0xe0] sm:$0xff]
          %v6992 = vld [vmem:[#allocation3 + $0xe8] sm:$0xff]
          %v6993 = vld [vmem:[#allocation3 + $0xf0] sm:$0xff]
          %v6994 = vld [vmem:[#allocation3 + $0xf8] sm:$0xff]
          %v6995 = vld [vmem:[#allocation3 + $0x100] sm:$0xff]
          %v6996 = vld [vmem:[#allocation3 + $0x108] sm:$0xff]
          %v6997 = vld [vmem:[#allocation3 + $0x110] sm:$0xff]
          %v6998 = vld [vmem:[#allocation3 + $0x118] sm:$0xff]
          %v6999 = vld [vmem:[#allocation3 + $0x120] sm:$0xff]
          %v7000 = vld [vmem:[#allocation3 + $0x128] sm:$0xff]
          %v7001 = vld [vmem:[#allocation3 + $0x130] sm:$0xff]
          %v7002 = vld [vmem:[#allocation3 + $0x138] sm:$0xff]
          %v7003 = vld [vmem:[#allocation3 + $0x140] sm:$0xff]
          %v7004 = vld [vmem:[#allocation3 + $0x148] sm:$0xff]
          %v7005 = vld [vmem:[#allocation3 + $0x150] sm:$0xff]
          %v7006 = vld [vmem:[#allocation3 + $0x158] sm:$0xff]
          %v7007 = vld [vmem:[#allocation3 + $0x160] sm:$0xff]
          %v7008 = vld [vmem:[#allocation3 + $0x168] sm:$0xff]
          %v7009 = vld [vmem:[#allocation3 + $0x170] sm:$0xff]
          %v7010 = vld [vmem:[#allocation3 + $0x178] sm:$0xff]
          %v7011 = vld [vmem:[#allocation3 + $0x180] sm:$0xff]
          %v7012 = vld [vmem:[#allocation3 + $0x188] sm:$0xff]
          %v7013 = vld [vmem:[#allocation3 + $0x190] sm:$0xff]
          %v7014 = vld [vmem:[#allocation3 + $0x198] sm:$0xff]
          %v7015 = vld [vmem:[#allocation3 + $0x1a0] sm:$0xff]
          %v7016 = vld [vmem:[#allocation3 + $0x1a8] sm:$0xff]
          %v7017 = vld [vmem:[#allocation3 + $0x1b0] sm:$0xff]
          %v7018 = vld [vmem:[#allocation3 + $0x1b8] sm:$0xff]
          %v7019 = vld [vmem:[#allocation3 + $0x1c0] sm:$0xff]
          %v7020 = vld [vmem:[#allocation3 + $0x1c8] sm:$0xff]
          %v7021 = vld [vmem:[#allocation3 + $0x1d0] sm:$0xff]
          %v7022 = vld [vmem:[#allocation3 + $0x1d8] sm:$0xff]
          %v7023 = vld [vmem:[#allocation3 + $0x1e0] sm:$0xff]
          %v7024 = vld [vmem:[#allocation3 + $0x1e8] sm:$0xff]
          %v7025 = vld [vmem:[#allocation3 + $0x1f0] sm:$0xff]
          %v7026 = vld [vmem:[#allocation3 + $0x1f8] sm:$0xff]
          %v7027 = vunpack.c.l.bf16 %v6963
          %v7028 = vunpack.c.h.bf16 %v6963
          %v7029 = vunpack.c.l.bf16 %v6964
          %v7030 = vunpack.c.h.bf16 %v6964
          %v7031 = vunpack.c.l.bf16 %v6965
          %v7032 = vunpack.c.h.bf16 %v6965
          %v7033 = vunpack.c.l.bf16 %v6966
          %v7034 = vunpack.c.h.bf16 %v6966
          %v7035 = vunpack.c.l.bf16 %v6967
          %v7036 = vunpack.c.h.bf16 %v6967
          %v7037 = vunpack.c.l.bf16 %v6968
          %v7038 = vunpack.c.h.bf16 %v6968
          %v7039 = vunpack.c.l.bf16 %v6969
          %v7040 = vunpack.c.h.bf16 %v6969
          %v7041 = vunpack.c.l.bf16 %v6970
          %v7042 = vunpack.c.h.bf16 %v6970
          %v7043 = vunpack.c.l.bf16 %v6971
          %v7044 = vunpack.c.h.bf16 %v6971
          %v7045 = vunpack.c.l.bf16 %v6972
          %v7046 = vunpack.c.h.bf16 %v6972
          %v7047 = vunpack.c.l.bf16 %v6973
          %v7048 = vunpack.c.h.bf16 %v6973
          %v7049 = vunpack.c.l.bf16 %v6974
          %v7050 = vunpack.c.h.bf16 %v6974
          %v7051 = vunpack.c.l.bf16 %v6975
          %v7052 = vunpack.c.h.bf16 %v6975
          %v7053 = vunpack.c.l.bf16 %v6976
          %v7054 = vunpack.c.h.bf16 %v6976
          %v7055 = vunpack.c.l.bf16 %v6977
          %v7056 = vunpack.c.h.bf16 %v6977
          %v7057 = vunpack.c.l.bf16 %v6978
          %v7058 = vunpack.c.h.bf16 %v6978
          %v7059 = vunpack.c.l.bf16 %v6979
          %v7060 = vunpack.c.h.bf16 %v6979
          %v7061 = vunpack.c.l.bf16 %v6980
          %v7062 = vunpack.c.h.bf16 %v6980
          %v7063 = vunpack.c.l.bf16 %v6981
          %v7064 = vunpack.c.h.bf16 %v6981
          %v7065 = vunpack.c.l.bf16 %v6982
          %v7066 = vunpack.c.h.bf16 %v6982
          %v7067 = vunpack.c.l.bf16 %v6983
          %v7068 = vunpack.c.h.bf16 %v6983
          %v7069 = vunpack.c.l.bf16 %v6984
          %v7070 = vunpack.c.h.bf16 %v6984
          %v7071 = vunpack.c.l.bf16 %v6985
          %v7072 = vunpack.c.h.bf16 %v6985
          %v7073 = vunpack.c.l.bf16 %v6986
          %v7074 = vunpack.c.h.bf16 %v6986
          %v7075 = vunpack.c.l.bf16 %v6987
          %v7076 = vunpack.c.h.bf16 %v6987
          %v7077 = vunpack.c.l.bf16 %v6988
          %v7078 = vunpack.c.h.bf16 %v6988
          %v7079 = vunpack.c.l.bf16 %v6989
          %v7080 = vunpack.c.h.bf16 %v6989
          %v7081 = vunpack.c.l.bf16 %v6990
          %v7082 = vunpack.c.h.bf16 %v6990
          %v7083 = vunpack.c.l.bf16 %v6991
          %v7084 = vunpack.c.h.bf16 %v6991
          %v7085 = vunpack.c.l.bf16 %v6992
          %v7086 = vunpack.c.h.bf16 %v6992
          %v7087 = vunpack.c.l.bf16 %v6993
          %v7088 = vunpack.c.h.bf16 %v6993
          %v7089 = vunpack.c.l.bf16 %v6994
          %v7090 = vunpack.c.h.bf16 %v6994
          %v7091 = vunpack.c.l.bf16 %v6995
          %v7092 = vunpack.c.h.bf16 %v6995
          %v7093 = vunpack.c.l.bf16 %v6996
          %v7094 = vunpack.c.h.bf16 %v6996
          %v7095 = vunpack.c.l.bf16 %v6997
          %v7096 = vunpack.c.h.bf16 %v6997
          %v7097 = vunpack.c.l.bf16 %v6998
          %v7098 = vunpack.c.h.bf16 %v6998
          %v7099 = vunpack.c.l.bf16 %v6999
          %v7100 = vunpack.c.h.bf16 %v6999
          %v7101 = vunpack.c.l.bf16 %v7000
          %v7102 = vunpack.c.h.bf16 %v7000
          %v7103 = vunpack.c.l.bf16 %v7001
          %v7104 = vunpack.c.h.bf16 %v7001
          %v7105 = vunpack.c.l.bf16 %v7002
          %v7106 = vunpack.c.h.bf16 %v7002
          %v7107 = vunpack.c.l.bf16 %v7003
          %v7108 = vunpack.c.h.bf16 %v7003
          %v7109 = vunpack.c.l.bf16 %v7004
          %v7110 = vunpack.c.h.bf16 %v7004
          %v7111 = vunpack.c.l.bf16 %v7005
          %v7112 = vunpack.c.h.bf16 %v7005
          %v7113 = vunpack.c.l.bf16 %v7006
          %v7114 = vunpack.c.h.bf16 %v7006
          %v7115 = vunpack.c.l.bf16 %v7007
          %v7116 = vunpack.c.h.bf16 %v7007
          %v7117 = vunpack.c.l.bf16 %v7008
          %v7118 = vunpack.c.h.bf16 %v7008
          %v7119 = vunpack.c.l.bf16 %v7009
          %v7120 = vunpack.c.h.bf16 %v7009
          %v7121 = vunpack.c.l.bf16 %v7010
          %v7122 = vunpack.c.h.bf16 %v7010
          %v7123 = vunpack.c.l.bf16 %v7011
          %v7124 = vunpack.c.h.bf16 %v7011
          %v7125 = vunpack.c.l.bf16 %v7012
          %v7126 = vunpack.c.h.bf16 %v7012
          %v7127 = vunpack.c.l.bf16 %v7013
          %v7128 = vunpack.c.h.bf16 %v7013
          %v7129 = vunpack.c.l.bf16 %v7014
          %v7130 = vunpack.c.h.bf16 %v7014
          %v7131 = vunpack.c.l.bf16 %v7015
          %v7132 = vunpack.c.h.bf16 %v7015
          %v7133 = vunpack.c.l.bf16 %v7016
          %v7134 = vunpack.c.h.bf16 %v7016
          %v7135 = vunpack.c.l.bf16 %v7017
          %v7136 = vunpack.c.h.bf16 %v7017
          %v7137 = vunpack.c.l.bf16 %v7018
          %v7138 = vunpack.c.h.bf16 %v7018
          %v7139 = vunpack.c.l.bf16 %v7019
          %v7140 = vunpack.c.h.bf16 %v7019
          %v7141 = vunpack.c.l.bf16 %v7020
          %v7142 = vunpack.c.h.bf16 %v7020
          %v7143 = vunpack.c.l.bf16 %v7021
          %v7144 = vunpack.c.h.bf16 %v7021
          %v7145 = vunpack.c.l.bf16 %v7022
          %v7146 = vunpack.c.h.bf16 %v7022
          %v7147 = vunpack.c.l.bf16 %v7023
          %v7148 = vunpack.c.h.bf16 %v7023
          %v7149 = vunpack.c.l.bf16 %v7024
          %v7150 = vunpack.c.h.bf16 %v7024
          %v7151 = vunpack.c.l.bf16 %v7025
          %v7152 = vunpack.c.h.bf16 %v7025
          %v7153 = vunpack.c.l.bf16 %v7026
          %v7154 = vunpack.c.h.bf16 %v7026
          %v7155 = vld [vmem:[#allocation4] sm:$0xff]
          %v7156 = vld [vmem:[#allocation4 + $0x8] sm:$0xff]
          %v7157 = vld [vmem:[#allocation4 + $0x10] sm:$0xff]
          %v7158 = vld [vmem:[#allocation4 + $0x18] sm:$0xff]
          %v7159 = vld [vmem:[#allocation4 + $0x20] sm:$0xff]
          %v7160 = vld [vmem:[#allocation4 + $0x28] sm:$0xff]
          %v7161 = vld [vmem:[#allocation4 + $0x30] sm:$0xff]
          %v7162 = vld [vmem:[#allocation4 + $0x38] sm:$0xff]
          %v7163 = vld [vmem:[#allocation4 + $0x40] sm:$0xff]
          %v7164 = vld [vmem:[#allocation4 + $0x48] sm:$0xff]
          %v7165 = vld [vmem:[#allocation4 + $0x50] sm:$0xff]
          %v7166 = vld [vmem:[#allocation4 + $0x58] sm:$0xff]
          %v7167 = vld [vmem:[#allocation4 + $0x60] sm:$0xff]
          %v7168 = vld [vmem:[#allocation4 + $0x68] sm:$0xff]
          %v7169 = vld [vmem:[#allocation4 + $0x70] sm:$0xff]
          %v7170 = vld [vmem:[#allocation4 + $0x78] sm:$0xff]
          %v7171 = vld [vmem:[#allocation4 + $0x80] sm:$0xff]
          %v7172 = vld [vmem:[#allocation4 + $0x88] sm:$0xff]
          %v7173 = vld [vmem:[#allocation4 + $0x90] sm:$0xff]
          %v7174 = vld [vmem:[#allocation4 + $0x98] sm:$0xff]
          %v7175 = vld [vmem:[#allocation4 + $0xa0] sm:$0xff]
          %v7176 = vld [vmem:[#allocation4 + $0xa8] sm:$0xff]
          %v7177 = vld [vmem:[#allocation4 + $0xb0] sm:$0xff]
          %v7178 = vld [vmem:[#allocation4 + $0xb8] sm:$0xff]
          %v7179 = vld [vmem:[#allocation4 + $0xc0] sm:$0xff]
          %v7180 = vld [vmem:[#allocation4 + $0xc8] sm:$0xff]
          %v7181 = vld [vmem:[#allocation4 + $0xd0] sm:$0xff]
          %v7182 = vld [vmem:[#allocation4 + $0xd8] sm:$0xff]
          %v7183 = vld [vmem:[#allocation4 + $0xe0] sm:$0xff]
          %v7184 = vld [vmem:[#allocation4 + $0xe8] sm:$0xff]
          %v7185 = vld [vmem:[#allocation4 + $0xf0] sm:$0xff]
          %v7186 = vld [vmem:[#allocation4 + $0xf8] sm:$0xff]
          %v7187 = vld [vmem:[#allocation4 + $0x100] sm:$0xff]
          %v7188 = vld [vmem:[#allocation4 + $0x108] sm:$0xff]
          %v7189 = vld [vmem:[#allocation4 + $0x110] sm:$0xff]
          %v7190 = vld [vmem:[#allocation4 + $0x118] sm:$0xff]
          %v7191 = vld [vmem:[#allocation4 + $0x120] sm:$0xff]
          %v7192 = vld [vmem:[#allocation4 + $0x128] sm:$0xff]
          %v7193 = vld [vmem:[#allocation4 + $0x130] sm:$0xff]
          %v7194 = vld [vmem:[#allocation4 + $0x138] sm:$0xff]
          %v7195 = vld [vmem:[#allocation4 + $0x140] sm:$0xff]
          %v7196 = vld [vmem:[#allocation4 + $0x148] sm:$0xff]
          %v7197 = vld [vmem:[#allocation4 + $0x150] sm:$0xff]
          %v7198 = vld [vmem:[#allocation4 + $0x158] sm:$0xff]
          %v7199 = vld [vmem:[#allocation4 + $0x160] sm:$0xff]
          %v7200 = vld [vmem:[#allocation4 + $0x168] sm:$0xff]
          %v7201 = vld [vmem:[#allocation4 + $0x170] sm:$0xff]
          %v7202 = vld [vmem:[#allocation4 + $0x178] sm:$0xff]
          %v7203 = vld [vmem:[#allocation4 + $0x180] sm:$0xff]
          %v7204 = vld [vmem:[#allocation4 + $0x188] sm:$0xff]
          %v7205 = vld [vmem:[#allocation4 + $0x190] sm:$0xff]
          %v7206 = vld [vmem:[#allocation4 + $0x198] sm:$0xff]
          %v7207 = vld [vmem:[#allocation4 + $0x1a0] sm:$0xff]
          %v7208 = vld [vmem:[#allocation4 + $0x1a8] sm:$0xff]
          %v7209 = vld [vmem:[#allocation4 + $0x1b0] sm:$0xff]
          %v7210 = vld [vmem:[#allocation4 + $0x1b8] sm:$0xff]
          %v7211 = vld [vmem:[#allocation4 + $0x1c0] sm:$0xff]
          %v7212 = vld [vmem:[#allocation4 + $0x1c8] sm:$0xff]
          %v7213 = vld [vmem:[#allocation4 + $0x1d0] sm:$0xff]
          %v7214 = vld [vmem:[#allocation4 + $0x1d8] sm:$0xff]
          %v7215 = vld [vmem:[#allocation4 + $0x1e0] sm:$0xff]
          %v7216 = vld [vmem:[#allocation4 + $0x1e8] sm:$0xff]
          %v7217 = vld [vmem:[#allocation4 + $0x1f0] sm:$0xff]
          %v7218 = vld [vmem:[#allocation4 + $0x1f8] sm:$0xff]
          %v7219 = vld [vmem:[#allocation4 + $0x200] sm:$0xff]
          %v7220 = vld [vmem:[#allocation4 + $0x208] sm:$0xff]
          %v7221 = vld [vmem:[#allocation4 + $0x210] sm:$0xff]
          %v7222 = vld [vmem:[#allocation4 + $0x218] sm:$0xff]
          %v7223 = vld [vmem:[#allocation4 + $0x220] sm:$0xff]
          %v7224 = vld [vmem:[#allocation4 + $0x228] sm:$0xff]
          %v7225 = vld [vmem:[#allocation4 + $0x230] sm:$0xff]
          %v7226 = vld [vmem:[#allocation4 + $0x238] sm:$0xff]
          %v7227 = vld [vmem:[#allocation4 + $0x240] sm:$0xff]
          %v7228 = vld [vmem:[#allocation4 + $0x248] sm:$0xff]
          %v7229 = vld [vmem:[#allocation4 + $0x250] sm:$0xff]
          %v7230 = vld [vmem:[#allocation4 + $0x258] sm:$0xff]
          %v7231 = vld [vmem:[#allocation4 + $0x260] sm:$0xff]
          %v7232 = vld [vmem:[#allocation4 + $0x268] sm:$0xff]
          %v7233 = vld [vmem:[#allocation4 + $0x270] sm:$0xff]
          %v7234 = vld [vmem:[#allocation4 + $0x278] sm:$0xff]
          %v7235 = vld [vmem:[#allocation4 + $0x280] sm:$0xff]
          %v7236 = vld [vmem:[#allocation4 + $0x288] sm:$0xff]
          %v7237 = vld [vmem:[#allocation4 + $0x290] sm:$0xff]
          %v7238 = vld [vmem:[#allocation4 + $0x298] sm:$0xff]
          %v7239 = vld [vmem:[#allocation4 + $0x2a0] sm:$0xff]
          %v7240 = vld [vmem:[#allocation4 + $0x2a8] sm:$0xff]
          %v7241 = vld [vmem:[#allocation4 + $0x2b0] sm:$0xff]
          %v7242 = vld [vmem:[#allocation4 + $0x2b8] sm:$0xff]
          %v7243 = vld [vmem:[#allocation4 + $0x2c0] sm:$0xff]
          %v7244 = vld [vmem:[#allocation4 + $0x2c8] sm:$0xff]
          %v7245 = vld [vmem:[#allocation4 + $0x2d0] sm:$0xff]
          %v7246 = vld [vmem:[#allocation4 + $0x2d8] sm:$0xff]
          %v7247 = vld [vmem:[#allocation4 + $0x2e0] sm:$0xff]
          %v7248 = vld [vmem:[#allocation4 + $0x2e8] sm:$0xff]
          %v7249 = vld [vmem:[#allocation4 + $0x2f0] sm:$0xff]
          %v7250 = vld [vmem:[#allocation4 + $0x2f8] sm:$0xff]
          %v7251 = vld [vmem:[#allocation4 + $0x300] sm:$0xff]
          %v7252 = vld [vmem:[#allocation4 + $0x308] sm:$0xff]
          %v7253 = vld [vmem:[#allocation4 + $0x310] sm:$0xff]
          %v7254 = vld [vmem:[#allocation4 + $0x318] sm:$0xff]
          %v7255 = vld [vmem:[#allocation4 + $0x320] sm:$0xff]
          %v7256 = vld [vmem:[#allocation4 + $0x328] sm:$0xff]
          %v7257 = vld [vmem:[#allocation4 + $0x330] sm:$0xff]
          %v7258 = vld [vmem:[#allocation4 + $0x338] sm:$0xff]
          %v7259 = vld [vmem:[#allocation4 + $0x340] sm:$0xff]
          %v7260 = vld [vmem:[#allocation4 + $0x348] sm:$0xff]
          %v7261 = vld [vmem:[#allocation4 + $0x350] sm:$0xff]
          %v7262 = vld [vmem:[#allocation4 + $0x358] sm:$0xff]
          %v7263 = vld [vmem:[#allocation4 + $0x360] sm:$0xff]
          %v7264 = vld [vmem:[#allocation4 + $0x368] sm:$0xff]
          %v7265 = vld [vmem:[#allocation4 + $0x370] sm:$0xff]
          %v7266 = vld [vmem:[#allocation4 + $0x378] sm:$0xff]
          %v7267 = vld [vmem:[#allocation4 + $0x380] sm:$0xff]
          %v7268 = vld [vmem:[#allocation4 + $0x388] sm:$0xff]
          %v7269 = vld [vmem:[#allocation4 + $0x390] sm:$0xff]
          %v7270 = vld [vmem:[#allocation4 + $0x398] sm:$0xff]
          %v7271 = vld [vmem:[#allocation4 + $0x3a0] sm:$0xff]
          %v7272 = vld [vmem:[#allocation4 + $0x3a8] sm:$0xff]
          %v7273 = vld [vmem:[#allocation4 + $0x3b0] sm:$0xff]
          %v7274 = vld [vmem:[#allocation4 + $0x3b8] sm:$0xff]
          %v7275 = vld [vmem:[#allocation4 + $0x3c0] sm:$0xff]
          %v7276 = vld [vmem:[#allocation4 + $0x3c8] sm:$0xff]
          %v7277 = vld [vmem:[#allocation4 + $0x3d0] sm:$0xff]
          %v7278 = vld [vmem:[#allocation4 + $0x3d8] sm:$0xff]
          %v7279 = vld [vmem:[#allocation4 + $0x3e0] sm:$0xff]
          %v7280 = vld [vmem:[#allocation4 + $0x3e8] sm:$0xff]
          %v7281 = vld [vmem:[#allocation4 + $0x3f0] sm:$0xff]
          %v7282 = vld [vmem:[#allocation4 + $0x3f8] sm:$0xff]
          %v7283 = vld [vmem:[%s6] sm:$0xff]
          %v7284 = vld [vmem:[%s6 + $0x8] sm:$0xff]
          %v7285 = vld [vmem:[%s6 + $0x10] sm:$0xff]
          %v7286 = vld [vmem:[%s6 + $0x18] sm:$0xff]
          %v7288 = vsel %vm5194, %v7155, 0
          %v7291 = vsel %vm5194, %v7156, 0
          %v7294 = vsel %vm5194, %v7157, 0
          %v7297 = vsel %vm5194, %v7158, 0
          %v7300 = vsel %vm5194, %v7159, 0
          %v7303 = vsel %vm5194, %v7160, 0
          %v7306 = vsel %vm5194, %v7161, 0
          %v7309 = vsel %vm5194, %v7162, 0
          %v7312 = vsel %vm5194, %v7163, 0
          %v7315 = vsel %vm5194, %v7164, 0
          %v7318 = vsel %vm5194, %v7165, 0
          %v7321 = vsel %vm5194, %v7166, 0
          %v7324 = vsel %vm5194, %v7167, 0
          %v7327 = vsel %vm5194, %v7168, 0
          %v7330 = vsel %vm5194, %v7169, 0
          %v7333 = vsel %vm5194, %v7170, 0
          %v7336 = vsel %vm5194, %v7171, 0
          %v7339 = vsel %vm5194, %v7172, 0
          %v7342 = vsel %vm5194, %v7173, 0
          %v7345 = vsel %vm5194, %v7174, 0
          %v7348 = vsel %vm5194, %v7175, 0
          %v7351 = vsel %vm5194, %v7176, 0
          %v7354 = vsel %vm5194, %v7177, 0
          %v7357 = vsel %vm5194, %v7178, 0
          %v7360 = vsel %vm5194, %v7179, 0
          %v7363 = vsel %vm5194, %v7180, 0
          %v7366 = vsel %vm5194, %v7181, 0
          %v7369 = vsel %vm5194, %v7182, 0
          %v7372 = vsel %vm5194, %v7183, 0
          %v7375 = vsel %vm5194, %v7184, 0
          %v7378 = vsel %vm5194, %v7185, 0
          %v7381 = vsel %vm5194, %v7186, 0
          %v7384 = vsel %vm5194, %v7187, 0
          %v7387 = vsel %vm5194, %v7188, 0
          %v7390 = vsel %vm5194, %v7189, 0
          %v7393 = vsel %vm5194, %v7190, 0
          %v7396 = vsel %vm5194, %v7191, 0
          %v7399 = vsel %vm5194, %v7192, 0
          %v7402 = vsel %vm5194, %v7193, 0
          %v7405 = vsel %vm5194, %v7194, 0
          %v7408 = vsel %vm5194, %v7195, 0
          %v7411 = vsel %vm5194, %v7196, 0
          %v7414 = vsel %vm5194, %v7197, 0
          %v7417 = vsel %vm5194, %v7198, 0
          %v7420 = vsel %vm5194, %v7199, 0
          %v7423 = vsel %vm5194, %v7200, 0
          %v7426 = vsel %vm5194, %v7201, 0
          %v7429 = vsel %vm5194, %v7202, 0
          %v7432 = vsel %vm5194, %v7203, 0
          %v7435 = vsel %vm5194, %v7204, 0
          %v7438 = vsel %vm5194, %v7205, 0
          %v7441 = vsel %vm5194, %v7206, 0
          %v7444 = vsel %vm5194, %v7207, 0
          %v7447 = vsel %vm5194, %v7208, 0
          %v7450 = vsel %vm5194, %v7209, 0
          %v7453 = vsel %vm5194, %v7210, 0
          %v7456 = vsel %vm5194, %v7211, 0
          %v7459 = vsel %vm5194, %v7212, 0
          %v7462 = vsel %vm5194, %v7213, 0
          %v7465 = vsel %vm5194, %v7214, 0
          %v7468 = vsel %vm5194, %v7215, 0
          %v7471 = vsel %vm5194, %v7216, 0
          %v7474 = vsel %vm5194, %v7217, 0
          %v7477 = vsel %vm5194, %v7218, 0
          %v7480 = vsel %vm5194, %v7219, 0
          %v7483 = vsel %vm5194, %v7220, 0
          %v7486 = vsel %vm5194, %v7221, 0
          %v7489 = vsel %vm5194, %v7222, 0
          %v7492 = vsel %vm5194, %v7223, 0
          %v7495 = vsel %vm5194, %v7224, 0
          %v7498 = vsel %vm5194, %v7225, 0
          %v7501 = vsel %vm5194, %v7226, 0
          %v7504 = vsel %vm5194, %v7227, 0
          %v7507 = vsel %vm5194, %v7228, 0
          %v7510 = vsel %vm5194, %v7229, 0
          %v7513 = vsel %vm5194, %v7230, 0
          %v7516 = vsel %vm5194, %v7231, 0
          %v7519 = vsel %vm5194, %v7232, 0
          %v7522 = vsel %vm5194, %v7233, 0
          %v7525 = vsel %vm5194, %v7234, 0
          %v7528 = vsel %vm5194, %v7235, 0
          %v7531 = vsel %vm5194, %v7236, 0
          %v7534 = vsel %vm5194, %v7237, 0
          %v7537 = vsel %vm5194, %v7238, 0
          %v7540 = vsel %vm5194, %v7239, 0
          %v7543 = vsel %vm5194, %v7240, 0
          %v7546 = vsel %vm5194, %v7241, 0
          %v7549 = vsel %vm5194, %v7242, 0
          %v7552 = vsel %vm5194, %v7243, 0
          %v7555 = vsel %vm5194, %v7244, 0
          %v7558 = vsel %vm5194, %v7245, 0
          %v7561 = vsel %vm5194, %v7246, 0
          %v7564 = vsel %vm5194, %v7247, 0
          %v7567 = vsel %vm5194, %v7248, 0
          %v7570 = vsel %vm5194, %v7249, 0
          %v7573 = vsel %vm5194, %v7250, 0
          %v7576 = vsel %vm5194, %v7251, 0
          %v7579 = vsel %vm5194, %v7252, 0
          %v7582 = vsel %vm5194, %v7253, 0
          %v7585 = vsel %vm5194, %v7254, 0
          %v7588 = vsel %vm5194, %v7255, 0
          %v7591 = vsel %vm5194, %v7256, 0
          %v7594 = vsel %vm5194, %v7257, 0
          %v7597 = vsel %vm5194, %v7258, 0
          %v7600 = vsel %vm5194, %v7259, 0
          %v7603 = vsel %vm5194, %v7260, 0
          %v7606 = vsel %vm5194, %v7261, 0
          %v7609 = vsel %vm5194, %v7262, 0
          %v7612 = vsel %vm5194, %v7263, 0
          %v7615 = vsel %vm5194, %v7264, 0
          %v7618 = vsel %vm5194, %v7265, 0
          %v7621 = vsel %vm5194, %v7266, 0
          %v7624 = vsel %vm5194, %v7267, 0
          %v7627 = vsel %vm5194, %v7268, 0
          %v7630 = vsel %vm5194, %v7269, 0
          %v7633 = vsel %vm5194, %v7270, 0
          %v7636 = vsel %vm5194, %v7271, 0
          %v7639 = vsel %vm5194, %v7272, 0
          %v7642 = vsel %vm5194, %v7273, 0
          %v7645 = vsel %vm5194, %v7274, 0
          %v7648 = vsel %vm5194, %v7275, 0
          %v7651 = vsel %vm5194, %v7276, 0
          %v7654 = vsel %vm5194, %v7277, 0
          %v7657 = vsel %vm5194, %v7278, 0
          %v7660 = vsel %vm5194, %v7279, 0
          %v7663 = vsel %vm5194, %v7280, 0
          %v7666 = vsel %vm5194, %v7281, 0
          %v7669 = vsel %vm5194, %v7282, 0
          %7671 = vmatprep.subr.mxu0 0.0
          %7672 = vmatpush1.msra.mxu0 %v7283
          %7673 = vmatprep.subr.mxu0 0.0
          %7674 = vmatpush1.msra.mxu0 %v7284
          %7675 = vmatprep.subr.mxu0 0.0
          %7676 = vmatpush1.msra.mxu0 %v7285
          %7677 = vmatprep.subr.mxu0 0.0
          %7678 = vmatpush1.msra.mxu0 %v7286
          %7679 = vmatprep.subr.mxu0 0.0
          %7680 = vmatpush1.msra.mxu0 0.0
          %7681 = vmatprep.subr.mxu0 0.0
          %7682 = vmatpush1.msra.mxu0 0.0
          %7683 = vmatprep.subr.mxu0 0.0
          %7684 = vmatpush1.msra.mxu0 0.0
          %7685 = vmatprep.subr.mxu0 0.0
          %7686 = vmatpush1.msra.mxu0 0.0
          %7687 = vmatprep.subr.mxu0 0.0
          %7688 = vmatpush1.msra.mxu0 0.0
          %7689 = vmatprep.subr.mxu0 0.0
          %7690 = vmatpush1.msra.mxu0 0.0
          %7691 = vmatprep.subr.mxu0 0.0
          %7692 = vmatpush1.msra.mxu0 0.0
          %7693 = vmatprep.subr.mxu0 0.0
          %7694 = vmatpush1.msra.mxu0 0.0
          %7695 = vmatprep.subr.mxu0 0.0
          %7696 = vmatpush1.msra.mxu0 0.0
          %7697 = vmatprep.subr.mxu0 0.0
          %7698 = vmatpush1.msra.mxu0 0.0
          %7699 = vmatprep.subr.mxu0 0.0
          %7700 = vmatpush1.msra.mxu0 0.0
          %7701 = vmatprep.subr.mxu0 0.0
          %7702 = vmatpush1.msra.mxu0 0.0
          %7703 = vmatprep.subr.mxu0 0.0
          %7704 = vmatpush1.msra.mxu0 0.0
          %7705 = vmatprep.subr.mxu0 0.0
          %7706 = vmatpush1.msra.mxu0 0.0
          %7707 = vmatprep.subr.mxu0 0.0
          %7708 = vmatpush1.msra.mxu0 0.0
          %7709 = vmatprep.subr.mxu0 0.0
          %7710 = vmatpush1.msra.mxu0 0.0
          %7711 = vmatprep.subr.mxu0 0.0
          %7712 = vmatpush1.msra.mxu0 0.0
          %7713 = vmatprep.subr.mxu0 0.0
          %7714 = vmatpush1.msra.mxu0 0.0
          %7715 = vmatprep.subr.mxu0 0.0
          %7716 = vmatpush1.msra.mxu0 0.0
          %7717 = vmatprep.subr.mxu0 0.0
          %7718 = vmatpush1.msra.mxu0 0.0
          %7719 = vmatprep.subr.mxu0 0.0
          %7720 = vmatpush1.msra.mxu0 0.0
          %7721 = vmatprep.subr.mxu0 0.0
          %7722 = vmatpush1.msra.mxu0 0.0
          %7723 = vmatprep.subr.mxu0 0.0
          %7724 = vmatpush1.msra.mxu0 0.0
          %7725 = vmatprep.subr.mxu0 0.0
          %7726 = vmatpush1.msra.mxu0 0.0
          %7727 = vmatprep.subr.mxu0 0.0
          %7728 = vmatpush1.msra.mxu0 0.0
          %7729 = vmatprep.subr.mxu0 0.0
          %7730 = vmatpush1.msra.mxu0 0.0
          %7731 = vmatprep.subr.mxu0 0.0
          %7732 = vmatpush1.msra.mxu0 0.0
          %7733 = vmatprep.subr.mxu0 0.0
          %7734 = vmatpush1.msra.mxu0 0.0
          %7735 = vmatprep.mubr.f32.mxu0 0.0
          %7736 = vmatmul.mubr.f32.gmra.mrb[0].mxu0 %v7288
          %v7737 = vpop.f32.mrb[0].mxu0
          %v7738 = vadd.f32 0.0, %v7737
          %v7739 = vpop.f32.mrb[0].mxu0
          %7740 = vmatprep.mubr.f32.mxu0 0.0
          %7741 = vmatmul.mubr.f32.gmra.mrb[0].mxu0 %v7291
          %v7742 = vpop.f32.mrb[0].mxu0
          %v7743 = vadd.f32 0.0, %v7742
          %v7744 = vpop.f32.mrb[0].mxu0
          %7745 = vmatprep.mubr.f32.mxu0 0.0
          %7746 = vmatmul.mubr.f32.gmra.mrb[0].mxu0 %v7294
          %v7747 = vpop.f32.mrb[0].mxu0
          %v7748 = vadd.f32 0.0, %v7747
          %v7749 = vpop.f32.mrb[0].mxu0
          %7750 = vmatprep.mubr.f32.mxu0 0.0
          %7751 = vmatmul.mubr.f32.gmra.mrb[0].mxu0 %v7297
          %v7752 = vpop.f32.mrb[0].mxu0
          %v7753 = vadd.f32 0.0, %v7752
          %v7754 = vpop.f32.mrb[0].mxu0
          %7755 = vmatprep.mubr.f32.mxu0 0.0
          %7756 = vmatmul.mubr.f32.gmra.mrb[0].mxu0 %v7300
          %v7757 = vpop.f32.mrb[0].mxu0
          %v7758 = vadd.f32 0.0, %v7757
          %v7759 = vpop.f32.mrb[0].mxu0
          %7760 = vmatprep.mubr.f32.mxu0 0.0
          %7761 = vmatmul.mubr.f32.gmra.mrb[0].mxu0 %v7303
          %v7762 = vpop.f32.mrb[0].mxu0
          %v7763 = vadd.f32 0.0, %v7762
          %v7764 = vpop.f32.mrb[0].mxu0
          %7765 = vmatprep.mubr.f32.mxu0 0.0
          %7766 = vmatmul.mubr.f32.gmra.mrb[0].mxu0 %v7306
          %v7767 = vpop.f32.mrb[0].mxu0
          %v7768 = vadd.f32 0.0, %v7767
          %v7769 = vpop.f32.mrb[0].mxu0
          %7770 = vmatprep.mubr.f32.mxu0 0.0
          %7771 = vmatmul.mubr.f32.gmra.mrb[0].mxu0 %v7309
          %v7772 = vpop.f32.mrb[0].mxu0
          %v7773 = vadd.f32 0.0, %v7772
          %v7774 = vpop.f32.mrb[0].mxu0
          %7775 = vmatprep.mubr.f32.mxu0 0.0
          %7776 = vmatmul.mubr.f32.gmra.mrb[0].mxu0 %v7312
          %v7777 = vpop.f32.mrb[0].mxu0
          %v7778 = vadd.f32 0.0, %v7777
          %v7779 = vpop.f32.mrb[0].mxu0
          %7780 = vmatprep.mubr.f32.mxu0 0.0
          %7781 = vmatmul.mubr.f32.gmra.mrb[0].mxu0 %v7315
          %v7782 = vpop.f32.mrb[0].mxu0
          %v7783 = vadd.f32 0.0, %v7782
          %v7784 = vpop.f32.mrb[0].mxu0
          %7785 = vmatprep.mubr.f32.mxu0 0.0
          %7786 = vmatmul.mubr.f32.gmra.mrb[0].mxu0 %v7318
          %v7787 = vpop.f32.mrb[0].mxu0
          %v7788 = vadd.f32 0.0, %v7787
          %v7789 = vpop.f32.mrb[0].mxu0
          %7790 = vmatprep.mubr.f32.mxu0 0.0
          %7791 = vmatmul.mubr.f32.gmra.mrb[0].mxu0 %v7321
          %v7792 = vpop.f32.mrb[0].mxu0
          %v7793 = vadd.f32 0.0, %v7792
          %v7794 = vpop.f32.mrb[0].mxu0
          %7795 = vmatprep.mubr.f32.mxu0 0.0
          %7796 = vmatmul.mubr.f32.gmra.mrb[0].mxu0 %v7324
          %v7797 = vpop.f32.mrb[0].mxu0
          %v7798 = vadd.f32 0.0, %v7797
          %v7799 = vpop.f32.mrb[0].mxu0
          %7800 = vmatprep.mubr.f32.mxu0 0.0
          %7801 = vmatmul.mubr.f32.gmra.mrb[0].mxu0 %v7327
          %v7802 = vpop.f32.mrb[0].mxu0
          %v7803 = vadd.f32 0.0, %v7802
          %v7804 = vpop.f32.mrb[0].mxu0
          %7805 = vmatprep.mubr.f32.mxu0 0.0
          %7806 = vmatmul.mubr.f32.gmra.mrb[0].mxu0 %v7330
          %v7807 = vpop.f32.mrb[0].mxu0
          %v7808 = vadd.f32 0.0, %v7807
          %v7809 = vpop.f32.mrb[0].mxu0
          %7810 = vmatprep.mubr.f32.mxu0 0.0
          %7811 = vmatmul.mubr.f32.gmra.mrb[0].mxu0 %v7333
          %v7812 = vpop.f32.mrb[0].mxu0
          %v7813 = vadd.f32 0.0, %v7812
          %v7814 = vpop.f32.mrb[0].mxu0
          %7815 = vmatprep.mubr.f32.mxu0 0.0
          %7816 = vmatmul.mubr.f32.gmra.mrb[0].mxu0 %v7336
          %v7817 = vpop.f32.mrb[0].mxu0
          %v7818 = vadd.f32 0.0, %v7817
          %v7819 = vpop.f32.mrb[0].mxu0
          %7820 = vmatprep.mubr.f32.mxu0 0.0
          %7821 = vmatmul.mubr.f32.gmra.mrb[0].mxu0 %v7339
          %v7822 = vpop.f32.mrb[0].mxu0
          %v7823 = vadd.f32 0.0, %v7822
          %v7824 = vpop.f32.mrb[0].mxu0
          %7825 = vmatprep.mubr.f32.mxu0 0.0
          %7826 = vmatmul.mubr.f32.gmra.mrb[0].mxu0 %v7342
          %v7827 = vpop.f32.mrb[0].mxu0
          %v7828 = vadd.f32 0.0, %v7827
          %v7829 = vpop.f32.mrb[0].mxu0
          %7830 = vmatprep.mubr.f32.mxu0 0.0
          %7831 = vmatmul.mubr.f32.gmra.mrb[0].mxu0 %v7345
          %v7832 = vpop.f32.mrb[0].mxu0
          %v7833 = vadd.f32 0.0, %v7832
          %v7834 = vpop.f32.mrb[0].mxu0
          %7835 = vmatprep.mubr.f32.mxu0 0.0
          %7836 = vmatmul.mubr.f32.gmra.mrb[0].mxu0 %v7348
          %v7837 = vpop.f32.mrb[0].mxu0
          %v7838 = vadd.f32 0.0, %v7837
          %v7839 = vpop.f32.mrb[0].mxu0
          %7840 = vmatprep.mubr.f32.mxu0 0.0
          %7841 = vmatmul.mubr.f32.gmra.mrb[0].mxu0 %v7351
          %v7842 = vpop.f32.mrb[0].mxu0
          %v7843 = vadd.f32 0.0, %v7842
          %v7844 = vpop.f32.mrb[0].mxu0
          %7845 = vmatprep.mubr.f32.mxu0 0.0
          %7846 = vmatmul.mubr.f32.gmra.mrb[0].mxu0 %v7354
          %v7847 = vpop.f32.mrb[0].mxu0
          %v7848 = vadd.f32 0.0, %v7847
          %v7849 = vpop.f32.mrb[0].mxu0
          %7850 = vmatprep.mubr.f32.mxu0 0.0
          %7851 = vmatmul.mubr.f32.gmra.mrb[0].mxu0 %v7357
          %v7852 = vpop.f32.mrb[0].mxu0
          %v7853 = vadd.f32 0.0, %v7852
          %v7854 = vpop.f32.mrb[0].mxu0
          %7855 = vmatprep.mubr.f32.mxu0 0.0
          %7856 = vmatmul.mubr.f32.gmra.mrb[0].mxu0 %v7360
          %v7857 = vpop.f32.mrb[0].mxu0
          %v7858 = vadd.f32 0.0, %v7857
          %v7859 = vpop.f32.mrb[0].mxu0
          %7860 = vmatprep.mubr.f32.mxu0 0.0
          %7861 = vmatmul.mubr.f32.gmra.mrb[0].mxu0 %v7363
          %v7862 = vpop.f32.mrb[0].mxu0
          %v7863 = vadd.f32 0.0, %v7862
          %v7864 = vpop.f32.mrb[0].mxu0
          %7865 = vmatprep.mubr.f32.mxu0 0.0
          %7866 = vmatmul.mubr.f32.gmra.mrb[0].mxu0 %v7366
          %v7867 = vpop.f32.mrb[0].mxu0
          %v7868 = vadd.f32 0.0, %v7867
          %v7869 = vpop.f32.mrb[0].mxu0
          %7870 = vmatprep.mubr.f32.mxu0 0.0
          %7871 = vmatmul.mubr.f32.gmra.mrb[0].mxu0 %v7369
          %v7872 = vpop.f32.mrb[0].mxu0
          %v7873 = vadd.f32 0.0, %v7872
          %v7874 = vpop.f32.mrb[0].mxu0
          %7875 = vmatprep.mubr.f32.mxu0 0.0
          %7876 = vmatmul.mubr.f32.gmra.mrb[0].mxu0 %v7372
          %v7877 = vpop.f32.mrb[0].mxu0
          %v7878 = vadd.f32 0.0, %v7877
          %v7879 = vpop.f32.mrb[0].mxu0
          %7880 = vmatprep.mubr.f32.mxu0 0.0
          %7881 = vmatmul.mubr.f32.gmra.mrb[0].mxu0 %v7375
          %v7882 = vpop.f32.mrb[0].mxu0
          %v7883 = vadd.f32 0.0, %v7882
          %v7884 = vpop.f32.mrb[0].mxu0
          %7885 = vmatprep.mubr.f32.mxu0 0.0
          %7886 = vmatmul.mubr.f32.gmra.mrb[0].mxu0 %v7378
          %v7887 = vpop.f32.mrb[0].mxu0
          %v7888 = vadd.f32 0.0, %v7887
          %v7889 = vpop.f32.mrb[0].mxu0
          %7890 = vmatprep.mubr.f32.mxu0 0.0
          %7891 = vmatmul.mubr.f32.gmra.mrb[0].mxu0 %v7381
          %v7892 = vpop.f32.mrb[0].mxu0
          %v7893 = vadd.f32 0.0, %v7892
          %v7894 = vpop.f32.mrb[0].mxu0
          %7895 = vmatprep.mubr.f32.mxu0 0.0
          %7896 = vmatmul.mubr.f32.gmra.mrb[0].mxu0 %v7384
          %v7897 = vpop.f32.mrb[0].mxu0
          %v7898 = vadd.f32 0.0, %v7897
          %v7899 = vpop.f32.mrb[0].mxu0
          %7900 = vmatprep.mubr.f32.mxu0 0.0
          %7901 = vmatmul.mubr.f32.gmra.mrb[0].mxu0 %v7387
          %v7902 = vpop.f32.mrb[0].mxu0
          %v7903 = vadd.f32 0.0, %v7902
          %v7904 = vpop.f32.mrb[0].mxu0
          %7905 = vmatprep.mubr.f32.mxu0 0.0
          %7906 = vmatmul.mubr.f32.gmra.mrb[0].mxu0 %v7390
          %v7907 = vpop.f32.mrb[0].mxu0
          %v7908 = vadd.f32 0.0, %v7907
          %v7909 = vpop.f32.mrb[0].mxu0
          %7910 = vmatprep.mubr.f32.mxu0 0.0
          %7911 = vmatmul.mubr.f32.gmra.mrb[0].mxu0 %v7393
          %v7912 = vpop.f32.mrb[0].mxu0
          %v7913 = vadd.f32 0.0, %v7912
          %v7914 = vpop.f32.mrb[0].mxu0
          %7915 = vmatprep.mubr.f32.mxu0 0.0
          %7916 = vmatmul.mubr.f32.gmra.mrb[0].mxu0 %v7396
          %v7917 = vpop.f32.mrb[0].mxu0
          %v7918 = vadd.f32 0.0, %v7917
          %v7919 = vpop.f32.mrb[0].mxu0
          %7920 = vmatprep.mubr.f32.mxu0 0.0
          %7921 = vmatmul.mubr.f32.gmra.mrb[0].mxu0 %v7399
          %v7922 = vpop.f32.mrb[0].mxu0
          %v7923 = vadd.f32 0.0, %v7922
          %v7924 = vpop.f32.mrb[0].mxu0
          %7925 = vmatprep.mubr.f32.mxu0 0.0
          %7926 = vmatmul.mubr.f32.gmra.mrb[0].mxu0 %v7402
          %v7927 = vpop.f32.mrb[0].mxu0
          %v7928 = vadd.f32 0.0, %v7927
          %v7929 = vpop.f32.mrb[0].mxu0
          %7930 = vmatprep.mubr.f32.mxu0 0.0
          %7931 = vmatmul.mubr.f32.gmra.mrb[0].mxu0 %v7405
          %v7932 = vpop.f32.mrb[0].mxu0
          %v7933 = vadd.f32 0.0, %v7932
          %v7934 = vpop.f32.mrb[0].mxu0
          %7935 = vmatprep.mubr.f32.mxu0 0.0
          %7936 = vmatmul.mubr.f32.gmra.mrb[0].mxu0 %v7408
          %v7937 = vpop.f32.mrb[0].mxu0
          %v7938 = vadd.f32 0.0, %v7937
          %v7939 = vpop.f32.mrb[0].mxu0
          %7940 = vmatprep.mubr.f32.mxu0 0.0
          %7941 = vmatmul.mubr.f32.gmra.mrb[0].mxu0 %v7411
          %v7942 = vpop.f32.mrb[0].mxu0
          %v7943 = vadd.f32 0.0, %v7942
          %v7944 = vpop.f32.mrb[0].mxu0
          %7945 = vmatprep.mubr.f32.mxu0 0.0
          %7946 = vmatmul.mubr.f32.gmra.mrb[0].mxu0 %v7414
          %v7947 = vpop.f32.mrb[0].mxu0
          %v7948 = vadd.f32 0.0, %v7947
          %v7949 = vpop.f32.mrb[0].mxu0
          %7950 = vmatprep.mubr.f32.mxu0 0.0
          %7951 = vmatmul.mubr.f32.gmra.mrb[0].mxu0 %v7417
          %v7952 = vpop.f32.mrb[0].mxu0
          %v7953 = vadd.f32 0.0, %v7952
          %v7954 = vpop.f32.mrb[0].mxu0
          %7955 = vmatprep.mubr.f32.mxu0 0.0
          %7956 = vmatmul.mubr.f32.gmra.mrb[0].mxu0 %v7420
          %v7957 = vpop.f32.mrb[0].mxu0
          %v7958 = vadd.f32 0.0, %v7957
          %v7959 = vpop.f32.mrb[0].mxu0
          %7960 = vmatprep.mubr.f32.mxu0 0.0
          %7961 = vmatmul.mubr.f32.gmra.mrb[0].mxu0 %v7423
          %v7962 = vpop.f32.mrb[0].mxu0
          %v7963 = vadd.f32 0.0, %v7962
          %v7964 = vpop.f32.mrb[0].mxu0
          %7965 = vmatprep.mubr.f32.mxu0 0.0
          %7966 = vmatmul.mubr.f32.gmra.mrb[0].mxu0 %v7426
          %v7967 = vpop.f32.mrb[0].mxu0
          %v7968 = vadd.f32 0.0, %v7967
          %v7969 = vpop.f32.mrb[0].mxu0
          %7970 = vmatprep.mubr.f32.mxu0 0.0
          %7971 = vmatmul.mubr.f32.gmra.mrb[0].mxu0 %v7429
          %v7972 = vpop.f32.mrb[0].mxu0
          %v7973 = vadd.f32 0.0, %v7972
          %v7974 = vpop.f32.mrb[0].mxu0
          %7975 = vmatprep.mubr.f32.mxu0 0.0
          %7976 = vmatmul.mubr.f32.gmra.mrb[0].mxu0 %v7432
          %v7977 = vpop.f32.mrb[0].mxu0
          %v7978 = vadd.f32 0.0, %v7977
          %v7979 = vpop.f32.mrb[0].mxu0
          %7980 = vmatprep.mubr.f32.mxu0 0.0
          %7981 = vmatmul.mubr.f32.gmra.mrb[0].mxu0 %v7435
          %v7982 = vpop.f32.mrb[0].mxu0
          %v7983 = vadd.f32 0.0, %v7982
          %v7984 = vpop.f32.mrb[0].mxu0
          %7985 = vmatprep.mubr.f32.mxu0 0.0
          %7986 = vmatmul.mubr.f32.gmra.mrb[0].mxu0 %v7438
          %v7987 = vpop.f32.mrb[0].mxu0
          %v7988 = vadd.f32 0.0, %v7987
          %v7989 = vpop.f32.mrb[0].mxu0
          %7990 = vmatprep.mubr.f32.mxu0 0.0
          %7991 = vmatmul.mubr.f32.gmra.mrb[0].mxu0 %v7441
          %v7992 = vpop.f32.mrb[0].mxu0
          %v7993 = vadd.f32 0.0, %v7992
          %v7994 = vpop.f32.mrb[0].mxu0
          %7995 = vmatprep.mubr.f32.mxu0 0.0
          %7996 = vmatmul.mubr.f32.gmra.mrb[0].mxu0 %v7444
          %v7997 = vpop.f32.mrb[0].mxu0
          %v7998 = vadd.f32 0.0, %v7997
          %v7999 = vpop.f32.mrb[0].mxu0
          %8000 = vmatprep.mubr.f32.mxu0 0.0
          %8001 = vmatmul.mubr.f32.gmra.mrb[0].mxu0 %v7447
          %v8002 = vpop.f32.mrb[0].mxu0
          %v8003 = vadd.f32 0.0, %v8002
          %v8004 = vpop.f32.mrb[0].mxu0
          %8005 = vmatprep.mubr.f32.mxu0 0.0
          %8006 = vmatmul.mubr.f32.gmra.mrb[0].mxu0 %v7450
          %v8007 = vpop.f32.mrb[0].mxu0
          %v8008 = vadd.f32 0.0, %v8007
          %v8009 = vpop.f32.mrb[0].mxu0
          %8010 = vmatprep.mubr.f32.mxu0 0.0
          %8011 = vmatmul.mubr.f32.gmra.mrb[0].mxu0 %v7453
          %v8012 = vpop.f32.mrb[0].mxu0
          %v8013 = vadd.f32 0.0, %v8012
          %v8014 = vpop.f32.mrb[0].mxu0
          %8015 = vmatprep.mubr.f32.mxu0 0.0
          %8016 = vmatmul.mubr.f32.gmra.mrb[0].mxu0 %v7456
          %v8017 = vpop.f32.mrb[0].mxu0
          %v8018 = vadd.f32 0.0, %v8017
          %v8019 = vpop.f32.mrb[0].mxu0
          %8020 = vmatprep.mubr.f32.mxu0 0.0
          %8021 = vmatmul.mubr.f32.gmra.mrb[0].mxu0 %v7459
          %v8022 = vpop.f32.mrb[0].mxu0
          %v8023 = vadd.f32 0.0, %v8022
          %v8024 = vpop.f32.mrb[0].mxu0
          %8025 = vmatprep.mubr.f32.mxu0 0.0
          %8026 = vmatmul.mubr.f32.gmra.mrb[0].mxu0 %v7462
          %v8027 = vpop.f32.mrb[0].mxu0
          %v8028 = vadd.f32 0.0, %v8027
          %v8029 = vpop.f32.mrb[0].mxu0
          %8030 = vmatprep.mubr.f32.mxu0 0.0
          %8031 = vmatmul.mubr.f32.gmra.mrb[0].mxu0 %v7465
          %v8032 = vpop.f32.mrb[0].mxu0
          %v8033 = vadd.f32 0.0, %v8032
          %v8034 = vpop.f32.mrb[0].mxu0
          %8035 = vmatprep.mubr.f32.mxu0 0.0
          %8036 = vmatmul.mubr.f32.gmra.mrb[0].mxu0 %v7468
          %v8037 = vpop.f32.mrb[0].mxu0
          %v8038 = vadd.f32 0.0, %v8037
          %v8039 = vpop.f32.mrb[0].mxu0
          %8040 = vmatprep.mubr.f32.mxu0 0.0
          %8041 = vmatmul.mubr.f32.gmra.mrb[0].mxu0 %v7471
          %v8042 = vpop.f32.mrb[0].mxu0
          %v8043 = vadd.f32 0.0, %v8042
          %v8044 = vpop.f32.mrb[0].mxu0
          %8045 = vmatprep.mubr.f32.mxu0 0.0
          %8046 = vmatmul.mubr.f32.gmra.mrb[0].mxu0 %v7474
          %v8047 = vpop.f32.mrb[0].mxu0
          %v8048 = vadd.f32 0.0, %v8047
          %v8049 = vpop.f32.mrb[0].mxu0
          %8050 = vmatprep.mubr.f32.mxu0 0.0
          %8051 = vmatmul.mubr.f32.gmra.mrb[0].mxu0 %v7477
          %v8052 = vpop.f32.mrb[0].mxu0
          %v8053 = vadd.f32 0.0, %v8052
          %v8054 = vpop.f32.mrb[0].mxu0
          %8055 = vmatprep.mubr.f32.mxu0 0.0
          %8056 = vmatmul.mubr.f32.gmra.mrb[0].mxu0 %v7480
          %v8057 = vpop.f32.mrb[0].mxu0
          %v8058 = vadd.f32 0.0, %v8057
          %v8059 = vpop.f32.mrb[0].mxu0
          %8060 = vmatprep.mubr.f32.mxu0 0.0
          %8061 = vmatmul.mubr.f32.gmra.mrb[0].mxu0 %v7483
          %v8062 = vpop.f32.mrb[0].mxu0
          %v8063 = vadd.f32 0.0, %v8062
          %v8064 = vpop.f32.mrb[0].mxu0
          %8065 = vmatprep.mubr.f32.mxu0 0.0
          %8066 = vmatmul.mubr.f32.gmra.mrb[0].mxu0 %v7486
          %v8067 = vpop.f32.mrb[0].mxu0
          %v8068 = vadd.f32 0.0, %v8067
          %v8069 = vpop.f32.mrb[0].mxu0
          %8070 = vmatprep.mubr.f32.mxu0 0.0
          %8071 = vmatmul.mubr.f32.gmra.mrb[0].mxu0 %v7489
          %v8072 = vpop.f32.mrb[0].mxu0
          %v8073 = vadd.f32 0.0, %v8072
          %v8074 = vpop.f32.mrb[0].mxu0
          %8075 = vmatprep.mubr.f32.mxu0 0.0
          %8076 = vmatmul.mubr.f32.gmra.mrb[0].mxu0 %v7492
          %v8077 = vpop.f32.mrb[0].mxu0
          %v8078 = vadd.f32 0.0, %v8077
          %v8079 = vpop.f32.mrb[0].mxu0
          %8080 = vmatprep.mubr.f32.mxu0 0.0
          %8081 = vmatmul.mubr.f32.gmra.mrb[0].mxu0 %v7495
          %v8082 = vpop.f32.mrb[0].mxu0
          %v8083 = vadd.f32 0.0, %v8082
          %v8084 = vpop.f32.mrb[0].mxu0
          %8085 = vmatprep.mubr.f32.mxu0 0.0
          %8086 = vmatmul.mubr.f32.gmra.mrb[0].mxu0 %v7498
          %v8087 = vpop.f32.mrb[0].mxu0
          %v8088 = vadd.f32 0.0, %v8087
          %v8089 = vpop.f32.mrb[0].mxu0
          %8090 = vmatprep.mubr.f32.mxu0 0.0
          %8091 = vmatmul.mubr.f32.gmra.mrb[0].mxu0 %v7501
          %v8092 = vpop.f32.mrb[0].mxu0
          %v8093 = vadd.f32 0.0, %v8092
          %v8094 = vpop.f32.mrb[0].mxu0
          %8095 = vmatprep.mubr.f32.mxu0 0.0
          %8096 = vmatmul.mubr.f32.gmra.mrb[0].mxu0 %v7504
          %v8097 = vpop.f32.mrb[0].mxu0
          %v8098 = vadd.f32 0.0, %v8097
          %v8099 = vpop.f32.mrb[0].mxu0
          %8100 = vmatprep.mubr.f32.mxu0 0.0
          %8101 = vmatmul.mubr.f32.gmra.mrb[0].mxu0 %v7507
          %v8102 = vpop.f32.mrb[0].mxu0
          %v8103 = vadd.f32 0.0, %v8102
          %v8104 = vpop.f32.mrb[0].mxu0
          %8105 = vmatprep.mubr.f32.mxu0 0.0
          %8106 = vmatmul.mubr.f32.gmra.mrb[0].mxu0 %v7510
          %v8107 = vpop.f32.mrb[0].mxu0
          %v8108 = vadd.f32 0.0, %v8107
          %v8109 = vpop.f32.mrb[0].mxu0
          %8110 = vmatprep.mubr.f32.mxu0 0.0
          %8111 = vmatmul.mubr.f32.gmra.mrb[0].mxu0 %v7513
          %v8112 = vpop.f32.mrb[0].mxu0
          %v8113 = vadd.f32 0.0, %v8112
          %v8114 = vpop.f32.mrb[0].mxu0
          %8115 = vmatprep.mubr.f32.mxu0 0.0
          %8116 = vmatmul.mubr.f32.gmra.mrb[0].mxu0 %v7516
          %v8117 = vpop.f32.mrb[0].mxu0
          %v8118 = vadd.f32 0.0, %v8117
          %v8119 = vpop.f32.mrb[0].mxu0
          %8120 = vmatprep.mubr.f32.mxu0 0.0
          %8121 = vmatmul.mubr.f32.gmra.mrb[0].mxu0 %v7519
          %v8122 = vpop.f32.mrb[0].mxu0
          %v8123 = vadd.f32 0.0, %v8122
          %v8124 = vpop.f32.mrb[0].mxu0
          %8125 = vmatprep.mubr.f32.mxu0 0.0
          %8126 = vmatmul.mubr.f32.gmra.mrb[0].mxu0 %v7522
          %v8127 = vpop.f32.mrb[0].mxu0
          %v8128 = vadd.f32 0.0, %v8127
          %v8129 = vpop.f32.mrb[0].mxu0
          %8130 = vmatprep.mubr.f32.mxu0 0.0
          %8131 = vmatmul.mubr.f32.gmra.mrb[0].mxu0 %v7525
          %v8132 = vpop.f32.mrb[0].mxu0
          %v8133 = vadd.f32 0.0, %v8132
          %v8134 = vpop.f32.mrb[0].mxu0
          %8135 = vmatprep.mubr.f32.mxu0 0.0
          %8136 = vmatmul.mubr.f32.gmra.mrb[0].mxu0 %v7528
          %v8137 = vpop.f32.mrb[0].mxu0
          %v8138 = vadd.f32 0.0, %v8137
          %v8139 = vpop.f32.mrb[0].mxu0
          %8140 = vmatprep.mubr.f32.mxu0 0.0
          %8141 = vmatmul.mubr.f32.gmra.mrb[0].mxu0 %v7531
          %v8142 = vpop.f32.mrb[0].mxu0
          %v8143 = vadd.f32 0.0, %v8142
          %v8144 = vpop.f32.mrb[0].mxu0
          %8145 = vmatprep.mubr.f32.mxu0 0.0
          %8146 = vmatmul.mubr.f32.gmra.mrb[0].mxu0 %v7534
          %v8147 = vpop.f32.mrb[0].mxu0
          %v8148 = vadd.f32 0.0, %v8147
          %v8149 = vpop.f32.mrb[0].mxu0
          %8150 = vmatprep.mubr.f32.mxu0 0.0
          %8151 = vmatmul.mubr.f32.gmra.mrb[0].mxu0 %v7537
          %v8152 = vpop.f32.mrb[0].mxu0
          %v8153 = vadd.f32 0.0, %v8152
          %v8154 = vpop.f32.mrb[0].mxu0
          %8155 = vmatprep.mubr.f32.mxu0 0.0
          %8156 = vmatmul.mubr.f32.gmra.mrb[0].mxu0 %v7540
          %v8157 = vpop.f32.mrb[0].mxu0
          %v8158 = vadd.f32 0.0, %v8157
          %v8159 = vpop.f32.mrb[0].mxu0
          %8160 = vmatprep.mubr.f32.mxu0 0.0
          %8161 = vmatmul.mubr.f32.gmra.mrb[0].mxu0 %v7543
          %v8162 = vpop.f32.mrb[0].mxu0
          %v8163 = vadd.f32 0.0, %v8162
          %v8164 = vpop.f32.mrb[0].mxu0
          %8165 = vmatprep.mubr.f32.mxu0 0.0
          %8166 = vmatmul.mubr.f32.gmra.mrb[0].mxu0 %v7546
          %v8167 = vpop.f32.mrb[0].mxu0
          %v8168 = vadd.f32 0.0, %v8167
          %v8169 = vpop.f32.mrb[0].mxu0
          %8170 = vmatprep.mubr.f32.mxu0 0.0
          %8171 = vmatmul.mubr.f32.gmra.mrb[0].mxu0 %v7549
          %v8172 = vpop.f32.mrb[0].mxu0
          %v8173 = vadd.f32 0.0, %v8172
          %v8174 = vpop.f32.mrb[0].mxu0
          %8175 = vmatprep.mubr.f32.mxu0 0.0
          %8176 = vmatmul.mubr.f32.gmra.mrb[0].mxu0 %v7552
          %v8177 = vpop.f32.mrb[0].mxu0
          %v8178 = vadd.f32 0.0, %v8177
          %v8179 = vpop.f32.mrb[0].mxu0
          %8180 = vmatprep.mubr.f32.mxu0 0.0
          %8181 = vmatmul.mubr.f32.gmra.mrb[0].mxu0 %v7555
          %v8182 = vpop.f32.mrb[0].mxu0
          %v8183 = vadd.f32 0.0, %v8182
          %v8184 = vpop.f32.mrb[0].mxu0
          %8185 = vmatprep.mubr.f32.mxu0 0.0
          %8186 = vmatmul.mubr.f32.gmra.mrb[0].mxu0 %v7558
          %v8187 = vpop.f32.mrb[0].mxu0
          %v8188 = vadd.f32 0.0, %v8187
          %v8189 = vpop.f32.mrb[0].mxu0
          %8190 = vmatprep.mubr.f32.mxu0 0.0
          %8191 = vmatmul.mubr.f32.gmra.mrb[0].mxu0 %v7561
          %v8192 = vpop.f32.mrb[0].mxu0
          %v8193 = vadd.f32 0.0, %v8192
          %v8194 = vpop.f32.mrb[0].mxu0
          %8195 = vmatprep.mubr.f32.mxu0 0.0
          %8196 = vmatmul.mubr.f32.gmra.mrb[0].mxu0 %v7564
          %v8197 = vpop.f32.mrb[0].mxu0
          %v8198 = vadd.f32 0.0, %v8197
          %v8199 = vpop.f32.mrb[0].mxu0
          %8200 = vmatprep.mubr.f32.mxu0 0.0
          %8201 = vmatmul.mubr.f32.gmra.mrb[0].mxu0 %v7567
          %v8202 = vpop.f32.mrb[0].mxu0
          %v8203 = vadd.f32 0.0, %v8202
          %v8204 = vpop.f32.mrb[0].mxu0
          %8205 = vmatprep.mubr.f32.mxu0 0.0
          %8206 = vmatmul.mubr.f32.gmra.mrb[0].mxu0 %v7570
          %v8207 = vpop.f32.mrb[0].mxu0
          %v8208 = vadd.f32 0.0, %v8207
          %v8209 = vpop.f32.mrb[0].mxu0
          %8210 = vmatprep.mubr.f32.mxu0 0.0
          %8211 = vmatmul.mubr.f32.gmra.mrb[0].mxu0 %v7573
          %v8212 = vpop.f32.mrb[0].mxu0
          %v8213 = vadd.f32 0.0, %v8212
          %v8214 = vpop.f32.mrb[0].mxu0
          %8215 = vmatprep.mubr.f32.mxu0 0.0
          %8216 = vmatmul.mubr.f32.gmra.mrb[0].mxu0 %v7576
          %v8217 = vpop.f32.mrb[0].mxu0
          %v8218 = vadd.f32 0.0, %v8217
          %v8219 = vpop.f32.mrb[0].mxu0
          %8220 = vmatprep.mubr.f32.mxu0 0.0
          %8221 = vmatmul.mubr.f32.gmra.mrb[0].mxu0 %v7579
          %v8222 = vpop.f32.mrb[0].mxu0
          %v8223 = vadd.f32 0.0, %v8222
          %v8224 = vpop.f32.mrb[0].mxu0
          %8225 = vmatprep.mubr.f32.mxu0 0.0
          %8226 = vmatmul.mubr.f32.gmra.mrb[0].mxu0 %v7582
          %v8227 = vpop.f32.mrb[0].mxu0
          %v8228 = vadd.f32 0.0, %v8227
          %v8229 = vpop.f32.mrb[0].mxu0
          %8230 = vmatprep.mubr.f32.mxu0 0.0
          %8231 = vmatmul.mubr.f32.gmra.mrb[0].mxu0 %v7585
          %v8232 = vpop.f32.mrb[0].mxu0
          %v8233 = vadd.f32 0.0, %v8232
          %v8234 = vpop.f32.mrb[0].mxu0
          %8235 = vmatprep.mubr.f32.mxu0 0.0
          %8236 = vmatmul.mubr.f32.gmra.mrb[0].mxu0 %v7588
          %v8237 = vpop.f32.mrb[0].mxu0
          %v8238 = vadd.f32 0.0, %v8237
          %v8239 = vpop.f32.mrb[0].mxu0
          %8240 = vmatprep.mubr.f32.mxu0 0.0
          %8241 = vmatmul.mubr.f32.gmra.mrb[0].mxu0 %v7591
          %v8242 = vpop.f32.mrb[0].mxu0
          %v8243 = vadd.f32 0.0, %v8242
          %v8244 = vpop.f32.mrb[0].mxu0
          %8245 = vmatprep.mubr.f32.mxu0 0.0
          %8246 = vmatmul.mubr.f32.gmra.mrb[0].mxu0 %v7594
          %v8247 = vpop.f32.mrb[0].mxu0
          %v8248 = vadd.f32 0.0, %v8247
          %v8249 = vpop.f32.mrb[0].mxu0
          %8250 = vmatprep.mubr.f32.mxu0 0.0
          %8251 = vmatmul.mubr.f32.gmra.mrb[0].mxu0 %v7597
          %v8252 = vpop.f32.mrb[0].mxu0
          %v8253 = vadd.f32 0.0, %v8252
          %v8254 = vpop.f32.mrb[0].mxu0
          %8255 = vmatprep.mubr.f32.mxu0 0.0
          %8256 = vmatmul.mubr.f32.gmra.mrb[0].mxu0 %v7600
          %v8257 = vpop.f32.mrb[0].mxu0
          %v8258 = vadd.f32 0.0, %v8257
          %v8259 = vpop.f32.mrb[0].mxu0
          %8260 = vmatprep.mubr.f32.mxu0 0.0
          %8261 = vmatmul.mubr.f32.gmra.mrb[0].mxu0 %v7603
          %v8262 = vpop.f32.mrb[0].mxu0
          %v8263 = vadd.f32 0.0, %v8262
          %v8264 = vpop.f32.mrb[0].mxu0
          %8265 = vmatprep.mubr.f32.mxu0 0.0
          %8266 = vmatmul.mubr.f32.gmra.mrb[0].mxu0 %v7606
          %v8267 = vpop.f32.mrb[0].mxu0
          %v8268 = vadd.f32 0.0, %v8267
          %v8269 = vpop.f32.mrb[0].mxu0
          %8270 = vmatprep.mubr.f32.mxu0 0.0
          %8271 = vmatmul.mubr.f32.gmra.mrb[0].mxu0 %v7609
          %v8272 = vpop.f32.mrb[0].mxu0
          %v8273 = vadd.f32 0.0, %v8272
          %v8274 = vpop.f32.mrb[0].mxu0
          %8275 = vmatprep.mubr.f32.mxu0 0.0
          %8276 = vmatmul.mubr.f32.gmra.mrb[0].mxu0 %v7612
          %v8277 = vpop.f32.mrb[0].mxu0
          %v8278 = vadd.f32 0.0, %v8277
          %v8279 = vpop.f32.mrb[0].mxu0
          %8280 = vmatprep.mubr.f32.mxu0 0.0
          %8281 = vmatmul.mubr.f32.gmra.mrb[0].mxu0 %v7615
          %v8282 = vpop.f32.mrb[0].mxu0
          %v8283 = vadd.f32 0.0, %v8282
          %v8284 = vpop.f32.mrb[0].mxu0
          %8285 = vmatprep.mubr.f32.mxu0 0.0
          %8286 = vmatmul.mubr.f32.gmra.mrb[0].mxu0 %v7618
          %v8287 = vpop.f32.mrb[0].mxu0
          %v8288 = vadd.f32 0.0, %v8287
          %v8289 = vpop.f32.mrb[0].mxu0
          %8290 = vmatprep.mubr.f32.mxu0 0.0
          %8291 = vmatmul.mubr.f32.gmra.mrb[0].mxu0 %v7621
          %v8292 = vpop.f32.mrb[0].mxu0
          %v8293 = vadd.f32 0.0, %v8292
          %v8294 = vpop.f32.mrb[0].mxu0
          %8295 = vmatprep.mubr.f32.mxu0 0.0
          %8296 = vmatmul.mubr.f32.gmra.mrb[0].mxu0 %v7624
          %v8297 = vpop.f32.mrb[0].mxu0
          %v8298 = vadd.f32 0.0, %v8297
          %v8299 = vpop.f32.mrb[0].mxu0
          %8300 = vmatprep.mubr.f32.mxu0 0.0
          %8301 = vmatmul.mubr.f32.gmra.mrb[0].mxu0 %v7627
          %v8302 = vpop.f32.mrb[0].mxu0
          %v8303 = vadd.f32 0.0, %v8302
          %v8304 = vpop.f32.mrb[0].mxu0
          %8305 = vmatprep.mubr.f32.mxu0 0.0
          %8306 = vmatmul.mubr.f32.gmra.mrb[0].mxu0 %v7630
          %v8307 = vpop.f32.mrb[0].mxu0
          %v8308 = vadd.f32 0.0, %v8307
          %v8309 = vpop.f32.mrb[0].mxu0
          %8310 = vmatprep.mubr.f32.mxu0 0.0
          %8311 = vmatmul.mubr.f32.gmra.mrb[0].mxu0 %v7633
          %v8312 = vpop.f32.mrb[0].mxu0
          %v8313 = vadd.f32 0.0, %v8312
          %v8314 = vpop.f32.mrb[0].mxu0
          %8315 = vmatprep.mubr.f32.mxu0 0.0
          %8316 = vmatmul.mubr.f32.gmra.mrb[0].mxu0 %v7636
          %v8317 = vpop.f32.mrb[0].mxu0
          %v8318 = vadd.f32 0.0, %v8317
          %v8319 = vpop.f32.mrb[0].mxu0
          %8320 = vmatprep.mubr.f32.mxu0 0.0
          %8321 = vmatmul.mubr.f32.gmra.mrb[0].mxu0 %v7639
          %v8322 = vpop.f32.mrb[0].mxu0
          %v8323 = vadd.f32 0.0, %v8322
          %v8324 = vpop.f32.mrb[0].mxu0
          %8325 = vmatprep.mubr.f32.mxu0 0.0
          %8326 = vmatmul.mubr.f32.gmra.mrb[0].mxu0 %v7642
          %v8327 = vpop.f32.mrb[0].mxu0
          %v8328 = vadd.f32 0.0, %v8327
          %v8329 = vpop.f32.mrb[0].mxu0
          %8330 = vmatprep.mubr.f32.mxu0 0.0
          %8331 = vmatmul.mubr.f32.gmra.mrb[0].mxu0 %v7645
          %v8332 = vpop.f32.mrb[0].mxu0
          %v8333 = vadd.f32 0.0, %v8332
          %v8334 = vpop.f32.mrb[0].mxu0
          %8335 = vmatprep.mubr.f32.mxu0 0.0
          %8336 = vmatmul.mubr.f32.gmra.mrb[0].mxu0 %v7648
          %v8337 = vpop.f32.mrb[0].mxu0
          %v8338 = vadd.f32 0.0, %v8337
          %v8339 = vpop.f32.mrb[0].mxu0
          %8340 = vmatprep.mubr.f32.mxu0 0.0
          %8341 = vmatmul.mubr.f32.gmra.mrb[0].mxu0 %v7651
          %v8342 = vpop.f32.mrb[0].mxu0
          %v8343 = vadd.f32 0.0, %v8342
          %v8344 = vpop.f32.mrb[0].mxu0
          %8345 = vmatprep.mubr.f32.mxu0 0.0
          %8346 = vmatmul.mubr.f32.gmra.mrb[0].mxu0 %v7654
          %v8347 = vpop.f32.mrb[0].mxu0
          %v8348 = vadd.f32 0.0, %v8347
          %v8349 = vpop.f32.mrb[0].mxu0
          %8350 = vmatprep.mubr.f32.mxu0 0.0
          %8351 = vmatmul.mubr.f32.gmra.mrb[0].mxu0 %v7657
          %v8352 = vpop.f32.mrb[0].mxu0
          %v8353 = vadd.f32 0.0, %v8352
          %v8354 = vpop.f32.mrb[0].mxu0
          %8355 = vmatprep.mubr.f32.mxu0 0.0
          %8356 = vmatmul.mubr.f32.gmra.mrb[0].mxu0 %v7660
          %v8357 = vpop.f32.mrb[0].mxu0
          %v8358 = vadd.f32 0.0, %v8357
          %v8359 = vpop.f32.mrb[0].mxu0
          %8360 = vmatprep.mubr.f32.mxu0 0.0
          %8361 = vmatmul.mubr.f32.gmra.mrb[0].mxu0 %v7663
          %v8362 = vpop.f32.mrb[0].mxu0
          %v8363 = vadd.f32 0.0, %v8362
          %v8364 = vpop.f32.mrb[0].mxu0
          %8365 = vmatprep.mubr.f32.mxu0 0.0
          %8366 = vmatmul.mubr.f32.gmra.mrb[0].mxu0 %v7666
          %v8367 = vpop.f32.mrb[0].mxu0
          %v8368 = vadd.f32 0.0, %v8367
          %v8369 = vpop.f32.mrb[0].mxu0
          %8370 = vmatprep.mubr.f32.mxu0 0.0
          %8371 = vmatmul.mubr.f32.gmra.mrb[0].mxu0 %v7669
          %v8372 = vpop.f32.mrb[0].mxu0
          %v8373 = vadd.f32 0.0, %v8372
          %v8374 = vpop.f32.mrb[0].mxu0
          %8375 = vdwg.mxu0
          %v8376 = vadd.f32 %v7027, %v7738
          %v8377 = vadd.f32 %v7028, %v7743
          %v8378 = vadd.f32 %v7029, %v7748
          %v8379 = vadd.f32 %v7030, %v7753
          %v8380 = vadd.f32 %v7031, %v7758
          %v8381 = vadd.f32 %v7032, %v7763
          %v8382 = vadd.f32 %v7033, %v7768
          %v8383 = vadd.f32 %v7034, %v7773
          %v8384 = vadd.f32 %v7035, %v7778
          %v8385 = vadd.f32 %v7036, %v7783
          %v8386 = vadd.f32 %v7037, %v7788
          %v8387 = vadd.f32 %v7038, %v7793
          %v8388 = vadd.f32 %v7039, %v7798
          %v8389 = vadd.f32 %v7040, %v7803
          %v8390 = vadd.f32 %v7041, %v7808
          %v8391 = vadd.f32 %v7042, %v7813
          %v8392 = vadd.f32 %v7043, %v7818
          %v8393 = vadd.f32 %v7044, %v7823
          %v8394 = vadd.f32 %v7045, %v7828
          %v8395 = vadd.f32 %v7046, %v7833
          %v8396 = vadd.f32 %v7047, %v7838
          %v8397 = vadd.f32 %v7048, %v7843
          %v8398 = vadd.f32 %v7049, %v7848
          %v8399 = vadd.f32 %v7050, %v7853
          %v8400 = vadd.f32 %v7051, %v7858
          %v8401 = vadd.f32 %v7052, %v7863
          %v8402 = vadd.f32 %v7053, %v7868
          %v8403 = vadd.f32 %v7054, %v7873
          %v8404 = vadd.f32 %v7055, %v7878
          %v8405 = vadd.f32 %v7056, %v7883
          %v8406 = vadd.f32 %v7057, %v7888
          %v8407 = vadd.f32 %v7058, %v7893
          %v8408 = vadd.f32 %v7059, %v7898
          %v8409 = vadd.f32 %v7060, %v7903
          %v8410 = vadd.f32 %v7061, %v7908
          %v8411 = vadd.f32 %v7062, %v7913
          %v8412 = vadd.f32 %v7063, %v7918
          %v8413 = vadd.f32 %v7064, %v7923
          %v8414 = vadd.f32 %v7065, %v7928
          %v8415 = vadd.f32 %v7066, %v7933
          %v8416 = vadd.f32 %v7067, %v7938
          %v8417 = vadd.f32 %v7068, %v7943
          %v8418 = vadd.f32 %v7069, %v7948
          %v8419 = vadd.f32 %v7070, %v7953
          %v8420 = vadd.f32 %v7071, %v7958
          %v8421 = vadd.f32 %v7072, %v7963
          %v8422 = vadd.f32 %v7073, %v7968
          %v8423 = vadd.f32 %v7074, %v7973
          %v8424 = vadd.f32 %v7075, %v7978
          %v8425 = vadd.f32 %v7076, %v7983
          %v8426 = vadd.f32 %v7077, %v7988
          %v8427 = vadd.f32 %v7078, %v7993
          %v8428 = vadd.f32 %v7079, %v7998
          %v8429 = vadd.f32 %v7080, %v8003
          %v8430 = vadd.f32 %v7081, %v8008
          %v8431 = vadd.f32 %v7082, %v8013
          %v8432 = vadd.f32 %v7083, %v8018
          %v8433 = vadd.f32 %v7084, %v8023
          %v8434 = vadd.f32 %v7085, %v8028
          %v8435 = vadd.f32 %v7086, %v8033
          %v8436 = vadd.f32 %v7087, %v8038
          %v8437 = vadd.f32 %v7088, %v8043
          %v8438 = vadd.f32 %v7089, %v8048
          %v8439 = vadd.f32 %v7090, %v8053
          %v8440 = vadd.f32 %v7091, %v8058
          %v8441 = vadd.f32 %v7092, %v8063
          %v8442 = vadd.f32 %v7093, %v8068
          %v8443 = vadd.f32 %v7094, %v8073
          %v8444 = vadd.f32 %v7095, %v8078
          %v8445 = vadd.f32 %v7096, %v8083
          %v8446 = vadd.f32 %v7097, %v8088
          %v8447 = vadd.f32 %v7098, %v8093
          %v8448 = vadd.f32 %v7099, %v8098
          %v8449 = vadd.f32 %v7100, %v8103
          %v8450 = vadd.f32 %v7101, %v8108
          %v8451 = vadd.f32 %v7102, %v8113
          %v8452 = vadd.f32 %v7103, %v8118
          %v8453 = vadd.f32 %v7104, %v8123
          %v8454 = vadd.f32 %v7105, %v8128
          %v8455 = vadd.f32 %v7106, %v8133
          %v8456 = vadd.f32 %v7107, %v8138
          %v8457 = vadd.f32 %v7108, %v8143
          %v8458 = vadd.f32 %v7109, %v8148
          %v8459 = vadd.f32 %v7110, %v8153
          %v8460 = vadd.f32 %v7111, %v8158
          %v8461 = vadd.f32 %v7112, %v8163
          %v8462 = vadd.f32 %v7113, %v8168
          %v8463 = vadd.f32 %v7114, %v8173
          %v8464 = vadd.f32 %v7115, %v8178
          %v8465 = vadd.f32 %v7116, %v8183
          %v8466 = vadd.f32 %v7117, %v8188
          %v8467 = vadd.f32 %v7118, %v8193
          %v8468 = vadd.f32 %v7119, %v8198
          %v8469 = vadd.f32 %v7120, %v8203
          %v8470 = vadd.f32 %v7121, %v8208
          %v8471 = vadd.f32 %v7122, %v8213
          %v8472 = vadd.f32 %v7123, %v8218
          %v8473 = vadd.f32 %v7124, %v8223
          %v8474 = vadd.f32 %v7125, %v8228
          %v8475 = vadd.f32 %v7126, %v8233
          %v8476 = vadd.f32 %v7127, %v8238
          %v8477 = vadd.f32 %v7128, %v8243
          %v8478 = vadd.f32 %v7129, %v8248
          %v8479 = vadd.f32 %v7130, %v8253
          %v8480 = vadd.f32 %v7131, %v8258
          %v8481 = vadd.f32 %v7132, %v8263
          %v8482 = vadd.f32 %v7133, %v8268
          %v8483 = vadd.f32 %v7134, %v8273
          %v8484 = vadd.f32 %v7135, %v8278
          %v8485 = vadd.f32 %v7136, %v8283
          %v8486 = vadd.f32 %v7137, %v8288
          %v8487 = vadd.f32 %v7138, %v8293
          %v8488 = vadd.f32 %v7139, %v8298
          %v8489 = vadd.f32 %v7140, %v8303
          %v8490 = vadd.f32 %v7141, %v8308
          %v8491 = vadd.f32 %v7142, %v8313
          %v8492 = vadd.f32 %v7143, %v8318
          %v8493 = vadd.f32 %v7144, %v8323
          %v8494 = vadd.f32 %v7145, %v8328
          %v8495 = vadd.f32 %v7146, %v8333
          %v8496 = vadd.f32 %v7147, %v8338
          %v8497 = vadd.f32 %v7148, %v8343
          %v8498 = vadd.f32 %v7149, %v8348
          %v8499 = vadd.f32 %v7150, %v8353
          %v8500 = vadd.f32 %v7151, %v8358
          %v8501 = vadd.f32 %v7152, %v8363
          %v8502 = vadd.f32 %v7153, %v8368
          %v8503 = vadd.f32 %v7154, %v8373
          %v8504 = vlaneseq
          %v8505 = vshrl.u32 %v8504, 7
          %v8506 = vsub.s32 2, %v8505
          %v8507 = vrot.slane %v2495, %v8506
          %v8508 = vadd.f32 %v8376, %v8507
          %v8509 = vadd.f32 %v8377, %v8507
          %v8510 = vadd.f32 %v8378, %v8507
          %v8511 = vadd.f32 %v8379, %v8507
          %v8512 = vadd.f32 %v8380, %v8507
          %v8513 = vadd.f32 %v8381, %v8507
          %v8514 = vadd.f32 %v8382, %v8507
          %v8515 = vadd.f32 %v8383, %v8507
          %v8516 = vadd.f32 %v8384, %v8507
          %v8517 = vadd.f32 %v8385, %v8507
          %v8518 = vadd.f32 %v8386, %v8507
          %v8519 = vadd.f32 %v8387, %v8507
          %v8520 = vadd.f32 %v8388, %v8507
          %v8521 = vadd.f32 %v8389, %v8507
          %v8522 = vadd.f32 %v8390, %v8507
          %v8523 = vadd.f32 %v8391, %v8507
          %v8524 = vadd.f32 %v8392, %v8507
          %v8525 = vadd.f32 %v8393, %v8507
          %v8526 = vadd.f32 %v8394, %v8507
          %v8527 = vadd.f32 %v8395, %v8507
          %v8528 = vadd.f32 %v8396, %v8507
          %v8529 = vadd.f32 %v8397, %v8507
          %v8530 = vadd.f32 %v8398, %v8507
          %v8531 = vadd.f32 %v8399, %v8507
          %v8532 = vadd.f32 %v8400, %v8507
          %v8533 = vadd.f32 %v8401, %v8507
          %v8534 = vadd.f32 %v8402, %v8507
          %v8535 = vadd.f32 %v8403, %v8507
          %v8536 = vadd.f32 %v8404, %v8507
          %v8537 = vadd.f32 %v8405, %v8507
          %v8538 = vadd.f32 %v8406, %v8507
          %v8539 = vadd.f32 %v8407, %v8507
          %v8540 = vadd.f32 %v8408, %v8507
          %v8541 = vadd.f32 %v8409, %v8507
          %v8542 = vadd.f32 %v8410, %v8507
          %v8543 = vadd.f32 %v8411, %v8507
          %v8544 = vadd.f32 %v8412, %v8507
          %v8545 = vadd.f32 %v8413, %v8507
          %v8546 = vadd.f32 %v8414, %v8507
          %v8547 = vadd.f32 %v8415, %v8507
          %v8548 = vadd.f32 %v8416, %v8507
          %v8549 = vadd.f32 %v8417, %v8507
          %v8550 = vadd.f32 %v8418, %v8507
          %v8551 = vadd.f32 %v8419, %v8507
          %v8552 = vadd.f32 %v8420, %v8507
          %v8553 = vadd.f32 %v8421, %v8507
          %v8554 = vadd.f32 %v8422, %v8507
          %v8555 = vadd.f32 %v8423, %v8507
          %v8556 = vadd.f32 %v8424, %v8507
          %v8557 = vadd.f32 %v8425, %v8507
          %v8558 = vadd.f32 %v8426, %v8507
          %v8559 = vadd.f32 %v8427, %v8507
          %v8560 = vadd.f32 %v8428, %v8507
          %v8561 = vadd.f32 %v8429, %v8507
          %v8562 = vadd.f32 %v8430, %v8507
          %v8563 = vadd.f32 %v8431, %v8507
          %v8564 = vadd.f32 %v8432, %v8507
          %v8565 = vadd.f32 %v8433, %v8507
          %v8566 = vadd.f32 %v8434, %v8507
          %v8567 = vadd.f32 %v8435, %v8507
          %v8568 = vadd.f32 %v8436, %v8507
          %v8569 = vadd.f32 %v8437, %v8507
          %v8570 = vadd.f32 %v8438, %v8507
          %v8571 = vadd.f32 %v8439, %v8507
          %v8572 = vadd.f32 %v8440, %v8507
          %v8573 = vadd.f32 %v8441, %v8507
          %v8574 = vadd.f32 %v8442, %v8507
          %v8575 = vadd.f32 %v8443, %v8507
          %v8576 = vadd.f32 %v8444, %v8507
          %v8577 = vadd.f32 %v8445, %v8507
          %v8578 = vadd.f32 %v8446, %v8507
          %v8579 = vadd.f32 %v8447, %v8507
          %v8580 = vadd.f32 %v8448, %v8507
          %v8581 = vadd.f32 %v8449, %v8507
          %v8582 = vadd.f32 %v8450, %v8507
          %v8583 = vadd.f32 %v8451, %v8507
          %v8584 = vadd.f32 %v8452, %v8507
          %v8585 = vadd.f32 %v8453, %v8507
          %v8586 = vadd.f32 %v8454, %v8507
          %v8587 = vadd.f32 %v8455, %v8507
          %v8588 = vadd.f32 %v8456, %v8507
          %v8589 = vadd.f32 %v8457, %v8507
          %v8590 = vadd.f32 %v8458, %v8507
          %v8591 = vadd.f32 %v8459, %v8507
          %v8592 = vadd.f32 %v8460, %v8507
          %v8593 = vadd.f32 %v8461, %v8507
          %v8594 = vadd.f32 %v8462, %v8507
          %v8595 = vadd.f32 %v8463, %v8507
          %v8596 = vadd.f32 %v8464, %v8507
          %v8597 = vadd.f32 %v8465, %v8507
          %v8598 = vadd.f32 %v8466, %v8507
          %v8599 = vadd.f32 %v8467, %v8507
          %v8600 = vadd.f32 %v8468, %v8507
          %v8601 = vadd.f32 %v8469, %v8507
          %v8602 = vadd.f32 %v8470, %v8507
          %v8603 = vadd.f32 %v8471, %v8507
          %v8604 = vadd.f32 %v8472, %v8507
          %v8605 = vadd.f32 %v8473, %v8507
          %v8606 = vadd.f32 %v8474, %v8507
          %v8607 = vadd.f32 %v8475, %v8507
          %v8608 = vadd.f32 %v8476, %v8507
          %v8609 = vadd.f32 %v8477, %v8507
          %v8610 = vadd.f32 %v8478, %v8507
          %v8611 = vadd.f32 %v8479, %v8507
          %v8612 = vadd.f32 %v8480, %v8507
          %v8613 = vadd.f32 %v8481, %v8507
          %v8614 = vadd.f32 %v8482, %v8507
          %v8615 = vadd.f32 %v8483, %v8507
          %v8616 = vadd.f32 %v8484, %v8507
          %v8617 = vadd.f32 %v8485, %v8507
          %v8618 = vadd.f32 %v8486, %v8507
          %v8619 = vadd.f32 %v8487, %v8507
          %v8620 = vadd.f32 %v8488, %v8507
          %v8621 = vadd.f32 %v8489, %v8507
          %v8622 = vadd.f32 %v8490, %v8507
          %v8623 = vadd.f32 %v8491, %v8507
          %v8624 = vadd.f32 %v8492, %v8507
          %v8625 = vadd.f32 %v8493, %v8507
          %v8626 = vadd.f32 %v8494, %v8507
          %v8627 = vadd.f32 %v8495, %v8507
          %v8628 = vadd.f32 %v8496, %v8507
          %v8629 = vadd.f32 %v8497, %v8507
          %v8630 = vadd.f32 %v8498, %v8507
          %v8631 = vadd.f32 %v8499, %v8507
          %v8632 = vadd.f32 %v8500, %v8507
          %v8633 = vadd.f32 %v8501, %v8507
          %v8634 = vadd.f32 %v8502, %v8507
          %v8635 = vadd.f32 %v8503, %v8507
          %v8636 = vmax.f32 %v8508, 0.0
          %v8637 = vmax.f32 %v8509, 0.0
          %v8638 = vmax.f32 %v8510, 0.0
          %v8639 = vmax.f32 %v8511, 0.0
          %v8640 = vmax.f32 %v8512, 0.0
          %v8641 = vmax.f32 %v8513, 0.0
          %v8642 = vmax.f32 %v8514, 0.0
          %v8643 = vmax.f32 %v8515, 0.0
          %v8644 = vmax.f32 %v8516, 0.0
          %v8645 = vmax.f32 %v8517, 0.0
          %v8646 = vmax.f32 %v8518, 0.0
          %v8647 = vmax.f32 %v8519, 0.0
          %v8648 = vmax.f32 %v8520, 0.0
          %v8649 = vmax.f32 %v8521, 0.0
          %v8650 = vmax.f32 %v8522, 0.0
          %v8651 = vmax.f32 %v8523, 0.0
          %v8652 = vmax.f32 %v8524, 0.0
          %v8653 = vmax.f32 %v8525, 0.0
          %v8654 = vmax.f32 %v8526, 0.0
          %v8655 = vmax.f32 %v8527, 0.0
          %v8656 = vmax.f32 %v8528, 0.0
          %v8657 = vmax.f32 %v8529, 0.0
          %v8658 = vmax.f32 %v8530, 0.0
          %v8659 = vmax.f32 %v8531, 0.0
          %v8660 = vmax.f32 %v8532, 0.0
          %v8661 = vmax.f32 %v8533, 0.0
          %v8662 = vmax.f32 %v8534, 0.0
          %v8663 = vmax.f32 %v8535, 0.0
          %v8664 = vmax.f32 %v8536, 0.0
          %v8665 = vmax.f32 %v8537, 0.0
          %v8666 = vmax.f32 %v8538, 0.0
          %v8667 = vmax.f32 %v8539, 0.0
          %v8668 = vmax.f32 %v8540, 0.0
          %v8669 = vmax.f32 %v8541, 0.0
          %v8670 = vmax.f32 %v8542, 0.0
          %v8671 = vmax.f32 %v8543, 0.0
          %v8672 = vmax.f32 %v8544, 0.0
          %v8673 = vmax.f32 %v8545, 0.0
          %v8674 = vmax.f32 %v8546, 0.0
          %v8675 = vmax.f32 %v8547, 0.0
          %v8676 = vmax.f32 %v8548, 0.0
          %v8677 = vmax.f32 %v8549, 0.0
          %v8678 = vmax.f32 %v8550, 0.0
          %v8679 = vmax.f32 %v8551, 0.0
          %v8680 = vmax.f32 %v8552, 0.0
          %v8681 = vmax.f32 %v8553, 0.0
          %v8682 = vmax.f32 %v8554, 0.0
          %v8683 = vmax.f32 %v8555, 0.0
          %v8684 = vmax.f32 %v8556, 0.0
          %v8685 = vmax.f32 %v8557, 0.0
          %v8686 = vmax.f32 %v8558, 0.0
          %v8687 = vmax.f32 %v8559, 0.0
          %v8688 = vmax.f32 %v8560, 0.0
          %v8689 = vmax.f32 %v8561, 0.0
          %v8690 = vmax.f32 %v8562, 0.0
          %v8691 = vmax.f32 %v8563, 0.0
          %v8692 = vmax.f32 %v8564, 0.0
          %v8693 = vmax.f32 %v8565, 0.0
          %v8694 = vmax.f32 %v8566, 0.0
          %v8695 = vmax.f32 %v8567, 0.0
          %v8696 = vmax.f32 %v8568, 0.0
          %v8697 = vmax.f32 %v8569, 0.0
          %v8698 = vmax.f32 %v8570, 0.0
          %v8699 = vmax.f32 %v8571, 0.0
          %v8700 = vmax.f32 %v8572, 0.0
          %v8701 = vmax.f32 %v8573, 0.0
          %v8702 = vmax.f32 %v8574, 0.0
          %v8703 = vmax.f32 %v8575, 0.0
          %v8704 = vmax.f32 %v8576, 0.0
          %v8705 = vmax.f32 %v8577, 0.0
          %v8706 = vmax.f32 %v8578, 0.0
          %v8707 = vmax.f32 %v8579, 0.0
          %v8708 = vmax.f32 %v8580, 0.0
          %v8709 = vmax.f32 %v8581, 0.0
          %v8710 = vmax.f32 %v8582, 0.0
          %v8711 = vmax.f32 %v8583, 0.0
          %v8712 = vmax.f32 %v8584, 0.0
          %v8713 = vmax.f32 %v8585, 0.0
          %v8714 = vmax.f32 %v8586, 0.0
          %v8715 = vmax.f32 %v8587, 0.0
          %v8716 = vmax.f32 %v8588, 0.0
          %v8717 = vmax.f32 %v8589, 0.0
          %v8718 = vmax.f32 %v8590, 0.0
          %v8719 = vmax.f32 %v8591, 0.0
          %v8720 = vmax.f32 %v8592, 0.0
          %v8721 = vmax.f32 %v8593, 0.0
          %v8722 = vmax.f32 %v8594, 0.0
          %v8723 = vmax.f32 %v8595, 0.0
          %v8724 = vmax.f32 %v8596, 0.0
          %v8725 = vmax.f32 %v8597, 0.0
          %v8726 = vmax.f32 %v8598, 0.0
          %v8727 = vmax.f32 %v8599, 0.0
          %v8728 = vmax.f32 %v8600, 0.0
          %v8729 = vmax.f32 %v8601, 0.0
          %v8730 = vmax.f32 %v8602, 0.0
          %v8731 = vmax.f32 %v8603, 0.0
          %v8732 = vmax.f32 %v8604, 0.0
          %v8733 = vmax.f32 %v8605, 0.0
          %v8734 = vmax.f32 %v8606, 0.0
          %v8735 = vmax.f32 %v8607, 0.0
          %v8736 = vmax.f32 %v8608, 0.0
          %v8737 = vmax.f32 %v8609, 0.0
          %v8738 = vmax.f32 %v8610, 0.0
          %v8739 = vmax.f32 %v8611, 0.0
          %v8740 = vmax.f32 %v8612, 0.0
          %v8741 = vmax.f32 %v8613, 0.0
          %v8742 = vmax.f32 %v8614, 0.0
          %v8743 = vmax.f32 %v8615, 0.0
          %v8744 = vmax.f32 %v8616, 0.0
          %v8745 = vmax.f32 %v8617, 0.0
          %v8746 = vmax.f32 %v8618, 0.0
          %v8747 = vmax.f32 %v8619, 0.0
          %v8748 = vmax.f32 %v8620, 0.0
          %v8749 = vmax.f32 %v8621, 0.0
          %v8750 = vmax.f32 %v8622, 0.0
          %v8751 = vmax.f32 %v8623, 0.0
          %v8752 = vmax.f32 %v8624, 0.0
          %v8753 = vmax.f32 %v8625, 0.0
          %v8754 = vmax.f32 %v8626, 0.0
          %v8755 = vmax.f32 %v8627, 0.0
          %v8756 = vmax.f32 %v8628, 0.0
          %v8757 = vmax.f32 %v8629, 0.0
          %v8758 = vmax.f32 %v8630, 0.0
          %v8759 = vmax.f32 %v8631, 0.0
          %v8760 = vmax.f32 %v8632, 0.0
          %v8761 = vmax.f32 %v8633, 0.0
          %v8762 = vmax.f32 %v8634, 0.0
          %v8763 = vmax.f32 %v8635, 0.0
          %v8764 = vld [vmem:[%s7] sm:$0xff]
          %v8765 = vld [vmem:[%s7 + $0x8] sm:$0xff]
          %v8766 = vld [vmem:[%s7 + $0x10] sm:$0xff]
          %v8767 = vld [vmem:[%s7 + $0x18] sm:$0xff]
          %v8768 = vlaneseq
          %v8769 = vshrl.u32 %v8768, 7
          %v8770 = vsub.s32 3, %v8769
          %v8771 = vrot.slane %v2495, %v8770
          %v8773 = vsel %vm5194, %v8636, 0
          %v8776 = vsel %vm5194, %v8637, 0
          %v8779 = vsel %vm5194, %v8638, 0
          %v8782 = vsel %vm5194, %v8639, 0
          %v8785 = vsel %vm5194, %v8640, 0
          %v8788 = vsel %vm5194, %v8641, 0
          %v8791 = vsel %vm5194, %v8642, 0
          %v8794 = vsel %vm5194, %v8643, 0
          %v8797 = vsel %vm5194, %v8644, 0
          %v8800 = vsel %vm5194, %v8645, 0
          %v8803 = vsel %vm5194, %v8646, 0
          %v8806 = vsel %vm5194, %v8647, 0
          %v8809 = vsel %vm5194, %v8648, 0
          %v8812 = vsel %vm5194, %v8649, 0
          %v8815 = vsel %vm5194, %v8650, 0
          %v8818 = vsel %vm5194, %v8651, 0
          %v8821 = vsel %vm5194, %v8652, 0
          %v8824 = vsel %vm5194, %v8653, 0
          %v8827 = vsel %vm5194, %v8654, 0
          %v8830 = vsel %vm5194, %v8655, 0
          %v8833 = vsel %vm5194, %v8656, 0
          %v8836 = vsel %vm5194, %v8657, 0
          %v8839 = vsel %vm5194, %v8658, 0
          %v8842 = vsel %vm5194, %v8659, 0
          %v8845 = vsel %vm5194, %v8660, 0
          %v8848 = vsel %vm5194, %v8661, 0
          %v8851 = vsel %vm5194, %v8662, 0
          %v8854 = vsel %vm5194, %v8663, 0
          %v8857 = vsel %vm5194, %v8664, 0
          %v8860 = vsel %vm5194, %v8665, 0
          %v8863 = vsel %vm5194, %v8666, 0
          %v8866 = vsel %vm5194, %v8667, 0
          %v8869 = vsel %vm5194, %v8668, 0
          %v8872 = vsel %vm5194, %v8669, 0
          %v8875 = vsel %vm5194, %v8670, 0
          %v8878 = vsel %vm5194, %v8671, 0
          %v8881 = vsel %vm5194, %v8672, 0
          %v8884 = vsel %vm5194, %v8673, 0
          %v8887 = vsel %vm5194, %v8674, 0
          %v8890 = vsel %vm5194, %v8675, 0
          %v8893 = vsel %vm5194, %v8676, 0
          %v8896 = vsel %vm5194, %v8677, 0
          %v8899 = vsel %vm5194, %v8678, 0
          %v8902 = vsel %vm5194, %v8679, 0
          %v8905 = vsel %vm5194, %v8680, 0
          %v8908 = vsel %vm5194, %v8681, 0
          %v8911 = vsel %vm5194, %v8682, 0
          %v8914 = vsel %vm5194, %v8683, 0
          %v8917 = vsel %vm5194, %v8684, 0
          %v8920 = vsel %vm5194, %v8685, 0
          %v8923 = vsel %vm5194, %v8686, 0
          %v8926 = vsel %vm5194, %v8687, 0
          %v8929 = vsel %vm5194, %v8688, 0
          %v8932 = vsel %vm5194, %v8689, 0
          %v8935 = vsel %vm5194, %v8690, 0
          %v8938 = vsel %vm5194, %v8691, 0
          %v8941 = vsel %vm5194, %v8692, 0
          %v8944 = vsel %vm5194, %v8693, 0
          %v8947 = vsel %vm5194, %v8694, 0
          %v8950 = vsel %vm5194, %v8695, 0
          %v8953 = vsel %vm5194, %v8696, 0
          %v8956 = vsel %vm5194, %v8697, 0
          %v8959 = vsel %vm5194, %v8698, 0
          %v8962 = vsel %vm5194, %v8699, 0
          %v8965 = vsel %vm5194, %v8700, 0
          %v8968 = vsel %vm5194, %v8701, 0
          %v8971 = vsel %vm5194, %v8702, 0
          %v8974 = vsel %vm5194, %v8703, 0
          %v8977 = vsel %vm5194, %v8704, 0
          %v8980 = vsel %vm5194, %v8705, 0
          %v8983 = vsel %vm5194, %v8706, 0
          %v8986 = vsel %vm5194, %v8707, 0
          %v8989 = vsel %vm5194, %v8708, 0
          %v8992 = vsel %vm5194, %v8709, 0
          %v8995 = vsel %vm5194, %v8710, 0
          %v8998 = vsel %vm5194, %v8711, 0
          %v9001 = vsel %vm5194, %v8712, 0
          %v9004 = vsel %vm5194, %v8713, 0
          %v9007 = vsel %vm5194, %v8714, 0
          %v9010 = vsel %vm5194, %v8715, 0
          %v9013 = vsel %vm5194, %v8716, 0
          %v9016 = vsel %vm5194, %v8717, 0
          %v9019 = vsel %vm5194, %v8718, 0
          %v9022 = vsel %vm5194, %v8719, 0
          %v9025 = vsel %vm5194, %v8720, 0
          %v9028 = vsel %vm5194, %v8721, 0
          %v9031 = vsel %vm5194, %v8722, 0
          %v9034 = vsel %vm5194, %v8723, 0
          %v9037 = vsel %vm5194, %v8724, 0
          %v9040 = vsel %vm5194, %v8725, 0
          %v9043 = vsel %vm5194, %v8726, 0
          %v9046 = vsel %vm5194, %v8727, 0
          %v9049 = vsel %vm5194, %v8728, 0
          %v9052 = vsel %vm5194, %v8729, 0
          %v9055 = vsel %vm5194, %v8730, 0
          %v9058 = vsel %vm5194, %v8731, 0
          %v9061 = vsel %vm5194, %v8732, 0
          %v9064 = vsel %vm5194, %v8733, 0
          %v9067 = vsel %vm5194, %v8734, 0
          %v9070 = vsel %vm5194, %v8735, 0
          %v9073 = vsel %vm5194, %v8736, 0
          %v9076 = vsel %vm5194, %v8737, 0
          %v9079 = vsel %vm5194, %v8738, 0
          %v9082 = vsel %vm5194, %v8739, 0
          %v9085 = vsel %vm5194, %v8740, 0
          %v9088 = vsel %vm5194, %v8741, 0
          %v9091 = vsel %vm5194, %v8742, 0
          %v9094 = vsel %vm5194, %v8743, 0
          %v9097 = vsel %vm5194, %v8744, 0
          %v9100 = vsel %vm5194, %v8745, 0
          %v9103 = vsel %vm5194, %v8746, 0
          %v9106 = vsel %vm5194, %v8747, 0
          %v9109 = vsel %vm5194, %v8748, 0
          %v9112 = vsel %vm5194, %v8749, 0
          %v9115 = vsel %vm5194, %v8750, 0
          %v9118 = vsel %vm5194, %v8751, 0
          %v9121 = vsel %vm5194, %v8752, 0
          %v9124 = vsel %vm5194, %v8753, 0
          %v9127 = vsel %vm5194, %v8754, 0
          %v9130 = vsel %vm5194, %v8755, 0
          %v9133 = vsel %vm5194, %v8756, 0
          %v9136 = vsel %vm5194, %v8757, 0
          %v9139 = vsel %vm5194, %v8758, 0
          %v9142 = vsel %vm5194, %v8759, 0
          %v9145 = vsel %vm5194, %v8760, 0
          %v9148 = vsel %vm5194, %v8761, 0
          %v9151 = vsel %vm5194, %v8762, 0
          %v9154 = vsel %vm5194, %v8763, 0
          %9156 = vmatprep.subr.mxu0 0.0
          %9157 = vmatpush1.msra.mxu0 %v8764
          %9158 = vmatprep.subr.mxu0 0.0
          %9159 = vmatpush1.msra.mxu0 %v8765
          %9160 = vmatprep.subr.mxu0 0.0
          %9161 = vmatpush1.msra.mxu0 %v8766
          %9162 = vmatprep.subr.mxu0 0.0
          %9163 = vmatpush1.msra.mxu0 %v8767
          %9164 = vmatprep.subr.mxu0 0.0
          %9165 = vmatpush1.msra.mxu0 0.0
          %9166 = vmatprep.subr.mxu0 0.0
          %9167 = vmatpush1.msra.mxu0 0.0
          %9168 = vmatprep.subr.mxu0 0.0
          %9169 = vmatpush1.msra.mxu0 0.0
          %9170 = vmatprep.subr.mxu0 0.0
          %9171 = vmatpush1.msra.mxu0 0.0
          %9172 = vmatprep.subr.mxu0 0.0
          %9173 = vmatpush1.msra.mxu0 0.0
          %9174 = vmatprep.subr.mxu0 0.0
          %9175 = vmatpush1.msra.mxu0 0.0
          %9176 = vmatprep.subr.mxu0 0.0
          %9177 = vmatpush1.msra.mxu0 0.0
          %9178 = vmatprep.subr.mxu0 0.0
          %9179 = vmatpush1.msra.mxu0 0.0
          %9180 = vmatprep.subr.mxu0 0.0
          %9181 = vmatpush1.msra.mxu0 0.0
          %9182 = vmatprep.subr.mxu0 0.0
          %9183 = vmatpush1.msra.mxu0 0.0
          %9184 = vmatprep.subr.mxu0 0.0
          %9185 = vmatpush1.msra.mxu0 0.0
          %9186 = vmatprep.subr.mxu0 0.0
          %9187 = vmatpush1.msra.mxu0 0.0
          %9188 = vmatprep.subr.mxu0 0.0
          %9189 = vmatpush1.msra.mxu0 0.0
          %9190 = vmatprep.subr.mxu0 0.0
          %9191 = vmatpush1.msra.mxu0 0.0
          %9192 = vmatprep.subr.mxu0 0.0
          %9193 = vmatpush1.msra.mxu0 0.0
          %9194 = vmatprep.subr.mxu0 0.0
          %9195 = vmatpush1.msra.mxu0 0.0
          %9196 = vmatprep.subr.mxu0 0.0
          %9197 = vmatpush1.msra.mxu0 0.0
          %9198 = vmatprep.subr.mxu0 0.0
          %9199 = vmatpush1.msra.mxu0 0.0
          %9200 = vmatprep.subr.mxu0 0.0
          %9201 = vmatpush1.msra.mxu0 0.0
          %9202 = vmatprep.subr.mxu0 0.0
          %9203 = vmatpush1.msra.mxu0 0.0
          %9204 = vmatprep.subr.mxu0 0.0
          %9205 = vmatpush1.msra.mxu0 0.0
          %9206 = vmatprep.subr.mxu0 0.0
          %9207 = vmatpush1.msra.mxu0 0.0
          %9208 = vmatprep.subr.mxu0 0.0
          %9209 = vmatpush1.msra.mxu0 0.0
          %9210 = vmatprep.subr.mxu0 0.0
          %9211 = vmatpush1.msra.mxu0 0.0
          %9212 = vmatprep.subr.mxu0 0.0
          %9213 = vmatpush1.msra.mxu0 0.0
          %9214 = vmatprep.subr.mxu0 0.0
          %9215 = vmatpush1.msra.mxu0 0.0
          %9216 = vmatprep.subr.mxu0 0.0
          %9217 = vmatpush1.msra.mxu0 0.0
          %9218 = vmatprep.subr.mxu0 0.0
          %9219 = vmatpush1.msra.mxu0 0.0
          %9220 = vmatprep.mubr.f32.mxu0 0.0
          %9221 = vmatmul.mubr.f32.gmra.mrb[0].mxu0 %v8773
          %v9222 = vpop.f32.mrb[0].mxu0
          %v9223 = vadd.f32 %v8771, %v9222
          %v9224 = vpop.f32.mrb[0].mxu0
          %9225 = vmatprep.mubr.f32.mxu0 0.0
          %9226 = vmatmul.mubr.f32.gmra.mrb[0].mxu0 %v8776
          %v9227 = vpop.f32.mrb[0].mxu0
          %v9228 = vadd.f32 %v8771, %v9227
          %v9229 = vpop.f32.mrb[0].mxu0
          %9230 = vmatprep.mubr.f32.mxu0 0.0
          %9231 = vmatmul.mubr.f32.gmra.mrb[0].mxu0 %v8779
          %v9232 = vpop.f32.mrb[0].mxu0
          %v9233 = vadd.f32 %v8771, %v9232
          %v9234 = vpop.f32.mrb[0].mxu0
          %9235 = vmatprep.mubr.f32.mxu0 0.0
          %9236 = vmatmul.mubr.f32.gmra.mrb[0].mxu0 %v8782
          %v9237 = vpop.f32.mrb[0].mxu0
          %v9238 = vadd.f32 %v8771, %v9237
          %v9239 = vpop.f32.mrb[0].mxu0
          %9240 = vmatprep.mubr.f32.mxu0 0.0
          %9241 = vmatmul.mubr.f32.gmra.mrb[0].mxu0 %v8785
          %v9242 = vpop.f32.mrb[0].mxu0
          %v9243 = vadd.f32 %v8771, %v9242
          %v9244 = vpop.f32.mrb[0].mxu0
          %9245 = vmatprep.mubr.f32.mxu0 0.0
          %9246 = vmatmul.mubr.f32.gmra.mrb[0].mxu0 %v8788
          %v9247 = vpop.f32.mrb[0].mxu0
          %v9248 = vadd.f32 %v8771, %v9247
          %v9249 = vpop.f32.mrb[0].mxu0
          %9250 = vmatprep.mubr.f32.mxu0 0.0
          %9251 = vmatmul.mubr.f32.gmra.mrb[0].mxu0 %v8791
          %v9252 = vpop.f32.mrb[0].mxu0
          %v9253 = vadd.f32 %v8771, %v9252
          %v9254 = vpop.f32.mrb[0].mxu0
          %9255 = vmatprep.mubr.f32.mxu0 0.0
          %9256 = vmatmul.mubr.f32.gmra.mrb[0].mxu0 %v8794
          %v9257 = vpop.f32.mrb[0].mxu0
          %v9258 = vadd.f32 %v8771, %v9257
          %v9259 = vpop.f32.mrb[0].mxu0
          %9260 = vmatprep.mubr.f32.mxu0 0.0
          %9261 = vmatmul.mubr.f32.gmra.mrb[0].mxu0 %v8797
          %v9262 = vpop.f32.mrb[0].mxu0
          %v9263 = vadd.f32 %v8771, %v9262
          %v9264 = vpop.f32.mrb[0].mxu0
          %9265 = vmatprep.mubr.f32.mxu0 0.0
          %9266 = vmatmul.mubr.f32.gmra.mrb[0].mxu0 %v8800
          %v9267 = vpop.f32.mrb[0].mxu0
          %v9268 = vadd.f32 %v8771, %v9267
          %v9269 = vpop.f32.mrb[0].mxu0
          %9270 = vmatprep.mubr.f32.mxu0 0.0
          %9271 = vmatmul.mubr.f32.gmra.mrb[0].mxu0 %v8803
          %v9272 = vpop.f32.mrb[0].mxu0
          %v9273 = vadd.f32 %v8771, %v9272
          %v9274 = vpop.f32.mrb[0].mxu0
          %9275 = vmatprep.mubr.f32.mxu0 0.0
          %9276 = vmatmul.mubr.f32.gmra.mrb[0].mxu0 %v8806
          %v9277 = vpop.f32.mrb[0].mxu0
          %v9278 = vadd.f32 %v8771, %v9277
          %v9279 = vpop.f32.mrb[0].mxu0
          %9280 = vmatprep.mubr.f32.mxu0 0.0
          %9281 = vmatmul.mubr.f32.gmra.mrb[0].mxu0 %v8809
          %v9282 = vpop.f32.mrb[0].mxu0
          %v9283 = vadd.f32 %v8771, %v9282
          %v9284 = vpop.f32.mrb[0].mxu0
          %9285 = vmatprep.mubr.f32.mxu0 0.0
          %9286 = vmatmul.mubr.f32.gmra.mrb[0].mxu0 %v8812
          %v9287 = vpop.f32.mrb[0].mxu0
          %v9288 = vadd.f32 %v8771, %v9287
          %v9289 = vpop.f32.mrb[0].mxu0
          %9290 = vmatprep.mubr.f32.mxu0 0.0
          %9291 = vmatmul.mubr.f32.gmra.mrb[0].mxu0 %v8815
          %v9292 = vpop.f32.mrb[0].mxu0
          %v9293 = vadd.f32 %v8771, %v9292
          %v9294 = vpop.f32.mrb[0].mxu0
          %9295 = vmatprep.mubr.f32.mxu0 0.0
          %9296 = vmatmul.mubr.f32.gmra.mrb[0].mxu0 %v8818
          %v9297 = vpop.f32.mrb[0].mxu0
          %v9298 = vadd.f32 %v8771, %v9297
          %v9299 = vpop.f32.mrb[0].mxu0
          %9300 = vmatprep.mubr.f32.mxu0 0.0
          %9301 = vmatmul.mubr.f32.gmra.mrb[0].mxu0 %v8821
          %v9302 = vpop.f32.mrb[0].mxu0
          %v9303 = vadd.f32 %v8771, %v9302
          %v9304 = vpop.f32.mrb[0].mxu0
          %9305 = vmatprep.mubr.f32.mxu0 0.0
          %9306 = vmatmul.mubr.f32.gmra.mrb[0].mxu0 %v8824
          %v9307 = vpop.f32.mrb[0].mxu0
          %v9308 = vadd.f32 %v8771, %v9307
          %v9309 = vpop.f32.mrb[0].mxu0
          %9310 = vmatprep.mubr.f32.mxu0 0.0
          %9311 = vmatmul.mubr.f32.gmra.mrb[0].mxu0 %v8827
          %v9312 = vpop.f32.mrb[0].mxu0
          %v9313 = vadd.f32 %v8771, %v9312
          %v9314 = vpop.f32.mrb[0].mxu0
          %9315 = vmatprep.mubr.f32.mxu0 0.0
          %9316 = vmatmul.mubr.f32.gmra.mrb[0].mxu0 %v8830
          %v9317 = vpop.f32.mrb[0].mxu0
          %v9318 = vadd.f32 %v8771, %v9317
          %v9319 = vpop.f32.mrb[0].mxu0
          %9320 = vmatprep.mubr.f32.mxu0 0.0
          %9321 = vmatmul.mubr.f32.gmra.mrb[0].mxu0 %v8833
          %v9322 = vpop.f32.mrb[0].mxu0
          %v9323 = vadd.f32 %v8771, %v9322
          %v9324 = vpop.f32.mrb[0].mxu0
          %9325 = vmatprep.mubr.f32.mxu0 0.0
          %9326 = vmatmul.mubr.f32.gmra.mrb[0].mxu0 %v8836
          %v9327 = vpop.f32.mrb[0].mxu0
          %v9328 = vadd.f32 %v8771, %v9327
          %v9329 = vpop.f32.mrb[0].mxu0
          %9330 = vmatprep.mubr.f32.mxu0 0.0
          %9331 = vmatmul.mubr.f32.gmra.mrb[0].mxu0 %v8839
          %v9332 = vpop.f32.mrb[0].mxu0
          %v9333 = vadd.f32 %v8771, %v9332
          %v9334 = vpop.f32.mrb[0].mxu0
          %9335 = vmatprep.mubr.f32.mxu0 0.0
          %9336 = vmatmul.mubr.f32.gmra.mrb[0].mxu0 %v8842
          %v9337 = vpop.f32.mrb[0].mxu0
          %v9338 = vadd.f32 %v8771, %v9337
          %v9339 = vpop.f32.mrb[0].mxu0
          %9340 = vmatprep.mubr.f32.mxu0 0.0
          %9341 = vmatmul.mubr.f32.gmra.mrb[0].mxu0 %v8845
          %v9342 = vpop.f32.mrb[0].mxu0
          %v9343 = vadd.f32 %v8771, %v9342
          %v9344 = vpop.f32.mrb[0].mxu0
          %9345 = vmatprep.mubr.f32.mxu0 0.0
          %9346 = vmatmul.mubr.f32.gmra.mrb[0].mxu0 %v8848
          %v9347 = vpop.f32.mrb[0].mxu0
          %v9348 = vadd.f32 %v8771, %v9347
          %v9349 = vpop.f32.mrb[0].mxu0
          %9350 = vmatprep.mubr.f32.mxu0 0.0
          %9351 = vmatmul.mubr.f32.gmra.mrb[0].mxu0 %v8851
          %v9352 = vpop.f32.mrb[0].mxu0
          %v9353 = vadd.f32 %v8771, %v9352
          %v9354 = vpop.f32.mrb[0].mxu0
          %9355 = vmatprep.mubr.f32.mxu0 0.0
          %9356 = vmatmul.mubr.f32.gmra.mrb[0].mxu0 %v8854
          %v9357 = vpop.f32.mrb[0].mxu0
          %v9358 = vadd.f32 %v8771, %v9357
          %v9359 = vpop.f32.mrb[0].mxu0
          %9360 = vmatprep.mubr.f32.mxu0 0.0
          %9361 = vmatmul.mubr.f32.gmra.mrb[0].mxu0 %v8857
          %v9362 = vpop.f32.mrb[0].mxu0
          %v9363 = vadd.f32 %v8771, %v9362
          %v9364 = vpop.f32.mrb[0].mxu0
          %9365 = vmatprep.mubr.f32.mxu0 0.0
          %9366 = vmatmul.mubr.f32.gmra.mrb[0].mxu0 %v8860
          %v9367 = vpop.f32.mrb[0].mxu0
          %v9368 = vadd.f32 %v8771, %v9367
          %v9369 = vpop.f32.mrb[0].mxu0
          %9370 = vmatprep.mubr.f32.mxu0 0.0
          %9371 = vmatmul.mubr.f32.gmra.mrb[0].mxu0 %v8863
          %v9372 = vpop.f32.mrb[0].mxu0
          %v9373 = vadd.f32 %v8771, %v9372
          %v9374 = vpop.f32.mrb[0].mxu0
          %9375 = vmatprep.mubr.f32.mxu0 0.0
          %9376 = vmatmul.mubr.f32.gmra.mrb[0].mxu0 %v8866
          %v9377 = vpop.f32.mrb[0].mxu0
          %v9378 = vadd.f32 %v8771, %v9377
          %v9379 = vpop.f32.mrb[0].mxu0
          %9380 = vmatprep.mubr.f32.mxu0 0.0
          %9381 = vmatmul.mubr.f32.gmra.mrb[0].mxu0 %v8869
          %v9382 = vpop.f32.mrb[0].mxu0
          %v9383 = vadd.f32 %v8771, %v9382
          %v9384 = vpop.f32.mrb[0].mxu0
          %9385 = vmatprep.mubr.f32.mxu0 0.0
          %9386 = vmatmul.mubr.f32.gmra.mrb[0].mxu0 %v8872
          %v9387 = vpop.f32.mrb[0].mxu0
          %v9388 = vadd.f32 %v8771, %v9387
          %v9389 = vpop.f32.mrb[0].mxu0
          %9390 = vmatprep.mubr.f32.mxu0 0.0
          %9391 = vmatmul.mubr.f32.gmra.mrb[0].mxu0 %v8875
          %v9392 = vpop.f32.mrb[0].mxu0
          %v9393 = vadd.f32 %v8771, %v9392
          %v9394 = vpop.f32.mrb[0].mxu0
          %9395 = vmatprep.mubr.f32.mxu0 0.0
          %9396 = vmatmul.mubr.f32.gmra.mrb[0].mxu0 %v8878
          %v9397 = vpop.f32.mrb[0].mxu0
          %v9398 = vadd.f32 %v8771, %v9397
          %v9399 = vpop.f32.mrb[0].mxu0
          %9400 = vmatprep.mubr.f32.mxu0 0.0
          %9401 = vmatmul.mubr.f32.gmra.mrb[0].mxu0 %v8881
          %v9402 = vpop.f32.mrb[0].mxu0
          %v9403 = vadd.f32 %v8771, %v9402
          %v9404 = vpop.f32.mrb[0].mxu0
          %9405 = vmatprep.mubr.f32.mxu0 0.0
          %9406 = vmatmul.mubr.f32.gmra.mrb[0].mxu0 %v8884
          %v9407 = vpop.f32.mrb[0].mxu0
          %v9408 = vadd.f32 %v8771, %v9407
          %v9409 = vpop.f32.mrb[0].mxu0
          %9410 = vmatprep.mubr.f32.mxu0 0.0
          %9411 = vmatmul.mubr.f32.gmra.mrb[0].mxu0 %v8887
          %v9412 = vpop.f32.mrb[0].mxu0
          %v9413 = vadd.f32 %v8771, %v9412
          %v9414 = vpop.f32.mrb[0].mxu0
          %9415 = vmatprep.mubr.f32.mxu0 0.0
          %9416 = vmatmul.mubr.f32.gmra.mrb[0].mxu0 %v8890
          %v9417 = vpop.f32.mrb[0].mxu0
          %v9418 = vadd.f32 %v8771, %v9417
          %v9419 = vpop.f32.mrb[0].mxu0
          %9420 = vmatprep.mubr.f32.mxu0 0.0
          %9421 = vmatmul.mubr.f32.gmra.mrb[0].mxu0 %v8893
          %v9422 = vpop.f32.mrb[0].mxu0
          %v9423 = vadd.f32 %v8771, %v9422
          %v9424 = vpop.f32.mrb[0].mxu0
          %9425 = vmatprep.mubr.f32.mxu0 0.0
          %9426 = vmatmul.mubr.f32.gmra.mrb[0].mxu0 %v8896
          %v9427 = vpop.f32.mrb[0].mxu0
          %v9428 = vadd.f32 %v8771, %v9427
          %v9429 = vpop.f32.mrb[0].mxu0
          %9430 = vmatprep.mubr.f32.mxu0 0.0
          %9431 = vmatmul.mubr.f32.gmra.mrb[0].mxu0 %v8899
          %v9432 = vpop.f32.mrb[0].mxu0
          %v9433 = vadd.f32 %v8771, %v9432
          %v9434 = vpop.f32.mrb[0].mxu0
          %9435 = vmatprep.mubr.f32.mxu0 0.0
          %9436 = vmatmul.mubr.f32.gmra.mrb[0].mxu0 %v8902
          %v9437 = vpop.f32.mrb[0].mxu0
          %v9438 = vadd.f32 %v8771, %v9437
          %v9439 = vpop.f32.mrb[0].mxu0
          %9440 = vmatprep.mubr.f32.mxu0 0.0
          %9441 = vmatmul.mubr.f32.gmra.mrb[0].mxu0 %v8905
          %v9442 = vpop.f32.mrb[0].mxu0
          %v9443 = vadd.f32 %v8771, %v9442
          %v9444 = vpop.f32.mrb[0].mxu0
          %9445 = vmatprep.mubr.f32.mxu0 0.0
          %9446 = vmatmul.mubr.f32.gmra.mrb[0].mxu0 %v8908
          %v9447 = vpop.f32.mrb[0].mxu0
          %v9448 = vadd.f32 %v8771, %v9447
          %v9449 = vpop.f32.mrb[0].mxu0
          %9450 = vmatprep.mubr.f32.mxu0 0.0
          %9451 = vmatmul.mubr.f32.gmra.mrb[0].mxu0 %v8911
          %v9452 = vpop.f32.mrb[0].mxu0
          %v9453 = vadd.f32 %v8771, %v9452
          %v9454 = vpop.f32.mrb[0].mxu0
          %9455 = vmatprep.mubr.f32.mxu0 0.0
          %9456 = vmatmul.mubr.f32.gmra.mrb[0].mxu0 %v8914
          %v9457 = vpop.f32.mrb[0].mxu0
          %v9458 = vadd.f32 %v8771, %v9457
          %v9459 = vpop.f32.mrb[0].mxu0
          %9460 = vmatprep.mubr.f32.mxu0 0.0
          %9461 = vmatmul.mubr.f32.gmra.mrb[0].mxu0 %v8917
          %v9462 = vpop.f32.mrb[0].mxu0
          %v9463 = vadd.f32 %v8771, %v9462
          %v9464 = vpop.f32.mrb[0].mxu0
          %9465 = vmatprep.mubr.f32.mxu0 0.0
          %9466 = vmatmul.mubr.f32.gmra.mrb[0].mxu0 %v8920
          %v9467 = vpop.f32.mrb[0].mxu0
          %v9468 = vadd.f32 %v8771, %v9467
          %v9469 = vpop.f32.mrb[0].mxu0
          %9470 = vmatprep.mubr.f32.mxu0 0.0
          %9471 = vmatmul.mubr.f32.gmra.mrb[0].mxu0 %v8923
          %v9472 = vpop.f32.mrb[0].mxu0
          %v9473 = vadd.f32 %v8771, %v9472
          %v9474 = vpop.f32.mrb[0].mxu0
          %9475 = vmatprep.mubr.f32.mxu0 0.0
          %9476 = vmatmul.mubr.f32.gmra.mrb[0].mxu0 %v8926
          %v9477 = vpop.f32.mrb[0].mxu0
          %v9478 = vadd.f32 %v8771, %v9477
          %v9479 = vpop.f32.mrb[0].mxu0
          %9480 = vmatprep.mubr.f32.mxu0 0.0
          %9481 = vmatmul.mubr.f32.gmra.mrb[0].mxu0 %v8929
          %v9482 = vpop.f32.mrb[0].mxu0
          %v9483 = vadd.f32 %v8771, %v9482
          %v9484 = vpop.f32.mrb[0].mxu0
          %9485 = vmatprep.mubr.f32.mxu0 0.0
          %9486 = vmatmul.mubr.f32.gmra.mrb[0].mxu0 %v8932
          %v9487 = vpop.f32.mrb[0].mxu0
          %v9488 = vadd.f32 %v8771, %v9487
          %v9489 = vpop.f32.mrb[0].mxu0
          %9490 = vmatprep.mubr.f32.mxu0 0.0
          %9491 = vmatmul.mubr.f32.gmra.mrb[0].mxu0 %v8935
          %v9492 = vpop.f32.mrb[0].mxu0
          %v9493 = vadd.f32 %v8771, %v9492
          %v9494 = vpop.f32.mrb[0].mxu0
          %9495 = vmatprep.mubr.f32.mxu0 0.0
          %9496 = vmatmul.mubr.f32.gmra.mrb[0].mxu0 %v8938
          %v9497 = vpop.f32.mrb[0].mxu0
          %v9498 = vadd.f32 %v8771, %v9497
          %v9499 = vpop.f32.mrb[0].mxu0
          %9500 = vmatprep.mubr.f32.mxu0 0.0
          %9501 = vmatmul.mubr.f32.gmra.mrb[0].mxu0 %v8941
          %v9502 = vpop.f32.mrb[0].mxu0
          %v9503 = vadd.f32 %v8771, %v9502
          %v9504 = vpop.f32.mrb[0].mxu0
          %9505 = vmatprep.mubr.f32.mxu0 0.0
          %9506 = vmatmul.mubr.f32.gmra.mrb[0].mxu0 %v8944
          %v9507 = vpop.f32.mrb[0].mxu0
          %v9508 = vadd.f32 %v8771, %v9507
          %v9509 = vpop.f32.mrb[0].mxu0
          %9510 = vmatprep.mubr.f32.mxu0 0.0
          %9511 = vmatmul.mubr.f32.gmra.mrb[0].mxu0 %v8947
          %v9512 = vpop.f32.mrb[0].mxu0
          %v9513 = vadd.f32 %v8771, %v9512
          %v9514 = vpop.f32.mrb[0].mxu0
          %9515 = vmatprep.mubr.f32.mxu0 0.0
          %9516 = vmatmul.mubr.f32.gmra.mrb[0].mxu0 %v8950
          %v9517 = vpop.f32.mrb[0].mxu0
          %v9518 = vadd.f32 %v8771, %v9517
          %v9519 = vpop.f32.mrb[0].mxu0
          %9520 = vmatprep.mubr.f32.mxu0 0.0
          %9521 = vmatmul.mubr.f32.gmra.mrb[0].mxu0 %v8953
          %v9522 = vpop.f32.mrb[0].mxu0
          %v9523 = vadd.f32 %v8771, %v9522
          %v9524 = vpop.f32.mrb[0].mxu0
          %9525 = vmatprep.mubr.f32.mxu0 0.0
          %9526 = vmatmul.mubr.f32.gmra.mrb[0].mxu0 %v8956
          %v9527 = vpop.f32.mrb[0].mxu0
          %v9528 = vadd.f32 %v8771, %v9527
          %v9529 = vpop.f32.mrb[0].mxu0
          %9530 = vmatprep.mubr.f32.mxu0 0.0
          %9531 = vmatmul.mubr.f32.gmra.mrb[0].mxu0 %v8959
          %v9532 = vpop.f32.mrb[0].mxu0
          %v9533 = vadd.f32 %v8771, %v9532
          %v9534 = vpop.f32.mrb[0].mxu0
          %9535 = vmatprep.mubr.f32.mxu0 0.0
          %9536 = vmatmul.mubr.f32.gmra.mrb[0].mxu0 %v8962
          %v9537 = vpop.f32.mrb[0].mxu0
          %v9538 = vadd.f32 %v8771, %v9537
          %v9539 = vpop.f32.mrb[0].mxu0
          %9540 = vmatprep.mubr.f32.mxu0 0.0
          %9541 = vmatmul.mubr.f32.gmra.mrb[0].mxu0 %v8965
          %v9542 = vpop.f32.mrb[0].mxu0
          %v9543 = vadd.f32 %v8771, %v9542
          %v9544 = vpop.f32.mrb[0].mxu0
          %9545 = vmatprep.mubr.f32.mxu0 0.0
          %9546 = vmatmul.mubr.f32.gmra.mrb[0].mxu0 %v8968
          %v9547 = vpop.f32.mrb[0].mxu0
          %v9548 = vadd.f32 %v8771, %v9547
          %v9549 = vpop.f32.mrb[0].mxu0
          %9550 = vmatprep.mubr.f32.mxu0 0.0
          %9551 = vmatmul.mubr.f32.gmra.mrb[0].mxu0 %v8971
          %v9552 = vpop.f32.mrb[0].mxu0
          %v9553 = vadd.f32 %v8771, %v9552
          %v9554 = vpop.f32.mrb[0].mxu0
          %9555 = vmatprep.mubr.f32.mxu0 0.0
          %9556 = vmatmul.mubr.f32.gmra.mrb[0].mxu0 %v8974
          %v9557 = vpop.f32.mrb[0].mxu0
          %v9558 = vadd.f32 %v8771, %v9557
          %v9559 = vpop.f32.mrb[0].mxu0
          %9560 = vmatprep.mubr.f32.mxu0 0.0
          %9561 = vmatmul.mubr.f32.gmra.mrb[0].mxu0 %v8977
          %v9562 = vpop.f32.mrb[0].mxu0
          %v9563 = vadd.f32 %v8771, %v9562
          %v9564 = vpop.f32.mrb[0].mxu0
          %9565 = vmatprep.mubr.f32.mxu0 0.0
          %9566 = vmatmul.mubr.f32.gmra.mrb[0].mxu0 %v8980
          %v9567 = vpop.f32.mrb[0].mxu0
          %v9568 = vadd.f32 %v8771, %v9567
          %v9569 = vpop.f32.mrb[0].mxu0
          %9570 = vmatprep.mubr.f32.mxu0 0.0
          %9571 = vmatmul.mubr.f32.gmra.mrb[0].mxu0 %v8983
          %v9572 = vpop.f32.mrb[0].mxu0
          %v9573 = vadd.f32 %v8771, %v9572
          %v9574 = vpop.f32.mrb[0].mxu0
          %9575 = vmatprep.mubr.f32.mxu0 0.0
          %9576 = vmatmul.mubr.f32.gmra.mrb[0].mxu0 %v8986
          %v9577 = vpop.f32.mrb[0].mxu0
          %v9578 = vadd.f32 %v8771, %v9577
          %v9579 = vpop.f32.mrb[0].mxu0
          %9580 = vmatprep.mubr.f32.mxu0 0.0
          %9581 = vmatmul.mubr.f32.gmra.mrb[0].mxu0 %v8989
          %v9582 = vpop.f32.mrb[0].mxu0
          %v9583 = vadd.f32 %v8771, %v9582
          %v9584 = vpop.f32.mrb[0].mxu0
          %9585 = vmatprep.mubr.f32.mxu0 0.0
          %9586 = vmatmul.mubr.f32.gmra.mrb[0].mxu0 %v8992
          %v9587 = vpop.f32.mrb[0].mxu0
          %v9588 = vadd.f32 %v8771, %v9587
          %v9589 = vpop.f32.mrb[0].mxu0
          %9590 = vmatprep.mubr.f32.mxu0 0.0
          %9591 = vmatmul.mubr.f32.gmra.mrb[0].mxu0 %v8995
          %v9592 = vpop.f32.mrb[0].mxu0
          %v9593 = vadd.f32 %v8771, %v9592
          %v9594 = vpop.f32.mrb[0].mxu0
          %9595 = vmatprep.mubr.f32.mxu0 0.0
          %9596 = vmatmul.mubr.f32.gmra.mrb[0].mxu0 %v8998
          %v9597 = vpop.f32.mrb[0].mxu0
          %v9598 = vadd.f32 %v8771, %v9597
          %v9599 = vpop.f32.mrb[0].mxu0
          %9600 = vmatprep.mubr.f32.mxu0 0.0
          %9601 = vmatmul.mubr.f32.gmra.mrb[0].mxu0 %v9001
          %v9602 = vpop.f32.mrb[0].mxu0
          %v9603 = vadd.f32 %v8771, %v9602
          %v9604 = vpop.f32.mrb[0].mxu0
          %9605 = vmatprep.mubr.f32.mxu0 0.0
          %9606 = vmatmul.mubr.f32.gmra.mrb[0].mxu0 %v9004
          %v9607 = vpop.f32.mrb[0].mxu0
          %v9608 = vadd.f32 %v8771, %v9607
          %v9609 = vpop.f32.mrb[0].mxu0
          %9610 = vmatprep.mubr.f32.mxu0 0.0
          %9611 = vmatmul.mubr.f32.gmra.mrb[0].mxu0 %v9007
          %v9612 = vpop.f32.mrb[0].mxu0
          %v9613 = vadd.f32 %v8771, %v9612
          %v9614 = vpop.f32.mrb[0].mxu0
          %9615 = vmatprep.mubr.f32.mxu0 0.0
          %9616 = vmatmul.mubr.f32.gmra.mrb[0].mxu0 %v9010
          %v9617 = vpop.f32.mrb[0].mxu0
          %v9618 = vadd.f32 %v8771, %v9617
          %v9619 = vpop.f32.mrb[0].mxu0
          %9620 = vmatprep.mubr.f32.mxu0 0.0
          %9621 = vmatmul.mubr.f32.gmra.mrb[0].mxu0 %v9013
          %v9622 = vpop.f32.mrb[0].mxu0
          %v9623 = vadd.f32 %v8771, %v9622
          %v9624 = vpop.f32.mrb[0].mxu0
          %9625 = vmatprep.mubr.f32.mxu0 0.0
          %9626 = vmatmul.mubr.f32.gmra.mrb[0].mxu0 %v9016
          %v9627 = vpop.f32.mrb[0].mxu0
          %v9628 = vadd.f32 %v8771, %v9627
          %v9629 = vpop.f32.mrb[0].mxu0
          %9630 = vmatprep.mubr.f32.mxu0 0.0
          %9631 = vmatmul.mubr.f32.gmra.mrb[0].mxu0 %v9019
          %v9632 = vpop.f32.mrb[0].mxu0
          %v9633 = vadd.f32 %v8771, %v9632
          %v9634 = vpop.f32.mrb[0].mxu0
          %9635 = vmatprep.mubr.f32.mxu0 0.0
          %9636 = vmatmul.mubr.f32.gmra.mrb[0].mxu0 %v9022
          %v9637 = vpop.f32.mrb[0].mxu0
          %v9638 = vadd.f32 %v8771, %v9637
          %v9639 = vpop.f32.mrb[0].mxu0
          %9640 = vmatprep.mubr.f32.mxu0 0.0
          %9641 = vmatmul.mubr.f32.gmra.mrb[0].mxu0 %v9025
          %v9642 = vpop.f32.mrb[0].mxu0
          %v9643 = vadd.f32 %v8771, %v9642
          %v9644 = vpop.f32.mrb[0].mxu0
          %9645 = vmatprep.mubr.f32.mxu0 0.0
          %9646 = vmatmul.mubr.f32.gmra.mrb[0].mxu0 %v9028
          %v9647 = vpop.f32.mrb[0].mxu0
          %v9648 = vadd.f32 %v8771, %v9647
          %v9649 = vpop.f32.mrb[0].mxu0
          %9650 = vmatprep.mubr.f32.mxu0 0.0
          %9651 = vmatmul.mubr.f32.gmra.mrb[0].mxu0 %v9031
          %v9652 = vpop.f32.mrb[0].mxu0
          %v9653 = vadd.f32 %v8771, %v9652
          %v9654 = vpop.f32.mrb[0].mxu0
          %9655 = vmatprep.mubr.f32.mxu0 0.0
          %9656 = vmatmul.mubr.f32.gmra.mrb[0].mxu0 %v9034
          %v9657 = vpop.f32.mrb[0].mxu0
          %v9658 = vadd.f32 %v8771, %v9657
          %v9659 = vpop.f32.mrb[0].mxu0
          %9660 = vmatprep.mubr.f32.mxu0 0.0
          %9661 = vmatmul.mubr.f32.gmra.mrb[0].mxu0 %v9037
          %v9662 = vpop.f32.mrb[0].mxu0
          %v9663 = vadd.f32 %v8771, %v9662
          %v9664 = vpop.f32.mrb[0].mxu0
          %9665 = vmatprep.mubr.f32.mxu0 0.0
          %9666 = vmatmul.mubr.f32.gmra.mrb[0].mxu0 %v9040
          %v9667 = vpop.f32.mrb[0].mxu0
          %v9668 = vadd.f32 %v8771, %v9667
          %v9669 = vpop.f32.mrb[0].mxu0
          %9670 = vmatprep.mubr.f32.mxu0 0.0
          %9671 = vmatmul.mubr.f32.gmra.mrb[0].mxu0 %v9043
          %v9672 = vpop.f32.mrb[0].mxu0
          %v9673 = vadd.f32 %v8771, %v9672
          %v9674 = vpop.f32.mrb[0].mxu0
          %9675 = vmatprep.mubr.f32.mxu0 0.0
          %9676 = vmatmul.mubr.f32.gmra.mrb[0].mxu0 %v9046
          %v9677 = vpop.f32.mrb[0].mxu0
          %v9678 = vadd.f32 %v8771, %v9677
          %v9679 = vpop.f32.mrb[0].mxu0
          %9680 = vmatprep.mubr.f32.mxu0 0.0
          %9681 = vmatmul.mubr.f32.gmra.mrb[0].mxu0 %v9049
          %v9682 = vpop.f32.mrb[0].mxu0
          %v9683 = vadd.f32 %v8771, %v9682
          %v9684 = vpop.f32.mrb[0].mxu0
          %9685 = vmatprep.mubr.f32.mxu0 0.0
          %9686 = vmatmul.mubr.f32.gmra.mrb[0].mxu0 %v9052
          %v9687 = vpop.f32.mrb[0].mxu0
          %v9688 = vadd.f32 %v8771, %v9687
          %v9689 = vpop.f32.mrb[0].mxu0
          %9690 = vmatprep.mubr.f32.mxu0 0.0
          %9691 = vmatmul.mubr.f32.gmra.mrb[0].mxu0 %v9055
          %v9692 = vpop.f32.mrb[0].mxu0
          %v9693 = vadd.f32 %v8771, %v9692
          %v9694 = vpop.f32.mrb[0].mxu0
          %9695 = vmatprep.mubr.f32.mxu0 0.0
          %9696 = vmatmul.mubr.f32.gmra.mrb[0].mxu0 %v9058
          %v9697 = vpop.f32.mrb[0].mxu0
          %v9698 = vadd.f32 %v8771, %v9697
          %v9699 = vpop.f32.mrb[0].mxu0
          %9700 = vmatprep.mubr.f32.mxu0 0.0
          %9701 = vmatmul.mubr.f32.gmra.mrb[0].mxu0 %v9061
          %v9702 = vpop.f32.mrb[0].mxu0
          %v9703 = vadd.f32 %v8771, %v9702
          %v9704 = vpop.f32.mrb[0].mxu0
          %9705 = vmatprep.mubr.f32.mxu0 0.0
          %9706 = vmatmul.mubr.f32.gmra.mrb[0].mxu0 %v9064
          %v9707 = vpop.f32.mrb[0].mxu0
          %v9708 = vadd.f32 %v8771, %v9707
          %v9709 = vpop.f32.mrb[0].mxu0
          %9710 = vmatprep.mubr.f32.mxu0 0.0
          %9711 = vmatmul.mubr.f32.gmra.mrb[0].mxu0 %v9067
          %v9712 = vpop.f32.mrb[0].mxu0
          %v9713 = vadd.f32 %v8771, %v9712
          %v9714 = vpop.f32.mrb[0].mxu0
          %9715 = vmatprep.mubr.f32.mxu0 0.0
          %9716 = vmatmul.mubr.f32.gmra.mrb[0].mxu0 %v9070
          %v9717 = vpop.f32.mrb[0].mxu0
          %v9718 = vadd.f32 %v8771, %v9717
          %v9719 = vpop.f32.mrb[0].mxu0
          %9720 = vmatprep.mubr.f32.mxu0 0.0
          %9721 = vmatmul.mubr.f32.gmra.mrb[0].mxu0 %v9073
          %v9722 = vpop.f32.mrb[0].mxu0
          %v9723 = vadd.f32 %v8771, %v9722
          %v9724 = vpop.f32.mrb[0].mxu0
          %9725 = vmatprep.mubr.f32.mxu0 0.0
          %9726 = vmatmul.mubr.f32.gmra.mrb[0].mxu0 %v9076
          %v9727 = vpop.f32.mrb[0].mxu0
          %v9728 = vadd.f32 %v8771, %v9727
          %v9729 = vpop.f32.mrb[0].mxu0
          %9730 = vmatprep.mubr.f32.mxu0 0.0
          %9731 = vmatmul.mubr.f32.gmra.mrb[0].mxu0 %v9079
          %v9732 = vpop.f32.mrb[0].mxu0
          %v9733 = vadd.f32 %v8771, %v9732
          %v9734 = vpop.f32.mrb[0].mxu0
          %9735 = vmatprep.mubr.f32.mxu0 0.0
          %9736 = vmatmul.mubr.f32.gmra.mrb[0].mxu0 %v9082
          %v9737 = vpop.f32.mrb[0].mxu0
          %v9738 = vadd.f32 %v8771, %v9737
          %v9739 = vpop.f32.mrb[0].mxu0
          %9740 = vmatprep.mubr.f32.mxu0 0.0
          %9741 = vmatmul.mubr.f32.gmra.mrb[0].mxu0 %v9085
          %v9742 = vpop.f32.mrb[0].mxu0
          %v9743 = vadd.f32 %v8771, %v9742
          %v9744 = vpop.f32.mrb[0].mxu0
          %9745 = vmatprep.mubr.f32.mxu0 0.0
          %9746 = vmatmul.mubr.f32.gmra.mrb[0].mxu0 %v9088
          %v9747 = vpop.f32.mrb[0].mxu0
          %v9748 = vadd.f32 %v8771, %v9747
          %v9749 = vpop.f32.mrb[0].mxu0
          %9750 = vmatprep.mubr.f32.mxu0 0.0
          %9751 = vmatmul.mubr.f32.gmra.mrb[0].mxu0 %v9091
          %v9752 = vpop.f32.mrb[0].mxu0
          %v9753 = vadd.f32 %v8771, %v9752
          %v9754 = vpop.f32.mrb[0].mxu0
          %9755 = vmatprep.mubr.f32.mxu0 0.0
          %9756 = vmatmul.mubr.f32.gmra.mrb[0].mxu0 %v9094
          %v9757 = vpop.f32.mrb[0].mxu0
          %v9758 = vadd.f32 %v8771, %v9757
          %v9759 = vpop.f32.mrb[0].mxu0
          %9760 = vmatprep.mubr.f32.mxu0 0.0
          %9761 = vmatmul.mubr.f32.gmra.mrb[0].mxu0 %v9097
          %v9762 = vpop.f32.mrb[0].mxu0
          %v9763 = vadd.f32 %v8771, %v9762
          %v9764 = vpop.f32.mrb[0].mxu0
          %9765 = vmatprep.mubr.f32.mxu0 0.0
          %9766 = vmatmul.mubr.f32.gmra.mrb[0].mxu0 %v9100
          %v9767 = vpop.f32.mrb[0].mxu0
          %v9768 = vadd.f32 %v8771, %v9767
          %v9769 = vpop.f32.mrb[0].mxu0
          %9770 = vmatprep.mubr.f32.mxu0 0.0
          %9771 = vmatmul.mubr.f32.gmra.mrb[0].mxu0 %v9103
          %v9772 = vpop.f32.mrb[0].mxu0
          %v9773 = vadd.f32 %v8771, %v9772
          %v9774 = vpop.f32.mrb[0].mxu0
          %9775 = vmatprep.mubr.f32.mxu0 0.0
          %9776 = vmatmul.mubr.f32.gmra.mrb[0].mxu0 %v9106
          %v9777 = vpop.f32.mrb[0].mxu0
          %v9778 = vadd.f32 %v8771, %v9777
          %v9779 = vpop.f32.mrb[0].mxu0
          %9780 = vmatprep.mubr.f32.mxu0 0.0
          %9781 = vmatmul.mubr.f32.gmra.mrb[0].mxu0 %v9109
          %v9782 = vpop.f32.mrb[0].mxu0
          %v9783 = vadd.f32 %v8771, %v9782
          %v9784 = vpop.f32.mrb[0].mxu0
          %9785 = vmatprep.mubr.f32.mxu0 0.0
          %9786 = vmatmul.mubr.f32.gmra.mrb[0].mxu0 %v9112
          %v9787 = vpop.f32.mrb[0].mxu0
          %v9788 = vadd.f32 %v8771, %v9787
          %v9789 = vpop.f32.mrb[0].mxu0
          %9790 = vmatprep.mubr.f32.mxu0 0.0
          %9791 = vmatmul.mubr.f32.gmra.mrb[0].mxu0 %v9115
          %v9792 = vpop.f32.mrb[0].mxu0
          %v9793 = vadd.f32 %v8771, %v9792
          %v9794 = vpop.f32.mrb[0].mxu0
          %9795 = vmatprep.mubr.f32.mxu0 0.0
          %9796 = vmatmul.mubr.f32.gmra.mrb[0].mxu0 %v9118
          %v9797 = vpop.f32.mrb[0].mxu0
          %v9798 = vadd.f32 %v8771, %v9797
          %v9799 = vpop.f32.mrb[0].mxu0
          %9800 = vmatprep.mubr.f32.mxu0 0.0
          %9801 = vmatmul.mubr.f32.gmra.mrb[0].mxu0 %v9121
          %v9802 = vpop.f32.mrb[0].mxu0
          %v9803 = vadd.f32 %v8771, %v9802
          %v9804 = vpop.f32.mrb[0].mxu0
          %9805 = vmatprep.mubr.f32.mxu0 0.0
          %9806 = vmatmul.mubr.f32.gmra.mrb[0].mxu0 %v9124
          %v9807 = vpop.f32.mrb[0].mxu0
          %v9808 = vadd.f32 %v8771, %v9807
          %v9809 = vpop.f32.mrb[0].mxu0
          %9810 = vmatprep.mubr.f32.mxu0 0.0
          %9811 = vmatmul.mubr.f32.gmra.mrb[0].mxu0 %v9127
          %v9812 = vpop.f32.mrb[0].mxu0
          %v9813 = vadd.f32 %v8771, %v9812
          %v9814 = vpop.f32.mrb[0].mxu0
          %9815 = vmatprep.mubr.f32.mxu0 0.0
          %9816 = vmatmul.mubr.f32.gmra.mrb[0].mxu0 %v9130
          %v9817 = vpop.f32.mrb[0].mxu0
          %v9818 = vadd.f32 %v8771, %v9817
          %v9819 = vpop.f32.mrb[0].mxu0
          %9820 = vmatprep.mubr.f32.mxu0 0.0
          %9821 = vmatmul.mubr.f32.gmra.mrb[0].mxu0 %v9133
          %v9822 = vpop.f32.mrb[0].mxu0
          %v9823 = vadd.f32 %v8771, %v9822
          %v9824 = vpop.f32.mrb[0].mxu0
          %9825 = vmatprep.mubr.f32.mxu0 0.0
          %9826 = vmatmul.mubr.f32.gmra.mrb[0].mxu0 %v9136
          %v9827 = vpop.f32.mrb[0].mxu0
          %v9828 = vadd.f32 %v8771, %v9827
          %v9829 = vpop.f32.mrb[0].mxu0
          %9830 = vmatprep.mubr.f32.mxu0 0.0
          %9831 = vmatmul.mubr.f32.gmra.mrb[0].mxu0 %v9139
          %v9832 = vpop.f32.mrb[0].mxu0
          %v9833 = vadd.f32 %v8771, %v9832
          %v9834 = vpop.f32.mrb[0].mxu0
          %9835 = vmatprep.mubr.f32.mxu0 0.0
          %9836 = vmatmul.mubr.f32.gmra.mrb[0].mxu0 %v9142
          %v9837 = vpop.f32.mrb[0].mxu0
          %v9838 = vadd.f32 %v8771, %v9837
          %v9839 = vpop.f32.mrb[0].mxu0
          %9840 = vmatprep.mubr.f32.mxu0 0.0
          %9841 = vmatmul.mubr.f32.gmra.mrb[0].mxu0 %v9145
          %v9842 = vpop.f32.mrb[0].mxu0
          %v9843 = vadd.f32 %v8771, %v9842
          %v9844 = vpop.f32.mrb[0].mxu0
          %9845 = vmatprep.mubr.f32.mxu0 0.0
          %9846 = vmatmul.mubr.f32.gmra.mrb[0].mxu0 %v9148
          %v9847 = vpop.f32.mrb[0].mxu0
          %v9848 = vadd.f32 %v8771, %v9847
          %v9849 = vpop.f32.mrb[0].mxu0
          %9850 = vmatprep.mubr.f32.mxu0 0.0
          %9851 = vmatmul.mubr.f32.gmra.mrb[0].mxu0 %v9151
          %v9852 = vpop.f32.mrb[0].mxu0
          %v9853 = vadd.f32 %v8771, %v9852
          %v9854 = vpop.f32.mrb[0].mxu0
          %9855 = vmatprep.mubr.f32.mxu0 0.0
          %9856 = vmatmul.mubr.f32.gmra.mrb[0].mxu0 %v9154
          %v9857 = vpop.f32.mrb[0].mxu0
          %v9858 = vadd.f32 %v8771, %v9857
          %v9859 = vpop.f32.mrb[0].mxu0
          %9860 = vdwg.mxu0
          %v9861 = vmax.f32 %v9223, 0.0
          %v9862 = vmax.f32 %v9228, 0.0
          %v9863 = vmax.f32 %v9233, 0.0
          %v9864 = vmax.f32 %v9238, 0.0
          %v9865 = vmax.f32 %v9243, 0.0
          %v9866 = vmax.f32 %v9248, 0.0
          %v9867 = vmax.f32 %v9253, 0.0
          %v9868 = vmax.f32 %v9258, 0.0
          %v9869 = vmax.f32 %v9263, 0.0
          %v9870 = vmax.f32 %v9268, 0.0
          %v9871 = vmax.f32 %v9273, 0.0
          %v9872 = vmax.f32 %v9278, 0.0
          %v9873 = vmax.f32 %v9283, 0.0
          %v9874 = vmax.f32 %v9288, 0.0
          %v9875 = vmax.f32 %v9293, 0.0
          %v9876 = vmax.f32 %v9298, 0.0
          %v9877 = vmax.f32 %v9303, 0.0
          %v9878 = vmax.f32 %v9308, 0.0
          %v9879 = vmax.f32 %v9313, 0.0
          %v9880 = vmax.f32 %v9318, 0.0
          %v9881 = vmax.f32 %v9323, 0.0
          %v9882 = vmax.f32 %v9328, 0.0
          %v9883 = vmax.f32 %v9333, 0.0
          %v9884 = vmax.f32 %v9338, 0.0
          %v9885 = vmax.f32 %v9343, 0.0
          %v9886 = vmax.f32 %v9348, 0.0
          %v9887 = vmax.f32 %v9353, 0.0
          %v9888 = vmax.f32 %v9358, 0.0
          %v9889 = vmax.f32 %v9363, 0.0
          %v9890 = vmax.f32 %v9368, 0.0
          %v9891 = vmax.f32 %v9373, 0.0
          %v9892 = vmax.f32 %v9378, 0.0
          %v9893 = vmax.f32 %v9383, 0.0
          %v9894 = vmax.f32 %v9388, 0.0
          %v9895 = vmax.f32 %v9393, 0.0
          %v9896 = vmax.f32 %v9398, 0.0
          %v9897 = vmax.f32 %v9403, 0.0
          %v9898 = vmax.f32 %v9408, 0.0
          %v9899 = vmax.f32 %v9413, 0.0
          %v9900 = vmax.f32 %v9418, 0.0
          %v9901 = vmax.f32 %v9423, 0.0
          %v9902 = vmax.f32 %v9428, 0.0
          %v9903 = vmax.f32 %v9433, 0.0
          %v9904 = vmax.f32 %v9438, 0.0
          %v9905 = vmax.f32 %v9443, 0.0
          %v9906 = vmax.f32 %v9448, 0.0
          %v9907 = vmax.f32 %v9453, 0.0
          %v9908 = vmax.f32 %v9458, 0.0
          %v9909 = vmax.f32 %v9463, 0.0
          %v9910 = vmax.f32 %v9468, 0.0
          %v9911 = vmax.f32 %v9473, 0.0
          %v9912 = vmax.f32 %v9478, 0.0
          %v9913 = vmax.f32 %v9483, 0.0
          %v9914 = vmax.f32 %v9488, 0.0
          %v9915 = vmax.f32 %v9493, 0.0
          %v9916 = vmax.f32 %v9498, 0.0
          %v9917 = vmax.f32 %v9503, 0.0
          %v9918 = vmax.f32 %v9508, 0.0
          %v9919 = vmax.f32 %v9513, 0.0
          %v9920 = vmax.f32 %v9518, 0.0
          %v9921 = vmax.f32 %v9523, 0.0
          %v9922 = vmax.f32 %v9528, 0.0
          %v9923 = vmax.f32 %v9533, 0.0
          %v9924 = vmax.f32 %v9538, 0.0
          %v9925 = vmax.f32 %v9543, 0.0
          %v9926 = vmax.f32 %v9548, 0.0
          %v9927 = vmax.f32 %v9553, 0.0
          %v9928 = vmax.f32 %v9558, 0.0
          %v9929 = vmax.f32 %v9563, 0.0
          %v9930 = vmax.f32 %v9568, 0.0
          %v9931 = vmax.f32 %v9573, 0.0
          %v9932 = vmax.f32 %v9578, 0.0
          %v9933 = vmax.f32 %v9583, 0.0
          %v9934 = vmax.f32 %v9588, 0.0
          %v9935 = vmax.f32 %v9593, 0.0
          %v9936 = vmax.f32 %v9598, 0.0
          %v9937 = vmax.f32 %v9603, 0.0
          %v9938 = vmax.f32 %v9608, 0.0
          %v9939 = vmax.f32 %v9613, 0.0
          %v9940 = vmax.f32 %v9618, 0.0
          %v9941 = vmax.f32 %v9623, 0.0
          %v9942 = vmax.f32 %v9628, 0.0
          %v9943 = vmax.f32 %v9633, 0.0
          %v9944 = vmax.f32 %v9638, 0.0
          %v9945 = vmax.f32 %v9643, 0.0
          %v9946 = vmax.f32 %v9648, 0.0
          %v9947 = vmax.f32 %v9653, 0.0
          %v9948 = vmax.f32 %v9658, 0.0
          %v9949 = vmax.f32 %v9663, 0.0
          %v9950 = vmax.f32 %v9668, 0.0
          %v9951 = vmax.f32 %v9673, 0.0
          %v9952 = vmax.f32 %v9678, 0.0
          %v9953 = vmax.f32 %v9683, 0.0
          %v9954 = vmax.f32 %v9688, 0.0
          %v9955 = vmax.f32 %v9693, 0.0
          %v9956 = vmax.f32 %v9698, 0.0
          %v9957 = vmax.f32 %v9703, 0.0
          %v9958 = vmax.f32 %v9708, 0.0
          %v9959 = vmax.f32 %v9713, 0.0
          %v9960 = vmax.f32 %v9718, 0.0
          %v9961 = vmax.f32 %v9723, 0.0
          %v9962 = vmax.f32 %v9728, 0.0
          %v9963 = vmax.f32 %v9733, 0.0
          %v9964 = vmax.f32 %v9738, 0.0
          %v9965 = vmax.f32 %v9743, 0.0
          %v9966 = vmax.f32 %v9748, 0.0
          %v9967 = vmax.f32 %v9753, 0.0
          %v9968 = vmax.f32 %v9758, 0.0
          %v9969 = vmax.f32 %v9763, 0.0
          %v9970 = vmax.f32 %v9768, 0.0
          %v9971 = vmax.f32 %v9773, 0.0
          %v9972 = vmax.f32 %v9778, 0.0
          %v9973 = vmax.f32 %v9783, 0.0
          %v9974 = vmax.f32 %v9788, 0.0
          %v9975 = vmax.f32 %v9793, 0.0
          %v9976 = vmax.f32 %v9798, 0.0
          %v9977 = vmax.f32 %v9803, 0.0
          %v9978 = vmax.f32 %v9808, 0.0
          %v9979 = vmax.f32 %v9813, 0.0
          %v9980 = vmax.f32 %v9818, 0.0
          %v9981 = vmax.f32 %v9823, 0.0
          %v9982 = vmax.f32 %v9828, 0.0
          %v9983 = vmax.f32 %v9833, 0.0
          %v9984 = vmax.f32 %v9838, 0.0
          %v9985 = vmax.f32 %v9843, 0.0
          %v9986 = vmax.f32 %v9848, 0.0
          %v9987 = vmax.f32 %v9853, 0.0
          %v9988 = vmax.f32 %v9858, 0.0
          %v9989 = vld [vmem:[%s8] sm:$0xff]
          %9990 = vset.pattern.permute.xlu0 1
          %9991 = vperm.xlu0 %9990, %v2496
          %v9992 = vpop.permute.xlu0 %9991
          %v9995 = vsel %vm5194, %v9989, 0
          %v9998 = vsel %vm5194, %v9861, 0
          %v10001 = vsel %vm5194, %v9862, 0
          %v10004 = vsel %vm5194, %v9863, 0
          %v10007 = vsel %vm5194, %v9864, 0
          %v10010 = vsel %vm5194, %v9865, 0
          %v10013 = vsel %vm5194, %v9866, 0
          %v10016 = vsel %vm5194, %v9867, 0
          %v10019 = vsel %vm5194, %v9868, 0
          %v10022 = vsel %vm5194, %v9869, 0
          %v10025 = vsel %vm5194, %v9870, 0
          %v10028 = vsel %vm5194, %v9871, 0
          %v10031 = vsel %vm5194, %v9872, 0
          %v10034 = vsel %vm5194, %v9873, 0
          %v10037 = vsel %vm5194, %v9874, 0
          %v10040 = vsel %vm5194, %v9875, 0
          %v10043 = vsel %vm5194, %v9876, 0
          %v10046 = vsel %vm5194, %v9877, 0
          %v10049 = vsel %vm5194, %v9878, 0
          %v10052 = vsel %vm5194, %v9879, 0
          %v10055 = vsel %vm5194, %v9880, 0
          %v10058 = vsel %vm5194, %v9881, 0
          %v10061 = vsel %vm5194, %v9882, 0
          %v10064 = vsel %vm5194, %v9883, 0
          %v10067 = vsel %vm5194, %v9884, 0
          %v10070 = vsel %vm5194, %v9885, 0
          %v10073 = vsel %vm5194, %v9886, 0
          %v10076 = vsel %vm5194, %v9887, 0
          %v10079 = vsel %vm5194, %v9888, 0
          %v10082 = vsel %vm5194, %v9889, 0
          %v10085 = vsel %vm5194, %v9890, 0
          %v10088 = vsel %vm5194, %v9891, 0
          %v10091 = vsel %vm5194, %v9892, 0
          %v10094 = vsel %vm5194, %v9893, 0
          %v10097 = vsel %vm5194, %v9894, 0
          %v10100 = vsel %vm5194, %v9895, 0
          %v10103 = vsel %vm5194, %v9896, 0
          %v10106 = vsel %vm5194, %v9897, 0
          %v10109 = vsel %vm5194, %v9898, 0
          %v10112 = vsel %vm5194, %v9899, 0
          %v10115 = vsel %vm5194, %v9900, 0
          %v10118 = vsel %vm5194, %v9901, 0
          %v10121 = vsel %vm5194, %v9902, 0
          %v10124 = vsel %vm5194, %v9903, 0
          %v10127 = vsel %vm5194, %v9904, 0
          %v10130 = vsel %vm5194, %v9905, 0
          %v10133 = vsel %vm5194, %v9906, 0
          %v10136 = vsel %vm5194, %v9907, 0
          %v10139 = vsel %vm5194, %v9908, 0
          %v10142 = vsel %vm5194, %v9909, 0
          %v10145 = vsel %vm5194, %v9910, 0
          %v10148 = vsel %vm5194, %v9911, 0
          %v10151 = vsel %vm5194, %v9912, 0
          %v10154 = vsel %vm5194, %v9913, 0
          %v10157 = vsel %vm5194, %v9914, 0
          %v10160 = vsel %vm5194, %v9915, 0
          %v10163 = vsel %vm5194, %v9916, 0
          %v10166 = vsel %vm5194, %v9917, 0
          %v10169 = vsel %vm5194, %v9918, 0
          %v10172 = vsel %vm5194, %v9919, 0
          %v10175 = vsel %vm5194, %v9920, 0
          %v10178 = vsel %vm5194, %v9921, 0
          %v10181 = vsel %vm5194, %v9922, 0
          %v10184 = vsel %vm5194, %v9923, 0
          %v10187 = vsel %vm5194, %v9924, 0
          %v10190 = vsel %vm5194, %v9925, 0
          %v10193 = vsel %vm5194, %v9926, 0
          %v10196 = vsel %vm5194, %v9927, 0
          %v10199 = vsel %vm5194, %v9928, 0
          %v10202 = vsel %vm5194, %v9929, 0
          %v10205 = vsel %vm5194, %v9930, 0
          %v10208 = vsel %vm5194, %v9931, 0
          %v10211 = vsel %vm5194, %v9932, 0
          %v10214 = vsel %vm5194, %v9933, 0
          %v10217 = vsel %vm5194, %v9934, 0
          %v10220 = vsel %vm5194, %v9935, 0
          %v10223 = vsel %vm5194, %v9936, 0
          %v10226 = vsel %vm5194, %v9937, 0
          %v10229 = vsel %vm5194, %v9938, 0
          %v10232 = vsel %vm5194, %v9939, 0
          %v10235 = vsel %vm5194, %v9940, 0
          %v10238 = vsel %vm5194, %v9941, 0
          %v10241 = vsel %vm5194, %v9942, 0
          %v10244 = vsel %vm5194, %v9943, 0
          %v10247 = vsel %vm5194, %v9944, 0
          %v10250 = vsel %vm5194, %v9945, 0
          %v10253 = vsel %vm5194, %v9946, 0
          %v10256 = vsel %vm5194, %v9947, 0
          %v10259 = vsel %vm5194, %v9948, 0
          %v10262 = vsel %vm5194, %v9949, 0
          %v10265 = vsel %vm5194, %v9950, 0
          %v10268 = vsel %vm5194, %v9951, 0
          %v10271 = vsel %vm5194, %v9952, 0
          %v10274 = vsel %vm5194, %v9953, 0
          %v10277 = vsel %vm5194, %v9954, 0
          %v10280 = vsel %vm5194, %v9955, 0
          %v10283 = vsel %vm5194, %v9956, 0
          %v10286 = vsel %vm5194, %v9957, 0
          %v10289 = vsel %vm5194, %v9958, 0
          %v10292 = vsel %vm5194, %v9959, 0
          %v10295 = vsel %vm5194, %v9960, 0
          %v10298 = vsel %vm5194, %v9961, 0
          %v10301 = vsel %vm5194, %v9962, 0
          %v10304 = vsel %vm5194, %v9963, 0
          %v10307 = vsel %vm5194, %v9964, 0
          %v10310 = vsel %vm5194, %v9965, 0
          %v10313 = vsel %vm5194, %v9966, 0
          %v10316 = vsel %vm5194, %v9967, 0
          %v10319 = vsel %vm5194, %v9968, 0
          %v10322 = vsel %vm5194, %v9969, 0
          %v10325 = vsel %vm5194, %v9970, 0
          %v10328 = vsel %vm5194, %v9971, 0
          %v10331 = vsel %vm5194, %v9972, 0
          %v10334 = vsel %vm5194, %v9973, 0
          %v10337 = vsel %vm5194, %v9974, 0
          %v10340 = vsel %vm5194, %v9975, 0
          %v10343 = vsel %vm5194, %v9976, 0
          %v10346 = vsel %vm5194, %v9977, 0
          %v10349 = vsel %vm5194, %v9978, 0
          %v10352 = vsel %vm5194, %v9979, 0
          %v10355 = vsel %vm5194, %v9980, 0
          %v10358 = vsel %vm5194, %v9981, 0
          %v10361 = vsel %vm5194, %v9982, 0
          %v10364 = vsel %vm5194, %v9983, 0
          %v10367 = vsel %vm5194, %v9984, 0
          %v10370 = vsel %vm5194, %v9985, 0
          %v10373 = vsel %vm5194, %v9986, 0
          %v10376 = vsel %vm5194, %v9987, 0
          %v10379 = vsel %vm5194, %v9988, 0
          %10381 = vmatprep.subr.mxu0 0.0
          %10382 = vmatpush1.xpose.msra.mxu0 %v9998
          %10383 = vmatprep.subr.mxu0 0.0
          %10384 = vmatpush1.xpose.msra.mxu0 %v10001
          %10385 = vmatprep.subr.mxu0 0.0
          %10386 = vmatpush1.xpose.msra.mxu0 %v10004
          %10387 = vmatprep.subr.mxu0 0.0
          %10388 = vmatpush1.xpose.msra.mxu0 %v10007
          %10389 = vmatprep.subr.mxu0 0.0
          %10390 = vmatpush1.xpose.msra.mxu0 %v10010
          %10391 = vmatprep.subr.mxu0 0.0
          %10392 = vmatpush1.xpose.msra.mxu0 %v10013
          %10393 = vmatprep.subr.mxu0 0.0
          %10394 = vmatpush1.xpose.msra.mxu0 %v10016
          %10395 = vmatprep.subr.mxu0 0.0
          %10396 = vmatpush1.xpose.msra.mxu0 %v10019
          %10397 = vmatprep.subr.mxu0 0.0
          %10398 = vmatpush1.xpose.msra.mxu0 %v10022
          %10399 = vmatprep.subr.mxu0 0.0
          %10400 = vmatpush1.xpose.msra.mxu0 %v10025
          %10401 = vmatprep.subr.mxu0 0.0
          %10402 = vmatpush1.xpose.msra.mxu0 %v10028
          %10403 = vmatprep.subr.mxu0 0.0
          %10404 = vmatpush1.xpose.msra.mxu0 %v10031
          %10405 = vmatprep.subr.mxu0 0.0
          %10406 = vmatpush1.xpose.msra.mxu0 %v10034
          %10407 = vmatprep.subr.mxu0 0.0
          %10408 = vmatpush1.xpose.msra.mxu0 %v10037
          %10409 = vmatprep.subr.mxu0 0.0
          %10410 = vmatpush1.xpose.msra.mxu0 %v10040
          %10411 = vmatprep.subr.mxu0 0.0
          %10412 = vmatpush1.xpose.msra.mxu0 %v10043
          %10413 = vmatprep.subr.mxu0 0.0
          %10414 = vmatpush1.xpose.msra.mxu0 %v10046
          %10415 = vmatprep.subr.mxu0 0.0
          %10416 = vmatpush1.xpose.msra.mxu0 %v10049
          %10417 = vmatprep.subr.mxu0 0.0
          %10418 = vmatpush1.xpose.msra.mxu0 %v10052
          %10419 = vmatprep.subr.mxu0 0.0
          %10420 = vmatpush1.xpose.msra.mxu0 %v10055
          %10421 = vmatprep.subr.mxu0 0.0
          %10422 = vmatpush1.xpose.msra.mxu0 %v10058
          %10423 = vmatprep.subr.mxu0 0.0
          %10424 = vmatpush1.xpose.msra.mxu0 %v10061
          %10425 = vmatprep.subr.mxu0 0.0
          %10426 = vmatpush1.xpose.msra.mxu0 %v10064
          %10427 = vmatprep.subr.mxu0 0.0
          %10428 = vmatpush1.xpose.msra.mxu0 %v10067
          %10429 = vmatprep.subr.mxu0 0.0
          %10430 = vmatpush1.xpose.msra.mxu0 %v10070
          %10431 = vmatprep.subr.mxu0 0.0
          %10432 = vmatpush1.xpose.msra.mxu0 %v10073
          %10433 = vmatprep.subr.mxu0 0.0
          %10434 = vmatpush1.xpose.msra.mxu0 %v10076
          %10435 = vmatprep.subr.mxu0 0.0
          %10436 = vmatpush1.xpose.msra.mxu0 %v10079
          %10437 = vmatprep.subr.mxu0 0.0
          %10438 = vmatpush1.xpose.msra.mxu0 %v10082
          %10439 = vmatprep.subr.mxu0 0.0
          %10440 = vmatpush1.xpose.msra.mxu0 %v10085
          %10441 = vmatprep.subr.mxu0 0.0
          %10442 = vmatpush1.xpose.msra.mxu0 %v10088
          %10443 = vmatprep.subr.mxu0 0.0
          %10444 = vmatpush1.xpose.msra.mxu0 %v10091
          %10445 = vmatprep.mubr.f32.mxu0 0.0
          %10446 = vmatmul.mubr.f32.gmra.mrb[0].mxu0 %v9995
          %v10447 = vpop.f32.mrb[0].mxu0
          %v10448 = vadd.f32 %v9992, %v10447
          %v10449 = vpop.f32.mrb[0].mxu0
          %v10450 = vadd.f32 %v9992, %v10449
          %10451 = vdwg.mxu0
          %10452 = vmatprep.subr.mxu0 0.0
          %10453 = vmatpush1.xpose.msra.mxu0 %v10094
          %10454 = vmatprep.subr.mxu0 0.0
          %10455 = vmatpush1.xpose.msra.mxu0 %v10097
          %10456 = vmatprep.subr.mxu0 0.0
          %10457 = vmatpush1.xpose.msra.mxu0 %v10100
          %10458 = vmatprep.subr.mxu0 0.0
          %10459 = vmatpush1.xpose.msra.mxu0 %v10103
          %10460 = vmatprep.subr.mxu0 0.0
          %10461 = vmatpush1.xpose.msra.mxu0 %v10106
          %10462 = vmatprep.subr.mxu0 0.0
          %10463 = vmatpush1.xpose.msra.mxu0 %v10109
          %10464 = vmatprep.subr.mxu0 0.0
          %10465 = vmatpush1.xpose.msra.mxu0 %v10112
          %10466 = vmatprep.subr.mxu0 0.0
          %10467 = vmatpush1.xpose.msra.mxu0 %v10115
          %10468 = vmatprep.subr.mxu0 0.0
          %10469 = vmatpush1.xpose.msra.mxu0 %v10118
          %10470 = vmatprep.subr.mxu0 0.0
          %10471 = vmatpush1.xpose.msra.mxu0 %v10121
          %10472 = vmatprep.subr.mxu0 0.0
          %10473 = vmatpush1.xpose.msra.mxu0 %v10124
          %10474 = vmatprep.subr.mxu0 0.0
          %10475 = vmatpush1.xpose.msra.mxu0 %v10127
          %10476 = vmatprep.subr.mxu0 0.0
          %10477 = vmatpush1.xpose.msra.mxu0 %v10130
          %10478 = vmatprep.subr.mxu0 0.0
          %10479 = vmatpush1.xpose.msra.mxu0 %v10133
          %10480 = vmatprep.subr.mxu0 0.0
          %10481 = vmatpush1.xpose.msra.mxu0 %v10136
          %10482 = vmatprep.subr.mxu0 0.0
          %10483 = vmatpush1.xpose.msra.mxu0 %v10139
          %10484 = vmatprep.subr.mxu0 0.0
          %10485 = vmatpush1.xpose.msra.mxu0 %v10142
          %10486 = vmatprep.subr.mxu0 0.0
          %10487 = vmatpush1.xpose.msra.mxu0 %v10145
          %10488 = vmatprep.subr.mxu0 0.0
          %10489 = vmatpush1.xpose.msra.mxu0 %v10148
          %10490 = vmatprep.subr.mxu0 0.0
          %10491 = vmatpush1.xpose.msra.mxu0 %v10151
          %10492 = vmatprep.subr.mxu0 0.0
          %10493 = vmatpush1.xpose.msra.mxu0 %v10154
          %10494 = vmatprep.subr.mxu0 0.0
          %10495 = vmatpush1.xpose.msra.mxu0 %v10157
          %10496 = vmatprep.subr.mxu0 0.0
          %10497 = vmatpush1.xpose.msra.mxu0 %v10160
          %10498 = vmatprep.subr.mxu0 0.0
          %10499 = vmatpush1.xpose.msra.mxu0 %v10163
          %10500 = vmatprep.subr.mxu0 0.0
          %10501 = vmatpush1.xpose.msra.mxu0 %v10166
          %10502 = vmatprep.subr.mxu0 0.0
          %10503 = vmatpush1.xpose.msra.mxu0 %v10169
          %10504 = vmatprep.subr.mxu0 0.0
          %10505 = vmatpush1.xpose.msra.mxu0 %v10172
          %10506 = vmatprep.subr.mxu0 0.0
          %10507 = vmatpush1.xpose.msra.mxu0 %v10175
          %10508 = vmatprep.subr.mxu0 0.0
          %10509 = vmatpush1.xpose.msra.mxu0 %v10178
          %10510 = vmatprep.subr.mxu0 0.0
          %10511 = vmatpush1.xpose.msra.mxu0 %v10181
          %10512 = vmatprep.subr.mxu0 0.0
          %10513 = vmatpush1.xpose.msra.mxu0 %v10184
          %10514 = vmatprep.subr.mxu0 0.0
          %10515 = vmatpush1.xpose.msra.mxu0 %v10187
          %10516 = vmatprep.mubr.f32.mxu0 0.0
          %10517 = vmatmul.mubr.f32.gmra.mrb[0].mxu0 %v9995
          %v10518 = vpop.f32.mrb[0].mxu0
          %v10519 = vadd.f32 %v9992, %v10518
          %v10520 = vpop.f32.mrb[0].mxu0
          %v10521 = vadd.f32 %v9992, %v10520
          %10522 = vdwg.mxu0
          %10523 = vmatprep.subr.mxu0 0.0
          %10524 = vmatpush1.xpose.msra.mxu0 %v10190
          %10525 = vmatprep.subr.mxu0 0.0
          %10526 = vmatpush1.xpose.msra.mxu0 %v10193
          %10527 = vmatprep.subr.mxu0 0.0
          %10528 = vmatpush1.xpose.msra.mxu0 %v10196
          %10529 = vmatprep.subr.mxu0 0.0
          %10530 = vmatpush1.xpose.msra.mxu0 %v10199
          %10531 = vmatprep.subr.mxu0 0.0
          %10532 = vmatpush1.xpose.msra.mxu0 %v10202
          %10533 = vmatprep.subr.mxu0 0.0
          %10534 = vmatpush1.xpose.msra.mxu0 %v10205
          %10535 = vmatprep.subr.mxu0 0.0
          %10536 = vmatpush1.xpose.msra.mxu0 %v10208
          %10537 = vmatprep.subr.mxu0 0.0
          %10538 = vmatpush1.xpose.msra.mxu0 %v10211
          %10539 = vmatprep.subr.mxu0 0.0
          %10540 = vmatpush1.xpose.msra.mxu0 %v10214
          %10541 = vmatprep.subr.mxu0 0.0
          %10542 = vmatpush1.xpose.msra.mxu0 %v10217
          %10543 = vmatprep.subr.mxu0 0.0
          %10544 = vmatpush1.xpose.msra.mxu0 %v10220
          %10545 = vmatprep.subr.mxu0 0.0
          %10546 = vmatpush1.xpose.msra.mxu0 %v10223
          %10547 = vmatprep.subr.mxu0 0.0
          %10548 = vmatpush1.xpose.msra.mxu0 %v10226
          %10549 = vmatprep.subr.mxu0 0.0
          %10550 = vmatpush1.xpose.msra.mxu0 %v10229
          %10551 = vmatprep.subr.mxu0 0.0
          %10552 = vmatpush1.xpose.msra.mxu0 %v10232
          %10553 = vmatprep.subr.mxu0 0.0
          %10554 = vmatpush1.xpose.msra.mxu0 %v10235
          %10555 = vmatprep.subr.mxu0 0.0
          %10556 = vmatpush1.xpose.msra.mxu0 %v10238
          %10557 = vmatprep.subr.mxu0 0.0
          %10558 = vmatpush1.xpose.msra.mxu0 %v10241
          %10559 = vmatprep.subr.mxu0 0.0
          %10560 = vmatpush1.xpose.msra.mxu0 %v10244
          %10561 = vmatprep.subr.mxu0 0.0
          %10562 = vmatpush1.xpose.msra.mxu0 %v10247
          %10563 = vmatprep.subr.mxu0 0.0
          %10564 = vmatpush1.xpose.msra.mxu0 %v10250
          %10565 = vmatprep.subr.mxu0 0.0
          %10566 = vmatpush1.xpose.msra.mxu0 %v10253
          %10567 = vmatprep.subr.mxu0 0.0
          %10568 = vmatpush1.xpose.msra.mxu0 %v10256
          %10569 = vmatprep.subr.mxu0 0.0
          %10570 = vmatpush1.xpose.msra.mxu0 %v10259
          %10571 = vmatprep.subr.mxu0 0.0
          %10572 = vmatpush1.xpose.msra.mxu0 %v10262
          %10573 = vmatprep.subr.mxu0 0.0
          %10574 = vmatpush1.xpose.msra.mxu0 %v10265
          %10575 = vmatprep.subr.mxu0 0.0
          %10576 = vmatpush1.xpose.msra.mxu0 %v10268
          %10577 = vmatprep.subr.mxu0 0.0
          %10578 = vmatpush1.xpose.msra.mxu0 %v10271
          %10579 = vmatprep.subr.mxu0 0.0
          %10580 = vmatpush1.xpose.msra.mxu0 %v10274
          %10581 = vmatprep.subr.mxu0 0.0
          %10582 = vmatpush1.xpose.msra.mxu0 %v10277
          %10583 = vmatprep.subr.mxu0 0.0
          %10584 = vmatpush1.xpose.msra.mxu0 %v10280
          %10585 = vmatprep.subr.mxu0 0.0
          %10586 = vmatpush1.xpose.msra.mxu0 %v10283
          %10587 = vmatprep.mubr.f32.mxu0 0.0
          %10588 = vmatmul.mubr.f32.gmra.mrb[0].mxu0 %v9995
          %v10589 = vpop.f32.mrb[0].mxu0
          %v10590 = vadd.f32 %v9992, %v10589
          %v10591 = vpop.f32.mrb[0].mxu0
          %v10592 = vadd.f32 %v9992, %v10591
          %10593 = vdwg.mxu0
          %10594 = vmatprep.subr.mxu0 0.0
          %10595 = vmatpush1.xpose.msra.mxu0 %v10286
          %10596 = vmatprep.subr.mxu0 0.0
          %10597 = vmatpush1.xpose.msra.mxu0 %v10289
          %10598 = vmatprep.subr.mxu0 0.0
          %10599 = vmatpush1.xpose.msra.mxu0 %v10292
          %10600 = vmatprep.subr.mxu0 0.0
          %10601 = vmatpush1.xpose.msra.mxu0 %v10295
          %10602 = vmatprep.subr.mxu0 0.0
          %10603 = vmatpush1.xpose.msra.mxu0 %v10298
          %10604 = vmatprep.subr.mxu0 0.0
          %10605 = vmatpush1.xpose.msra.mxu0 %v10301
          %10606 = vmatprep.subr.mxu0 0.0
          %10607 = vmatpush1.xpose.msra.mxu0 %v10304
          %10608 = vmatprep.subr.mxu0 0.0
          %10609 = vmatpush1.xpose.msra.mxu0 %v10307
          %10610 = vmatprep.subr.mxu0 0.0
          %10611 = vmatpush1.xpose.msra.mxu0 %v10310
          %10612 = vmatprep.subr.mxu0 0.0
          %10613 = vmatpush1.xpose.msra.mxu0 %v10313
          %10614 = vmatprep.subr.mxu0 0.0
          %10615 = vmatpush1.xpose.msra.mxu0 %v10316
          %10616 = vmatprep.subr.mxu0 0.0
          %10617 = vmatpush1.xpose.msra.mxu0 %v10319
          %10618 = vmatprep.subr.mxu0 0.0
          %10619 = vmatpush1.xpose.msra.mxu0 %v10322
          %10620 = vmatprep.subr.mxu0 0.0
          %10621 = vmatpush1.xpose.msra.mxu0 %v10325
          %10622 = vmatprep.subr.mxu0 0.0
          %10623 = vmatpush1.xpose.msra.mxu0 %v10328
          %10624 = vmatprep.subr.mxu0 0.0
          %10625 = vmatpush1.xpose.msra.mxu0 %v10331
          %10626 = vmatprep.subr.mxu0 0.0
          %10627 = vmatpush1.xpose.msra.mxu0 %v10334
          %10628 = vmatprep.subr.mxu0 0.0
          %10629 = vmatpush1.xpose.msra.mxu0 %v10337
          %10630 = vmatprep.subr.mxu0 0.0
          %10631 = vmatpush1.xpose.msra.mxu0 %v10340
          %10632 = vmatprep.subr.mxu0 0.0
          %10633 = vmatpush1.xpose.msra.mxu0 %v10343
          %10634 = vmatprep.subr.mxu0 0.0
          %10635 = vmatpush1.xpose.msra.mxu0 %v10346
          %10636 = vmatprep.subr.mxu0 0.0
          %10637 = vmatpush1.xpose.msra.mxu0 %v10349
          %10638 = vmatprep.subr.mxu0 0.0
          %10639 = vmatpush1.xpose.msra.mxu0 %v10352
          %10640 = vmatprep.subr.mxu0 0.0
          %10641 = vmatpush1.xpose.msra.mxu0 %v10355
          %10642 = vmatprep.subr.mxu0 0.0
          %10643 = vmatpush1.xpose.msra.mxu0 %v10358
          %10644 = vmatprep.subr.mxu0 0.0
          %10645 = vmatpush1.xpose.msra.mxu0 %v10361
          %10646 = vmatprep.subr.mxu0 0.0
          %10647 = vmatpush1.xpose.msra.mxu0 %v10364
          %10648 = vmatprep.subr.mxu0 0.0
          %10649 = vmatpush1.xpose.msra.mxu0 %v10367
          %10650 = vmatprep.subr.mxu0 0.0
          %10651 = vmatpush1.xpose.msra.mxu0 %v10370
          %10652 = vmatprep.subr.mxu0 0.0
          %10653 = vmatpush1.xpose.msra.mxu0 %v10373
          %10654 = vmatprep.subr.mxu0 0.0
          %10655 = vmatpush1.xpose.msra.mxu0 %v10376
          %10656 = vmatprep.subr.mxu0 0.0
          %10657 = vmatpush1.xpose.msra.mxu0 %v10379
          %10658 = vmatprep.mubr.f32.mxu0 0.0
          %10659 = vmatmul.mubr.f32.gmra.mrb[0].mxu0 %v9995
          %v10660 = vpop.f32.mrb[0].mxu0
          %v10661 = vadd.f32 %v9992, %v10660
          %v10662 = vpop.f32.mrb[0].mxu0
          %v10663 = vadd.f32 %v9992, %v10662
          %10664 = vdwg.mxu0
          %10665 = vst [vmem:[#allocation5] sm:$0xff] %v10448
          %10666 = vst [vmem:[#allocation5 + $0x8] sm:$0xff] %v10450
          %10667 = vst [vmem:[#allocation5 + $0x10] sm:$0xff] %v10519
          %10668 = vst [vmem:[#allocation5 + $0x18] sm:$0xff] %v10521
          %10669 = vst [vmem:[#allocation5 + $0x20] sm:$0xff] %v10590
          %10670 = vst [vmem:[#allocation5 + $0x28] sm:$0xff] %v10592
          %10671 = vst [vmem:[#allocation5 + $0x30] sm:$0xff] %v10661
          %10672 = vst [vmem:[#allocation5 + $0x38] sm:$0xff] %v10663
        $region90: #{tpu_custom_call.1} parent=67 // pred_fallthru
          _
        %s10673 = sand.u32 %s320, 1
        %s10674 = scalar_lea.sflag [#allocation8], %s10673
        %s10675 = sand.u32 %s320, 1
        %s10676 = smul.addr %s10675, 16
        %s10677 = scalar_lea.vmem [#allocation7], %s10676
        // Predicated region
        $region91: #{tpu_custom_call.1} parent=67 // pred_check
          %p10678 = pneg %p304
        $region92: #{tpu_custom_call.1} parent=67 // pred_check_branch
          %10680 = sbr.rel (%p10678) target = $region94
        $region93: #{tpu_custom_call.1} parent=67 // pred_region
          %s10682 = ssub.s32 1024, 1024
          %10683 = vsyncadd [#allocation6], %s10682
          %s10685 = sshll.u32 [#allocation5], 4
          %s10686 = int_to_ptr.vmem [resolvable:$true] %s10685
          %10688 = dma.vmem_to_hbm [thread:$0]  %s10686, 1024, %s12, [#allocation6]
        $region94: #{tpu_custom_call.1} parent=67 // pred_fallthru
          _
        // Predicated region
        $region95: #{tpu_custom_call.1} parent=67 // pred_check
          %p10689 = pneg %p330
        $region96: #{tpu_custom_call.1} parent=67 // pred_check_branch
          %10691 = sbr.rel (%p10689) target = $region98
        $region97: #{tpu_custom_call.1} parent=67 // pred_region
          %s10693 = ssub.s32 256, 256
          %10694 = vsyncadd %s10674, %s10693
          %s10695 = smul.addr %s29, 2
          %s10696 = smul.addr %s10695, 128
          %s10697 = scalar_lea.hbm %s13, %s10696
          %s10699 = sshll.u32 %s10677, 4
          %s10700 = int_to_ptr.vmem [resolvable:$true] %s10699
          %10702 = dma.vmem_to_hbm [thread:$0]  %s10700, 256, %s10697, %s10674
        $region98: #{tpu_custom_call.1} parent=67 // pred_fallthru
          _
        // Predicated region
        $region99: #{tpu_custom_call.1} parent=67 // pred_check
          %p10703 = pneg %p304
        $region100: #{tpu_custom_call.1} parent=67 // pred_check_branch
          %10705 = sbr.rel (%p10703) target = $region102
        $region101: #{tpu_custom_call.1} parent=67 // pred_region
          %10706 = dma.done [#allocation6], 1024
        $region102: #{tpu_custom_call.1} parent=67 // pred_fallthru
          _
      $region68: #{tpu_custom_call.1} parent=5 // pred_fallthru
        _
      %p10707 = scmp.le.s32.totalorder 2, %s24
      // Predicated region
      $region103: #{tpu_custom_call.1} parent=5 // pred_check
        %p10708 = pneg %p10707
      $region104: #{tpu_custom_call.1} parent=5 // pred_check_branch
        %10710 = sbr.rel (%p10708) target = $region106
      $region105: #{tpu_custom_call.1} parent=5 // pred_region
        %s10711 = ssub.s32 %s24, 2
        // Predicated region
        $region107: #{tpu_custom_call.1} parent=105 // pred_check
          %p10712 = pneg %p336
        $region108: #{tpu_custom_call.1} parent=105 // pred_check_branch
          %10714 = sbr.rel (%p10712) target = $region110
        $region109: #{tpu_custom_call.1} parent=105 // pred_region
          %s10715 = sand.u32 %s321, 1
          %s10716 = scalar_lea.sflag [#allocation8], %s10715
          %s10717 = sand.u32 %s321, 1
          %s10718 = smul.addr %s10717, 16
          %s10719 = scalar_lea.vmem [#allocation7], %s10718
          %10720 = dma.done %s10716, 256
        $region110: #{tpu_custom_call.1} parent=105 // pred_fallthru
          _
      $region106: #{tpu_custom_call.1} parent=5 // pred_fallthru
        _
    $region6: #{tpu_custom_call.1} parent=1 // loop_footer
      %s28 = sadd.s32 1, %s24
    $region7: #{tpu_custom_call.1} parent=1 // loop_footer_branch
      %23 = sbr.rel target = $region3
    $region8: #{tpu_custom_call.1} parent=1 // loop_exit
      _
    %10721 = vsyncpa [#allocation6], 1
    %s10722 = scalar_lea.sflag [#allocation6], 1
    %10723 = vsyncpa %s10722, 1
    %10724 = vsyncpa [#allocation8], 1
    %s10725 = scalar_lea.sflag [#allocation8], 1
    %10726 = vsyncpa %s10725, 1

</llo_original>
